<compile_context>
chip_gen: v6e
topology: v6e:2x2x1
jax: 0.10.0
libtpu: 0.0.40
codegen_flags: <defaults>
</compile_context>

<pallas_src>
import math

import jax
import jax.numpy as jnp
from jax import lax
from jax.experimental import pallas as pl
from jax.experimental.pallas import tpu as pltpu


_PREC = lax.Precision.HIGHEST          # pinned: true f32 contraction on MXU
_BLK = 512                             # tile edge for adj / score at large N
_VMEM_LIMIT = 32 * 1024 * 1024         # explicit scoped-VMEM budget (safe on v5e/v6e/v7x)


def _round_up(n, m):
    return ((n + m - 1) // m) * m


# ---------------------------------------------------------------------------
# Kernels
# ---------------------------------------------------------------------------
def _xw_kernel(s_ref, w_ref, o_ref):
    # Feature transform of one row block: o = s @ w.
    o_ref[...] = jnp.dot(s_ref[...], w_ref[...],
                         preferred_element_type=jnp.float32, precision=_PREC)


def _agg_kernel(adj_ref, h_ref, b_ref, o_ref, acc_ref):
    # out[i] = sum_k adj[i, k] @ h[k]  + b   (k = reduction over adj column blocks)
    k = pl.program_id(1)

    @pl.when(k == 0)
    def _():
        acc_ref[...] = jnp.zeros_like(acc_ref)

    acc_ref[...] += jnp.dot(adj_ref[...], h_ref[...],
                            preferred_element_type=jnp.float32, precision=_PREC)

    @pl.when(k == pl.num_programs(1) - 1)
    def _():
        o_ref[...] = acc_ref[...] + b_ref[...]


def _gram_kernel(zi_ref, zj_ref, o_ref):
    # score tile (i, j) = Z_i @ Z_j^T — contract last dims, no materialized Z^T.
    o_ref[...] = lax.dot_general(
        zi_ref[...], zj_ref[...],
        dimension_numbers=(((1,), (1,)), ((), ())),
        preferred_element_type=jnp.float32, precision=_PREC)


# ---------------------------------------------------------------------------
# pallas_call wrappers
# ---------------------------------------------------------------------------
def _xw(s, w, blk):
    n_pad, f_in = s.shape
    f_out = w.shape[1]
    return pl.pallas_call(
        _xw_kernel,
        out_shape=jax.ShapeDtypeStruct((n_pad, f_out), jnp.float32),
        grid=(n_pad // blk,),
        in_specs=[pl.BlockSpec((blk, f_in), lambda i: (i, 0)),
                  pl.BlockSpec((f_in, f_out), lambda i: (0, 0))],
        out_specs=pl.BlockSpec((blk, f_out), lambda i: (i, 0)),
        compiler_params=pltpu.CompilerParams(
            dimension_semantics=("parallel",),
            vmem_limit_bytes=_VMEM_LIMIT),
        cost_estimate=pl.CostEstimate(
            flops=2 * n_pad * f_in * f_out,
            transcendentals=0,
            bytes_accessed=4 * (n_pad * f_in + f_in * f_out + n_pad * f_out)),
    )(s, w)


def _aggregate(adj_p, h, b, blk):
    n_pad = adj_p.shape[0]
    f_out = h.shape[1]
    return pl.pallas_call(
        _agg_kernel,
        out_shape=jax.ShapeDtypeStruct((n_pad, f_out), jnp.float32),
        grid=(n_pad // blk, n_pad // blk),
        in_specs=[pl.BlockSpec((blk, blk), lambda i, k: (i, k)),
                  pl.BlockSpec((blk, f_out), lambda i, k: (k, 0)),
                  pl.BlockSpec((1, f_out), lambda i, k: (0, 0))],
        out_specs=pl.BlockSpec((blk, f_out), lambda i, k: (i, 0)),
        scratch_shapes=[pltpu.VMEM((blk, f_out), jnp.float32)],
        compiler_params=pltpu.CompilerParams(
            dimension_semantics=("parallel", "arbitrary"),
            vmem_limit_bytes=_VMEM_LIMIT),
        cost_estimate=pl.CostEstimate(
            flops=2 * n_pad * n_pad * f_out,
            transcendentals=0,
            bytes_accessed=4 * (n_pad * n_pad + 2 * n_pad * f_out)),
    )(adj_p, h, b)


def _gram(z, blk):
    n_pad, e = z.shape
    return pl.pallas_call(
        _gram_kernel,
        out_shape=jax.ShapeDtypeStruct((n_pad, n_pad), jnp.float32),
        grid=(n_pad // blk, n_pad // blk),
        in_specs=[pl.BlockSpec((blk, e), lambda i, j: (i, 0)),
                  pl.BlockSpec((blk, e), lambda i, j: (j, 0))],
        out_specs=pl.BlockSpec((blk, blk), lambda i, j: (i, j)),
        compiler_params=pltpu.CompilerParams(
            dimension_semantics=("parallel", "parallel"),
            vmem_limit_bytes=_VMEM_LIMIT),
        cost_estimate=pl.CostEstimate(
            flops=2 * n_pad * n_pad * e,
            transcendentals=0,
            bytes_accessed=4 * (n_pad * n_pad + 2 * n_pad * e)),
    )(z, z)


# ---------------------------------------------------------------------------
# Forward pass (jitted; shapes drive the tiling decisions at trace time)
# ---------------------------------------------------------------------------
@jax.jit
def gae_forward(params, adj, x):
    n = adj.shape[0]
    if n >= _BLK:
        blk = _BLK
        n_pad = _round_up(n, blk)
    else:
        n_pad = _round_up(n, 8)      # sublane alignment; single block covers all rows
        blk = n_pad

    adj_f = adj.astype(jnp.float32)
    x_f = x.astype(jnp.float32)
    if n_pad != n:
        # Padded adj rows/cols are zero, so real rows of every layer output are
        # exact; padded rows of `score` are garbage and are sliced off below.
        adj_f = jnp.zeros((n_pad, n_pad), jnp.float32).at[:n, :n].set(adj_f)
        x_f = jnp.zeros((n_pad, x.shape[1]), jnp.float32).at[:n, :].set(x_f)

    layers = [params["encode"]] + list(params["medium"]) + [params["mean"]]
    support = x_f
    for w, b in layers:
        h = _xw(support, w, blk)              # H = S @ W       (small, row-tiled)
        support = _aggregate(adj_f, h, b, blk)  # S' = adj @ H + b (N^2 work, tiled)

    score = _gram(support, blk)               # score = Z @ Z^T  (N^2 work, tiled)
    if n_pad != n:
        score = score[:n, :n]
    return score


# ---------------------------------------------------------------------------
# GAE parameter init (mirrors GraphConvolution.reset_parameters).
# Bias is stored as (1, out_features) at init time (hoisted prep, no per-call reshape).
# ---------------------------------------------------------------------------
def init_gcn_params(key, in_features, out_features):
    stdv = 1.0 / math.sqrt(out_features)
    kw, kb = jax.random.split(key)
    w = jax.random.uniform(kw, (in_features, out_features),
                           minval=-stdv, maxval=stdv, dtype=jnp.float32)
    b = jax.random.uniform(kb, (1, out_features),
                           minval=-stdv, maxval=stdv, dtype=jnp.float32)
    return w, b


def gae_init(key, input_size, emb_size, hidden_size, layers=2):
    keys = jax.random.split(key, layers)
    params = {"encode": init_gcn_params(keys[0], input_size, hidden_size),
              "medium": [init_gcn_params(keys[1 + i], hidden_size, hidden_size)
                         for i in range(layers - 2)],
              "mean": init_gcn_params(keys[-1], hidden_size, emb_size)}
    return params


# ---------------------------------------------------------------------------
# Pure-JAX reference (same association order and pinned precision)
# ---------------------------------------------------------------------------
def gae_reference(params, adj, x):
    def layer(inp, w, b):
        h = jnp.dot(inp, w, precision=_PREC)
        return jnp.dot(adj, h, precision=_PREC) + b

    w_e, b_e = params["encode"]
    support = layer(x, w_e, b_e)
    for (w_m, b_m) in params["medium"]:
        support = layer(support, w_m, b_m)
    w_mu, b_mu = params["mean"]
    support = layer(support, w_mu, b_mu)
    return jnp.dot(support, support.T, precision=_PREC)


if __name__ == "__main__":
    key = jax.random.PRNGKey(0)
    k_param, k_adj, k_x = jax.random.split(key, 3)

    # Small shapes consistent with the module's forward:
    #   adj: (N, N) graph adjacency, x: (N, input_size) node features.
    N = 128
    input_size = 32
    hidden_size = 64
    emb_size = 16

    params = gae_init(k_param, input_size, emb_size, hidden_size, layers=2)

    # symmetric, row-normalized-ish adjacency
    a = jax.random.uniform(k_adj, (N, N), dtype=jnp.float32)
    adj = (a + a.T) * 0.5 / N
    x = jax.random.uniform(k_x, (N, input_size), dtype=jnp.float32)

    score = jax.block_until_ready(gae_forward(params, adj, x))

    ref = gae_reference(params, adj, x)
    assert score.shape == (N, N)
    assert jnp.allclose(score, ref, rtol=1e-4, atol=1e-4), "mismatch vs reference"

    print("KERNEL_OK")
</pallas_src>

<mosaic_0001>
module attributes {stable_mosaic.version = 11 : i64} {
  func.func @_agg_kernel(%arg0: i32, %arg1: i32, %arg2: memref<128x128xf32, #tpu.memory_space<vmem>>, %arg3: memref<128x64xf32, #tpu.memory_space<vmem>>, %arg4: memref<1x64xf32, #tpu.memory_space<vmem>>, %arg5: memref<128x64xf32, #tpu.memory_space<vmem>>, %arg6: memref<128x64xf32, #tpu.memory_space<vmem>>) attributes {dimension_semantics = [#tpu.dimension_semantics<parallel>, #tpu.dimension_semantics<arbitrary>], iteration_bounds = array<i64: 1, 1>, scalar_prefetch = 0 : i64, scratch_operands = 1 : i64, tpu.core_type = #tpu.core_type<tc>, window_params = [{transform_indices = @transform_0, window_bounds = array<i64: 128, 128>}, {transform_indices = @transform_1, window_bounds = array<i64: 128, 64>}, {pipeline_mode = #tpu.pipeline_mode<synchronous>, transform_indices = @transform_2, window_bounds = array<i64: 1, 64>}, {transform_indices = @transform_3, window_bounds = array<i64: 128, 64>}]} {
    %c0_i32 = arith.constant 0 : i32
    %0 = arith.cmpi eq, %arg1, %c0_i32 : i32
    %1 = arith.extui %0 : i1 to i32
    %c0_i32_0 = arith.constant 0 : i32
    %2 = arith.cmpi ne, %1, %c0_i32_0 : i32
    scf.if %2 {
      %cst_10 = arith.constant 0.000000e+00 : f32
      %12 = vector.broadcast %cst_10 : f32 to vector<128x64xf32>
      %c0_11 = arith.constant 0 : index
      %c0_12 = arith.constant 0 : index
      %13 = vector.load %arg6[%c0_11, %c0_12] : memref<128x64xf32, #tpu.memory_space<vmem>>, vector<128x64xf32>
      tpu.vector_store %arg6[%c0_11, %c0_12], %12 {strides = array<i32>} : memref<128x64xf32, #tpu.memory_space<vmem>>, vector<128x64xf32>,
    } else {
    }
    %c0 = arith.constant 0 : index
    %c0_1 = arith.constant 0 : index
    %3 = vector.load %arg6[%c0, %c0_1] : memref<128x64xf32, #tpu.memory_space<vmem>>, vector<128x64xf32>
    %c0_2 = arith.constant 0 : index
    %c0_3 = arith.constant 0 : index
    %4 = vector.load %arg2[%c0_2, %c0_3] : memref<128x128xf32, #tpu.memory_space<vmem>>, vector<128x128xf32>
    %c0_4 = arith.constant 0 : index
    %c0_5 = arith.constant 0 : index
    %5 = vector.load %arg3[%c0_4, %c0_5] : memref<128x64xf32, #tpu.memory_space<vmem>>, vector<128x64xf32>
    %cst = arith.constant dense<0.000000e+00> : vector<128x64xf32>
    %6 = tpu.matmul %4, %5, %cst {dimension_numbers = #tpu.dot_dimension_numbers<[1], [0], [0], [1], [0, 0, 1, 1], [], []>, precision = #tpu.contract_precision<fp32>} : vector<128x128xf32>, vector<128x64xf32>, vector<128x64xf32> -> vector<128x64xf32>
    %7 = arith.addf %3, %6 : vector<128x64xf32>
    %c0_6 = arith.constant 0 : index
    %c0_7 = arith.constant 0 : index
    %8 = vector.load %arg6[%c0_6, %c0_7] : memref<128x64xf32, #tpu.memory_space<vmem>>, vector<128x64xf32>
    tpu.vector_store %arg6[%c0_6, %c0_7], %7 {strides = array<i32>} : memref<128x64xf32, #tpu.memory_space<vmem>>, vector<128x64xf32>,
    %c0_i32_8 = arith.constant 0 : i32
    %9 = arith.cmpi eq, %arg1, %c0_i32_8 : i32
    %10 = arith.extui %9 : i1 to i32
    %c0_i32_9 = arith.constant 0 : i32
    %11 = arith.cmpi ne, %10, %c0_i32_9 : i32
    scf.if %11 {
      %c0_10 = arith.constant 0 : index
      %c0_11 = arith.constant 0 : index
      %12 = vector.load %arg6[%c0_10, %c0_11] : memref<128x64xf32, #tpu.memory_space<vmem>>, vector<128x64xf32>
      %c0_12 = arith.constant 0 : index
      %c0_13 = arith.constant 0 : index
      %13 = vector.load %arg4[%c0_12, %c0_13] : memref<1x64xf32, #tpu.memory_space<vmem>>, vector<1x64xf32>
      %14 = vector.broadcast %13 : vector<1x64xf32> to vector<128x64xf32>
      %15 = arith.addf %12, %14 : vector<128x64xf32>
      %c0_14 = arith.constant 0 : index
      %c0_15 = arith.constant 0 : index
      %16 = vector.load %arg5[%c0_14, %c0_15] : memref<128x64xf32, #tpu.memory_space<vmem>>, vector<128x64xf32>
      tpu.vector_store %arg5[%c0_14, %c0_15], %15 {strides = array<i32>} : memref<128x64xf32, #tpu.memory_space<vmem>>, vector<128x64xf32>,
    } else {
    }
    return
  }
  func.func @transform_0(%arg0: i32, %arg1: i32) -> (i32, i32) {
    %c0_i32 = arith.constant 0 : i32
    return %arg0, %arg1 : i32, i32
  }
  func.func @transform_1(%arg0: i32, %arg1: i32) -> (i32, i32) {
    %c0_i32 = arith.constant 0 : i32
    %c0_i32_0 = arith.constant 0 : i32
    return %arg1, %c0_i32 : i32, i32
  }
  func.func @transform_2(%arg0: i32, %arg1: i32) -> (i32, i32) {
    %c0_i32 = arith.constant 0 : i32
    %c0_i32_0 = arith.constant 0 : i32
    %c0_i32_1 = arith.constant 0 : i32
    return %c0_i32, %c0_i32_0 : i32, i32
  }
  func.func @transform_3(%arg0: i32, %arg1: i32) -> (i32, i32) {
    %c0_i32 = arith.constant 0 : i32
    %c0_i32_0 = arith.constant 0 : i32
    return %arg0, %c0_i32 : i32, i32
  }
}

module attributes {stable_mosaic.version = 11 : i64} {
  func.func @_xw_kernel(%arg0: i32, %arg1: memref<128x32xf32, #tpu.memory_space<vmem>>, %arg2: memref<32x64xf32, #tpu.memory_space<vmem>>, %arg3: memref<128x64xf32, #tpu.memory_space<vmem>>) attributes {dimension_semantics = [#tpu.dimension_semantics<parallel>], iteration_bounds = array<i64: 1>, scalar_prefetch = 0 : i64, scratch_operands = 0 : i64, tpu.core_type = #tpu.core_type<tc>, window_params = [{transform_indices = @transform_0, window_bounds = array<i64: 128, 32>}, {pipeline_mode = #tpu.pipeline_mode<synchronous>, transform_indices = @transform_1, window_bounds = array<i64: 32, 64>}, {transform_indices = @transform_2, window_bounds = array<i64: 128, 64>}]} {
    %c0 = arith.constant 0 : index
    %c0_0 = arith.constant 0 : index
    %0 = vector.load %arg1[%c0, %c0_0] : memref<128x32xf32, #tpu.memory_space<vmem>>, vector<128x32xf32>
    %c0_1 = arith.constant 0 : index
    %c0_2 = arith.constant 0 : index
    %1 = vector.load %arg2[%c0_1, %c0_2] : memref<32x64xf32, #tpu.memory_space<vmem>>, vector<32x64xf32>
    %cst = arith.constant dense<0.000000e+00> : vector<128x64xf32>
    %2 = tpu.matmul %0, %1, %cst {dimension_numbers = #tpu.dot_dimension_numbers<[1], [0], [0], [1], [0, 0, 1, 1], [], []>, precision = #tpu.contract_precision<fp32>} : vector<128x32xf32>, vector<32x64xf32>, vector<128x64xf32> -> vector<128x64xf32>
    %c0_3 = arith.constant 0 : index
    %c0_4 = arith.constant 0 : index
    %3 = vector.load %arg3[%c0_3, %c0_4] : memref<128x64xf32, #tpu.memory_space<vmem>>, vector<128x64xf32>
    tpu.vector_store %arg3[%c0_3, %c0_4], %2 {strides = array<i32>} : memref<128x64xf32, #tpu.memory_space<vmem>>, vector<128x64xf32>,
    return
  }
  func.func @transform_0(%arg0: i32) -> (i32, i32) {
    %c0_i32 = arith.constant 0 : i32
    %c0_i32_0 = arith.constant 0 : i32
    return %arg0, %c0_i32 : i32, i32
  }
  func.func @transform_1(%arg0: i32) -> (i32, i32) {
    %c0_i32 = arith.constant 0 : i32
    %c0_i32_0 = arith.constant 0 : i32
    %c0_i32_1 = arith.constant 0 : i32
    return %c0_i32, %c0_i32_0 : i32, i32
  }
  func.func @transform_2(%arg0: i32) -> (i32, i32) {
    %c0_i32 = arith.constant 0 : i32
    %c0_i32_0 = arith.constant 0 : i32
    return %arg0, %c0_i32 : i32, i32
  }
}

module attributes {stable_mosaic.version = 11 : i64} {
  func.func @_xw_kernel(%arg0: i32, %arg1: memref<128x64xf32, #tpu.memory_space<vmem>>, %arg2: memref<64x16xf32, #tpu.memory_space<vmem>>, %arg3: memref<128x16xf32, #tpu.memory_space<vmem>>) attributes {dimension_semantics = [#tpu.dimension_semantics<parallel>], iteration_bounds = array<i64: 1>, scalar_prefetch = 0 : i64, scratch_operands = 0 : i64, tpu.core_type = #tpu.core_type<tc>, window_params = [{transform_indices = @transform_0, window_bounds = array<i64: 128, 64>}, {pipeline_mode = #tpu.pipeline_mode<synchronous>, transform_indices = @transform_1, window_bounds = array<i64: 64, 16>}, {transform_indices = @transform_2, window_bounds = array<i64: 128, 16>}]} {
    %c0 = arith.constant 0 : index
    %c0_0 = arith.constant 0 : index
    %0 = vector.load %arg1[%c0, %c0_0] : memref<128x64xf32, #tpu.memory_space<vmem>>, vector<128x64xf32>
    %c0_1 = arith.constant 0 : index
    %c0_2 = arith.constant 0 : index
    %1 = vector.load %arg2[%c0_1, %c0_2] : memref<64x16xf32, #tpu.memory_space<vmem>>, vector<64x16xf32>
    %cst = arith.constant dense<0.000000e+00> : vector<128x16xf32>
    %2 = tpu.matmul %0, %1, %cst {dimension_numbers = #tpu.dot_dimension_numbers<[1], [0], [0], [1], [0, 0, 1, 1], [], []>, precision = #tpu.contract_precision<fp32>} : vector<128x64xf32>, vector<64x16xf32>, vector<128x16xf32> -> vector<128x16xf32>
    %c0_3 = arith.constant 0 : index
    %c0_4 = arith.constant 0 : index
    %3 = vector.load %arg3[%c0_3, %c0_4] : memref<128x16xf32, #tpu.memory_space<vmem>>, vector<128x16xf32>
    tpu.vector_store %arg3[%c0_3, %c0_4], %2 {strides = array<i32>} : memref<128x16xf32, #tpu.memory_space<vmem>>, vector<128x16xf32>,
    return
  }
  func.func @transform_0(%arg0: i32) -> (i32, i32) {
    %c0_i32 = arith.constant 0 : i32
    %c0_i32_0 = arith.constant 0 : i32
    return %arg0, %c0_i32 : i32, i32
  }
  func.func @transform_1(%arg0: i32) -> (i32, i32) {
    %c0_i32 = arith.constant 0 : i32
    %c0_i32_0 = arith.constant 0 : i32
    %c0_i32_1 = arith.constant 0 : i32
    return %c0_i32, %c0_i32_0 : i32, i32
  }
  func.func @transform_2(%arg0: i32) -> (i32, i32) {
    %c0_i32 = arith.constant 0 : i32
    %c0_i32_0 = arith.constant 0 : i32
    return %arg0, %c0_i32 : i32, i32
  }
}

module attributes {stable_mosaic.version = 11 : i64} {
  func.func @_agg_kernel(%arg0: i32, %arg1: i32, %arg2: memref<128x128xf32, #tpu.memory_space<vmem>>, %arg3: memref<128x16xf32, #tpu.memory_space<vmem>>, %arg4: memref<1x16xf32, #tpu.memory_space<vmem>>, %arg5: memref<128x16xf32, #tpu.memory_space<vmem>>, %arg6: memref<128x16xf32, #tpu.memory_space<vmem>>) attributes {dimension_semantics = [#tpu.dimension_semantics<parallel>, #tpu.dimension_semantics<arbitrary>], iteration_bounds = array<i64: 1, 1>, scalar_prefetch = 0 : i64, scratch_operands = 1 : i64, tpu.core_type = #tpu.core_type<tc>, window_params = [{transform_indices = @transform_0, window_bounds = array<i64: 128, 128>}, {transform_indices = @transform_1, window_bounds = array<i64: 128, 16>}, {pipeline_mode = #tpu.pipeline_mode<synchronous>, transform_indices = @transform_2, window_bounds = array<i64: 1, 16>}, {transform_indices = @transform_3, window_bounds = array<i64: 128, 16>}]} {
    %c0_i32 = arith.constant 0 : i32
    %0 = arith.cmpi eq, %arg1, %c0_i32 : i32
    %1 = arith.extui %0 : i1 to i32
    %c0_i32_0 = arith.constant 0 : i32
    %2 = arith.cmpi ne, %1, %c0_i32_0 : i32
    scf.if %2 {
      %cst_10 = arith.constant 0.000000e+00 : f32
      %12 = vector.broadcast %cst_10 : f32 to vector<128x16xf32>
      %c0_11 = arith.constant 0 : index
      %c0_12 = arith.constant 0 : index
      %13 = vector.load %arg6[%c0_11, %c0_12] : memref<128x16xf32, #tpu.memory_space<vmem>>, vector<128x16xf32>
      tpu.vector_store %arg6[%c0_11, %c0_12], %12 {strides = array<i32>} : memref<128x16xf32, #tpu.memory_space<vmem>>, vector<128x16xf32>,
    } else {
    }
    %c0 = arith.constant 0 : index
    %c0_1 = arith.constant 0 : index
    %3 = vector.load %arg6[%c0, %c0_1] : memref<128x16xf32, #tpu.memory_space<vmem>>, vector<128x16xf32>
    %c0_2 = arith.constant 0 : index
    %c0_3 = arith.constant 0 : index
    %4 = vector.load %arg2[%c0_2, %c0_3] : memref<128x128xf32, #tpu.memory_space<vmem>>, vector<128x128xf32>
    %c0_4 = arith.constant 0 : index
    %c0_5 = arith.constant 0 : index
    %5 = vector.load %arg3[%c0_4, %c0_5] : memref<128x16xf32, #tpu.memory_space<vmem>>, vector<128x16xf32>
    %cst = arith.constant dense<0.000000e+00> : vector<128x16xf32>
    %6 = tpu.matmul %4, %5, %cst {dimension_numbers = #tpu.dot_dimension_numbers<[1], [0], [0], [1], [0, 0, 1, 1], [], []>, precision = #tpu.contract_precision<fp32>} : vector<128x128xf32>, vector<128x16xf32>, vector<128x16xf32> -> vector<128x16xf32>
    %7 = arith.addf %3, %6 : vector<128x16xf32>
    %c0_6 = arith.constant 0 : index
    %c0_7 = arith.constant 0 : index
    %8 = vector.load %arg6[%c0_6, %c0_7] : memref<128x16xf32, #tpu.memory_space<vmem>>, vector<128x16xf32>
    tpu.vector_store %arg6[%c0_6, %c0_7], %7 {strides = array<i32>} : memref<128x16xf32, #tpu.memory_space<vmem>>, vector<128x16xf32>,
    %c0_i32_8 = arith.constant 0 : i32
    %9 = arith.cmpi eq, %arg1, %c0_i32_8 : i32
    %10 = arith.extui %9 : i1 to i32
    %c0_i32_9 = arith.constant 0 : i32
    %11 = arith.cmpi ne, %10, %c0_i32_9 : i32
    scf.if %11 {
      %c0_10 = arith.constant 0 : index
      %c0_11 = arith.constant 0 : index
      %12 = vector.load %arg6[%c0_10, %c0_11] : memref<128x16xf32, #tpu.memory_space<vmem>>, vector<128x16xf32>
      %c0_12 = arith.constant 0 : index
      %c0_13 = arith.constant 0 : index
      %13 = vector.load %arg4[%c0_12, %c0_13] : memref<1x16xf32, #tpu.memory_space<vmem>>, vector<1x16xf32>
      %14 = vector.broadcast %13 : vector<1x16xf32> to vector<128x16xf32>
      %15 = arith.addf %12, %14 : vector<128x16xf32>
      %c0_14 = arith.constant 0 : index
      %c0_15 = arith.constant 0 : index
      %16 = vector.load %arg5[%c0_14, %c0_15] : memref<128x16xf32, #tpu.memory_space<vmem>>, vector<128x16xf32>
      tpu.vector_store %arg5[%c0_14, %c0_15], %15 {strides = array<i32>} : memref<128x16xf32, #tpu.memory_space<vmem>>, vector<128x16xf32>,
    } else {
    }
    return
  }
  func.func @transform_0(%arg0: i32, %arg1: i32) -> (i32, i32) {
    %c0_i32 = arith.constant 0 : i32
    return %arg0, %arg1 : i32, i32
  }
  func.func @transform_1(%arg0: i32, %arg1: i32) -> (i32, i32) {
    %c0_i32 = arith.constant 0 : i32
    %c0_i32_0 = arith.constant 0 : i32
    return %arg1, %c0_i32 : i32, i32
  }
  func.func @transform_2(%arg0: i32, %arg1: i32) -> (i32, i32) {
    %c0_i32 = arith.constant 0 : i32
    %c0_i32_0 = arith.constant 0 : i32
    %c0_i32_1 = arith.constant 0 : i32
    return %c0_i32, %c0_i32_0 : i32, i32
  }
  func.func @transform_3(%arg0: i32, %arg1: i32) -> (i32, i32) {
    %c0_i32 = arith.constant 0 : i32
    %c0_i32_0 = arith.constant 0 : i32
    return %arg0, %c0_i32 : i32, i32
  }
}

module attributes {stable_mosaic.version = 11 : i64} {
  func.func @_gram_kernel(%arg0: i32, %arg1: i32, %arg2: memref<128x16xf32, #tpu.memory_space<vmem>>, %arg3: memref<128x16xf32, #tpu.memory_space<vmem>>, %arg4: memref<128x128xf32, #tpu.memory_space<vmem>>) attributes {dimension_semantics = [#tpu.dimension_semantics<parallel>, #tpu.dimension_semantics<parallel>], iteration_bounds = array<i64: 1, 1>, scalar_prefetch = 0 : i64, scratch_operands = 0 : i64, tpu.core_type = #tpu.core_type<tc>, window_params = [{transform_indices = @transform_0, window_bounds = array<i64: 128, 16>}, {transform_indices = @transform_1, window_bounds = array<i64: 128, 16>}, {transform_indices = @transform_2, window_bounds = array<i64: 128, 128>}]} {
    %c0 = arith.constant 0 : index
    %c0_0 = arith.constant 0 : index
    %0 = vector.load %arg2[%c0, %c0_0] : memref<128x16xf32, #tpu.memory_space<vmem>>, vector<128x16xf32>
    %c0_1 = arith.constant 0 : index
    %c0_2 = arith.constant 0 : index
    %1 = vector.load %arg3[%c0_1, %c0_2] : memref<128x16xf32, #tpu.memory_space<vmem>>, vector<128x16xf32>
    %cst = arith.constant dense<0.000000e+00> : vector<128x128xf32>
    %2 = tpu.matmul %0, %1, %cst {dimension_numbers = #tpu.dot_dimension_numbers<[1], [1], [0], [0], [0, 0, 1, 0], [], []>, precision = #tpu.contract_precision<fp32>} : vector<128x16xf32>, vector<128x16xf32>, vector<128x128xf32> -> vector<128x128xf32>
    %c0_3 = arith.constant 0 : index
    %c0_4 = arith.constant 0 : index
    %3 = vector.load %arg4[%c0_3, %c0_4] : memref<128x128xf32, #tpu.memory_space<vmem>>, vector<128x128xf32>
    tpu.vector_store %arg4[%c0_3, %c0_4], %2 {strides = array<i32>} : memref<128x128xf32, #tpu.memory_space<vmem>>, vector<128x128xf32>,
    return
  }
  func.func @transform_0(%arg0: i32, %arg1: i32) -> (i32, i32) {
    %c0_i32 = arith.constant 0 : i32
    %c0_i32_0 = arith.constant 0 : i32
    return %arg0, %c0_i32 : i32, i32
  }
  func.func @transform_1(%arg0: i32, %arg1: i32) -> (i32, i32) {
    %c0_i32 = arith.constant 0 : i32
    %c0_i32_0 = arith.constant 0 : i32
    return %arg1, %c0_i32 : i32, i32
  }
  func.func @transform_2(%arg0: i32, %arg1: i32) -> (i32, i32) {
    %c0_i32 = arith.constant 0 : i32
    return %arg0, %arg1 : i32, i32
  }
}

</mosaic_0001>

<llo_original>
// kernel: gae_forward.6
$region0: #{gae_forward.6}
  #allocation0 [shape = 'u32[]', space=smem, size = 0x4, offset = 0x4, fixed_abs, tag = 'smem constant byte address 0x4 - core index']
  #allocation1 [shape = 'u32[144,128]{1,0:T(1,128)}', space=vmem, size = 0x12000, scoped, tag = 'internal scratch']
  #allocation2 [shape = 'f32[128,64]{1,0:T(8,128)}', space=vmem, size = 0x10000, scoped, tag = 'scratch operand']
  %s0 = inlined_call_operand.vmem [shape: f32[128,128], index: 0, kind: input, shape index: {}]
  %s1 = inlined_call_operand.vmem [shape: f32[128,64], index: 1, kind: input, shape index: {}]
  %s2 = inlined_call_operand.vmem [shape: f32[1,64], index: 2, kind: input, shape index: {}]
  %s3 = inlined_call_operand.vmem [shape: f32[128,64], index: 3, kind: output, shape index: {}]
  %s4 = sld [smem:[#allocation0]]
  $region30: #{gae_forward.6} parent=0
    _
  %s6 = ssub.s32 1, %s4
  %s7 = scalar_select 0, %s6, %s4
  // Predicated region
  $region2: #{gae_forward.6} parent=0 // pred_check
    _
  $region3: #{gae_forward.6} parent=0 // pred_check_branch
    %9 = sbr.rel (0) target = $region5
  $region4: #{gae_forward.6} parent=0 // pred_region
    _
  $region5: #{gae_forward.6} parent=0 // pred_fallthru
    _
  // Predicated region
  $region6: #{gae_forward.6} parent=0 // pred_check
    _
  $region7: #{gae_forward.6} parent=0 // pred_check_branch
    %11 = sbr.rel (0) target = $region9
  $region8: #{gae_forward.6} parent=0 // pred_region
    _
  $region9: #{gae_forward.6} parent=0 // pred_fallthru
    _
  // Predicated region
  $region10: #{gae_forward.6} parent=0 // pred_check
    _
  $region11: #{gae_forward.6} parent=0 // pred_check_branch
    %13 = sbr.rel (0) target = $region13
  $region12: #{gae_forward.6} parent=0 // pred_region
    _
  $region13: #{gae_forward.6} parent=0 // pred_fallthru
    _
  %p14 = scmp.eq.s32.totalorder 0, 0
  // Predicated region
  $region14: #{gae_forward.6} parent=0 // pred_check
    %p15 = pneg %p14
  $region15: #{gae_forward.6} parent=0 // pred_check_branch
    %17 = sbr.rel (%p15) target = $region17
  $region16: #{gae_forward.6} parent=0 // pred_region
    %vm18 = vcmask 523264
    %19 = vst.msk [vmem:[#allocation2] sm:$0xff] %vm18, 0.0
    %20 = vst.msk [vmem:[#allocation2 + $0x8] sm:$0xff] %vm18, 0.0
    %21 = vst.msk [vmem:[#allocation2 + $0x10] sm:$0xff] %vm18, 0.0
    %22 = vst.msk [vmem:[#allocation2 + $0x18] sm:$0xff] %vm18, 0.0
    %23 = vst.msk [vmem:[#allocation2 + $0x20] sm:$0xff] %vm18, 0.0
    %24 = vst.msk [vmem:[#allocation2 + $0x28] sm:$0xff] %vm18, 0.0
    %25 = vst.msk [vmem:[#allocation2 + $0x30] sm:$0xff] %vm18, 0.0
    %26 = vst.msk [vmem:[#allocation2 + $0x38] sm:$0xff] %vm18, 0.0
    %27 = vst.msk [vmem:[#allocation2 + $0x40] sm:$0xff] %vm18, 0.0
    %28 = vst.msk [vmem:[#allocation2 + $0x48] sm:$0xff] %vm18, 0.0
    %29 = vst.msk [vmem:[#allocation2 + $0x50] sm:$0xff] %vm18, 0.0
    %30 = vst.msk [vmem:[#allocation2 + $0x58] sm:$0xff] %vm18, 0.0
    %31 = vst.msk [vmem:[#allocation2 + $0x60] sm:$0xff] %vm18, 0.0
    %32 = vst.msk [vmem:[#allocation2 + $0x68] sm:$0xff] %vm18, 0.0
    %33 = vst.msk [vmem:[#allocation2 + $0x70] sm:$0xff] %vm18, 0.0
    %34 = vst.msk [vmem:[#allocation2 + $0x78] sm:$0xff] %vm18, 0.0
  $region17: #{gae_forward.6} parent=0 // pred_fallthru
    _
  %v35 = vld [vmem:[#allocation2] sm:$0xff]
  %v36 = vld [vmem:[#allocation2 + $0x8] sm:$0xff]
  %v37 = vld [vmem:[#allocation2 + $0x10] sm:$0xff]
  %v38 = vld [vmem:[#allocation2 + $0x18] sm:$0xff]
  %v39 = vld [vmem:[#allocation2 + $0x20] sm:$0xff]
  %v40 = vld [vmem:[#allocation2 + $0x28] sm:$0xff]
  %v41 = vld [vmem:[#allocation2 + $0x30] sm:$0xff]
  %v42 = vld [vmem:[#allocation2 + $0x38] sm:$0xff]
  %v43 = vld [vmem:[#allocation2 + $0x40] sm:$0xff]
  %v44 = vld [vmem:[#allocation2 + $0x48] sm:$0xff]
  %v45 = vld [vmem:[#allocation2 + $0x50] sm:$0xff]
  %v46 = vld [vmem:[#allocation2 + $0x58] sm:$0xff]
  %v47 = vld [vmem:[#allocation2 + $0x60] sm:$0xff]
  %v48 = vld [vmem:[#allocation2 + $0x68] sm:$0xff]
  %v49 = vld [vmem:[#allocation2 + $0x70] sm:$0xff]
  %v50 = vld [vmem:[#allocation2 + $0x78] sm:$0xff]
  %v51 = vld [vmem:[%s0] sm:$0xff]
  %v52 = vld [vmem:[%s0 + $0x8] sm:$0xff]
  %v53 = vld [vmem:[%s0 + $0x10] sm:$0xff]
  %v54 = vld [vmem:[%s0 + $0x18] sm:$0xff]
  %v55 = vld [vmem:[%s0 + $0x20] sm:$0xff]
  %v56 = vld [vmem:[%s0 + $0x28] sm:$0xff]
  %v57 = vld [vmem:[%s0 + $0x30] sm:$0xff]
  %v58 = vld [vmem:[%s0 + $0x38] sm:$0xff]
  %v59 = vld [vmem:[%s0 + $0x40] sm:$0xff]
  %v60 = vld [vmem:[%s0 + $0x48] sm:$0xff]
  %v61 = vld [vmem:[%s0 + $0x50] sm:$0xff]
  %v62 = vld [vmem:[%s0 + $0x58] sm:$0xff]
  %v63 = vld [vmem:[%s0 + $0x60] sm:$0xff]
  %v64 = vld [vmem:[%s0 + $0x68] sm:$0xff]
  %v65 = vld [vmem:[%s0 + $0x70] sm:$0xff]
  %v66 = vld [vmem:[%s0 + $0x78] sm:$0xff]
  %v67 = vld [vmem:[%s1] sm:$0xff]
  %v68 = vld [vmem:[%s1 + $0x8] sm:$0xff]
  %v69 = vld [vmem:[%s1 + $0x10] sm:$0xff]
  %v70 = vld [vmem:[%s1 + $0x18] sm:$0xff]
  %v71 = vld [vmem:[%s1 + $0x20] sm:$0xff]
  %v72 = vld [vmem:[%s1 + $0x28] sm:$0xff]
  %v73 = vld [vmem:[%s1 + $0x30] sm:$0xff]
  %v74 = vld [vmem:[%s1 + $0x38] sm:$0xff]
  %v75 = vld [vmem:[%s1 + $0x40] sm:$0xff]
  %v76 = vld [vmem:[%s1 + $0x48] sm:$0xff]
  %v77 = vld [vmem:[%s1 + $0x50] sm:$0xff]
  %v78 = vld [vmem:[%s1 + $0x58] sm:$0xff]
  %v79 = vld [vmem:[%s1 + $0x60] sm:$0xff]
  %v80 = vld [vmem:[%s1 + $0x68] sm:$0xff]
  %v81 = vld [vmem:[%s1 + $0x70] sm:$0xff]
  %v82 = vld [vmem:[%s1 + $0x78] sm:$0xff]
  %83 = vmatprep.subr.mxu0 0.0
  %v84 = vand.u32 %v82, 4294901760
  %85 = vmatpush1.msra.mxu0 %v84
  %86 = vmatprep.subr.mxu0 0.0
  %v87 = vand.u32 %v81, 4294901760
  %88 = vmatpush1.msra.mxu0 %v87
  %89 = vmatprep.subr.mxu0 0.0
  %v90 = vand.u32 %v80, 4294901760
  %91 = vmatpush1.msra.mxu0 %v90
  %92 = vmatprep.subr.mxu0 0.0
  %v93 = vand.u32 %v79, 4294901760
  %94 = vmatpush1.msra.mxu0 %v93
  %95 = vmatprep.subr.mxu0 0.0
  %v96 = vand.u32 %v78, 4294901760
  %97 = vmatpush1.msra.mxu0 %v96
  %98 = vmatprep.subr.mxu0 0.0
  %v99 = vand.u32 %v77, 4294901760
  %100 = vmatpush1.msra.mxu0 %v99
  %101 = vmatprep.subr.mxu0 0.0
  %v102 = vand.u32 %v76, 4294901760
  %103 = vmatpush1.msra.mxu0 %v102
  %104 = vmatprep.subr.mxu0 0.0
  %v105 = vand.u32 %v75, 4294901760
  %106 = vmatpush1.msra.mxu0 %v105
  %107 = vmatprep.subr.mxu0 0.0
  %v108 = vand.u32 %v74, 4294901760
  %109 = vmatpush1.msra.mxu0 %v108
  %110 = vmatprep.subr.mxu0 0.0
  %v111 = vand.u32 %v73, 4294901760
  %112 = vmatpush1.msra.mxu0 %v111
  %113 = vmatprep.subr.mxu0 0.0
  %v114 = vand.u32 %v72, 4294901760
  %115 = vmatpush1.msra.mxu0 %v114
  %116 = vmatprep.subr.mxu0 0.0
  %v117 = vand.u32 %v71, 4294901760
  %118 = vmatpush1.msra.mxu0 %v117
  %119 = vmatprep.subr.mxu0 0.0
  %v120 = vand.u32 %v70, 4294901760
  %121 = vmatpush1.msra.mxu0 %v120
  %122 = vmatprep.subr.mxu0 0.0
  %v123 = vand.u32 %v69, 4294901760
  %124 = vmatpush1.msra.mxu0 %v123
  %125 = vmatprep.subr.mxu0 0.0
  %v126 = vand.u32 %v68, 4294901760
  %127 = vmatpush1.msra.mxu0 %v126
  %128 = vmatprep.subr.mxu0 0.0
  %v129 = vand.u32 %v67, 4294901760
  %130 = vmatpush1.msra.mxu0 %v129
  %131 = vmatprep.subr.mxu0 0.0
  %132 = vmatpush2.msra.mxu0 0.0
  %133 = vmatprep.subr.mxu0 0.0
  %134 = vmatpush2.msra.mxu0 0.0
  %135 = vmatprep.subr.mxu0 0.0
  %136 = vmatpush2.msra.mxu0 0.0
  %137 = vmatprep.subr.mxu0 0.0
  %138 = vmatpush2.msra.mxu0 0.0
  %139 = vmatprep.subr.mxu0 0.0
  %140 = vmatpush2.msra.mxu0 0.0
  %141 = vmatprep.subr.mxu0 0.0
  %142 = vmatpush2.msra.mxu0 0.0
  %143 = vmatprep.subr.mxu0 0.0
  %144 = vmatpush2.msra.mxu0 0.0
  %145 = vmatprep.subr.mxu0 0.0
  %146 = vmatpush2.msra.mxu0 0.0
  %147 = vmatprep.subr.mxu0 0.0
  %148 = vmatpush2.msra.mxu0 0.0
  %149 = vmatprep.subr.mxu0 0.0
  %150 = vmatpush2.msra.mxu0 0.0
  %151 = vmatprep.subr.mxu0 0.0
  %152 = vmatpush2.msra.mxu0 0.0
  %153 = vmatprep.subr.mxu0 0.0
  %154 = vmatpush2.msra.mxu0 0.0
  %155 = vmatprep.subr.mxu0 0.0
  %156 = vmatpush2.msra.mxu0 0.0
  %157 = vmatprep.subr.mxu0 0.0
  %158 = vmatpush2.msra.mxu0 0.0
  %159 = vmatprep.subr.mxu0 0.0
  %160 = vmatpush2.msra.mxu0 0.0
  %161 = vmatprep.subr.mxu0 0.0
  %162 = vmatpush2.msra.mxu0 0.0
  %163 = vmatprep.mubr.f32.mxu0 0.0
  %v164 = vand.u32 %v51, 4294901760
  %v165 = vsub.f32 %v51, %v164
  %v166 = vand.u32 %v165, 4294901760
  %v167 = vsub.f32 %v165, %v166
  %v168 = vand.u32 %v167, 4294901760
  %169 = vmatmul.mubr.f32.gmra.mxu0 %v168
  %v170 = vpop.f32.mrf.mxu0
  %v171 = vadd.f32 0.0, %v170
  %v172 = vpop.f32.mrf.mxu0
  %173 = vmatprep.mubr.f32.mxu0 0.0
  %v174 = vand.u32 %v52, 4294901760
  %v175 = vsub.f32 %v52, %v174
  %v176 = vand.u32 %v175, 4294901760
  %v177 = vsub.f32 %v175, %v176
  %v178 = vand.u32 %v177, 4294901760
  %179 = vmatmul.mubr.f32.gmra.mxu0 %v178
  %v180 = vpop.f32.mrf.mxu0
  %v181 = vadd.f32 0.0, %v180
  %v182 = vpop.f32.mrf.mxu0
  %183 = vmatprep.mubr.f32.mxu0 0.0
  %v184 = vand.u32 %v53, 4294901760
  %v185 = vsub.f32 %v53, %v184
  %v186 = vand.u32 %v185, 4294901760
  %v187 = vsub.f32 %v185, %v186
  %v188 = vand.u32 %v187, 4294901760
  %189 = vmatmul.mubr.f32.gmra.mxu0 %v188
  %v190 = vpop.f32.mrf.mxu0
  %v191 = vadd.f32 0.0, %v190
  %v192 = vpop.f32.mrf.mxu0
  %193 = vmatprep.mubr.f32.mxu0 0.0
  %v194 = vand.u32 %v54, 4294901760
  %v195 = vsub.f32 %v54, %v194
  %v196 = vand.u32 %v195, 4294901760
  %v197 = vsub.f32 %v195, %v196
  %v198 = vand.u32 %v197, 4294901760
  %199 = vmatmul.mubr.f32.gmra.mxu0 %v198
  %v200 = vpop.f32.mrf.mxu0
  %v201 = vadd.f32 0.0, %v200
  %v202 = vpop.f32.mrf.mxu0
  %203 = vmatprep.mubr.f32.mxu0 0.0
  %v204 = vand.u32 %v55, 4294901760
  %v205 = vsub.f32 %v55, %v204
  %v206 = vand.u32 %v205, 4294901760
  %v207 = vsub.f32 %v205, %v206
  %v208 = vand.u32 %v207, 4294901760
  %209 = vmatmul.mubr.f32.gmra.mxu0 %v208
  %v210 = vpop.f32.mrf.mxu0
  %v211 = vadd.f32 0.0, %v210
  %v212 = vpop.f32.mrf.mxu0
  %213 = vmatprep.mubr.f32.mxu0 0.0
  %v214 = vand.u32 %v56, 4294901760
  %v215 = vsub.f32 %v56, %v214
  %v216 = vand.u32 %v215, 4294901760
  %v217 = vsub.f32 %v215, %v216
  %v218 = vand.u32 %v217, 4294901760
  %219 = vmatmul.mubr.f32.gmra.mxu0 %v218
  %v220 = vpop.f32.mrf.mxu0
  %v221 = vadd.f32 0.0, %v220
  %v222 = vpop.f32.mrf.mxu0
  %223 = vmatprep.mubr.f32.mxu0 0.0
  %v224 = vand.u32 %v57, 4294901760
  %v225 = vsub.f32 %v57, %v224
  %v226 = vand.u32 %v225, 4294901760
  %v227 = vsub.f32 %v225, %v226
  %v228 = vand.u32 %v227, 4294901760
  %229 = vmatmul.mubr.f32.gmra.mxu0 %v228
  %v230 = vpop.f32.mrf.mxu0
  %v231 = vadd.f32 0.0, %v230
  %v232 = vpop.f32.mrf.mxu0
  %233 = vmatprep.mubr.f32.mxu0 0.0
  %v234 = vand.u32 %v58, 4294901760
  %v235 = vsub.f32 %v58, %v234
  %v236 = vand.u32 %v235, 4294901760
  %v237 = vsub.f32 %v235, %v236
  %v238 = vand.u32 %v237, 4294901760
  %239 = vmatmul.mubr.f32.gmra.mxu0 %v238
  %v240 = vpop.f32.mrf.mxu0
  %v241 = vadd.f32 0.0, %v240
  %v242 = vpop.f32.mrf.mxu0
  %243 = vmatprep.mubr.f32.mxu0 0.0
  %v244 = vand.u32 %v59, 4294901760
  %v245 = vsub.f32 %v59, %v244
  %v246 = vand.u32 %v245, 4294901760
  %v247 = vsub.f32 %v245, %v246
  %v248 = vand.u32 %v247, 4294901760
  %249 = vmatmul.mubr.f32.gmra.mxu0 %v248
  %v250 = vpop.f32.mrf.mxu0
  %v251 = vadd.f32 0.0, %v250
  %v252 = vpop.f32.mrf.mxu0
  %253 = vmatprep.mubr.f32.mxu0 0.0
  %v254 = vand.u32 %v60, 4294901760
  %v255 = vsub.f32 %v60, %v254
  %v256 = vand.u32 %v255, 4294901760
  %v257 = vsub.f32 %v255, %v256
  %v258 = vand.u32 %v257, 4294901760
  %259 = vmatmul.mubr.f32.gmra.mxu0 %v258
  %v260 = vpop.f32.mrf.mxu0
  %v261 = vadd.f32 0.0, %v260
  %v262 = vpop.f32.mrf.mxu0
  %263 = vmatprep.mubr.f32.mxu0 0.0
  %v264 = vand.u32 %v61, 4294901760
  %v265 = vsub.f32 %v61, %v264
  %v266 = vand.u32 %v265, 4294901760
  %v267 = vsub.f32 %v265, %v266
  %v268 = vand.u32 %v267, 4294901760
  %269 = vmatmul.mubr.f32.gmra.mxu0 %v268
  %v270 = vpop.f32.mrf.mxu0
  %v271 = vadd.f32 0.0, %v270
  %v272 = vpop.f32.mrf.mxu0
  %273 = vmatprep.mubr.f32.mxu0 0.0
  %v274 = vand.u32 %v62, 4294901760
  %v275 = vsub.f32 %v62, %v274
  %v276 = vand.u32 %v275, 4294901760
  %v277 = vsub.f32 %v275, %v276
  %v278 = vand.u32 %v277, 4294901760
  %279 = vmatmul.mubr.f32.gmra.mxu0 %v278
  %v280 = vpop.f32.mrf.mxu0
  %v281 = vadd.f32 0.0, %v280
  %v282 = vpop.f32.mrf.mxu0
  %283 = vmatprep.mubr.f32.mxu0 0.0
  %v284 = vand.u32 %v63, 4294901760
  %v285 = vsub.f32 %v63, %v284
  %v286 = vand.u32 %v285, 4294901760
  %v287 = vsub.f32 %v285, %v286
  %v288 = vand.u32 %v287, 4294901760
  %289 = vmatmul.mubr.f32.gmra.mxu0 %v288
  %v290 = vpop.f32.mrf.mxu0
  %v291 = vadd.f32 0.0, %v290
  %v292 = vpop.f32.mrf.mxu0
  %293 = vmatprep.mubr.f32.mxu0 0.0
  %v294 = vand.u32 %v64, 4294901760
  %v295 = vsub.f32 %v64, %v294
  %v296 = vand.u32 %v295, 4294901760
  %v297 = vsub.f32 %v295, %v296
  %v298 = vand.u32 %v297, 4294901760
  %299 = vmatmul.mubr.f32.gmra.mxu0 %v298
  %v300 = vpop.f32.mrf.mxu0
  %v301 = vadd.f32 0.0, %v300
  %v302 = vpop.f32.mrf.mxu0
  %303 = vmatprep.mubr.f32.mxu0 0.0
  %v304 = vand.u32 %v65, 4294901760
  %v305 = vsub.f32 %v65, %v304
  %v306 = vand.u32 %v305, 4294901760
  %v307 = vsub.f32 %v305, %v306
  %v308 = vand.u32 %v307, 4294901760
  %309 = vmatmul.mubr.f32.gmra.mxu0 %v308
  %v310 = vpop.f32.mrf.mxu0
  %v311 = vadd.f32 0.0, %v310
  %v312 = vpop.f32.mrf.mxu0
  %313 = vmatprep.mubr.f32.mxu0 0.0
  %v314 = vand.u32 %v66, 4294901760
  %v315 = vsub.f32 %v66, %v314
  %v316 = vand.u32 %v315, 4294901760
  %v317 = vsub.f32 %v315, %v316
  %v318 = vand.u32 %v317, 4294901760
  %319 = vmatmul.mubr.f32.gmra.mxu0 %v318
  %v320 = vpop.f32.mrf.mxu0
  %v321 = vadd.f32 0.0, %v320
  %v322 = vpop.f32.mrf.mxu0
  %323 = vdwg.mxu0
  %324 = vmatprep.subr.mxu0 0.0
  %v325 = vand.u32 %v82, 4294901760
  %v326 = vsub.f32 %v82, %v325
  %v327 = vand.u32 %v326, 4294901760
  %v328 = vsub.f32 %v326, %v327
  %v329 = vand.u32 %v328, 4294901760
  %330 = vmatpush1.msra.mxu0 %v329
  %331 = vmatprep.subr.mxu0 0.0
  %v332 = vand.u32 %v81, 4294901760
  %v333 = vsub.f32 %v81, %v332
  %v334 = vand.u32 %v333, 4294901760
  %v335 = vsub.f32 %v333, %v334
  %v336 = vand.u32 %v335, 4294901760
  %337 = vmatpush1.msra.mxu0 %v336
  %338 = vmatprep.subr.mxu0 0.0
  %v339 = vand.u32 %v80, 4294901760
  %v340 = vsub.f32 %v80, %v339
  %v341 = vand.u32 %v340, 4294901760
  %v342 = vsub.f32 %v340, %v341
  %v343 = vand.u32 %v342, 4294901760
  %344 = vmatpush1.msra.mxu0 %v343
  %345 = vmatprep.subr.mxu0 0.0
  %v346 = vand.u32 %v79, 4294901760
  %v347 = vsub.f32 %v79, %v346
  %v348 = vand.u32 %v347, 4294901760
  %v349 = vsub.f32 %v347, %v348
  %v350 = vand.u32 %v349, 4294901760
  %351 = vmatpush1.msra.mxu0 %v350
  %352 = vmatprep.subr.mxu0 0.0
  %v353 = vand.u32 %v78, 4294901760
  %v354 = vsub.f32 %v78, %v353
  %v355 = vand.u32 %v354, 4294901760
  %v356 = vsub.f32 %v354, %v355
  %v357 = vand.u32 %v356, 4294901760
  %358 = vmatpush1.msra.mxu0 %v357
  %359 = vmatprep.subr.mxu0 0.0
  %v360 = vand.u32 %v77, 4294901760
  %v361 = vsub.f32 %v77, %v360
  %v362 = vand.u32 %v361, 4294901760
  %v363 = vsub.f32 %v361, %v362
  %v364 = vand.u32 %v363, 4294901760
  %365 = vmatpush1.msra.mxu0 %v364
  %366 = vmatprep.subr.mxu0 0.0
  %v367 = vand.u32 %v76, 4294901760
  %v368 = vsub.f32 %v76, %v367
  %v369 = vand.u32 %v368, 4294901760
  %v370 = vsub.f32 %v368, %v369
  %v371 = vand.u32 %v370, 4294901760
  %372 = vmatpush1.msra.mxu0 %v371
  %373 = vmatprep.subr.mxu0 0.0
  %v374 = vand.u32 %v75, 4294901760
  %v375 = vsub.f32 %v75, %v374
  %v376 = vand.u32 %v375, 4294901760
  %v377 = vsub.f32 %v375, %v376
  %v378 = vand.u32 %v377, 4294901760
  %379 = vmatpush1.msra.mxu0 %v378
  %380 = vmatprep.subr.mxu0 0.0
  %v381 = vand.u32 %v74, 4294901760
  %v382 = vsub.f32 %v74, %v381
  %v383 = vand.u32 %v382, 4294901760
  %v384 = vsub.f32 %v382, %v383
  %v385 = vand.u32 %v384, 4294901760
  %386 = vmatpush1.msra.mxu0 %v385
  %387 = vmatprep.subr.mxu0 0.0
  %v388 = vand.u32 %v73, 4294901760
  %v389 = vsub.f32 %v73, %v388
  %v390 = vand.u32 %v389, 4294901760
  %v391 = vsub.f32 %v389, %v390
  %v392 = vand.u32 %v391, 4294901760
  %393 = vmatpush1.msra.mxu0 %v392
  %394 = vmatprep.subr.mxu0 0.0
  %v395 = vand.u32 %v72, 4294901760
  %v396 = vsub.f32 %v72, %v395
  %v397 = vand.u32 %v396, 4294901760
  %v398 = vsub.f32 %v396, %v397
  %v399 = vand.u32 %v398, 4294901760
  %400 = vmatpush1.msra.mxu0 %v399
  %401 = vmatprep.subr.mxu0 0.0
  %v402 = vand.u32 %v71, 4294901760
  %v403 = vsub.f32 %v71, %v402
  %v404 = vand.u32 %v403, 4294901760
  %v405 = vsub.f32 %v403, %v404
  %v406 = vand.u32 %v405, 4294901760
  %407 = vmatpush1.msra.mxu0 %v406
  %408 = vmatprep.subr.mxu0 0.0
  %v409 = vand.u32 %v70, 4294901760
  %v410 = vsub.f32 %v70, %v409
  %v411 = vand.u32 %v410, 4294901760
  %v412 = vsub.f32 %v410, %v411
  %v413 = vand.u32 %v412, 4294901760
  %414 = vmatpush1.msra.mxu0 %v413
  %415 = vmatprep.subr.mxu0 0.0
  %v416 = vand.u32 %v69, 4294901760
  %v417 = vsub.f32 %v69, %v416
  %v418 = vand.u32 %v417, 4294901760
  %v419 = vsub.f32 %v417, %v418
  %v420 = vand.u32 %v419, 4294901760
  %421 = vmatpush1.msra.mxu0 %v420
  %422 = vmatprep.subr.mxu0 0.0
  %v423 = vand.u32 %v68, 4294901760
  %v424 = vsub.f32 %v68, %v423
  %v425 = vand.u32 %v424, 4294901760
  %v426 = vsub.f32 %v424, %v425
  %v427 = vand.u32 %v426, 4294901760
  %428 = vmatpush1.msra.mxu0 %v427
  %429 = vmatprep.subr.mxu0 0.0
  %v430 = vand.u32 %v67, 4294901760
  %v431 = vsub.f32 %v67, %v430
  %v432 = vand.u32 %v431, 4294901760
  %v433 = vsub.f32 %v431, %v432
  %v434 = vand.u32 %v433, 4294901760
  %435 = vmatpush1.msra.mxu0 %v434
  %436 = vmatprep.subr.mxu0 0.0
  %437 = vmatpush2.msra.mxu0 0.0
  %438 = vmatprep.subr.mxu0 0.0
  %439 = vmatpush2.msra.mxu0 0.0
  %440 = vmatprep.subr.mxu0 0.0
  %441 = vmatpush2.msra.mxu0 0.0
  %442 = vmatprep.subr.mxu0 0.0
  %443 = vmatpush2.msra.mxu0 0.0
  %444 = vmatprep.subr.mxu0 0.0
  %445 = vmatpush2.msra.mxu0 0.0
  %446 = vmatprep.subr.mxu0 0.0
  %447 = vmatpush2.msra.mxu0 0.0
  %448 = vmatprep.subr.mxu0 0.0
  %449 = vmatpush2.msra.mxu0 0.0
  %450 = vmatprep.subr.mxu0 0.0
  %451 = vmatpush2.msra.mxu0 0.0
  %452 = vmatprep.subr.mxu0 0.0
  %453 = vmatpush2.msra.mxu0 0.0
  %454 = vmatprep.subr.mxu0 0.0
  %455 = vmatpush2.msra.mxu0 0.0
  %456 = vmatprep.subr.mxu0 0.0
  %457 = vmatpush2.msra.mxu0 0.0
  %458 = vmatprep.subr.mxu0 0.0
  %459 = vmatpush2.msra.mxu0 0.0
  %460 = vmatprep.subr.mxu0 0.0
  %461 = vmatpush2.msra.mxu0 0.0
  %462 = vmatprep.subr.mxu0 0.0
  %463 = vmatpush2.msra.mxu0 0.0
  %464 = vmatprep.subr.mxu0 0.0
  %465 = vmatpush2.msra.mxu0 0.0
  %466 = vmatprep.subr.mxu0 0.0
  %467 = vmatpush2.msra.mxu0 0.0
  %468 = vmatprep.mubr.f32.mxu0 0.0
  %v469 = vand.u32 %v51, 4294901760
  %470 = vmatmul.mubr.f32.gmra.mxu0 %v469
  %v471 = vpop.f32.mrf.mxu0
  %v472 = vadd.f32 %v171, %v471
  %v473 = vpop.f32.mrf.mxu0
  %474 = vmatprep.mubr.f32.mxu0 0.0
  %v475 = vand.u32 %v52, 4294901760
  %476 = vmatmul.mubr.f32.gmra.mxu0 %v475
  %v477 = vpop.f32.mrf.mxu0
  %v478 = vadd.f32 %v181, %v477
  %v479 = vpop.f32.mrf.mxu0
  %480 = vmatprep.mubr.f32.mxu0 0.0
  %v481 = vand.u32 %v53, 4294901760
  %482 = vmatmul.mubr.f32.gmra.mxu0 %v481
  %v483 = vpop.f32.mrf.mxu0
  %v484 = vadd.f32 %v191, %v483
  %v485 = vpop.f32.mrf.mxu0
  %486 = vmatprep.mubr.f32.mxu0 0.0
  %v487 = vand.u32 %v54, 4294901760
  %488 = vmatmul.mubr.f32.gmra.mxu0 %v487
  %v489 = vpop.f32.mrf.mxu0
  %v490 = vadd.f32 %v201, %v489
  %v491 = vpop.f32.mrf.mxu0
  %492 = vmatprep.mubr.f32.mxu0 0.0
  %v493 = vand.u32 %v55, 4294901760
  %494 = vmatmul.mubr.f32.gmra.mxu0 %v493
  %v495 = vpop.f32.mrf.mxu0
  %v496 = vadd.f32 %v211, %v495
  %v497 = vpop.f32.mrf.mxu0
  %498 = vmatprep.mubr.f32.mxu0 0.0
  %v499 = vand.u32 %v56, 4294901760
  %500 = vmatmul.mubr.f32.gmra.mxu0 %v499
  %v501 = vpop.f32.mrf.mxu0
  %v502 = vadd.f32 %v221, %v501
  %v503 = vpop.f32.mrf.mxu0
  %504 = vmatprep.mubr.f32.mxu0 0.0
  %v505 = vand.u32 %v57, 4294901760
  %506 = vmatmul.mubr.f32.gmra.mxu0 %v505
  %v507 = vpop.f32.mrf.mxu0
  %v508 = vadd.f32 %v231, %v507
  %v509 = vpop.f32.mrf.mxu0
  %510 = vmatprep.mubr.f32.mxu0 0.0
  %v511 = vand.u32 %v58, 4294901760
  %512 = vmatmul.mubr.f32.gmra.mxu0 %v511
  %v513 = vpop.f32.mrf.mxu0
  %v514 = vadd.f32 %v241, %v513
  %v515 = vpop.f32.mrf.mxu0
  %516 = vmatprep.mubr.f32.mxu0 0.0
  %v517 = vand.u32 %v59, 4294901760
  %518 = vmatmul.mubr.f32.gmra.mxu0 %v517
  %v519 = vpop.f32.mrf.mxu0
  %v520 = vadd.f32 %v251, %v519
  %v521 = vpop.f32.mrf.mxu0
  %522 = vmatprep.mubr.f32.mxu0 0.0
  %v523 = vand.u32 %v60, 4294901760
  %524 = vmatmul.mubr.f32.gmra.mxu0 %v523
  %v525 = vpop.f32.mrf.mxu0
  %v526 = vadd.f32 %v261, %v525
  %v527 = vpop.f32.mrf.mxu0
  %528 = vmatprep.mubr.f32.mxu0 0.0
  %v529 = vand.u32 %v61, 4294901760
  %530 = vmatmul.mubr.f32.gmra.mxu0 %v529
  %v531 = vpop.f32.mrf.mxu0
  %v532 = vadd.f32 %v271, %v531
  %v533 = vpop.f32.mrf.mxu0
  %534 = vmatprep.mubr.f32.mxu0 0.0
  %v535 = vand.u32 %v62, 4294901760
  %536 = vmatmul.mubr.f32.gmra.mxu0 %v535
  %v537 = vpop.f32.mrf.mxu0
  %v538 = vadd.f32 %v281, %v537
  %v539 = vpop.f32.mrf.mxu0
  %540 = vmatprep.mubr.f32.mxu0 0.0
  %v541 = vand.u32 %v63, 4294901760
  %542 = vmatmul.mubr.f32.gmra.mxu0 %v541
  %v543 = vpop.f32.mrf.mxu0
  %v544 = vadd.f32 %v291, %v543
  %v545 = vpop.f32.mrf.mxu0
  %546 = vmatprep.mubr.f32.mxu0 0.0
  %v547 = vand.u32 %v64, 4294901760
  %548 = vmatmul.mubr.f32.gmra.mxu0 %v547
  %v549 = vpop.f32.mrf.mxu0
  %v550 = vadd.f32 %v301, %v549
  %v551 = vpop.f32.mrf.mxu0
  %552 = vmatprep.mubr.f32.mxu0 0.0
  %v553 = vand.u32 %v65, 4294901760
  %554 = vmatmul.mubr.f32.gmra.mxu0 %v553
  %v555 = vpop.f32.mrf.mxu0
  %v556 = vadd.f32 %v311, %v555
  %v557 = vpop.f32.mrf.mxu0
  %558 = vmatprep.mubr.f32.mxu0 0.0
  %v559 = vand.u32 %v66, 4294901760
  %560 = vmatmul.mubr.f32.gmra.mxu0 %v559
  %v561 = vpop.f32.mrf.mxu0
  %v562 = vadd.f32 %v321, %v561
  %v563 = vpop.f32.mrf.mxu0
  %564 = vdwg.mxu0
  %565 = vmatprep.subr.mxu0 0.0
  %v566 = vand.u32 %v82, 4294901760
  %v567 = vsub.f32 %v82, %v566
  %568 = vmatpush1.msra.mxu0 %v567
  %569 = vmatprep.subr.mxu0 0.0
  %v570 = vand.u32 %v81, 4294901760
  %v571 = vsub.f32 %v81, %v570
  %572 = vmatpush1.msra.mxu0 %v571
  %573 = vmatprep.subr.mxu0 0.0
  %v574 = vand.u32 %v80, 4294901760
  %v575 = vsub.f32 %v80, %v574
  %576 = vmatpush1.msra.mxu0 %v575
  %577 = vmatprep.subr.mxu0 0.0
  %v578 = vand.u32 %v79, 4294901760
  %v579 = vsub.f32 %v79, %v578
  %580 = vmatpush1.msra.mxu0 %v579
  %581 = vmatprep.subr.mxu0 0.0
  %v582 = vand.u32 %v78, 4294901760
  %v583 = vsub.f32 %v78, %v582
  %584 = vmatpush1.msra.mxu0 %v583
  %585 = vmatprep.subr.mxu0 0.0
  %v586 = vand.u32 %v77, 4294901760
  %v587 = vsub.f32 %v77, %v586
  %588 = vmatpush1.msra.mxu0 %v587
  %589 = vmatprep.subr.mxu0 0.0
  %v590 = vand.u32 %v76, 4294901760
  %v591 = vsub.f32 %v76, %v590
  %592 = vmatpush1.msra.mxu0 %v591
  %593 = vmatprep.subr.mxu0 0.0
  %v594 = vand.u32 %v75, 4294901760
  %v595 = vsub.f32 %v75, %v594
  %596 = vmatpush1.msra.mxu0 %v595
  %597 = vmatprep.subr.mxu0 0.0
  %v598 = vand.u32 %v74, 4294901760
  %v599 = vsub.f32 %v74, %v598
  %600 = vmatpush1.msra.mxu0 %v599
  %601 = vmatprep.subr.mxu0 0.0
  %v602 = vand.u32 %v73, 4294901760
  %v603 = vsub.f32 %v73, %v602
  %604 = vmatpush1.msra.mxu0 %v603
  %605 = vmatprep.subr.mxu0 0.0
  %v606 = vand.u32 %v72, 4294901760
  %v607 = vsub.f32 %v72, %v606
  %608 = vmatpush1.msra.mxu0 %v607
  %609 = vmatprep.subr.mxu0 0.0
  %v610 = vand.u32 %v71, 4294901760
  %v611 = vsub.f32 %v71, %v610
  %612 = vmatpush1.msra.mxu0 %v611
  %613 = vmatprep.subr.mxu0 0.0
  %v614 = vand.u32 %v70, 4294901760
  %v615 = vsub.f32 %v70, %v614
  %616 = vmatpush1.msra.mxu0 %v615
  %617 = vmatprep.subr.mxu0 0.0
  %v618 = vand.u32 %v69, 4294901760
  %v619 = vsub.f32 %v69, %v618
  %620 = vmatpush1.msra.mxu0 %v619
  %621 = vmatprep.subr.mxu0 0.0
  %v622 = vand.u32 %v68, 4294901760
  %v623 = vsub.f32 %v68, %v622
  %624 = vmatpush1.msra.mxu0 %v623
  %625 = vmatprep.subr.mxu0 0.0
  %v626 = vand.u32 %v67, 4294901760
  %v627 = vsub.f32 %v67, %v626
  %628 = vmatpush1.msra.mxu0 %v627
  %629 = vmatprep.subr.mxu0 0.0
  %630 = vmatpush2.msra.mxu0 0.0
  %631 = vmatprep.subr.mxu0 0.0
  %632 = vmatpush2.msra.mxu0 0.0
  %633 = vmatprep.subr.mxu0 0.0
  %634 = vmatpush2.msra.mxu0 0.0
  %635 = vmatprep.subr.mxu0 0.0
  %636 = vmatpush2.msra.mxu0 0.0
  %637 = vmatprep.subr.mxu0 0.0
  %638 = vmatpush2.msra.mxu0 0.0
  %639 = vmatprep.subr.mxu0 0.0
  %640 = vmatpush2.msra.mxu0 0.0
  %641 = vmatprep.subr.mxu0 0.0
  %642 = vmatpush2.msra.mxu0 0.0
  %643 = vmatprep.subr.mxu0 0.0
  %644 = vmatpush2.msra.mxu0 0.0
  %645 = vmatprep.subr.mxu0 0.0
  %646 = vmatpush2.msra.mxu0 0.0
  %647 = vmatprep.subr.mxu0 0.0
  %648 = vmatpush2.msra.mxu0 0.0
  %649 = vmatprep.subr.mxu0 0.0
  %650 = vmatpush2.msra.mxu0 0.0
  %651 = vmatprep.subr.mxu0 0.0
  %652 = vmatpush2.msra.mxu0 0.0
  %653 = vmatprep.subr.mxu0 0.0
  %654 = vmatpush2.msra.mxu0 0.0
  %655 = vmatprep.subr.mxu0 0.0
  %656 = vmatpush2.msra.mxu0 0.0
  %657 = vmatprep.subr.mxu0 0.0
  %658 = vmatpush2.msra.mxu0 0.0
  %659 = vmatprep.subr.mxu0 0.0
  %660 = vmatpush2.msra.mxu0 0.0
  %661 = vmatprep.mubr.f32.mxu0 0.0
  %v662 = vand.u32 %v51, 4294901760
  %v663 = vsub.f32 %v51, %v662
  %664 = vmatmul.mubr.f32.gmra.mxu0 %v663
  %v665 = vpop.f32.mrf.mxu0
  %v666 = vadd.f32 %v472, %v665
  %v667 = vpop.f32.mrf.mxu0
  %668 = vmatprep.mubr.f32.mxu0 0.0
  %v669 = vand.u32 %v52, 4294901760
  %v670 = vsub.f32 %v52, %v669
  %671 = vmatmul.mubr.f32.gmra.mxu0 %v670
  %v672 = vpop.f32.mrf.mxu0
  %v673 = vadd.f32 %v478, %v672
  %v674 = vpop.f32.mrf.mxu0
  %675 = vmatprep.mubr.f32.mxu0 0.0
  %v676 = vand.u32 %v53, 4294901760
  %v677 = vsub.f32 %v53, %v676
  %678 = vmatmul.mubr.f32.gmra.mxu0 %v677
  %v679 = vpop.f32.mrf.mxu0
  %v680 = vadd.f32 %v484, %v679
  %v681 = vpop.f32.mrf.mxu0
  %682 = vmatprep.mubr.f32.mxu0 0.0
  %v683 = vand.u32 %v54, 4294901760
  %v684 = vsub.f32 %v54, %v683
  %685 = vmatmul.mubr.f32.gmra.mxu0 %v684
  %v686 = vpop.f32.mrf.mxu0
  %v687 = vadd.f32 %v490, %v686
  %v688 = vpop.f32.mrf.mxu0
  %689 = vmatprep.mubr.f32.mxu0 0.0
  %v690 = vand.u32 %v55, 4294901760
  %v691 = vsub.f32 %v55, %v690
  %692 = vmatmul.mubr.f32.gmra.mxu0 %v691
  %v693 = vpop.f32.mrf.mxu0
  %v694 = vadd.f32 %v496, %v693
  %v695 = vpop.f32.mrf.mxu0
  %696 = vmatprep.mubr.f32.mxu0 0.0
  %v697 = vand.u32 %v56, 4294901760
  %v698 = vsub.f32 %v56, %v697
  %699 = vmatmul.mubr.f32.gmra.mxu0 %v698
  %v700 = vpop.f32.mrf.mxu0
  %v701 = vadd.f32 %v502, %v700
  %v702 = vpop.f32.mrf.mxu0
  %703 = vmatprep.mubr.f32.mxu0 0.0
  %v704 = vand.u32 %v57, 4294901760
  %v705 = vsub.f32 %v57, %v704
  %706 = vmatmul.mubr.f32.gmra.mxu0 %v705
  %v707 = vpop.f32.mrf.mxu0
  %v708 = vadd.f32 %v508, %v707
  %v709 = vpop.f32.mrf.mxu0
  %710 = vmatprep.mubr.f32.mxu0 0.0
  %v711 = vand.u32 %v58, 4294901760
  %v712 = vsub.f32 %v58, %v711
  %713 = vmatmul.mubr.f32.gmra.mxu0 %v712
  %v714 = vpop.f32.mrf.mxu0
  %v715 = vadd.f32 %v514, %v714
  %v716 = vpop.f32.mrf.mxu0
  %717 = vmatprep.mubr.f32.mxu0 0.0
  %v718 = vand.u32 %v59, 4294901760
  %v719 = vsub.f32 %v59, %v718
  %720 = vmatmul.mubr.f32.gmra.mxu0 %v719
  %v721 = vpop.f32.mrf.mxu0
  %v722 = vadd.f32 %v520, %v721
  %v723 = vpop.f32.mrf.mxu0
  %724 = vmatprep.mubr.f32.mxu0 0.0
  %v725 = vand.u32 %v60, 4294901760
  %v726 = vsub.f32 %v60, %v725
  %727 = vmatmul.mubr.f32.gmra.mxu0 %v726
  %v728 = vpop.f32.mrf.mxu0
  %v729 = vadd.f32 %v526, %v728
  %v730 = vpop.f32.mrf.mxu0
  %731 = vmatprep.mubr.f32.mxu0 0.0
  %v732 = vand.u32 %v61, 4294901760
  %v733 = vsub.f32 %v61, %v732
  %734 = vmatmul.mubr.f32.gmra.mxu0 %v733
  %v735 = vpop.f32.mrf.mxu0
  %v736 = vadd.f32 %v532, %v735
  %v737 = vpop.f32.mrf.mxu0
  %738 = vmatprep.mubr.f32.mxu0 0.0
  %v739 = vand.u32 %v62, 4294901760
  %v740 = vsub.f32 %v62, %v739
  %741 = vmatmul.mubr.f32.gmra.mxu0 %v740
  %v742 = vpop.f32.mrf.mxu0
  %v743 = vadd.f32 %v538, %v742
  %v744 = vpop.f32.mrf.mxu0
  %745 = vmatprep.mubr.f32.mxu0 0.0
  %v746 = vand.u32 %v63, 4294901760
  %v747 = vsub.f32 %v63, %v746
  %748 = vmatmul.mubr.f32.gmra.mxu0 %v747
  %v749 = vpop.f32.mrf.mxu0
  %v750 = vadd.f32 %v544, %v749
  %v751 = vpop.f32.mrf.mxu0
  %752 = vmatprep.mubr.f32.mxu0 0.0
  %v753 = vand.u32 %v64, 4294901760
  %v754 = vsub.f32 %v64, %v753
  %755 = vmatmul.mubr.f32.gmra.mxu0 %v754
  %v756 = vpop.f32.mrf.mxu0
  %v757 = vadd.f32 %v550, %v756
  %v758 = vpop.f32.mrf.mxu0
  %759 = vmatprep.mubr.f32.mxu0 0.0
  %v760 = vand.u32 %v65, 4294901760
  %v761 = vsub.f32 %v65, %v760
  %762 = vmatmul.mubr.f32.gmra.mxu0 %v761
  %v763 = vpop.f32.mrf.mxu0
  %v764 = vadd.f32 %v556, %v763
  %v765 = vpop.f32.mrf.mxu0
  %766 = vmatprep.mubr.f32.mxu0 0.0
  %v767 = vand.u32 %v66, 4294901760
  %v768 = vsub.f32 %v66, %v767
  %769 = vmatmul.mubr.f32.gmra.mxu0 %v768
  %v770 = vpop.f32.mrf.mxu0
  %v771 = vadd.f32 %v562, %v770
  %v772 = vpop.f32.mrf.mxu0
  %773 = vdwg.mxu0
  %774 = vmatprep.subr.mxu0 0.0
  %v775 = vand.u32 %v82, 4294901760
  %776 = vmatpush1.msra.mxu0 %v775
  %777 = vmatprep.subr.mxu0 0.0
  %v778 = vand.u32 %v81, 4294901760
  %779 = vmatpush1.msra.mxu0 %v778
  %780 = vmatprep.subr.mxu0 0.0
  %v781 = vand.u32 %v80, 4294901760
  %782 = vmatpush1.msra.mxu0 %v781
  %783 = vmatprep.subr.mxu0 0.0
  %v784 = vand.u32 %v79, 4294901760
  %785 = vmatpush1.msra.mxu0 %v784
  %786 = vmatprep.subr.mxu0 0.0
  %v787 = vand.u32 %v78, 4294901760
  %788 = vmatpush1.msra.mxu0 %v787
  %789 = vmatprep.subr.mxu0 0.0
  %v790 = vand.u32 %v77, 4294901760
  %791 = vmatpush1.msra.mxu0 %v790
  %792 = vmatprep.subr.mxu0 0.0
  %v793 = vand.u32 %v76, 4294901760
  %794 = vmatpush1.msra.mxu0 %v793
  %795 = vmatprep.subr.mxu0 0.0
  %v796 = vand.u32 %v75, 4294901760
  %797 = vmatpush1.msra.mxu0 %v796
  %798 = vmatprep.subr.mxu0 0.0
  %v799 = vand.u32 %v74, 4294901760
  %800 = vmatpush1.msra.mxu0 %v799
  %801 = vmatprep.subr.mxu0 0.0
  %v802 = vand.u32 %v73, 4294901760
  %803 = vmatpush1.msra.mxu0 %v802
  %804 = vmatprep.subr.mxu0 0.0
  %v805 = vand.u32 %v72, 4294901760
  %806 = vmatpush1.msra.mxu0 %v805
  %807 = vmatprep.subr.mxu0 0.0
  %v808 = vand.u32 %v71, 4294901760
  %809 = vmatpush1.msra.mxu0 %v808
  %810 = vmatprep.subr.mxu0 0.0
  %v811 = vand.u32 %v70, 4294901760
  %812 = vmatpush1.msra.mxu0 %v811
  %813 = vmatprep.subr.mxu0 0.0
  %v814 = vand.u32 %v69, 4294901760
  %815 = vmatpush1.msra.mxu0 %v814
  %816 = vmatprep.subr.mxu0 0.0
  %v817 = vand.u32 %v68, 4294901760
  %818 = vmatpush1.msra.mxu0 %v817
  %819 = vmatprep.subr.mxu0 0.0
  %v820 = vand.u32 %v67, 4294901760
  %821 = vmatpush1.msra.mxu0 %v820
  %822 = vmatprep.subr.mxu0 0.0
  %823 = vmatpush2.msra.mxu0 0.0
  %824 = vmatprep.subr.mxu0 0.0
  %825 = vmatpush2.msra.mxu0 0.0
  %826 = vmatprep.subr.mxu0 0.0
  %827 = vmatpush2.msra.mxu0 0.0
  %828 = vmatprep.subr.mxu0 0.0
  %829 = vmatpush2.msra.mxu0 0.0
  %830 = vmatprep.subr.mxu0 0.0
  %831 = vmatpush2.msra.mxu0 0.0
  %832 = vmatprep.subr.mxu0 0.0
  %833 = vmatpush2.msra.mxu0 0.0
  %834 = vmatprep.subr.mxu0 0.0
  %835 = vmatpush2.msra.mxu0 0.0
  %836 = vmatprep.subr.mxu0 0.0
  %837 = vmatpush2.msra.mxu0 0.0
  %838 = vmatprep.subr.mxu0 0.0
  %839 = vmatpush2.msra.mxu0 0.0
  %840 = vmatprep.subr.mxu0 0.0
  %841 = vmatpush2.msra.mxu0 0.0
  %842 = vmatprep.subr.mxu0 0.0
  %843 = vmatpush2.msra.mxu0 0.0
  %844 = vmatprep.subr.mxu0 0.0
  %845 = vmatpush2.msra.mxu0 0.0
  %846 = vmatprep.subr.mxu0 0.0
  %847 = vmatpush2.msra.mxu0 0.0
  %848 = vmatprep.subr.mxu0 0.0
  %849 = vmatpush2.msra.mxu0 0.0
  %850 = vmatprep.subr.mxu0 0.0
  %851 = vmatpush2.msra.mxu0 0.0
  %852 = vmatprep.subr.mxu0 0.0
  %853 = vmatpush2.msra.mxu0 0.0
  %854 = vmatprep.mubr.f32.mxu0 0.0
  %v855 = vand.u32 %v51, 4294901760
  %v856 = vsub.f32 %v51, %v855
  %v857 = vand.u32 %v856, 4294901760
  %858 = vmatmul.mubr.f32.gmra.mxu0 %v857
  %v859 = vpop.f32.mrf.mxu0
  %v860 = vadd.f32 %v666, %v859
  %v861 = vpop.f32.mrf.mxu0
  %862 = vmatprep.mubr.f32.mxu0 0.0
  %v863 = vand.u32 %v52, 4294901760
  %v864 = vsub.f32 %v52, %v863
  %v865 = vand.u32 %v864, 4294901760
  %866 = vmatmul.mubr.f32.gmra.mxu0 %v865
  %v867 = vpop.f32.mrf.mxu0
  %v868 = vadd.f32 %v673, %v867
  %v869 = vpop.f32.mrf.mxu0
  %870 = vmatprep.mubr.f32.mxu0 0.0
  %v871 = vand.u32 %v53, 4294901760
  %v872 = vsub.f32 %v53, %v871
  %v873 = vand.u32 %v872, 4294901760
  %874 = vmatmul.mubr.f32.gmra.mxu0 %v873
  %v875 = vpop.f32.mrf.mxu0
  %v876 = vadd.f32 %v680, %v875
  %v877 = vpop.f32.mrf.mxu0
  %878 = vmatprep.mubr.f32.mxu0 0.0
  %v879 = vand.u32 %v54, 4294901760
  %v880 = vsub.f32 %v54, %v879
  %v881 = vand.u32 %v880, 4294901760
  %882 = vmatmul.mubr.f32.gmra.mxu0 %v881
  %v883 = vpop.f32.mrf.mxu0
  %v884 = vadd.f32 %v687, %v883
  %v885 = vpop.f32.mrf.mxu0
  %886 = vmatprep.mubr.f32.mxu0 0.0
  %v887 = vand.u32 %v55, 4294901760
  %v888 = vsub.f32 %v55, %v887
  %v889 = vand.u32 %v888, 4294901760
  %890 = vmatmul.mubr.f32.gmra.mxu0 %v889
  %v891 = vpop.f32.mrf.mxu0
  %v892 = vadd.f32 %v694, %v891
  %v893 = vpop.f32.mrf.mxu0
  %894 = vmatprep.mubr.f32.mxu0 0.0
  %v895 = vand.u32 %v56, 4294901760
  %v896 = vsub.f32 %v56, %v895
  %v897 = vand.u32 %v896, 4294901760
  %898 = vmatmul.mubr.f32.gmra.mxu0 %v897
  %v899 = vpop.f32.mrf.mxu0
  %v900 = vadd.f32 %v701, %v899
  %v901 = vpop.f32.mrf.mxu0
  %902 = vmatprep.mubr.f32.mxu0 0.0
  %v903 = vand.u32 %v57, 4294901760
  %v904 = vsub.f32 %v57, %v903
  %v905 = vand.u32 %v904, 4294901760
  %906 = vmatmul.mubr.f32.gmra.mxu0 %v905
  %v907 = vpop.f32.mrf.mxu0
  %v908 = vadd.f32 %v708, %v907
  %v909 = vpop.f32.mrf.mxu0
  %910 = vmatprep.mubr.f32.mxu0 0.0
  %v911 = vand.u32 %v58, 4294901760
  %v912 = vsub.f32 %v58, %v911
  %v913 = vand.u32 %v912, 4294901760
  %914 = vmatmul.mubr.f32.gmra.mxu0 %v913
  %v915 = vpop.f32.mrf.mxu0
  %v916 = vadd.f32 %v715, %v915
  %v917 = vpop.f32.mrf.mxu0
  %918 = vmatprep.mubr.f32.mxu0 0.0
  %v919 = vand.u32 %v59, 4294901760
  %v920 = vsub.f32 %v59, %v919
  %v921 = vand.u32 %v920, 4294901760
  %922 = vmatmul.mubr.f32.gmra.mxu0 %v921
  %v923 = vpop.f32.mrf.mxu0
  %v924 = vadd.f32 %v722, %v923
  %v925 = vpop.f32.mrf.mxu0
  %926 = vmatprep.mubr.f32.mxu0 0.0
  %v927 = vand.u32 %v60, 4294901760
  %v928 = vsub.f32 %v60, %v927
  %v929 = vand.u32 %v928, 4294901760
  %930 = vmatmul.mubr.f32.gmra.mxu0 %v929
  %v931 = vpop.f32.mrf.mxu0
  %v932 = vadd.f32 %v729, %v931
  %v933 = vpop.f32.mrf.mxu0
  %934 = vmatprep.mubr.f32.mxu0 0.0
  %v935 = vand.u32 %v61, 4294901760
  %v936 = vsub.f32 %v61, %v935
  %v937 = vand.u32 %v936, 4294901760
  %938 = vmatmul.mubr.f32.gmra.mxu0 %v937
  %v939 = vpop.f32.mrf.mxu0
  %v940 = vadd.f32 %v736, %v939
  %v941 = vpop.f32.mrf.mxu0
  %942 = vmatprep.mubr.f32.mxu0 0.0
  %v943 = vand.u32 %v62, 4294901760
  %v944 = vsub.f32 %v62, %v943
  %v945 = vand.u32 %v944, 4294901760
  %946 = vmatmul.mubr.f32.gmra.mxu0 %v945
  %v947 = vpop.f32.mrf.mxu0
  %v948 = vadd.f32 %v743, %v947
  %v949 = vpop.f32.mrf.mxu0
  %950 = vmatprep.mubr.f32.mxu0 0.0
  %v951 = vand.u32 %v63, 4294901760
  %v952 = vsub.f32 %v63, %v951
  %v953 = vand.u32 %v952, 4294901760
  %954 = vmatmul.mubr.f32.gmra.mxu0 %v953
  %v955 = vpop.f32.mrf.mxu0
  %v956 = vadd.f32 %v750, %v955
  %v957 = vpop.f32.mrf.mxu0
  %958 = vmatprep.mubr.f32.mxu0 0.0
  %v959 = vand.u32 %v64, 4294901760
  %v960 = vsub.f32 %v64, %v959
  %v961 = vand.u32 %v960, 4294901760
  %962 = vmatmul.mubr.f32.gmra.mxu0 %v961
  %v963 = vpop.f32.mrf.mxu0
  %v964 = vadd.f32 %v757, %v963
  %v965 = vpop.f32.mrf.mxu0
  %966 = vmatprep.mubr.f32.mxu0 0.0
  %v967 = vand.u32 %v65, 4294901760
  %v968 = vsub.f32 %v65, %v967
  %v969 = vand.u32 %v968, 4294901760
  %970 = vmatmul.mubr.f32.gmra.mxu0 %v969
  %v971 = vpop.f32.mrf.mxu0
  %v972 = vadd.f32 %v764, %v971
  %v973 = vpop.f32.mrf.mxu0
  %974 = vmatprep.mubr.f32.mxu0 0.0
  %v975 = vand.u32 %v66, 4294901760
  %v976 = vsub.f32 %v66, %v975
  %v977 = vand.u32 %v976, 4294901760
  %978 = vmatmul.mubr.f32.gmra.mxu0 %v977
  %v979 = vpop.f32.mrf.mxu0
  %v980 = vadd.f32 %v771, %v979
  %v981 = vpop.f32.mrf.mxu0
  %982 = vdwg.mxu0
  %983 = vmatprep.subr.mxu0 0.0
  %v984 = vand.u32 %v82, 4294901760
  %v985 = vsub.f32 %v82, %v984
  %v986 = vand.u32 %v985, 4294901760
  %987 = vmatpush1.msra.mxu0 %v986
  %988 = vmatprep.subr.mxu0 0.0
  %v989 = vand.u32 %v81, 4294901760
  %v990 = vsub.f32 %v81, %v989
  %v991 = vand.u32 %v990, 4294901760
  %992 = vmatpush1.msra.mxu0 %v991
  %993 = vmatprep.subr.mxu0 0.0
  %v994 = vand.u32 %v80, 4294901760
  %v995 = vsub.f32 %v80, %v994
  %v996 = vand.u32 %v995, 4294901760
  %997 = vmatpush1.msra.mxu0 %v996
  %998 = vmatprep.subr.mxu0 0.0
  %v999 = vand.u32 %v79, 4294901760
  %v1000 = vsub.f32 %v79, %v999
  %v1001 = vand.u32 %v1000, 4294901760
  %1002 = vmatpush1.msra.mxu0 %v1001
  %1003 = vmatprep.subr.mxu0 0.0
  %v1004 = vand.u32 %v78, 4294901760
  %v1005 = vsub.f32 %v78, %v1004
  %v1006 = vand.u32 %v1005, 4294901760
  %1007 = vmatpush1.msra.mxu0 %v1006
  %1008 = vmatprep.subr.mxu0 0.0
  %v1009 = vand.u32 %v77, 4294901760
  %v1010 = vsub.f32 %v77, %v1009
  %v1011 = vand.u32 %v1010, 4294901760
  %1012 = vmatpush1.msra.mxu0 %v1011
  %1013 = vmatprep.subr.mxu0 0.0
  %v1014 = vand.u32 %v76, 4294901760
  %v1015 = vsub.f32 %v76, %v1014
  %v1016 = vand.u32 %v1015, 4294901760
  %1017 = vmatpush1.msra.mxu0 %v1016
  %1018 = vmatprep.subr.mxu0 0.0
  %v1019 = vand.u32 %v75, 4294901760
  %v1020 = vsub.f32 %v75, %v1019
  %v1021 = vand.u32 %v1020, 4294901760
  %1022 = vmatpush1.msra.mxu0 %v1021
  %1023 = vmatprep.subr.mxu0 0.0
  %v1024 = vand.u32 %v74, 4294901760
  %v1025 = vsub.f32 %v74, %v1024
  %v1026 = vand.u32 %v1025, 4294901760
  %1027 = vmatpush1.msra.mxu0 %v1026
  %1028 = vmatprep.subr.mxu0 0.0
  %v1029 = vand.u32 %v73, 4294901760
  %v1030 = vsub.f32 %v73, %v1029
  %v1031 = vand.u32 %v1030, 4294901760
  %1032 = vmatpush1.msra.mxu0 %v1031
  %1033 = vmatprep.subr.mxu0 0.0
  %v1034 = vand.u32 %v72, 4294901760
  %v1035 = vsub.f32 %v72, %v1034
  %v1036 = vand.u32 %v1035, 4294901760
  %1037 = vmatpush1.msra.mxu0 %v1036
  %1038 = vmatprep.subr.mxu0 0.0
  %v1039 = vand.u32 %v71, 4294901760
  %v1040 = vsub.f32 %v71, %v1039
  %v1041 = vand.u32 %v1040, 4294901760
  %1042 = vmatpush1.msra.mxu0 %v1041
  %1043 = vmatprep.subr.mxu0 0.0
  %v1044 = vand.u32 %v70, 4294901760
  %v1045 = vsub.f32 %v70, %v1044
  %v1046 = vand.u32 %v1045, 4294901760
  %1047 = vmatpush1.msra.mxu0 %v1046
  %1048 = vmatprep.subr.mxu0 0.0
  %v1049 = vand.u32 %v69, 4294901760
  %v1050 = vsub.f32 %v69, %v1049
  %v1051 = vand.u32 %v1050, 4294901760
  %1052 = vmatpush1.msra.mxu0 %v1051
  %1053 = vmatprep.subr.mxu0 0.0
  %v1054 = vand.u32 %v68, 4294901760
  %v1055 = vsub.f32 %v68, %v1054
  %v1056 = vand.u32 %v1055, 4294901760
  %1057 = vmatpush1.msra.mxu0 %v1056
  %1058 = vmatprep.subr.mxu0 0.0
  %v1059 = vand.u32 %v67, 4294901760
  %v1060 = vsub.f32 %v67, %v1059
  %v1061 = vand.u32 %v1060, 4294901760
  %1062 = vmatpush1.msra.mxu0 %v1061
  %1063 = vmatprep.subr.mxu0 0.0
  %1064 = vmatpush2.msra.mxu0 0.0
  %1065 = vmatprep.subr.mxu0 0.0
  %1066 = vmatpush2.msra.mxu0 0.0
  %1067 = vmatprep.subr.mxu0 0.0
  %1068 = vmatpush2.msra.mxu0 0.0
  %1069 = vmatprep.subr.mxu0 0.0
  %1070 = vmatpush2.msra.mxu0 0.0
  %1071 = vmatprep.subr.mxu0 0.0
  %1072 = vmatpush2.msra.mxu0 0.0
  %1073 = vmatprep.subr.mxu0 0.0
  %1074 = vmatpush2.msra.mxu0 0.0
  %1075 = vmatprep.subr.mxu0 0.0
  %1076 = vmatpush2.msra.mxu0 0.0
  %1077 = vmatprep.subr.mxu0 0.0
  %1078 = vmatpush2.msra.mxu0 0.0
  %1079 = vmatprep.subr.mxu0 0.0
  %1080 = vmatpush2.msra.mxu0 0.0
  %1081 = vmatprep.subr.mxu0 0.0
  %1082 = vmatpush2.msra.mxu0 0.0
  %1083 = vmatprep.subr.mxu0 0.0
  %1084 = vmatpush2.msra.mxu0 0.0
  %1085 = vmatprep.subr.mxu0 0.0
  %1086 = vmatpush2.msra.mxu0 0.0
  %1087 = vmatprep.subr.mxu0 0.0
  %1088 = vmatpush2.msra.mxu0 0.0
  %1089 = vmatprep.subr.mxu0 0.0
  %1090 = vmatpush2.msra.mxu0 0.0
  %1091 = vmatprep.subr.mxu0 0.0
  %1092 = vmatpush2.msra.mxu0 0.0
  %1093 = vmatprep.subr.mxu0 0.0
  %1094 = vmatpush2.msra.mxu0 0.0
  %1095 = vmatprep.mubr.f32.mxu0 0.0
  %v1096 = vand.u32 %v51, 4294901760
  %1097 = vmatmul.mubr.f32.gmra.mxu0 %v1096
  %v1098 = vpop.f32.mrf.mxu0
  %v1099 = vadd.f32 %v860, %v1098
  %v1100 = vpop.f32.mrf.mxu0
  %1101 = vmatprep.mubr.f32.mxu0 0.0
  %v1102 = vand.u32 %v52, 4294901760
  %1103 = vmatmul.mubr.f32.gmra.mxu0 %v1102
  %v1104 = vpop.f32.mrf.mxu0
  %v1105 = vadd.f32 %v868, %v1104
  %v1106 = vpop.f32.mrf.mxu0
  %1107 = vmatprep.mubr.f32.mxu0 0.0
  %v1108 = vand.u32 %v53, 4294901760
  %1109 = vmatmul.mubr.f32.gmra.mxu0 %v1108
  %v1110 = vpop.f32.mrf.mxu0
  %v1111 = vadd.f32 %v876, %v1110
  %v1112 = vpop.f32.mrf.mxu0
  %1113 = vmatprep.mubr.f32.mxu0 0.0
  %v1114 = vand.u32 %v54, 4294901760
  %1115 = vmatmul.mubr.f32.gmra.mxu0 %v1114
  %v1116 = vpop.f32.mrf.mxu0
  %v1117 = vadd.f32 %v884, %v1116
  %v1118 = vpop.f32.mrf.mxu0
  %1119 = vmatprep.mubr.f32.mxu0 0.0
  %v1120 = vand.u32 %v55, 4294901760
  %1121 = vmatmul.mubr.f32.gmra.mxu0 %v1120
  %v1122 = vpop.f32.mrf.mxu0
  %v1123 = vadd.f32 %v892, %v1122
  %v1124 = vpop.f32.mrf.mxu0
  %1125 = vmatprep.mubr.f32.mxu0 0.0
  %v1126 = vand.u32 %v56, 4294901760
  %1127 = vmatmul.mubr.f32.gmra.mxu0 %v1126
  %v1128 = vpop.f32.mrf.mxu0
  %v1129 = vadd.f32 %v900, %v1128
  %v1130 = vpop.f32.mrf.mxu0
  %1131 = vmatprep.mubr.f32.mxu0 0.0
  %v1132 = vand.u32 %v57, 4294901760
  %1133 = vmatmul.mubr.f32.gmra.mxu0 %v1132
  %v1134 = vpop.f32.mrf.mxu0
  %v1135 = vadd.f32 %v908, %v1134
  %v1136 = vpop.f32.mrf.mxu0
  %1137 = vmatprep.mubr.f32.mxu0 0.0
  %v1138 = vand.u32 %v58, 4294901760
  %1139 = vmatmul.mubr.f32.gmra.mxu0 %v1138
  %v1140 = vpop.f32.mrf.mxu0
  %v1141 = vadd.f32 %v916, %v1140
  %v1142 = vpop.f32.mrf.mxu0
  %1143 = vmatprep.mubr.f32.mxu0 0.0
  %v1144 = vand.u32 %v59, 4294901760
  %1145 = vmatmul.mubr.f32.gmra.mxu0 %v1144
  %v1146 = vpop.f32.mrf.mxu0
  %v1147 = vadd.f32 %v924, %v1146
  %v1148 = vpop.f32.mrf.mxu0
  %1149 = vmatprep.mubr.f32.mxu0 0.0
  %v1150 = vand.u32 %v60, 4294901760
  %1151 = vmatmul.mubr.f32.gmra.mxu0 %v1150
  %v1152 = vpop.f32.mrf.mxu0
  %v1153 = vadd.f32 %v932, %v1152
  %v1154 = vpop.f32.mrf.mxu0
  %1155 = vmatprep.mubr.f32.mxu0 0.0
  %v1156 = vand.u32 %v61, 4294901760
  %1157 = vmatmul.mubr.f32.gmra.mxu0 %v1156
  %v1158 = vpop.f32.mrf.mxu0
  %v1159 = vadd.f32 %v940, %v1158
  %v1160 = vpop.f32.mrf.mxu0
  %1161 = vmatprep.mubr.f32.mxu0 0.0
  %v1162 = vand.u32 %v62, 4294901760
  %1163 = vmatmul.mubr.f32.gmra.mxu0 %v1162
  %v1164 = vpop.f32.mrf.mxu0
  %v1165 = vadd.f32 %v948, %v1164
  %v1166 = vpop.f32.mrf.mxu0
  %1167 = vmatprep.mubr.f32.mxu0 0.0
  %v1168 = vand.u32 %v63, 4294901760
  %1169 = vmatmul.mubr.f32.gmra.mxu0 %v1168
  %v1170 = vpop.f32.mrf.mxu0
  %v1171 = vadd.f32 %v956, %v1170
  %v1172 = vpop.f32.mrf.mxu0
  %1173 = vmatprep.mubr.f32.mxu0 0.0
  %v1174 = vand.u32 %v64, 4294901760
  %1175 = vmatmul.mubr.f32.gmra.mxu0 %v1174
  %v1176 = vpop.f32.mrf.mxu0
  %v1177 = vadd.f32 %v964, %v1176
  %v1178 = vpop.f32.mrf.mxu0
  %1179 = vmatprep.mubr.f32.mxu0 0.0
  %v1180 = vand.u32 %v65, 4294901760
  %1181 = vmatmul.mubr.f32.gmra.mxu0 %v1180
  %v1182 = vpop.f32.mrf.mxu0
  %v1183 = vadd.f32 %v972, %v1182
  %v1184 = vpop.f32.mrf.mxu0
  %1185 = vmatprep.mubr.f32.mxu0 0.0
  %v1186 = vand.u32 %v66, 4294901760
  %1187 = vmatmul.mubr.f32.gmra.mxu0 %v1186
  %v1188 = vpop.f32.mrf.mxu0
  %v1189 = vadd.f32 %v980, %v1188
  %v1190 = vpop.f32.mrf.mxu0
  %1191 = vdwg.mxu0
  %1192 = vmatprep.subr.mxu0 0.0
  %v1193 = vand.u32 %v82, 4294901760
  %1194 = vmatpush1.msra.mxu0 %v1193
  %1195 = vmatprep.subr.mxu0 0.0
  %v1196 = vand.u32 %v81, 4294901760
  %1197 = vmatpush1.msra.mxu0 %v1196
  %1198 = vmatprep.subr.mxu0 0.0
  %v1199 = vand.u32 %v80, 4294901760
  %1200 = vmatpush1.msra.mxu0 %v1199
  %1201 = vmatprep.subr.mxu0 0.0
  %v1202 = vand.u32 %v79, 4294901760
  %1203 = vmatpush1.msra.mxu0 %v1202
  %1204 = vmatprep.subr.mxu0 0.0
  %v1205 = vand.u32 %v78, 4294901760
  %1206 = vmatpush1.msra.mxu0 %v1205
  %1207 = vmatprep.subr.mxu0 0.0
  %v1208 = vand.u32 %v77, 4294901760
  %1209 = vmatpush1.msra.mxu0 %v1208
  %1210 = vmatprep.subr.mxu0 0.0
  %v1211 = vand.u32 %v76, 4294901760
  %1212 = vmatpush1.msra.mxu0 %v1211
  %1213 = vmatprep.subr.mxu0 0.0
  %v1214 = vand.u32 %v75, 4294901760
  %1215 = vmatpush1.msra.mxu0 %v1214
  %1216 = vmatprep.subr.mxu0 0.0
  %v1217 = vand.u32 %v74, 4294901760
  %1218 = vmatpush1.msra.mxu0 %v1217
  %1219 = vmatprep.subr.mxu0 0.0
  %v1220 = vand.u32 %v73, 4294901760
  %1221 = vmatpush1.msra.mxu0 %v1220
  %1222 = vmatprep.subr.mxu0 0.0
  %v1223 = vand.u32 %v72, 4294901760
  %1224 = vmatpush1.msra.mxu0 %v1223
  %1225 = vmatprep.subr.mxu0 0.0
  %v1226 = vand.u32 %v71, 4294901760
  %1227 = vmatpush1.msra.mxu0 %v1226
  %1228 = vmatprep.subr.mxu0 0.0
  %v1229 = vand.u32 %v70, 4294901760
  %1230 = vmatpush1.msra.mxu0 %v1229
  %1231 = vmatprep.subr.mxu0 0.0
  %v1232 = vand.u32 %v69, 4294901760
  %1233 = vmatpush1.msra.mxu0 %v1232
  %1234 = vmatprep.subr.mxu0 0.0
  %v1235 = vand.u32 %v68, 4294901760
  %1236 = vmatpush1.msra.mxu0 %v1235
  %1237 = vmatprep.subr.mxu0 0.0
  %v1238 = vand.u32 %v67, 4294901760
  %1239 = vmatpush1.msra.mxu0 %v1238
  %1240 = vmatprep.subr.mxu0 0.0
  %1241 = vmatpush2.msra.mxu0 0.0
  %1242 = vmatprep.subr.mxu0 0.0
  %1243 = vmatpush2.msra.mxu0 0.0
  %1244 = vmatprep.subr.mxu0 0.0
  %1245 = vmatpush2.msra.mxu0 0.0
  %1246 = vmatprep.subr.mxu0 0.0
  %1247 = vmatpush2.msra.mxu0 0.0
  %1248 = vmatprep.subr.mxu0 0.0
  %1249 = vmatpush2.msra.mxu0 0.0
  %1250 = vmatprep.subr.mxu0 0.0
  %1251 = vmatpush2.msra.mxu0 0.0
  %1252 = vmatprep.subr.mxu0 0.0
  %1253 = vmatpush2.msra.mxu0 0.0
  %1254 = vmatprep.subr.mxu0 0.0
  %1255 = vmatpush2.msra.mxu0 0.0
  %1256 = vmatprep.subr.mxu0 0.0
  %1257 = vmatpush2.msra.mxu0 0.0
  %1258 = vmatprep.subr.mxu0 0.0
  %1259 = vmatpush2.msra.mxu0 0.0
  %1260 = vmatprep.subr.mxu0 0.0
  %1261 = vmatpush2.msra.mxu0 0.0
  %1262 = vmatprep.subr.mxu0 0.0
  %1263 = vmatpush2.msra.mxu0 0.0
  %1264 = vmatprep.subr.mxu0 0.0
  %1265 = vmatpush2.msra.mxu0 0.0
  %1266 = vmatprep.subr.mxu0 0.0
  %1267 = vmatpush2.msra.mxu0 0.0
  %1268 = vmatprep.subr.mxu0 0.0
  %1269 = vmatpush2.msra.mxu0 0.0
  %1270 = vmatprep.subr.mxu0 0.0
  %1271 = vmatpush2.msra.mxu0 0.0
  %1272 = vmatprep.mubr.f32.mxu0 0.0
  %v1273 = vand.u32 %v51, 4294901760
  %1274 = vmatmul.mubr.f32.gmra.mxu0 %v1273
  %v1275 = vpop.f32.mrf.mxu0
  %v1276 = vadd.f32 %v1099, %v1275
  %v1277 = vpop.f32.mrf.mxu0
  %1278 = vmatprep.mubr.f32.mxu0 0.0
  %v1279 = vand.u32 %v52, 4294901760
  %1280 = vmatmul.mubr.f32.gmra.mxu0 %v1279
  %v1281 = vpop.f32.mrf.mxu0
  %v1282 = vadd.f32 %v1105, %v1281
  %v1283 = vpop.f32.mrf.mxu0
  %1284 = vmatprep.mubr.f32.mxu0 0.0
  %v1285 = vand.u32 %v53, 4294901760
  %1286 = vmatmul.mubr.f32.gmra.mxu0 %v1285
  %v1287 = vpop.f32.mrf.mxu0
  %v1288 = vadd.f32 %v1111, %v1287
  %v1289 = vpop.f32.mrf.mxu0
  %1290 = vmatprep.mubr.f32.mxu0 0.0
  %v1291 = vand.u32 %v54, 4294901760
  %1292 = vmatmul.mubr.f32.gmra.mxu0 %v1291
  %v1293 = vpop.f32.mrf.mxu0
  %v1294 = vadd.f32 %v1117, %v1293
  %v1295 = vpop.f32.mrf.mxu0
  %1296 = vmatprep.mubr.f32.mxu0 0.0
  %v1297 = vand.u32 %v55, 4294901760
  %1298 = vmatmul.mubr.f32.gmra.mxu0 %v1297
  %v1299 = vpop.f32.mrf.mxu0
  %v1300 = vadd.f32 %v1123, %v1299
  %v1301 = vpop.f32.mrf.mxu0
  %1302 = vmatprep.mubr.f32.mxu0 0.0
  %v1303 = vand.u32 %v56, 4294901760
  %1304 = vmatmul.mubr.f32.gmra.mxu0 %v1303
  %v1305 = vpop.f32.mrf.mxu0
  %v1306 = vadd.f32 %v1129, %v1305
  %v1307 = vpop.f32.mrf.mxu0
  %1308 = vmatprep.mubr.f32.mxu0 0.0
  %v1309 = vand.u32 %v57, 4294901760
  %1310 = vmatmul.mubr.f32.gmra.mxu0 %v1309
  %v1311 = vpop.f32.mrf.mxu0
  %v1312 = vadd.f32 %v1135, %v1311
  %v1313 = vpop.f32.mrf.mxu0
  %1314 = vmatprep.mubr.f32.mxu0 0.0
  %v1315 = vand.u32 %v58, 4294901760
  %1316 = vmatmul.mubr.f32.gmra.mxu0 %v1315
  %v1317 = vpop.f32.mrf.mxu0
  %v1318 = vadd.f32 %v1141, %v1317
  %v1319 = vpop.f32.mrf.mxu0
  %1320 = vmatprep.mubr.f32.mxu0 0.0
  %v1321 = vand.u32 %v59, 4294901760
  %1322 = vmatmul.mubr.f32.gmra.mxu0 %v1321
  %v1323 = vpop.f32.mrf.mxu0
  %v1324 = vadd.f32 %v1147, %v1323
  %v1325 = vpop.f32.mrf.mxu0
  %1326 = vmatprep.mubr.f32.mxu0 0.0
  %v1327 = vand.u32 %v60, 4294901760
  %1328 = vmatmul.mubr.f32.gmra.mxu0 %v1327
  %v1329 = vpop.f32.mrf.mxu0
  %v1330 = vadd.f32 %v1153, %v1329
  %v1331 = vpop.f32.mrf.mxu0
  %1332 = vmatprep.mubr.f32.mxu0 0.0
  %v1333 = vand.u32 %v61, 4294901760
  %1334 = vmatmul.mubr.f32.gmra.mxu0 %v1333
  %v1335 = vpop.f32.mrf.mxu0
  %v1336 = vadd.f32 %v1159, %v1335
  %v1337 = vpop.f32.mrf.mxu0
  %1338 = vmatprep.mubr.f32.mxu0 0.0
  %v1339 = vand.u32 %v62, 4294901760
  %1340 = vmatmul.mubr.f32.gmra.mxu0 %v1339
  %v1341 = vpop.f32.mrf.mxu0
  %v1342 = vadd.f32 %v1165, %v1341
  %v1343 = vpop.f32.mrf.mxu0
  %1344 = vmatprep.mubr.f32.mxu0 0.0
  %v1345 = vand.u32 %v63, 4294901760
  %1346 = vmatmul.mubr.f32.gmra.mxu0 %v1345
  %v1347 = vpop.f32.mrf.mxu0
  %v1348 = vadd.f32 %v1171, %v1347
  %v1349 = vpop.f32.mrf.mxu0
  %1350 = vmatprep.mubr.f32.mxu0 0.0
  %v1351 = vand.u32 %v64, 4294901760
  %1352 = vmatmul.mubr.f32.gmra.mxu0 %v1351
  %v1353 = vpop.f32.mrf.mxu0
  %v1354 = vadd.f32 %v1177, %v1353
  %v1355 = vpop.f32.mrf.mxu0
  %1356 = vmatprep.mubr.f32.mxu0 0.0
  %v1357 = vand.u32 %v65, 4294901760
  %1358 = vmatmul.mubr.f32.gmra.mxu0 %v1357
  %v1359 = vpop.f32.mrf.mxu0
  %v1360 = vadd.f32 %v1183, %v1359
  %v1361 = vpop.f32.mrf.mxu0
  %1362 = vmatprep.mubr.f32.mxu0 0.0
  %v1363 = vand.u32 %v66, 4294901760
  %1364 = vmatmul.mubr.f32.gmra.mxu0 %v1363
  %v1365 = vpop.f32.mrf.mxu0
  %v1366 = vadd.f32 %v1189, %v1365
  %v1367 = vpop.f32.mrf.mxu0
  %1368 = vdwg.mxu0
  %v1369 = vadd.f32 %v35, %v1276
  %v1370 = vadd.f32 %v36, %v1282
  %v1371 = vadd.f32 %v37, %v1288
  %v1372 = vadd.f32 %v38, %v1294
  %v1373 = vadd.f32 %v39, %v1300
  %v1374 = vadd.f32 %v40, %v1306
  %v1375 = vadd.f32 %v41, %v1312
  %v1376 = vadd.f32 %v42, %v1318
  %v1377 = vadd.f32 %v43, %v1324
  %v1378 = vadd.f32 %v44, %v1330
  %v1379 = vadd.f32 %v45, %v1336
  %v1380 = vadd.f32 %v46, %v1342
  %v1381 = vadd.f32 %v47, %v1348
  %v1382 = vadd.f32 %v48, %v1354
  %v1383 = vadd.f32 %v49, %v1360
  %v1384 = vadd.f32 %v50, %v1366
  %vm1385 = vcmask 523264
  %1386 = vst.msk [vmem:[#allocation2] sm:$0xff] %vm1385, %v1369
  %1387 = vst.msk [vmem:[#allocation2 + $0x8] sm:$0xff] %vm1385, %v1370
  %1388 = vst.msk [vmem:[#allocation2 + $0x10] sm:$0xff] %vm1385, %v1371
  %1389 = vst.msk [vmem:[#allocation2 + $0x18] sm:$0xff] %vm1385, %v1372
  %1390 = vst.msk [vmem:[#allocation2 + $0x20] sm:$0xff] %vm1385, %v1373
  %1391 = vst.msk [vmem:[#allocation2 + $0x28] sm:$0xff] %vm1385, %v1374
  %1392 = vst.msk [vmem:[#allocation2 + $0x30] sm:$0xff] %vm1385, %v1375
  %1393 = vst.msk [vmem:[#allocation2 + $0x38] sm:$0xff] %vm1385, %v1376
  %1394 = vst.msk [vmem:[#allocation2 + $0x40] sm:$0xff] %vm1385, %v1377
  %1395 = vst.msk [vmem:[#allocation2 + $0x48] sm:$0xff] %vm1385, %v1378
  %1396 = vst.msk [vmem:[#allocation2 + $0x50] sm:$0xff] %vm1385, %v1379
  %1397 = vst.msk [vmem:[#allocation2 + $0x58] sm:$0xff] %vm1385, %v1380
  %1398 = vst.msk [vmem:[#allocation2 + $0x60] sm:$0xff] %vm1385, %v1381
  %1399 = vst.msk [vmem:[#allocation2 + $0x68] sm:$0xff] %vm1385, %v1382
  %1400 = vst.msk [vmem:[#allocation2 + $0x70] sm:$0xff] %vm1385, %v1383
  %1401 = vst.msk [vmem:[#allocation2 + $0x78] sm:$0xff] %vm1385, %v1384
  // Predicated region
  $region18: #{gae_forward.6} parent=0 // pred_check
    %p1402 = pneg %p14
  $region19: #{gae_forward.6} parent=0 // pred_check_branch
    %1404 = sbr.rel (%p1402) target = $region21
  $region20: #{gae_forward.6} parent=0 // pred_region
    %v1405 = vld [vmem:[#allocation2] sm:$0xff]
    %v1406 = vld [vmem:[#allocation2 + $0x8] sm:$0xff]
    %v1407 = vld [vmem:[#allocation2 + $0x10] sm:$0xff]
    %v1408 = vld [vmem:[#allocation2 + $0x18] sm:$0xff]
    %v1409 = vld [vmem:[#allocation2 + $0x20] sm:$0xff]
    %v1410 = vld [vmem:[#allocation2 + $0x28] sm:$0xff]
    %v1411 = vld [vmem:[#allocation2 + $0x30] sm:$0xff]
    %v1412 = vld [vmem:[#allocation2 + $0x38] sm:$0xff]
    %v1413 = vld [vmem:[#allocation2 + $0x40] sm:$0xff]
    %v1414 = vld [vmem:[#allocation2 + $0x48] sm:$0xff]
    %v1415 = vld [vmem:[#allocation2 + $0x50] sm:$0xff]
    %v1416 = vld [vmem:[#allocation2 + $0x58] sm:$0xff]
    %v1417 = vld [vmem:[#allocation2 + $0x60] sm:$0xff]
    %v1418 = vld [vmem:[#allocation2 + $0x68] sm:$0xff]
    %v1419 = vld [vmem:[#allocation2 + $0x70] sm:$0xff]
    %v1420 = vld [vmem:[#allocation2 + $0x78] sm:$0xff]
    %v1421 = vld [vmem:[%s2] sm:$0x1]
    %v1423 = vlaneseq
    %v1424 = vshrl.u32 %v1423, 7
    %v1425 = vsub.s32 0, %v1424
    %v1426 = vrot.slane %v1421, %v1425
    %v1428 = vadd.f32 %v1405, %v1426
    %v1429 = vadd.f32 %v1406, %v1426
    %v1430 = vadd.f32 %v1407, %v1426
    %v1431 = vadd.f32 %v1408, %v1426
    %v1432 = vadd.f32 %v1409, %v1426
    %v1433 = vadd.f32 %v1410, %v1426
    %v1434 = vadd.f32 %v1411, %v1426
    %v1435 = vadd.f32 %v1412, %v1426
    %v1436 = vadd.f32 %v1413, %v1426
    %v1437 = vadd.f32 %v1414, %v1426
    %v1438 = vadd.f32 %v1415, %v1426
    %v1439 = vadd.f32 %v1416, %v1426
    %v1440 = vadd.f32 %v1417, %v1426
    %v1441 = vadd.f32 %v1418, %v1426
    %v1442 = vadd.f32 %v1419, %v1426
    %v1443 = vadd.f32 %v1420, %v1426
    %1444 = vst.msk [vmem:[%s3] sm:$0xff] %vm1385, %v1428
    %1445 = vst.msk [vmem:[%s3 + $0x8] sm:$0xff] %vm1385, %v1429
    %1446 = vst.msk [vmem:[%s3 + $0x10] sm:$0xff] %vm1385, %v1430
    %1447 = vst.msk [vmem:[%s3 + $0x18] sm:$0xff] %vm1385, %v1431
    %1448 = vst.msk [vmem:[%s3 + $0x20] sm:$0xff] %vm1385, %v1432
    %1449 = vst.msk [vmem:[%s3 + $0x28] sm:$0xff] %vm1385, %v1433
    %1450 = vst.msk [vmem:[%s3 + $0x30] sm:$0xff] %vm1385, %v1434
    %1451 = vst.msk [vmem:[%s3 + $0x38] sm:$0xff] %vm1385, %v1435
    %1452 = vst.msk [vmem:[%s3 + $0x40] sm:$0xff] %vm1385, %v1436
    %1453 = vst.msk [vmem:[%s3 + $0x48] sm:$0xff] %vm1385, %v1437
    %1454 = vst.msk [vmem:[%s3 + $0x50] sm:$0xff] %vm1385, %v1438
    %1455 = vst.msk [vmem:[%s3 + $0x58] sm:$0xff] %vm1385, %v1439
    %1456 = vst.msk [vmem:[%s3 + $0x60] sm:$0xff] %vm1385, %v1440
    %1457 = vst.msk [vmem:[%s3 + $0x68] sm:$0xff] %vm1385, %v1441
    %1458 = vst.msk [vmem:[%s3 + $0x70] sm:$0xff] %vm1385, %v1442
    %1459 = vst.msk [vmem:[%s3 + $0x78] sm:$0xff] %vm1385, %v1443
  $region21: #{gae_forward.6} parent=0 // pred_fallthru
    _
  // Predicated region
  $region22: #{gae_forward.6} parent=0 // pred_check
    _
  $region23: #{gae_forward.6} parent=0 // pred_check_branch
    %1461 = sbr.rel (0) target = $region25
  $region24: #{gae_forward.6} parent=0 // pred_region
    _
  $region25: #{gae_forward.6} parent=0 // pred_fallthru
    _
  // Predicated region
  $region26: #{gae_forward.6} parent=0 // pred_check
    _
  $region27: #{gae_forward.6} parent=0 // pred_check_branch
    %1463 = sbr.rel (0) target = $region29
  $region28: #{gae_forward.6} parent=0 // pred_region
    _
  $region29: #{gae_forward.6} parent=0 // pred_fallthru
    _

// kernel: gae_forward.5
$region0: #{gae_forward.5}
  #allocation0 [shape = 'u32[]', space=smem, size = 0x4, offset = 0x4, fixed_abs, tag = 'smem constant byte address 0x4 - core index']
  #allocation1 [shape = 'u32[144,128]{1,0:T(1,128)}', space=vmem, size = 0x12000, scoped, tag = 'internal scratch']
  %s0 = inlined_call_operand.vmem [shape: f32[128,32], index: 0, kind: input, shape index: {}]
  %s1 = inlined_call_operand.vmem [shape: f32[32,64], index: 1, kind: input, shape index: {}]
  %s2 = inlined_call_operand.vmem [shape: f32[128,64], index: 2, kind: output, shape index: {}]
  %s3 = sld [smem:[#allocation0]]
  $region18: #{gae_forward.5} parent=0
    _
  %s5 = ssub.s32 1, %s3
  %s6 = scalar_select 0, %s5, %s3
  // Predicated region
  $region2: #{gae_forward.5} parent=0 // pred_check
    _
  $region3: #{gae_forward.5} parent=0 // pred_check_branch
    %8 = sbr.rel (0) target = $region5
  $region4: #{gae_forward.5} parent=0 // pred_region
    _
  $region5: #{gae_forward.5} parent=0 // pred_fallthru
    _
  // Predicated region
  $region6: #{gae_forward.5} parent=0 // pred_check
    _
  $region7: #{gae_forward.5} parent=0 // pred_check_branch
    %10 = sbr.rel (0) target = $region9
  $region8: #{gae_forward.5} parent=0 // pred_region
    _
  $region9: #{gae_forward.5} parent=0 // pred_fallthru
    _
  %v11 = vld [vmem:[%s0] sm:$0xff]
  %v12 = vld [vmem:[%s0 + $0x8] sm:$0xff]
  %v13 = vld [vmem:[%s0 + $0x10] sm:$0xff]
  %v14 = vld [vmem:[%s0 + $0x18] sm:$0xff]
  %v15 = vld [vmem:[%s0 + $0x20] sm:$0xff]
  %v16 = vld [vmem:[%s0 + $0x28] sm:$0xff]
  %v17 = vld [vmem:[%s0 + $0x30] sm:$0xff]
  %v18 = vld [vmem:[%s0 + $0x38] sm:$0xff]
  %v19 = vld [vmem:[%s0 + $0x40] sm:$0xff]
  %v20 = vld [vmem:[%s0 + $0x48] sm:$0xff]
  %v21 = vld [vmem:[%s0 + $0x50] sm:$0xff]
  %v22 = vld [vmem:[%s0 + $0x58] sm:$0xff]
  %v23 = vld [vmem:[%s0 + $0x60] sm:$0xff]
  %v24 = vld [vmem:[%s0 + $0x68] sm:$0xff]
  %v25 = vld [vmem:[%s0 + $0x70] sm:$0xff]
  %v26 = vld [vmem:[%s0 + $0x78] sm:$0xff]
  %v27 = vld [vmem:[%s1] sm:$0xff]
  %v28 = vld [vmem:[%s1 + $0x8] sm:$0xff]
  %v29 = vld [vmem:[%s1 + $0x10] sm:$0xff]
  %v30 = vld [vmem:[%s1 + $0x18] sm:$0xff]
  %vm31 = vcmask 261120
  %v33 = vsel %vm31, %v11, 0
  %v36 = vsel %vm31, %v12, 0
  %v39 = vsel %vm31, %v13, 0
  %v42 = vsel %vm31, %v14, 0
  %v45 = vsel %vm31, %v15, 0
  %v48 = vsel %vm31, %v16, 0
  %v51 = vsel %vm31, %v17, 0
  %v54 = vsel %vm31, %v18, 0
  %v57 = vsel %vm31, %v19, 0
  %v60 = vsel %vm31, %v20, 0
  %v63 = vsel %vm31, %v21, 0
  %v66 = vsel %vm31, %v22, 0
  %v69 = vsel %vm31, %v23, 0
  %v72 = vsel %vm31, %v24, 0
  %v75 = vsel %vm31, %v25, 0
  %v78 = vsel %vm31, %v26, 0
  %80 = vmatprep.subr.mxu0 0.0
  %81 = vmatpush1.msra.mxu0 0.0
  %82 = vmatprep.subr.mxu0 0.0
  %83 = vmatpush1.msra.mxu0 0.0
  %84 = vmatprep.subr.mxu0 0.0
  %85 = vmatpush1.msra.mxu0 0.0
  %86 = vmatprep.subr.mxu0 0.0
  %87 = vmatpush1.msra.mxu0 0.0
  %88 = vmatprep.subr.mxu0 0.0
  %89 = vmatpush1.msra.mxu0 0.0
  %90 = vmatprep.subr.mxu0 0.0
  %91 = vmatpush1.msra.mxu0 0.0
  %92 = vmatprep.subr.mxu0 0.0
  %93 = vmatpush1.msra.mxu0 0.0
  %94 = vmatprep.subr.mxu0 0.0
  %95 = vmatpush1.msra.mxu0 0.0
  %96 = vmatprep.subr.mxu0 0.0
  %97 = vmatpush1.msra.mxu0 0.0
  %98 = vmatprep.subr.mxu0 0.0
  %99 = vmatpush1.msra.mxu0 0.0
  %100 = vmatprep.subr.mxu0 0.0
  %101 = vmatpush1.msra.mxu0 0.0
  %102 = vmatprep.subr.mxu0 0.0
  %103 = vmatpush1.msra.mxu0 0.0
  %104 = vmatprep.subr.mxu0 0.0
  %v105 = vand.u32 %v30, 4294901760
  %106 = vmatpush1.msra.mxu0 %v105
  %107 = vmatprep.subr.mxu0 0.0
  %v108 = vand.u32 %v29, 4294901760
  %109 = vmatpush1.msra.mxu0 %v108
  %110 = vmatprep.subr.mxu0 0.0
  %v111 = vand.u32 %v28, 4294901760
  %112 = vmatpush1.msra.mxu0 %v111
  %113 = vmatprep.subr.mxu0 0.0
  %v114 = vand.u32 %v27, 4294901760
  %115 = vmatpush1.msra.mxu0 %v114
  %116 = vmatprep.subr.mxu0 0.0
  %117 = vmatpush2.msra.mxu0 0.0
  %118 = vmatprep.subr.mxu0 0.0
  %119 = vmatpush2.msra.mxu0 0.0
  %120 = vmatprep.subr.mxu0 0.0
  %121 = vmatpush2.msra.mxu0 0.0
  %122 = vmatprep.subr.mxu0 0.0
  %123 = vmatpush2.msra.mxu0 0.0
  %124 = vmatprep.subr.mxu0 0.0
  %125 = vmatpush2.msra.mxu0 0.0
  %126 = vmatprep.subr.mxu0 0.0
  %127 = vmatpush2.msra.mxu0 0.0
  %128 = vmatprep.subr.mxu0 0.0
  %129 = vmatpush2.msra.mxu0 0.0
  %130 = vmatprep.subr.mxu0 0.0
  %131 = vmatpush2.msra.mxu0 0.0
  %132 = vmatprep.subr.mxu0 0.0
  %133 = vmatpush2.msra.mxu0 0.0
  %134 = vmatprep.subr.mxu0 0.0
  %135 = vmatpush2.msra.mxu0 0.0
  %136 = vmatprep.subr.mxu0 0.0
  %137 = vmatpush2.msra.mxu0 0.0
  %138 = vmatprep.subr.mxu0 0.0
  %139 = vmatpush2.msra.mxu0 0.0
  %140 = vmatprep.subr.mxu0 0.0
  %141 = vmatpush2.msra.mxu0 0.0
  %142 = vmatprep.subr.mxu0 0.0
  %143 = vmatpush2.msra.mxu0 0.0
  %144 = vmatprep.subr.mxu0 0.0
  %145 = vmatpush2.msra.mxu0 0.0
  %146 = vmatprep.subr.mxu0 0.0
  %147 = vmatpush2.msra.mxu0 0.0
  %148 = vmatprep.mubr.f32.mxu0 0.0
  %v149 = vand.u32 %v33, 4294901760
  %v150 = vsub.f32 %v33, %v149
  %v151 = vand.u32 %v150, 4294901760
  %v152 = vsub.f32 %v150, %v151
  %v153 = vand.u32 %v152, 4294901760
  %154 = vmatmul.mubr.f32.gmra.mxu0 %v153
  %v155 = vpop.f32.mrf.mxu0
  %v156 = vadd.f32 0.0, %v155
  %v157 = vpop.f32.mrf.mxu0
  %158 = vmatprep.mubr.f32.mxu0 0.0
  %v159 = vand.u32 %v36, 4294901760
  %v160 = vsub.f32 %v36, %v159
  %v161 = vand.u32 %v160, 4294901760
  %v162 = vsub.f32 %v160, %v161
  %v163 = vand.u32 %v162, 4294901760
  %164 = vmatmul.mubr.f32.gmra.mxu0 %v163
  %v165 = vpop.f32.mrf.mxu0
  %v166 = vadd.f32 0.0, %v165
  %v167 = vpop.f32.mrf.mxu0
  %168 = vmatprep.mubr.f32.mxu0 0.0
  %v169 = vand.u32 %v39, 4294901760
  %v170 = vsub.f32 %v39, %v169
  %v171 = vand.u32 %v170, 4294901760
  %v172 = vsub.f32 %v170, %v171
  %v173 = vand.u32 %v172, 4294901760
  %174 = vmatmul.mubr.f32.gmra.mxu0 %v173
  %v175 = vpop.f32.mrf.mxu0
  %v176 = vadd.f32 0.0, %v175
  %v177 = vpop.f32.mrf.mxu0
  %178 = vmatprep.mubr.f32.mxu0 0.0
  %v179 = vand.u32 %v42, 4294901760
  %v180 = vsub.f32 %v42, %v179
  %v181 = vand.u32 %v180, 4294901760
  %v182 = vsub.f32 %v180, %v181
  %v183 = vand.u32 %v182, 4294901760
  %184 = vmatmul.mubr.f32.gmra.mxu0 %v183
  %v185 = vpop.f32.mrf.mxu0
  %v186 = vadd.f32 0.0, %v185
  %v187 = vpop.f32.mrf.mxu0
  %188 = vmatprep.mubr.f32.mxu0 0.0
  %v189 = vand.u32 %v45, 4294901760
  %v190 = vsub.f32 %v45, %v189
  %v191 = vand.u32 %v190, 4294901760
  %v192 = vsub.f32 %v190, %v191
  %v193 = vand.u32 %v192, 4294901760
  %194 = vmatmul.mubr.f32.gmra.mxu0 %v193
  %v195 = vpop.f32.mrf.mxu0
  %v196 = vadd.f32 0.0, %v195
  %v197 = vpop.f32.mrf.mxu0
  %198 = vmatprep.mubr.f32.mxu0 0.0
  %v199 = vand.u32 %v48, 4294901760
  %v200 = vsub.f32 %v48, %v199
  %v201 = vand.u32 %v200, 4294901760
  %v202 = vsub.f32 %v200, %v201
  %v203 = vand.u32 %v202, 4294901760
  %204 = vmatmul.mubr.f32.gmra.mxu0 %v203
  %v205 = vpop.f32.mrf.mxu0
  %v206 = vadd.f32 0.0, %v205
  %v207 = vpop.f32.mrf.mxu0
  %208 = vmatprep.mubr.f32.mxu0 0.0
  %v209 = vand.u32 %v51, 4294901760
  %v210 = vsub.f32 %v51, %v209
  %v211 = vand.u32 %v210, 4294901760
  %v212 = vsub.f32 %v210, %v211
  %v213 = vand.u32 %v212, 4294901760
  %214 = vmatmul.mubr.f32.gmra.mxu0 %v213
  %v215 = vpop.f32.mrf.mxu0
  %v216 = vadd.f32 0.0, %v215
  %v217 = vpop.f32.mrf.mxu0
  %218 = vmatprep.mubr.f32.mxu0 0.0
  %v219 = vand.u32 %v54, 4294901760
  %v220 = vsub.f32 %v54, %v219
  %v221 = vand.u32 %v220, 4294901760
  %v222 = vsub.f32 %v220, %v221
  %v223 = vand.u32 %v222, 4294901760
  %224 = vmatmul.mubr.f32.gmra.mxu0 %v223
  %v225 = vpop.f32.mrf.mxu0
  %v226 = vadd.f32 0.0, %v225
  %v227 = vpop.f32.mrf.mxu0
  %228 = vmatprep.mubr.f32.mxu0 0.0
  %v229 = vand.u32 %v57, 4294901760
  %v230 = vsub.f32 %v57, %v229
  %v231 = vand.u32 %v230, 4294901760
  %v232 = vsub.f32 %v230, %v231
  %v233 = vand.u32 %v232, 4294901760
  %234 = vmatmul.mubr.f32.gmra.mxu0 %v233
  %v235 = vpop.f32.mrf.mxu0
  %v236 = vadd.f32 0.0, %v235
  %v237 = vpop.f32.mrf.mxu0
  %238 = vmatprep.mubr.f32.mxu0 0.0
  %v239 = vand.u32 %v60, 4294901760
  %v240 = vsub.f32 %v60, %v239
  %v241 = vand.u32 %v240, 4294901760
  %v242 = vsub.f32 %v240, %v241
  %v243 = vand.u32 %v242, 4294901760
  %244 = vmatmul.mubr.f32.gmra.mxu0 %v243
  %v245 = vpop.f32.mrf.mxu0
  %v246 = vadd.f32 0.0, %v245
  %v247 = vpop.f32.mrf.mxu0
  %248 = vmatprep.mubr.f32.mxu0 0.0
  %v249 = vand.u32 %v63, 4294901760
  %v250 = vsub.f32 %v63, %v249
  %v251 = vand.u32 %v250, 4294901760
  %v252 = vsub.f32 %v250, %v251
  %v253 = vand.u32 %v252, 4294901760
  %254 = vmatmul.mubr.f32.gmra.mxu0 %v253
  %v255 = vpop.f32.mrf.mxu0
  %v256 = vadd.f32 0.0, %v255
  %v257 = vpop.f32.mrf.mxu0
  %258 = vmatprep.mubr.f32.mxu0 0.0
  %v259 = vand.u32 %v66, 4294901760
  %v260 = vsub.f32 %v66, %v259
  %v261 = vand.u32 %v260, 4294901760
  %v262 = vsub.f32 %v260, %v261
  %v263 = vand.u32 %v262, 4294901760
  %264 = vmatmul.mubr.f32.gmra.mxu0 %v263
  %v265 = vpop.f32.mrf.mxu0
  %v266 = vadd.f32 0.0, %v265
  %v267 = vpop.f32.mrf.mxu0
  %268 = vmatprep.mubr.f32.mxu0 0.0
  %v269 = vand.u32 %v69, 4294901760
  %v270 = vsub.f32 %v69, %v269
  %v271 = vand.u32 %v270, 4294901760
  %v272 = vsub.f32 %v270, %v271
  %v273 = vand.u32 %v272, 4294901760
  %274 = vmatmul.mubr.f32.gmra.mxu0 %v273
  %v275 = vpop.f32.mrf.mxu0
  %v276 = vadd.f32 0.0, %v275
  %v277 = vpop.f32.mrf.mxu0
  %278 = vmatprep.mubr.f32.mxu0 0.0
  %v279 = vand.u32 %v72, 4294901760
  %v280 = vsub.f32 %v72, %v279
  %v281 = vand.u32 %v280, 4294901760
  %v282 = vsub.f32 %v280, %v281
  %v283 = vand.u32 %v282, 4294901760
  %284 = vmatmul.mubr.f32.gmra.mxu0 %v283
  %v285 = vpop.f32.mrf.mxu0
  %v286 = vadd.f32 0.0, %v285
  %v287 = vpop.f32.mrf.mxu0
  %288 = vmatprep.mubr.f32.mxu0 0.0
  %v289 = vand.u32 %v75, 4294901760
  %v290 = vsub.f32 %v75, %v289
  %v291 = vand.u32 %v290, 4294901760
  %v292 = vsub.f32 %v290, %v291
  %v293 = vand.u32 %v292, 4294901760
  %294 = vmatmul.mubr.f32.gmra.mxu0 %v293
  %v295 = vpop.f32.mrf.mxu0
  %v296 = vadd.f32 0.0, %v295
  %v297 = vpop.f32.mrf.mxu0
  %298 = vmatprep.mubr.f32.mxu0 0.0
  %v299 = vand.u32 %v78, 4294901760
  %v300 = vsub.f32 %v78, %v299
  %v301 = vand.u32 %v300, 4294901760
  %v302 = vsub.f32 %v300, %v301
  %v303 = vand.u32 %v302, 4294901760
  %304 = vmatmul.mubr.f32.gmra.mxu0 %v303
  %v305 = vpop.f32.mrf.mxu0
  %v306 = vadd.f32 0.0, %v305
  %v307 = vpop.f32.mrf.mxu0
  %308 = vdwg.mxu0
  %309 = vmatprep.subr.mxu0 0.0
  %310 = vmatpush1.msra.mxu0 0.0
  %311 = vmatprep.subr.mxu0 0.0
  %312 = vmatpush1.msra.mxu0 0.0
  %313 = vmatprep.subr.mxu0 0.0
  %314 = vmatpush1.msra.mxu0 0.0
  %315 = vmatprep.subr.mxu0 0.0
  %316 = vmatpush1.msra.mxu0 0.0
  %317 = vmatprep.subr.mxu0 0.0
  %318 = vmatpush1.msra.mxu0 0.0
  %319 = vmatprep.subr.mxu0 0.0
  %320 = vmatpush1.msra.mxu0 0.0
  %321 = vmatprep.subr.mxu0 0.0
  %322 = vmatpush1.msra.mxu0 0.0
  %323 = vmatprep.subr.mxu0 0.0
  %324 = vmatpush1.msra.mxu0 0.0
  %325 = vmatprep.subr.mxu0 0.0
  %326 = vmatpush1.msra.mxu0 0.0
  %327 = vmatprep.subr.mxu0 0.0
  %328 = vmatpush1.msra.mxu0 0.0
  %329 = vmatprep.subr.mxu0 0.0
  %330 = vmatpush1.msra.mxu0 0.0
  %331 = vmatprep.subr.mxu0 0.0
  %332 = vmatpush1.msra.mxu0 0.0
  %333 = vmatprep.subr.mxu0 0.0
  %v334 = vand.u32 %v30, 4294901760
  %v335 = vsub.f32 %v30, %v334
  %v336 = vand.u32 %v335, 4294901760
  %v337 = vsub.f32 %v335, %v336
  %v338 = vand.u32 %v337, 4294901760
  %339 = vmatpush1.msra.mxu0 %v338
  %340 = vmatprep.subr.mxu0 0.0
  %v341 = vand.u32 %v29, 4294901760
  %v342 = vsub.f32 %v29, %v341
  %v343 = vand.u32 %v342, 4294901760
  %v344 = vsub.f32 %v342, %v343
  %v345 = vand.u32 %v344, 4294901760
  %346 = vmatpush1.msra.mxu0 %v345
  %347 = vmatprep.subr.mxu0 0.0
  %v348 = vand.u32 %v28, 4294901760
  %v349 = vsub.f32 %v28, %v348
  %v350 = vand.u32 %v349, 4294901760
  %v351 = vsub.f32 %v349, %v350
  %v352 = vand.u32 %v351, 4294901760
  %353 = vmatpush1.msra.mxu0 %v352
  %354 = vmatprep.subr.mxu0 0.0
  %v355 = vand.u32 %v27, 4294901760
  %v356 = vsub.f32 %v27, %v355
  %v357 = vand.u32 %v356, 4294901760
  %v358 = vsub.f32 %v356, %v357
  %v359 = vand.u32 %v358, 4294901760
  %360 = vmatpush1.msra.mxu0 %v359
  %361 = vmatprep.subr.mxu0 0.0
  %362 = vmatpush2.msra.mxu0 0.0
  %363 = vmatprep.subr.mxu0 0.0
  %364 = vmatpush2.msra.mxu0 0.0
  %365 = vmatprep.subr.mxu0 0.0
  %366 = vmatpush2.msra.mxu0 0.0
  %367 = vmatprep.subr.mxu0 0.0
  %368 = vmatpush2.msra.mxu0 0.0
  %369 = vmatprep.subr.mxu0 0.0
  %370 = vmatpush2.msra.mxu0 0.0
  %371 = vmatprep.subr.mxu0 0.0
  %372 = vmatpush2.msra.mxu0 0.0
  %373 = vmatprep.subr.mxu0 0.0
  %374 = vmatpush2.msra.mxu0 0.0
  %375 = vmatprep.subr.mxu0 0.0
  %376 = vmatpush2.msra.mxu0 0.0
  %377 = vmatprep.subr.mxu0 0.0
  %378 = vmatpush2.msra.mxu0 0.0
  %379 = vmatprep.subr.mxu0 0.0
  %380 = vmatpush2.msra.mxu0 0.0
  %381 = vmatprep.subr.mxu0 0.0
  %382 = vmatpush2.msra.mxu0 0.0
  %383 = vmatprep.subr.mxu0 0.0
  %384 = vmatpush2.msra.mxu0 0.0
  %385 = vmatprep.subr.mxu0 0.0
  %386 = vmatpush2.msra.mxu0 0.0
  %387 = vmatprep.subr.mxu0 0.0
  %388 = vmatpush2.msra.mxu0 0.0
  %389 = vmatprep.subr.mxu0 0.0
  %390 = vmatpush2.msra.mxu0 0.0
  %391 = vmatprep.subr.mxu0 0.0
  %392 = vmatpush2.msra.mxu0 0.0
  %393 = vmatprep.mubr.f32.mxu0 0.0
  %v394 = vand.u32 %v33, 4294901760
  %395 = vmatmul.mubr.f32.gmra.mxu0 %v394
  %v396 = vpop.f32.mrf.mxu0
  %v397 = vadd.f32 %v156, %v396
  %v398 = vpop.f32.mrf.mxu0
  %399 = vmatprep.mubr.f32.mxu0 0.0
  %v400 = vand.u32 %v36, 4294901760
  %401 = vmatmul.mubr.f32.gmra.mxu0 %v400
  %v402 = vpop.f32.mrf.mxu0
  %v403 = vadd.f32 %v166, %v402
  %v404 = vpop.f32.mrf.mxu0
  %405 = vmatprep.mubr.f32.mxu0 0.0
  %v406 = vand.u32 %v39, 4294901760
  %407 = vmatmul.mubr.f32.gmra.mxu0 %v406
  %v408 = vpop.f32.mrf.mxu0
  %v409 = vadd.f32 %v176, %v408
  %v410 = vpop.f32.mrf.mxu0
  %411 = vmatprep.mubr.f32.mxu0 0.0
  %v412 = vand.u32 %v42, 4294901760
  %413 = vmatmul.mubr.f32.gmra.mxu0 %v412
  %v414 = vpop.f32.mrf.mxu0
  %v415 = vadd.f32 %v186, %v414
  %v416 = vpop.f32.mrf.mxu0
  %417 = vmatprep.mubr.f32.mxu0 0.0
  %v418 = vand.u32 %v45, 4294901760
  %419 = vmatmul.mubr.f32.gmra.mxu0 %v418
  %v420 = vpop.f32.mrf.mxu0
  %v421 = vadd.f32 %v196, %v420
  %v422 = vpop.f32.mrf.mxu0
  %423 = vmatprep.mubr.f32.mxu0 0.0
  %v424 = vand.u32 %v48, 4294901760
  %425 = vmatmul.mubr.f32.gmra.mxu0 %v424
  %v426 = vpop.f32.mrf.mxu0
  %v427 = vadd.f32 %v206, %v426
  %v428 = vpop.f32.mrf.mxu0
  %429 = vmatprep.mubr.f32.mxu0 0.0
  %v430 = vand.u32 %v51, 4294901760
  %431 = vmatmul.mubr.f32.gmra.mxu0 %v430
  %v432 = vpop.f32.mrf.mxu0
  %v433 = vadd.f32 %v216, %v432
  %v434 = vpop.f32.mrf.mxu0
  %435 = vmatprep.mubr.f32.mxu0 0.0
  %v436 = vand.u32 %v54, 4294901760
  %437 = vmatmul.mubr.f32.gmra.mxu0 %v436
  %v438 = vpop.f32.mrf.mxu0
  %v439 = vadd.f32 %v226, %v438
  %v440 = vpop.f32.mrf.mxu0
  %441 = vmatprep.mubr.f32.mxu0 0.0
  %v442 = vand.u32 %v57, 4294901760
  %443 = vmatmul.mubr.f32.gmra.mxu0 %v442
  %v444 = vpop.f32.mrf.mxu0
  %v445 = vadd.f32 %v236, %v444
  %v446 = vpop.f32.mrf.mxu0
  %447 = vmatprep.mubr.f32.mxu0 0.0
  %v448 = vand.u32 %v60, 4294901760
  %449 = vmatmul.mubr.f32.gmra.mxu0 %v448
  %v450 = vpop.f32.mrf.mxu0
  %v451 = vadd.f32 %v246, %v450
  %v452 = vpop.f32.mrf.mxu0
  %453 = vmatprep.mubr.f32.mxu0 0.0
  %v454 = vand.u32 %v63, 4294901760
  %455 = vmatmul.mubr.f32.gmra.mxu0 %v454
  %v456 = vpop.f32.mrf.mxu0
  %v457 = vadd.f32 %v256, %v456
  %v458 = vpop.f32.mrf.mxu0
  %459 = vmatprep.mubr.f32.mxu0 0.0
  %v460 = vand.u32 %v66, 4294901760
  %461 = vmatmul.mubr.f32.gmra.mxu0 %v460
  %v462 = vpop.f32.mrf.mxu0
  %v463 = vadd.f32 %v266, %v462
  %v464 = vpop.f32.mrf.mxu0
  %465 = vmatprep.mubr.f32.mxu0 0.0
  %v466 = vand.u32 %v69, 4294901760
  %467 = vmatmul.mubr.f32.gmra.mxu0 %v466
  %v468 = vpop.f32.mrf.mxu0
  %v469 = vadd.f32 %v276, %v468
  %v470 = vpop.f32.mrf.mxu0
  %471 = vmatprep.mubr.f32.mxu0 0.0
  %v472 = vand.u32 %v72, 4294901760
  %473 = vmatmul.mubr.f32.gmra.mxu0 %v472
  %v474 = vpop.f32.mrf.mxu0
  %v475 = vadd.f32 %v286, %v474
  %v476 = vpop.f32.mrf.mxu0
  %477 = vmatprep.mubr.f32.mxu0 0.0
  %v478 = vand.u32 %v75, 4294901760
  %479 = vmatmul.mubr.f32.gmra.mxu0 %v478
  %v480 = vpop.f32.mrf.mxu0
  %v481 = vadd.f32 %v296, %v480
  %v482 = vpop.f32.mrf.mxu0
  %483 = vmatprep.mubr.f32.mxu0 0.0
  %v484 = vand.u32 %v78, 4294901760
  %485 = vmatmul.mubr.f32.gmra.mxu0 %v484
  %v486 = vpop.f32.mrf.mxu0
  %v487 = vadd.f32 %v306, %v486
  %v488 = vpop.f32.mrf.mxu0
  %489 = vdwg.mxu0
  %490 = vmatprep.subr.mxu0 0.0
  %491 = vmatpush1.msra.mxu0 0.0
  %492 = vmatprep.subr.mxu0 0.0
  %493 = vmatpush1.msra.mxu0 0.0
  %494 = vmatprep.subr.mxu0 0.0
  %495 = vmatpush1.msra.mxu0 0.0
  %496 = vmatprep.subr.mxu0 0.0
  %497 = vmatpush1.msra.mxu0 0.0
  %498 = vmatprep.subr.mxu0 0.0
  %499 = vmatpush1.msra.mxu0 0.0
  %500 = vmatprep.subr.mxu0 0.0
  %501 = vmatpush1.msra.mxu0 0.0
  %502 = vmatprep.subr.mxu0 0.0
  %503 = vmatpush1.msra.mxu0 0.0
  %504 = vmatprep.subr.mxu0 0.0
  %505 = vmatpush1.msra.mxu0 0.0
  %506 = vmatprep.subr.mxu0 0.0
  %507 = vmatpush1.msra.mxu0 0.0
  %508 = vmatprep.subr.mxu0 0.0
  %509 = vmatpush1.msra.mxu0 0.0
  %510 = vmatprep.subr.mxu0 0.0
  %511 = vmatpush1.msra.mxu0 0.0
  %512 = vmatprep.subr.mxu0 0.0
  %513 = vmatpush1.msra.mxu0 0.0
  %514 = vmatprep.subr.mxu0 0.0
  %v515 = vand.u32 %v30, 4294901760
  %v516 = vsub.f32 %v30, %v515
  %517 = vmatpush1.msra.mxu0 %v516
  %518 = vmatprep.subr.mxu0 0.0
  %v519 = vand.u32 %v29, 4294901760
  %v520 = vsub.f32 %v29, %v519
  %521 = vmatpush1.msra.mxu0 %v520
  %522 = vmatprep.subr.mxu0 0.0
  %v523 = vand.u32 %v28, 4294901760
  %v524 = vsub.f32 %v28, %v523
  %525 = vmatpush1.msra.mxu0 %v524
  %526 = vmatprep.subr.mxu0 0.0
  %v527 = vand.u32 %v27, 4294901760
  %v528 = vsub.f32 %v27, %v527
  %529 = vmatpush1.msra.mxu0 %v528
  %530 = vmatprep.subr.mxu0 0.0
  %531 = vmatpush2.msra.mxu0 0.0
  %532 = vmatprep.subr.mxu0 0.0
  %533 = vmatpush2.msra.mxu0 0.0
  %534 = vmatprep.subr.mxu0 0.0
  %535 = vmatpush2.msra.mxu0 0.0
  %536 = vmatprep.subr.mxu0 0.0
  %537 = vmatpush2.msra.mxu0 0.0
  %538 = vmatprep.subr.mxu0 0.0
  %539 = vmatpush2.msra.mxu0 0.0
  %540 = vmatprep.subr.mxu0 0.0
  %541 = vmatpush2.msra.mxu0 0.0
  %542 = vmatprep.subr.mxu0 0.0
  %543 = vmatpush2.msra.mxu0 0.0
  %544 = vmatprep.subr.mxu0 0.0
  %545 = vmatpush2.msra.mxu0 0.0
  %546 = vmatprep.subr.mxu0 0.0
  %547 = vmatpush2.msra.mxu0 0.0
  %548 = vmatprep.subr.mxu0 0.0
  %549 = vmatpush2.msra.mxu0 0.0
  %550 = vmatprep.subr.mxu0 0.0
  %551 = vmatpush2.msra.mxu0 0.0
  %552 = vmatprep.subr.mxu0 0.0
  %553 = vmatpush2.msra.mxu0 0.0
  %554 = vmatprep.subr.mxu0 0.0
  %555 = vmatpush2.msra.mxu0 0.0
  %556 = vmatprep.subr.mxu0 0.0
  %557 = vmatpush2.msra.mxu0 0.0
  %558 = vmatprep.subr.mxu0 0.0
  %559 = vmatpush2.msra.mxu0 0.0
  %560 = vmatprep.subr.mxu0 0.0
  %561 = vmatpush2.msra.mxu0 0.0
  %562 = vmatprep.mubr.f32.mxu0 0.0
  %v563 = vand.u32 %v33, 4294901760
  %v564 = vsub.f32 %v33, %v563
  %565 = vmatmul.mubr.f32.gmra.mxu0 %v564
  %v566 = vpop.f32.mrf.mxu0
  %v567 = vadd.f32 %v397, %v566
  %v568 = vpop.f32.mrf.mxu0
  %569 = vmatprep.mubr.f32.mxu0 0.0
  %v570 = vand.u32 %v36, 4294901760
  %v571 = vsub.f32 %v36, %v570
  %572 = vmatmul.mubr.f32.gmra.mxu0 %v571
  %v573 = vpop.f32.mrf.mxu0
  %v574 = vadd.f32 %v403, %v573
  %v575 = vpop.f32.mrf.mxu0
  %576 = vmatprep.mubr.f32.mxu0 0.0
  %v577 = vand.u32 %v39, 4294901760
  %v578 = vsub.f32 %v39, %v577
  %579 = vmatmul.mubr.f32.gmra.mxu0 %v578
  %v580 = vpop.f32.mrf.mxu0
  %v581 = vadd.f32 %v409, %v580
  %v582 = vpop.f32.mrf.mxu0
  %583 = vmatprep.mubr.f32.mxu0 0.0
  %v584 = vand.u32 %v42, 4294901760
  %v585 = vsub.f32 %v42, %v584
  %586 = vmatmul.mubr.f32.gmra.mxu0 %v585
  %v587 = vpop.f32.mrf.mxu0
  %v588 = vadd.f32 %v415, %v587
  %v589 = vpop.f32.mrf.mxu0
  %590 = vmatprep.mubr.f32.mxu0 0.0
  %v591 = vand.u32 %v45, 4294901760
  %v592 = vsub.f32 %v45, %v591
  %593 = vmatmul.mubr.f32.gmra.mxu0 %v592
  %v594 = vpop.f32.mrf.mxu0
  %v595 = vadd.f32 %v421, %v594
  %v596 = vpop.f32.mrf.mxu0
  %597 = vmatprep.mubr.f32.mxu0 0.0
  %v598 = vand.u32 %v48, 4294901760
  %v599 = vsub.f32 %v48, %v598
  %600 = vmatmul.mubr.f32.gmra.mxu0 %v599
  %v601 = vpop.f32.mrf.mxu0
  %v602 = vadd.f32 %v427, %v601
  %v603 = vpop.f32.mrf.mxu0
  %604 = vmatprep.mubr.f32.mxu0 0.0
  %v605 = vand.u32 %v51, 4294901760
  %v606 = vsub.f32 %v51, %v605
  %607 = vmatmul.mubr.f32.gmra.mxu0 %v606
  %v608 = vpop.f32.mrf.mxu0
  %v609 = vadd.f32 %v433, %v608
  %v610 = vpop.f32.mrf.mxu0
  %611 = vmatprep.mubr.f32.mxu0 0.0
  %v612 = vand.u32 %v54, 4294901760
  %v613 = vsub.f32 %v54, %v612
  %614 = vmatmul.mubr.f32.gmra.mxu0 %v613
  %v615 = vpop.f32.mrf.mxu0
  %v616 = vadd.f32 %v439, %v615
  %v617 = vpop.f32.mrf.mxu0
  %618 = vmatprep.mubr.f32.mxu0 0.0
  %v619 = vand.u32 %v57, 4294901760
  %v620 = vsub.f32 %v57, %v619
  %621 = vmatmul.mubr.f32.gmra.mxu0 %v620
  %v622 = vpop.f32.mrf.mxu0
  %v623 = vadd.f32 %v445, %v622
  %v624 = vpop.f32.mrf.mxu0
  %625 = vmatprep.mubr.f32.mxu0 0.0
  %v626 = vand.u32 %v60, 4294901760
  %v627 = vsub.f32 %v60, %v626
  %628 = vmatmul.mubr.f32.gmra.mxu0 %v627
  %v629 = vpop.f32.mrf.mxu0
  %v630 = vadd.f32 %v451, %v629
  %v631 = vpop.f32.mrf.mxu0
  %632 = vmatprep.mubr.f32.mxu0 0.0
  %v633 = vand.u32 %v63, 4294901760
  %v634 = vsub.f32 %v63, %v633
  %635 = vmatmul.mubr.f32.gmra.mxu0 %v634
  %v636 = vpop.f32.mrf.mxu0
  %v637 = vadd.f32 %v457, %v636
  %v638 = vpop.f32.mrf.mxu0
  %639 = vmatprep.mubr.f32.mxu0 0.0
  %v640 = vand.u32 %v66, 4294901760
  %v641 = vsub.f32 %v66, %v640
  %642 = vmatmul.mubr.f32.gmra.mxu0 %v641
  %v643 = vpop.f32.mrf.mxu0
  %v644 = vadd.f32 %v463, %v643
  %v645 = vpop.f32.mrf.mxu0
  %646 = vmatprep.mubr.f32.mxu0 0.0
  %v647 = vand.u32 %v69, 4294901760
  %v648 = vsub.f32 %v69, %v647
  %649 = vmatmul.mubr.f32.gmra.mxu0 %v648
  %v650 = vpop.f32.mrf.mxu0
  %v651 = vadd.f32 %v469, %v650
  %v652 = vpop.f32.mrf.mxu0
  %653 = vmatprep.mubr.f32.mxu0 0.0
  %v654 = vand.u32 %v72, 4294901760
  %v655 = vsub.f32 %v72, %v654
  %656 = vmatmul.mubr.f32.gmra.mxu0 %v655
  %v657 = vpop.f32.mrf.mxu0
  %v658 = vadd.f32 %v475, %v657
  %v659 = vpop.f32.mrf.mxu0
  %660 = vmatprep.mubr.f32.mxu0 0.0
  %v661 = vand.u32 %v75, 4294901760
  %v662 = vsub.f32 %v75, %v661
  %663 = vmatmul.mubr.f32.gmra.mxu0 %v662
  %v664 = vpop.f32.mrf.mxu0
  %v665 = vadd.f32 %v481, %v664
  %v666 = vpop.f32.mrf.mxu0
  %667 = vmatprep.mubr.f32.mxu0 0.0
  %v668 = vand.u32 %v78, 4294901760
  %v669 = vsub.f32 %v78, %v668
  %670 = vmatmul.mubr.f32.gmra.mxu0 %v669
  %v671 = vpop.f32.mrf.mxu0
  %v672 = vadd.f32 %v487, %v671
  %v673 = vpop.f32.mrf.mxu0
  %674 = vdwg.mxu0
  %675 = vmatprep.subr.mxu0 0.0
  %676 = vmatpush1.msra.mxu0 0.0
  %677 = vmatprep.subr.mxu0 0.0
  %678 = vmatpush1.msra.mxu0 0.0
  %679 = vmatprep.subr.mxu0 0.0
  %680 = vmatpush1.msra.mxu0 0.0
  %681 = vmatprep.subr.mxu0 0.0
  %682 = vmatpush1.msra.mxu0 0.0
  %683 = vmatprep.subr.mxu0 0.0
  %684 = vmatpush1.msra.mxu0 0.0
  %685 = vmatprep.subr.mxu0 0.0
  %686 = vmatpush1.msra.mxu0 0.0
  %687 = vmatprep.subr.mxu0 0.0
  %688 = vmatpush1.msra.mxu0 0.0
  %689 = vmatprep.subr.mxu0 0.0
  %690 = vmatpush1.msra.mxu0 0.0
  %691 = vmatprep.subr.mxu0 0.0
  %692 = vmatpush1.msra.mxu0 0.0
  %693 = vmatprep.subr.mxu0 0.0
  %694 = vmatpush1.msra.mxu0 0.0
  %695 = vmatprep.subr.mxu0 0.0
  %696 = vmatpush1.msra.mxu0 0.0
  %697 = vmatprep.subr.mxu0 0.0
  %698 = vmatpush1.msra.mxu0 0.0
  %699 = vmatprep.subr.mxu0 0.0
  %v700 = vand.u32 %v30, 4294901760
  %701 = vmatpush1.msra.mxu0 %v700
  %702 = vmatprep.subr.mxu0 0.0
  %v703 = vand.u32 %v29, 4294901760
  %704 = vmatpush1.msra.mxu0 %v703
  %705 = vmatprep.subr.mxu0 0.0
  %v706 = vand.u32 %v28, 4294901760
  %707 = vmatpush1.msra.mxu0 %v706
  %708 = vmatprep.subr.mxu0 0.0
  %v709 = vand.u32 %v27, 4294901760
  %710 = vmatpush1.msra.mxu0 %v709
  %711 = vmatprep.subr.mxu0 0.0
  %712 = vmatpush2.msra.mxu0 0.0
  %713 = vmatprep.subr.mxu0 0.0
  %714 = vmatpush2.msra.mxu0 0.0
  %715 = vmatprep.subr.mxu0 0.0
  %716 = vmatpush2.msra.mxu0 0.0
  %717 = vmatprep.subr.mxu0 0.0
  %718 = vmatpush2.msra.mxu0 0.0
  %719 = vmatprep.subr.mxu0 0.0
  %720 = vmatpush2.msra.mxu0 0.0
  %721 = vmatprep.subr.mxu0 0.0
  %722 = vmatpush2.msra.mxu0 0.0
  %723 = vmatprep.subr.mxu0 0.0
  %724 = vmatpush2.msra.mxu0 0.0
  %725 = vmatprep.subr.mxu0 0.0
  %726 = vmatpush2.msra.mxu0 0.0
  %727 = vmatprep.subr.mxu0 0.0
  %728 = vmatpush2.msra.mxu0 0.0
  %729 = vmatprep.subr.mxu0 0.0
  %730 = vmatpush2.msra.mxu0 0.0
  %731 = vmatprep.subr.mxu0 0.0
  %732 = vmatpush2.msra.mxu0 0.0
  %733 = vmatprep.subr.mxu0 0.0
  %734 = vmatpush2.msra.mxu0 0.0
  %735 = vmatprep.subr.mxu0 0.0
  %736 = vmatpush2.msra.mxu0 0.0
  %737 = vmatprep.subr.mxu0 0.0
  %738 = vmatpush2.msra.mxu0 0.0
  %739 = vmatprep.subr.mxu0 0.0
  %740 = vmatpush2.msra.mxu0 0.0
  %741 = vmatprep.subr.mxu0 0.0
  %742 = vmatpush2.msra.mxu0 0.0
  %743 = vmatprep.mubr.f32.mxu0 0.0
  %v744 = vand.u32 %v33, 4294901760
  %v745 = vsub.f32 %v33, %v744
  %v746 = vand.u32 %v745, 4294901760
  %747 = vmatmul.mubr.f32.gmra.mxu0 %v746
  %v748 = vpop.f32.mrf.mxu0
  %v749 = vadd.f32 %v567, %v748
  %v750 = vpop.f32.mrf.mxu0
  %751 = vmatprep.mubr.f32.mxu0 0.0
  %v752 = vand.u32 %v36, 4294901760
  %v753 = vsub.f32 %v36, %v752
  %v754 = vand.u32 %v753, 4294901760
  %755 = vmatmul.mubr.f32.gmra.mxu0 %v754
  %v756 = vpop.f32.mrf.mxu0
  %v757 = vadd.f32 %v574, %v756
  %v758 = vpop.f32.mrf.mxu0
  %759 = vmatprep.mubr.f32.mxu0 0.0
  %v760 = vand.u32 %v39, 4294901760
  %v761 = vsub.f32 %v39, %v760
  %v762 = vand.u32 %v761, 4294901760
  %763 = vmatmul.mubr.f32.gmra.mxu0 %v762
  %v764 = vpop.f32.mrf.mxu0
  %v765 = vadd.f32 %v581, %v764
  %v766 = vpop.f32.mrf.mxu0
  %767 = vmatprep.mubr.f32.mxu0 0.0
  %v768 = vand.u32 %v42, 4294901760
  %v769 = vsub.f32 %v42, %v768
  %v770 = vand.u32 %v769, 4294901760
  %771 = vmatmul.mubr.f32.gmra.mxu0 %v770
  %v772 = vpop.f32.mrf.mxu0
  %v773 = vadd.f32 %v588, %v772
  %v774 = vpop.f32.mrf.mxu0
  %775 = vmatprep.mubr.f32.mxu0 0.0
  %v776 = vand.u32 %v45, 4294901760
  %v777 = vsub.f32 %v45, %v776
  %v778 = vand.u32 %v777, 4294901760
  %779 = vmatmul.mubr.f32.gmra.mxu0 %v778
  %v780 = vpop.f32.mrf.mxu0
  %v781 = vadd.f32 %v595, %v780
  %v782 = vpop.f32.mrf.mxu0
  %783 = vmatprep.mubr.f32.mxu0 0.0
  %v784 = vand.u32 %v48, 4294901760
  %v785 = vsub.f32 %v48, %v784
  %v786 = vand.u32 %v785, 4294901760
  %787 = vmatmul.mubr.f32.gmra.mxu0 %v786
  %v788 = vpop.f32.mrf.mxu0
  %v789 = vadd.f32 %v602, %v788
  %v790 = vpop.f32.mrf.mxu0
  %791 = vmatprep.mubr.f32.mxu0 0.0
  %v792 = vand.u32 %v51, 4294901760
  %v793 = vsub.f32 %v51, %v792
  %v794 = vand.u32 %v793, 4294901760
  %795 = vmatmul.mubr.f32.gmra.mxu0 %v794
  %v796 = vpop.f32.mrf.mxu0
  %v797 = vadd.f32 %v609, %v796
  %v798 = vpop.f32.mrf.mxu0
  %799 = vmatprep.mubr.f32.mxu0 0.0
  %v800 = vand.u32 %v54, 4294901760
  %v801 = vsub.f32 %v54, %v800
  %v802 = vand.u32 %v801, 4294901760
  %803 = vmatmul.mubr.f32.gmra.mxu0 %v802
  %v804 = vpop.f32.mrf.mxu0
  %v805 = vadd.f32 %v616, %v804
  %v806 = vpop.f32.mrf.mxu0
  %807 = vmatprep.mubr.f32.mxu0 0.0
  %v808 = vand.u32 %v57, 4294901760
  %v809 = vsub.f32 %v57, %v808
  %v810 = vand.u32 %v809, 4294901760
  %811 = vmatmul.mubr.f32.gmra.mxu0 %v810
  %v812 = vpop.f32.mrf.mxu0
  %v813 = vadd.f32 %v623, %v812
  %v814 = vpop.f32.mrf.mxu0
  %815 = vmatprep.mubr.f32.mxu0 0.0
  %v816 = vand.u32 %v60, 4294901760
  %v817 = vsub.f32 %v60, %v816
  %v818 = vand.u32 %v817, 4294901760
  %819 = vmatmul.mubr.f32.gmra.mxu0 %v818
  %v820 = vpop.f32.mrf.mxu0
  %v821 = vadd.f32 %v630, %v820
  %v822 = vpop.f32.mrf.mxu0
  %823 = vmatprep.mubr.f32.mxu0 0.0
  %v824 = vand.u32 %v63, 4294901760
  %v825 = vsub.f32 %v63, %v824
  %v826 = vand.u32 %v825, 4294901760
  %827 = vmatmul.mubr.f32.gmra.mxu0 %v826
  %v828 = vpop.f32.mrf.mxu0
  %v829 = vadd.f32 %v637, %v828
  %v830 = vpop.f32.mrf.mxu0
  %831 = vmatprep.mubr.f32.mxu0 0.0
  %v832 = vand.u32 %v66, 4294901760
  %v833 = vsub.f32 %v66, %v832
  %v834 = vand.u32 %v833, 4294901760
  %835 = vmatmul.mubr.f32.gmra.mxu0 %v834
  %v836 = vpop.f32.mrf.mxu0
  %v837 = vadd.f32 %v644, %v836
  %v838 = vpop.f32.mrf.mxu0
  %839 = vmatprep.mubr.f32.mxu0 0.0
  %v840 = vand.u32 %v69, 4294901760
  %v841 = vsub.f32 %v69, %v840
  %v842 = vand.u32 %v841, 4294901760
  %843 = vmatmul.mubr.f32.gmra.mxu0 %v842
  %v844 = vpop.f32.mrf.mxu0
  %v845 = vadd.f32 %v651, %v844
  %v846 = vpop.f32.mrf.mxu0
  %847 = vmatprep.mubr.f32.mxu0 0.0
  %v848 = vand.u32 %v72, 4294901760
  %v849 = vsub.f32 %v72, %v848
  %v850 = vand.u32 %v849, 4294901760
  %851 = vmatmul.mubr.f32.gmra.mxu0 %v850
  %v852 = vpop.f32.mrf.mxu0
  %v853 = vadd.f32 %v658, %v852
  %v854 = vpop.f32.mrf.mxu0
  %855 = vmatprep.mubr.f32.mxu0 0.0
  %v856 = vand.u32 %v75, 4294901760
  %v857 = vsub.f32 %v75, %v856
  %v858 = vand.u32 %v857, 4294901760
  %859 = vmatmul.mubr.f32.gmra.mxu0 %v858
  %v860 = vpop.f32.mrf.mxu0
  %v861 = vadd.f32 %v665, %v860
  %v862 = vpop.f32.mrf.mxu0
  %863 = vmatprep.mubr.f32.mxu0 0.0
  %v864 = vand.u32 %v78, 4294901760
  %v865 = vsub.f32 %v78, %v864
  %v866 = vand.u32 %v865, 4294901760
  %867 = vmatmul.mubr.f32.gmra.mxu0 %v866
  %v868 = vpop.f32.mrf.mxu0
  %v869 = vadd.f32 %v672, %v868
  %v870 = vpop.f32.mrf.mxu0
  %871 = vdwg.mxu0
  %872 = vmatprep.subr.mxu0 0.0
  %873 = vmatpush1.msra.mxu0 0.0
  %874 = vmatprep.subr.mxu0 0.0
  %875 = vmatpush1.msra.mxu0 0.0
  %876 = vmatprep.subr.mxu0 0.0
  %877 = vmatpush1.msra.mxu0 0.0
  %878 = vmatprep.subr.mxu0 0.0
  %879 = vmatpush1.msra.mxu0 0.0
  %880 = vmatprep.subr.mxu0 0.0
  %881 = vmatpush1.msra.mxu0 0.0
  %882 = vmatprep.subr.mxu0 0.0
  %883 = vmatpush1.msra.mxu0 0.0
  %884 = vmatprep.subr.mxu0 0.0
  %885 = vmatpush1.msra.mxu0 0.0
  %886 = vmatprep.subr.mxu0 0.0
  %887 = vmatpush1.msra.mxu0 0.0
  %888 = vmatprep.subr.mxu0 0.0
  %889 = vmatpush1.msra.mxu0 0.0
  %890 = vmatprep.subr.mxu0 0.0
  %891 = vmatpush1.msra.mxu0 0.0
  %892 = vmatprep.subr.mxu0 0.0
  %893 = vmatpush1.msra.mxu0 0.0
  %894 = vmatprep.subr.mxu0 0.0
  %895 = vmatpush1.msra.mxu0 0.0
  %896 = vmatprep.subr.mxu0 0.0
  %v897 = vand.u32 %v30, 4294901760
  %v898 = vsub.f32 %v30, %v897
  %v899 = vand.u32 %v898, 4294901760
  %900 = vmatpush1.msra.mxu0 %v899
  %901 = vmatprep.subr.mxu0 0.0
  %v902 = vand.u32 %v29, 4294901760
  %v903 = vsub.f32 %v29, %v902
  %v904 = vand.u32 %v903, 4294901760
  %905 = vmatpush1.msra.mxu0 %v904
  %906 = vmatprep.subr.mxu0 0.0
  %v907 = vand.u32 %v28, 4294901760
  %v908 = vsub.f32 %v28, %v907
  %v909 = vand.u32 %v908, 4294901760
  %910 = vmatpush1.msra.mxu0 %v909
  %911 = vmatprep.subr.mxu0 0.0
  %v912 = vand.u32 %v27, 4294901760
  %v913 = vsub.f32 %v27, %v912
  %v914 = vand.u32 %v913, 4294901760
  %915 = vmatpush1.msra.mxu0 %v914
  %916 = vmatprep.subr.mxu0 0.0
  %917 = vmatpush2.msra.mxu0 0.0
  %918 = vmatprep.subr.mxu0 0.0
  %919 = vmatpush2.msra.mxu0 0.0
  %920 = vmatprep.subr.mxu0 0.0
  %921 = vmatpush2.msra.mxu0 0.0
  %922 = vmatprep.subr.mxu0 0.0
  %923 = vmatpush2.msra.mxu0 0.0
  %924 = vmatprep.subr.mxu0 0.0
  %925 = vmatpush2.msra.mxu0 0.0
  %926 = vmatprep.subr.mxu0 0.0
  %927 = vmatpush2.msra.mxu0 0.0
  %928 = vmatprep.subr.mxu0 0.0
  %929 = vmatpush2.msra.mxu0 0.0
  %930 = vmatprep.subr.mxu0 0.0
  %931 = vmatpush2.msra.mxu0 0.0
  %932 = vmatprep.subr.mxu0 0.0
  %933 = vmatpush2.msra.mxu0 0.0
  %934 = vmatprep.subr.mxu0 0.0
  %935 = vmatpush2.msra.mxu0 0.0
  %936 = vmatprep.subr.mxu0 0.0
  %937 = vmatpush2.msra.mxu0 0.0
  %938 = vmatprep.subr.mxu0 0.0
  %939 = vmatpush2.msra.mxu0 0.0
  %940 = vmatprep.subr.mxu0 0.0
  %941 = vmatpush2.msra.mxu0 0.0
  %942 = vmatprep.subr.mxu0 0.0
  %943 = vmatpush2.msra.mxu0 0.0
  %944 = vmatprep.subr.mxu0 0.0
  %945 = vmatpush2.msra.mxu0 0.0
  %946 = vmatprep.subr.mxu0 0.0
  %947 = vmatpush2.msra.mxu0 0.0
  %948 = vmatprep.mubr.f32.mxu0 0.0
  %v949 = vand.u32 %v33, 4294901760
  %950 = vmatmul.mubr.f32.gmra.mxu0 %v949
  %v951 = vpop.f32.mrf.mxu0
  %v952 = vadd.f32 %v749, %v951
  %v953 = vpop.f32.mrf.mxu0
  %954 = vmatprep.mubr.f32.mxu0 0.0
  %v955 = vand.u32 %v36, 4294901760
  %956 = vmatmul.mubr.f32.gmra.mxu0 %v955
  %v957 = vpop.f32.mrf.mxu0
  %v958 = vadd.f32 %v757, %v957
  %v959 = vpop.f32.mrf.mxu0
  %960 = vmatprep.mubr.f32.mxu0 0.0
  %v961 = vand.u32 %v39, 4294901760
  %962 = vmatmul.mubr.f32.gmra.mxu0 %v961
  %v963 = vpop.f32.mrf.mxu0
  %v964 = vadd.f32 %v765, %v963
  %v965 = vpop.f32.mrf.mxu0
  %966 = vmatprep.mubr.f32.mxu0 0.0
  %v967 = vand.u32 %v42, 4294901760
  %968 = vmatmul.mubr.f32.gmra.mxu0 %v967
  %v969 = vpop.f32.mrf.mxu0
  %v970 = vadd.f32 %v773, %v969
  %v971 = vpop.f32.mrf.mxu0
  %972 = vmatprep.mubr.f32.mxu0 0.0
  %v973 = vand.u32 %v45, 4294901760
  %974 = vmatmul.mubr.f32.gmra.mxu0 %v973
  %v975 = vpop.f32.mrf.mxu0
  %v976 = vadd.f32 %v781, %v975
  %v977 = vpop.f32.mrf.mxu0
  %978 = vmatprep.mubr.f32.mxu0 0.0
  %v979 = vand.u32 %v48, 4294901760
  %980 = vmatmul.mubr.f32.gmra.mxu0 %v979
  %v981 = vpop.f32.mrf.mxu0
  %v982 = vadd.f32 %v789, %v981
  %v983 = vpop.f32.mrf.mxu0
  %984 = vmatprep.mubr.f32.mxu0 0.0
  %v985 = vand.u32 %v51, 4294901760
  %986 = vmatmul.mubr.f32.gmra.mxu0 %v985
  %v987 = vpop.f32.mrf.mxu0
  %v988 = vadd.f32 %v797, %v987
  %v989 = vpop.f32.mrf.mxu0
  %990 = vmatprep.mubr.f32.mxu0 0.0
  %v991 = vand.u32 %v54, 4294901760
  %992 = vmatmul.mubr.f32.gmra.mxu0 %v991
  %v993 = vpop.f32.mrf.mxu0
  %v994 = vadd.f32 %v805, %v993
  %v995 = vpop.f32.mrf.mxu0
  %996 = vmatprep.mubr.f32.mxu0 0.0
  %v997 = vand.u32 %v57, 4294901760
  %998 = vmatmul.mubr.f32.gmra.mxu0 %v997
  %v999 = vpop.f32.mrf.mxu0
  %v1000 = vadd.f32 %v813, %v999
  %v1001 = vpop.f32.mrf.mxu0
  %1002 = vmatprep.mubr.f32.mxu0 0.0
  %v1003 = vand.u32 %v60, 4294901760
  %1004 = vmatmul.mubr.f32.gmra.mxu0 %v1003
  %v1005 = vpop.f32.mrf.mxu0
  %v1006 = vadd.f32 %v821, %v1005
  %v1007 = vpop.f32.mrf.mxu0
  %1008 = vmatprep.mubr.f32.mxu0 0.0
  %v1009 = vand.u32 %v63, 4294901760
  %1010 = vmatmul.mubr.f32.gmra.mxu0 %v1009
  %v1011 = vpop.f32.mrf.mxu0
  %v1012 = vadd.f32 %v829, %v1011
  %v1013 = vpop.f32.mrf.mxu0
  %1014 = vmatprep.mubr.f32.mxu0 0.0
  %v1015 = vand.u32 %v66, 4294901760
  %1016 = vmatmul.mubr.f32.gmra.mxu0 %v1015
  %v1017 = vpop.f32.mrf.mxu0
  %v1018 = vadd.f32 %v837, %v1017
  %v1019 = vpop.f32.mrf.mxu0
  %1020 = vmatprep.mubr.f32.mxu0 0.0
  %v1021 = vand.u32 %v69, 4294901760
  %1022 = vmatmul.mubr.f32.gmra.mxu0 %v1021
  %v1023 = vpop.f32.mrf.mxu0
  %v1024 = vadd.f32 %v845, %v1023
  %v1025 = vpop.f32.mrf.mxu0
  %1026 = vmatprep.mubr.f32.mxu0 0.0
  %v1027 = vand.u32 %v72, 4294901760
  %1028 = vmatmul.mubr.f32.gmra.mxu0 %v1027
  %v1029 = vpop.f32.mrf.mxu0
  %v1030 = vadd.f32 %v853, %v1029
  %v1031 = vpop.f32.mrf.mxu0
  %1032 = vmatprep.mubr.f32.mxu0 0.0
  %v1033 = vand.u32 %v75, 4294901760
  %1034 = vmatmul.mubr.f32.gmra.mxu0 %v1033
  %v1035 = vpop.f32.mrf.mxu0
  %v1036 = vadd.f32 %v861, %v1035
  %v1037 = vpop.f32.mrf.mxu0
  %1038 = vmatprep.mubr.f32.mxu0 0.0
  %v1039 = vand.u32 %v78, 4294901760
  %1040 = vmatmul.mubr.f32.gmra.mxu0 %v1039
  %v1041 = vpop.f32.mrf.mxu0
  %v1042 = vadd.f32 %v869, %v1041
  %v1043 = vpop.f32.mrf.mxu0
  %1044 = vdwg.mxu0
  %1045 = vmatprep.subr.mxu0 0.0
  %1046 = vmatpush1.msra.mxu0 0.0
  %1047 = vmatprep.subr.mxu0 0.0
  %1048 = vmatpush1.msra.mxu0 0.0
  %1049 = vmatprep.subr.mxu0 0.0
  %1050 = vmatpush1.msra.mxu0 0.0
  %1051 = vmatprep.subr.mxu0 0.0
  %1052 = vmatpush1.msra.mxu0 0.0
  %1053 = vmatprep.subr.mxu0 0.0
  %1054 = vmatpush1.msra.mxu0 0.0
  %1055 = vmatprep.subr.mxu0 0.0
  %1056 = vmatpush1.msra.mxu0 0.0
  %1057 = vmatprep.subr.mxu0 0.0
  %1058 = vmatpush1.msra.mxu0 0.0
  %1059 = vmatprep.subr.mxu0 0.0
  %1060 = vmatpush1.msra.mxu0 0.0
  %1061 = vmatprep.subr.mxu0 0.0
  %1062 = vmatpush1.msra.mxu0 0.0
  %1063 = vmatprep.subr.mxu0 0.0
  %1064 = vmatpush1.msra.mxu0 0.0
  %1065 = vmatprep.subr.mxu0 0.0
  %1066 = vmatpush1.msra.mxu0 0.0
  %1067 = vmatprep.subr.mxu0 0.0
  %1068 = vmatpush1.msra.mxu0 0.0
  %1069 = vmatprep.subr.mxu0 0.0
  %v1070 = vand.u32 %v30, 4294901760
  %1071 = vmatpush1.msra.mxu0 %v1070
  %1072 = vmatprep.subr.mxu0 0.0
  %v1073 = vand.u32 %v29, 4294901760
  %1074 = vmatpush1.msra.mxu0 %v1073
  %1075 = vmatprep.subr.mxu0 0.0
  %v1076 = vand.u32 %v28, 4294901760
  %1077 = vmatpush1.msra.mxu0 %v1076
  %1078 = vmatprep.subr.mxu0 0.0
  %v1079 = vand.u32 %v27, 4294901760
  %1080 = vmatpush1.msra.mxu0 %v1079
  %1081 = vmatprep.subr.mxu0 0.0
  %1082 = vmatpush2.msra.mxu0 0.0
  %1083 = vmatprep.subr.mxu0 0.0
  %1084 = vmatpush2.msra.mxu0 0.0
  %1085 = vmatprep.subr.mxu0 0.0
  %1086 = vmatpush2.msra.mxu0 0.0
  %1087 = vmatprep.subr.mxu0 0.0
  %1088 = vmatpush2.msra.mxu0 0.0
  %1089 = vmatprep.subr.mxu0 0.0
  %1090 = vmatpush2.msra.mxu0 0.0
  %1091 = vmatprep.subr.mxu0 0.0
  %1092 = vmatpush2.msra.mxu0 0.0
  %1093 = vmatprep.subr.mxu0 0.0
  %1094 = vmatpush2.msra.mxu0 0.0
  %1095 = vmatprep.subr.mxu0 0.0
  %1096 = vmatpush2.msra.mxu0 0.0
  %1097 = vmatprep.subr.mxu0 0.0
  %1098 = vmatpush2.msra.mxu0 0.0
  %1099 = vmatprep.subr.mxu0 0.0
  %1100 = vmatpush2.msra.mxu0 0.0
  %1101 = vmatprep.subr.mxu0 0.0
  %1102 = vmatpush2.msra.mxu0 0.0
  %1103 = vmatprep.subr.mxu0 0.0
  %1104 = vmatpush2.msra.mxu0 0.0
  %1105 = vmatprep.subr.mxu0 0.0
  %1106 = vmatpush2.msra.mxu0 0.0
  %1107 = vmatprep.subr.mxu0 0.0
  %1108 = vmatpush2.msra.mxu0 0.0
  %1109 = vmatprep.subr.mxu0 0.0
  %1110 = vmatpush2.msra.mxu0 0.0
  %1111 = vmatprep.subr.mxu0 0.0
  %1112 = vmatpush2.msra.mxu0 0.0
  %1113 = vmatprep.mubr.f32.mxu0 0.0
  %v1114 = vand.u32 %v33, 4294901760
  %1115 = vmatmul.mubr.f32.gmra.mxu0 %v1114
  %v1116 = vpop.f32.mrf.mxu0
  %v1117 = vadd.f32 %v952, %v1116
  %v1118 = vpop.f32.mrf.mxu0
  %1119 = vmatprep.mubr.f32.mxu0 0.0
  %v1120 = vand.u32 %v36, 4294901760
  %1121 = vmatmul.mubr.f32.gmra.mxu0 %v1120
  %v1122 = vpop.f32.mrf.mxu0
  %v1123 = vadd.f32 %v958, %v1122
  %v1124 = vpop.f32.mrf.mxu0
  %1125 = vmatprep.mubr.f32.mxu0 0.0
  %v1126 = vand.u32 %v39, 4294901760
  %1127 = vmatmul.mubr.f32.gmra.mxu0 %v1126
  %v1128 = vpop.f32.mrf.mxu0
  %v1129 = vadd.f32 %v964, %v1128
  %v1130 = vpop.f32.mrf.mxu0
  %1131 = vmatprep.mubr.f32.mxu0 0.0
  %v1132 = vand.u32 %v42, 4294901760
  %1133 = vmatmul.mubr.f32.gmra.mxu0 %v1132
  %v1134 = vpop.f32.mrf.mxu0
  %v1135 = vadd.f32 %v970, %v1134
  %v1136 = vpop.f32.mrf.mxu0
  %1137 = vmatprep.mubr.f32.mxu0 0.0
  %v1138 = vand.u32 %v45, 4294901760
  %1139 = vmatmul.mubr.f32.gmra.mxu0 %v1138
  %v1140 = vpop.f32.mrf.mxu0
  %v1141 = vadd.f32 %v976, %v1140
  %v1142 = vpop.f32.mrf.mxu0
  %1143 = vmatprep.mubr.f32.mxu0 0.0
  %v1144 = vand.u32 %v48, 4294901760
  %1145 = vmatmul.mubr.f32.gmra.mxu0 %v1144
  %v1146 = vpop.f32.mrf.mxu0
  %v1147 = vadd.f32 %v982, %v1146
  %v1148 = vpop.f32.mrf.mxu0
  %1149 = vmatprep.mubr.f32.mxu0 0.0
  %v1150 = vand.u32 %v51, 4294901760
  %1151 = vmatmul.mubr.f32.gmra.mxu0 %v1150
  %v1152 = vpop.f32.mrf.mxu0
  %v1153 = vadd.f32 %v988, %v1152
  %v1154 = vpop.f32.mrf.mxu0
  %1155 = vmatprep.mubr.f32.mxu0 0.0
  %v1156 = vand.u32 %v54, 4294901760
  %1157 = vmatmul.mubr.f32.gmra.mxu0 %v1156
  %v1158 = vpop.f32.mrf.mxu0
  %v1159 = vadd.f32 %v994, %v1158
  %v1160 = vpop.f32.mrf.mxu0
  %1161 = vmatprep.mubr.f32.mxu0 0.0
  %v1162 = vand.u32 %v57, 4294901760
  %1163 = vmatmul.mubr.f32.gmra.mxu0 %v1162
  %v1164 = vpop.f32.mrf.mxu0
  %v1165 = vadd.f32 %v1000, %v1164
  %v1166 = vpop.f32.mrf.mxu0
  %1167 = vmatprep.mubr.f32.mxu0 0.0
  %v1168 = vand.u32 %v60, 4294901760
  %1169 = vmatmul.mubr.f32.gmra.mxu0 %v1168
  %v1170 = vpop.f32.mrf.mxu0
  %v1171 = vadd.f32 %v1006, %v1170
  %v1172 = vpop.f32.mrf.mxu0
  %1173 = vmatprep.mubr.f32.mxu0 0.0
  %v1174 = vand.u32 %v63, 4294901760
  %1175 = vmatmul.mubr.f32.gmra.mxu0 %v1174
  %v1176 = vpop.f32.mrf.mxu0
  %v1177 = vadd.f32 %v1012, %v1176
  %v1178 = vpop.f32.mrf.mxu0
  %1179 = vmatprep.mubr.f32.mxu0 0.0
  %v1180 = vand.u32 %v66, 4294901760
  %1181 = vmatmul.mubr.f32.gmra.mxu0 %v1180
  %v1182 = vpop.f32.mrf.mxu0
  %v1183 = vadd.f32 %v1018, %v1182
  %v1184 = vpop.f32.mrf.mxu0
  %1185 = vmatprep.mubr.f32.mxu0 0.0
  %v1186 = vand.u32 %v69, 4294901760
  %1187 = vmatmul.mubr.f32.gmra.mxu0 %v1186
  %v1188 = vpop.f32.mrf.mxu0
  %v1189 = vadd.f32 %v1024, %v1188
  %v1190 = vpop.f32.mrf.mxu0
  %1191 = vmatprep.mubr.f32.mxu0 0.0
  %v1192 = vand.u32 %v72, 4294901760
  %1193 = vmatmul.mubr.f32.gmra.mxu0 %v1192
  %v1194 = vpop.f32.mrf.mxu0
  %v1195 = vadd.f32 %v1030, %v1194
  %v1196 = vpop.f32.mrf.mxu0
  %1197 = vmatprep.mubr.f32.mxu0 0.0
  %v1198 = vand.u32 %v75, 4294901760
  %1199 = vmatmul.mubr.f32.gmra.mxu0 %v1198
  %v1200 = vpop.f32.mrf.mxu0
  %v1201 = vadd.f32 %v1036, %v1200
  %v1202 = vpop.f32.mrf.mxu0
  %1203 = vmatprep.mubr.f32.mxu0 0.0
  %v1204 = vand.u32 %v78, 4294901760
  %1205 = vmatmul.mubr.f32.gmra.mxu0 %v1204
  %v1206 = vpop.f32.mrf.mxu0
  %v1207 = vadd.f32 %v1042, %v1206
  %v1208 = vpop.f32.mrf.mxu0
  %1209 = vdwg.mxu0
  %vm1210 = vcmask 523264
  %1211 = vst.msk [vmem:[%s2] sm:$0xff] %vm1210, %v1117
  %1212 = vst.msk [vmem:[%s2 + $0x8] sm:$0xff] %vm1210, %v1123
  %1213 = vst.msk [vmem:[%s2 + $0x10] sm:$0xff] %vm1210, %v1129
  %1214 = vst.msk [vmem:[%s2 + $0x18] sm:$0xff] %vm1210, %v1135
  %1215 = vst.msk [vmem:[%s2 + $0x20] sm:$0xff] %vm1210, %v1141
  %1216 = vst.msk [vmem:[%s2 + $0x28] sm:$0xff] %vm1210, %v1147
  %1217 = vst.msk [vmem:[%s2 + $0x30] sm:$0xff] %vm1210, %v1153
  %1218 = vst.msk [vmem:[%s2 + $0x38] sm:$0xff] %vm1210, %v1159
  %1219 = vst.msk [vmem:[%s2 + $0x40] sm:$0xff] %vm1210, %v1165
  %1220 = vst.msk [vmem:[%s2 + $0x48] sm:$0xff] %vm1210, %v1171
  %1221 = vst.msk [vmem:[%s2 + $0x50] sm:$0xff] %vm1210, %v1177
  %1222 = vst.msk [vmem:[%s2 + $0x58] sm:$0xff] %vm1210, %v1183
  %1223 = vst.msk [vmem:[%s2 + $0x60] sm:$0xff] %vm1210, %v1189
  %1224 = vst.msk [vmem:[%s2 + $0x68] sm:$0xff] %vm1210, %v1195
  %1225 = vst.msk [vmem:[%s2 + $0x70] sm:$0xff] %vm1210, %v1201
  %1226 = vst.msk [vmem:[%s2 + $0x78] sm:$0xff] %vm1210, %v1207
  // Predicated region
  $region10: #{gae_forward.5} parent=0 // pred_check
    _
  $region11: #{gae_forward.5} parent=0 // pred_check_branch
    %1228 = sbr.rel (0) target = $region13
  $region12: #{gae_forward.5} parent=0 // pred_region
    _
  $region13: #{gae_forward.5} parent=0 // pred_fallthru
    _
  // Predicated region
  $region14: #{gae_forward.5} parent=0 // pred_check
    _
  $region15: #{gae_forward.5} parent=0 // pred_check_branch
    %1230 = sbr.rel (0) target = $region17
  $region16: #{gae_forward.5} parent=0 // pred_region
    _
  $region17: #{gae_forward.5} parent=0 // pred_fallthru
    _

// kernel: gae_forward.7
$region0: #{gae_forward.7}
  #allocation0 [shape = 'u32[]', space=smem, size = 0x4, offset = 0x4, fixed_abs, tag = 'smem constant byte address 0x4 - core index']
  #allocation1 [shape = 'u32[144,128]{1,0:T(1,128)}', space=vmem, size = 0x12000, scoped, tag = 'internal scratch']
  %s0 = inlined_call_operand.vmem [shape: f32[128,64], index: 0, kind: input, shape index: {}]
  %s1 = inlined_call_operand.vmem [shape: f32[64,16], index: 1, kind: input, shape index: {}]
  %s2 = inlined_call_operand.vmem [shape: f32[128,16], index: 2, kind: output, shape index: {}]
  %s3 = sld [smem:[#allocation0]]
  $region18: #{gae_forward.7} parent=0
    _
  %s5 = ssub.s32 1, %s3
  %s6 = scalar_select 0, %s5, %s3
  // Predicated region
  $region2: #{gae_forward.7} parent=0 // pred_check
    _
  $region3: #{gae_forward.7} parent=0 // pred_check_branch
    %8 = sbr.rel (0) target = $region5
  $region4: #{gae_forward.7} parent=0 // pred_region
    _
  $region5: #{gae_forward.7} parent=0 // pred_fallthru
    _
  // Predicated region
  $region6: #{gae_forward.7} parent=0 // pred_check
    _
  $region7: #{gae_forward.7} parent=0 // pred_check_branch
    %10 = sbr.rel (0) target = $region9
  $region8: #{gae_forward.7} parent=0 // pred_region
    _
  $region9: #{gae_forward.7} parent=0 // pred_fallthru
    _
  %v11 = vld [vmem:[%s0] sm:$0xff]
  %v12 = vld [vmem:[%s0 + $0x8] sm:$0xff]
  %v13 = vld [vmem:[%s0 + $0x10] sm:$0xff]
  %v14 = vld [vmem:[%s0 + $0x18] sm:$0xff]
  %v15 = vld [vmem:[%s0 + $0x20] sm:$0xff]
  %v16 = vld [vmem:[%s0 + $0x28] sm:$0xff]
  %v17 = vld [vmem:[%s0 + $0x30] sm:$0xff]
  %v18 = vld [vmem:[%s0 + $0x38] sm:$0xff]
  %v19 = vld [vmem:[%s0 + $0x40] sm:$0xff]
  %v20 = vld [vmem:[%s0 + $0x48] sm:$0xff]
  %v21 = vld [vmem:[%s0 + $0x50] sm:$0xff]
  %v22 = vld [vmem:[%s0 + $0x58] sm:$0xff]
  %v23 = vld [vmem:[%s0 + $0x60] sm:$0xff]
  %v24 = vld [vmem:[%s0 + $0x68] sm:$0xff]
  %v25 = vld [vmem:[%s0 + $0x70] sm:$0xff]
  %v26 = vld [vmem:[%s0 + $0x78] sm:$0xff]
  %v27 = vld [vmem:[%s1] sm:$0xff]
  %v28 = vld [vmem:[%s1 + $0x8] sm:$0xff]
  %v29 = vld [vmem:[%s1 + $0x10] sm:$0xff]
  %v30 = vld [vmem:[%s1 + $0x18] sm:$0xff]
  %v31 = vld [vmem:[%s1 + $0x20] sm:$0xff]
  %v32 = vld [vmem:[%s1 + $0x28] sm:$0xff]
  %v33 = vld [vmem:[%s1 + $0x30] sm:$0xff]
  %v34 = vld [vmem:[%s1 + $0x38] sm:$0xff]
  %vm35 = vcmask 523264
  %v37 = vsel %vm35, %v11, 0
  %v40 = vsel %vm35, %v12, 0
  %v43 = vsel %vm35, %v13, 0
  %v46 = vsel %vm35, %v14, 0
  %v49 = vsel %vm35, %v15, 0
  %v52 = vsel %vm35, %v16, 0
  %v55 = vsel %vm35, %v17, 0
  %v58 = vsel %vm35, %v18, 0
  %v61 = vsel %vm35, %v19, 0
  %v64 = vsel %vm35, %v20, 0
  %v67 = vsel %vm35, %v21, 0
  %v70 = vsel %vm35, %v22, 0
  %v73 = vsel %vm35, %v23, 0
  %v76 = vsel %vm35, %v24, 0
  %v79 = vsel %vm35, %v25, 0
  %v82 = vsel %vm35, %v26, 0
  %84 = vmatprep.subr.mxu0 0.0
  %85 = vmatpush1.msra.mxu0 0.0
  %86 = vmatprep.subr.mxu0 0.0
  %87 = vmatpush1.msra.mxu0 0.0
  %88 = vmatprep.subr.mxu0 0.0
  %89 = vmatpush1.msra.mxu0 0.0
  %90 = vmatprep.subr.mxu0 0.0
  %91 = vmatpush1.msra.mxu0 0.0
  %92 = vmatprep.subr.mxu0 0.0
  %93 = vmatpush1.msra.mxu0 0.0
  %94 = vmatprep.subr.mxu0 0.0
  %95 = vmatpush1.msra.mxu0 0.0
  %96 = vmatprep.subr.mxu0 0.0
  %97 = vmatpush1.msra.mxu0 0.0
  %98 = vmatprep.subr.mxu0 0.0
  %99 = vmatpush1.msra.mxu0 0.0
  %100 = vmatprep.subr.mxu0 0.0
  %v101 = vand.u32 %v34, 4294901760
  %102 = vmatpush1.msra.mxu0 %v101
  %103 = vmatprep.subr.mxu0 0.0
  %v104 = vand.u32 %v33, 4294901760
  %105 = vmatpush1.msra.mxu0 %v104
  %106 = vmatprep.subr.mxu0 0.0
  %v107 = vand.u32 %v32, 4294901760
  %108 = vmatpush1.msra.mxu0 %v107
  %109 = vmatprep.subr.mxu0 0.0
  %v110 = vand.u32 %v31, 4294901760
  %111 = vmatpush1.msra.mxu0 %v110
  %112 = vmatprep.subr.mxu0 0.0
  %v113 = vand.u32 %v30, 4294901760
  %114 = vmatpush1.msra.mxu0 %v113
  %115 = vmatprep.subr.mxu0 0.0
  %v116 = vand.u32 %v29, 4294901760
  %117 = vmatpush1.msra.mxu0 %v116
  %118 = vmatprep.subr.mxu0 0.0
  %v119 = vand.u32 %v28, 4294901760
  %120 = vmatpush1.msra.mxu0 %v119
  %121 = vmatprep.subr.mxu0 0.0
  %v122 = vand.u32 %v27, 4294901760
  %123 = vmatpush1.msra.mxu0 %v122
  %124 = vmatprep.subr.mxu0 0.0
  %125 = vmatpush2.msra.mxu0 0.0
  %126 = vmatprep.subr.mxu0 0.0
  %127 = vmatpush2.msra.mxu0 0.0
  %128 = vmatprep.subr.mxu0 0.0
  %129 = vmatpush2.msra.mxu0 0.0
  %130 = vmatprep.subr.mxu0 0.0
  %131 = vmatpush2.msra.mxu0 0.0
  %132 = vmatprep.subr.mxu0 0.0
  %133 = vmatpush2.msra.mxu0 0.0
  %134 = vmatprep.subr.mxu0 0.0
  %135 = vmatpush2.msra.mxu0 0.0
  %136 = vmatprep.subr.mxu0 0.0
  %137 = vmatpush2.msra.mxu0 0.0
  %138 = vmatprep.subr.mxu0 0.0
  %139 = vmatpush2.msra.mxu0 0.0
  %140 = vmatprep.subr.mxu0 0.0
  %141 = vmatpush2.msra.mxu0 0.0
  %142 = vmatprep.subr.mxu0 0.0
  %143 = vmatpush2.msra.mxu0 0.0
  %144 = vmatprep.subr.mxu0 0.0
  %145 = vmatpush2.msra.mxu0 0.0
  %146 = vmatprep.subr.mxu0 0.0
  %147 = vmatpush2.msra.mxu0 0.0
  %148 = vmatprep.subr.mxu0 0.0
  %149 = vmatpush2.msra.mxu0 0.0
  %150 = vmatprep.subr.mxu0 0.0
  %151 = vmatpush2.msra.mxu0 0.0
  %152 = vmatprep.subr.mxu0 0.0
  %153 = vmatpush2.msra.mxu0 0.0
  %154 = vmatprep.subr.mxu0 0.0
  %155 = vmatpush2.msra.mxu0 0.0
  %156 = vmatprep.mubr.f32.mxu0 0.0
  %v157 = vand.u32 %v37, 4294901760
  %v158 = vsub.f32 %v37, %v157
  %v159 = vand.u32 %v158, 4294901760
  %v160 = vsub.f32 %v158, %v159
  %v161 = vand.u32 %v160, 4294901760
  %162 = vmatmul.mubr.f32.gmra.mxu0 %v161
  %v163 = vpop.f32.mrf.mxu0
  %v164 = vadd.f32 0.0, %v163
  %v165 = vpop.f32.mrf.mxu0
  %166 = vmatprep.mubr.f32.mxu0 0.0
  %v167 = vand.u32 %v40, 4294901760
  %v168 = vsub.f32 %v40, %v167
  %v169 = vand.u32 %v168, 4294901760
  %v170 = vsub.f32 %v168, %v169
  %v171 = vand.u32 %v170, 4294901760
  %172 = vmatmul.mubr.f32.gmra.mxu0 %v171
  %v173 = vpop.f32.mrf.mxu0
  %v174 = vadd.f32 0.0, %v173
  %v175 = vpop.f32.mrf.mxu0
  %176 = vmatprep.mubr.f32.mxu0 0.0
  %v177 = vand.u32 %v43, 4294901760
  %v178 = vsub.f32 %v43, %v177
  %v179 = vand.u32 %v178, 4294901760
  %v180 = vsub.f32 %v178, %v179
  %v181 = vand.u32 %v180, 4294901760
  %182 = vmatmul.mubr.f32.gmra.mxu0 %v181
  %v183 = vpop.f32.mrf.mxu0
  %v184 = vadd.f32 0.0, %v183
  %v185 = vpop.f32.mrf.mxu0
  %186 = vmatprep.mubr.f32.mxu0 0.0
  %v187 = vand.u32 %v46, 4294901760
  %v188 = vsub.f32 %v46, %v187
  %v189 = vand.u32 %v188, 4294901760
  %v190 = vsub.f32 %v188, %v189
  %v191 = vand.u32 %v190, 4294901760
  %192 = vmatmul.mubr.f32.gmra.mxu0 %v191
  %v193 = vpop.f32.mrf.mxu0
  %v194 = vadd.f32 0.0, %v193
  %v195 = vpop.f32.mrf.mxu0
  %196 = vmatprep.mubr.f32.mxu0 0.0
  %v197 = vand.u32 %v49, 4294901760
  %v198 = vsub.f32 %v49, %v197
  %v199 = vand.u32 %v198, 4294901760
  %v200 = vsub.f32 %v198, %v199
  %v201 = vand.u32 %v200, 4294901760
  %202 = vmatmul.mubr.f32.gmra.mxu0 %v201
  %v203 = vpop.f32.mrf.mxu0
  %v204 = vadd.f32 0.0, %v203
  %v205 = vpop.f32.mrf.mxu0
  %206 = vmatprep.mubr.f32.mxu0 0.0
  %v207 = vand.u32 %v52, 4294901760
  %v208 = vsub.f32 %v52, %v207
  %v209 = vand.u32 %v208, 4294901760
  %v210 = vsub.f32 %v208, %v209
  %v211 = vand.u32 %v210, 4294901760
  %212 = vmatmul.mubr.f32.gmra.mxu0 %v211
  %v213 = vpop.f32.mrf.mxu0
  %v214 = vadd.f32 0.0, %v213
  %v215 = vpop.f32.mrf.mxu0
  %216 = vmatprep.mubr.f32.mxu0 0.0
  %v217 = vand.u32 %v55, 4294901760
  %v218 = vsub.f32 %v55, %v217
  %v219 = vand.u32 %v218, 4294901760
  %v220 = vsub.f32 %v218, %v219
  %v221 = vand.u32 %v220, 4294901760
  %222 = vmatmul.mubr.f32.gmra.mxu0 %v221
  %v223 = vpop.f32.mrf.mxu0
  %v224 = vadd.f32 0.0, %v223
  %v225 = vpop.f32.mrf.mxu0
  %226 = vmatprep.mubr.f32.mxu0 0.0
  %v227 = vand.u32 %v58, 4294901760
  %v228 = vsub.f32 %v58, %v227
  %v229 = vand.u32 %v228, 4294901760
  %v230 = vsub.f32 %v228, %v229
  %v231 = vand.u32 %v230, 4294901760
  %232 = vmatmul.mubr.f32.gmra.mxu0 %v231
  %v233 = vpop.f32.mrf.mxu0
  %v234 = vadd.f32 0.0, %v233
  %v235 = vpop.f32.mrf.mxu0
  %236 = vmatprep.mubr.f32.mxu0 0.0
  %v237 = vand.u32 %v61, 4294901760
  %v238 = vsub.f32 %v61, %v237
  %v239 = vand.u32 %v238, 4294901760
  %v240 = vsub.f32 %v238, %v239
  %v241 = vand.u32 %v240, 4294901760
  %242 = vmatmul.mubr.f32.gmra.mxu0 %v241
  %v243 = vpop.f32.mrf.mxu0
  %v244 = vadd.f32 0.0, %v243
  %v245 = vpop.f32.mrf.mxu0
  %246 = vmatprep.mubr.f32.mxu0 0.0
  %v247 = vand.u32 %v64, 4294901760
  %v248 = vsub.f32 %v64, %v247
  %v249 = vand.u32 %v248, 4294901760
  %v250 = vsub.f32 %v248, %v249
  %v251 = vand.u32 %v250, 4294901760
  %252 = vmatmul.mubr.f32.gmra.mxu0 %v251
  %v253 = vpop.f32.mrf.mxu0
  %v254 = vadd.f32 0.0, %v253
  %v255 = vpop.f32.mrf.mxu0
  %256 = vmatprep.mubr.f32.mxu0 0.0
  %v257 = vand.u32 %v67, 4294901760
  %v258 = vsub.f32 %v67, %v257
  %v259 = vand.u32 %v258, 4294901760
  %v260 = vsub.f32 %v258, %v259
  %v261 = vand.u32 %v260, 4294901760
  %262 = vmatmul.mubr.f32.gmra.mxu0 %v261
  %v263 = vpop.f32.mrf.mxu0
  %v264 = vadd.f32 0.0, %v263
  %v265 = vpop.f32.mrf.mxu0
  %266 = vmatprep.mubr.f32.mxu0 0.0
  %v267 = vand.u32 %v70, 4294901760
  %v268 = vsub.f32 %v70, %v267
  %v269 = vand.u32 %v268, 4294901760
  %v270 = vsub.f32 %v268, %v269
  %v271 = vand.u32 %v270, 4294901760
  %272 = vmatmul.mubr.f32.gmra.mxu0 %v271
  %v273 = vpop.f32.mrf.mxu0
  %v274 = vadd.f32 0.0, %v273
  %v275 = vpop.f32.mrf.mxu0
  %276 = vmatprep.mubr.f32.mxu0 0.0
  %v277 = vand.u32 %v73, 4294901760
  %v278 = vsub.f32 %v73, %v277
  %v279 = vand.u32 %v278, 4294901760
  %v280 = vsub.f32 %v278, %v279
  %v281 = vand.u32 %v280, 4294901760
  %282 = vmatmul.mubr.f32.gmra.mxu0 %v281
  %v283 = vpop.f32.mrf.mxu0
  %v284 = vadd.f32 0.0, %v283
  %v285 = vpop.f32.mrf.mxu0
  %286 = vmatprep.mubr.f32.mxu0 0.0
  %v287 = vand.u32 %v76, 4294901760
  %v288 = vsub.f32 %v76, %v287
  %v289 = vand.u32 %v288, 4294901760
  %v290 = vsub.f32 %v288, %v289
  %v291 = vand.u32 %v290, 4294901760
  %292 = vmatmul.mubr.f32.gmra.mxu0 %v291
  %v293 = vpop.f32.mrf.mxu0
  %v294 = vadd.f32 0.0, %v293
  %v295 = vpop.f32.mrf.mxu0
  %296 = vmatprep.mubr.f32.mxu0 0.0
  %v297 = vand.u32 %v79, 4294901760
  %v298 = vsub.f32 %v79, %v297
  %v299 = vand.u32 %v298, 4294901760
  %v300 = vsub.f32 %v298, %v299
  %v301 = vand.u32 %v300, 4294901760
  %302 = vmatmul.mubr.f32.gmra.mxu0 %v301
  %v303 = vpop.f32.mrf.mxu0
  %v304 = vadd.f32 0.0, %v303
  %v305 = vpop.f32.mrf.mxu0
  %306 = vmatprep.mubr.f32.mxu0 0.0
  %v307 = vand.u32 %v82, 4294901760
  %v308 = vsub.f32 %v82, %v307
  %v309 = vand.u32 %v308, 4294901760
  %v310 = vsub.f32 %v308, %v309
  %v311 = vand.u32 %v310, 4294901760
  %312 = vmatmul.mubr.f32.gmra.mxu0 %v311
  %v313 = vpop.f32.mrf.mxu0
  %v314 = vadd.f32 0.0, %v313
  %v315 = vpop.f32.mrf.mxu0
  %316 = vdwg.mxu0
  %317 = vmatprep.subr.mxu0 0.0
  %318 = vmatpush1.msra.mxu0 0.0
  %319 = vmatprep.subr.mxu0 0.0
  %320 = vmatpush1.msra.mxu0 0.0
  %321 = vmatprep.subr.mxu0 0.0
  %322 = vmatpush1.msra.mxu0 0.0
  %323 = vmatprep.subr.mxu0 0.0
  %324 = vmatpush1.msra.mxu0 0.0
  %325 = vmatprep.subr.mxu0 0.0
  %326 = vmatpush1.msra.mxu0 0.0
  %327 = vmatprep.subr.mxu0 0.0
  %328 = vmatpush1.msra.mxu0 0.0
  %329 = vmatprep.subr.mxu0 0.0
  %330 = vmatpush1.msra.mxu0 0.0
  %331 = vmatprep.subr.mxu0 0.0
  %332 = vmatpush1.msra.mxu0 0.0
  %333 = vmatprep.subr.mxu0 0.0
  %v334 = vand.u32 %v34, 4294901760
  %v335 = vsub.f32 %v34, %v334
  %v336 = vand.u32 %v335, 4294901760
  %v337 = vsub.f32 %v335, %v336
  %v338 = vand.u32 %v337, 4294901760
  %339 = vmatpush1.msra.mxu0 %v338
  %340 = vmatprep.subr.mxu0 0.0
  %v341 = vand.u32 %v33, 4294901760
  %v342 = vsub.f32 %v33, %v341
  %v343 = vand.u32 %v342, 4294901760
  %v344 = vsub.f32 %v342, %v343
  %v345 = vand.u32 %v344, 4294901760
  %346 = vmatpush1.msra.mxu0 %v345
  %347 = vmatprep.subr.mxu0 0.0
  %v348 = vand.u32 %v32, 4294901760
  %v349 = vsub.f32 %v32, %v348
  %v350 = vand.u32 %v349, 4294901760
  %v351 = vsub.f32 %v349, %v350
  %v352 = vand.u32 %v351, 4294901760
  %353 = vmatpush1.msra.mxu0 %v352
  %354 = vmatprep.subr.mxu0 0.0
  %v355 = vand.u32 %v31, 4294901760
  %v356 = vsub.f32 %v31, %v355
  %v357 = vand.u32 %v356, 4294901760
  %v358 = vsub.f32 %v356, %v357
  %v359 = vand.u32 %v358, 4294901760
  %360 = vmatpush1.msra.mxu0 %v359
  %361 = vmatprep.subr.mxu0 0.0
  %v362 = vand.u32 %v30, 4294901760
  %v363 = vsub.f32 %v30, %v362
  %v364 = vand.u32 %v363, 4294901760
  %v365 = vsub.f32 %v363, %v364
  %v366 = vand.u32 %v365, 4294901760
  %367 = vmatpush1.msra.mxu0 %v366
  %368 = vmatprep.subr.mxu0 0.0
  %v369 = vand.u32 %v29, 4294901760
  %v370 = vsub.f32 %v29, %v369
  %v371 = vand.u32 %v370, 4294901760
  %v372 = vsub.f32 %v370, %v371
  %v373 = vand.u32 %v372, 4294901760
  %374 = vmatpush1.msra.mxu0 %v373
  %375 = vmatprep.subr.mxu0 0.0
  %v376 = vand.u32 %v28, 4294901760
  %v377 = vsub.f32 %v28, %v376
  %v378 = vand.u32 %v377, 4294901760
  %v379 = vsub.f32 %v377, %v378
  %v380 = vand.u32 %v379, 4294901760
  %381 = vmatpush1.msra.mxu0 %v380
  %382 = vmatprep.subr.mxu0 0.0
  %v383 = vand.u32 %v27, 4294901760
  %v384 = vsub.f32 %v27, %v383
  %v385 = vand.u32 %v384, 4294901760
  %v386 = vsub.f32 %v384, %v385
  %v387 = vand.u32 %v386, 4294901760
  %388 = vmatpush1.msra.mxu0 %v387
  %389 = vmatprep.subr.mxu0 0.0
  %390 = vmatpush2.msra.mxu0 0.0
  %391 = vmatprep.subr.mxu0 0.0
  %392 = vmatpush2.msra.mxu0 0.0
  %393 = vmatprep.subr.mxu0 0.0
  %394 = vmatpush2.msra.mxu0 0.0
  %395 = vmatprep.subr.mxu0 0.0
  %396 = vmatpush2.msra.mxu0 0.0
  %397 = vmatprep.subr.mxu0 0.0
  %398 = vmatpush2.msra.mxu0 0.0
  %399 = vmatprep.subr.mxu0 0.0
  %400 = vmatpush2.msra.mxu0 0.0
  %401 = vmatprep.subr.mxu0 0.0
  %402 = vmatpush2.msra.mxu0 0.0
  %403 = vmatprep.subr.mxu0 0.0
  %404 = vmatpush2.msra.mxu0 0.0
  %405 = vmatprep.subr.mxu0 0.0
  %406 = vmatpush2.msra.mxu0 0.0
  %407 = vmatprep.subr.mxu0 0.0
  %408 = vmatpush2.msra.mxu0 0.0
  %409 = vmatprep.subr.mxu0 0.0
  %410 = vmatpush2.msra.mxu0 0.0
  %411 = vmatprep.subr.mxu0 0.0
  %412 = vmatpush2.msra.mxu0 0.0
  %413 = vmatprep.subr.mxu0 0.0
  %414 = vmatpush2.msra.mxu0 0.0
  %415 = vmatprep.subr.mxu0 0.0
  %416 = vmatpush2.msra.mxu0 0.0
  %417 = vmatprep.subr.mxu0 0.0
  %418 = vmatpush2.msra.mxu0 0.0
  %419 = vmatprep.subr.mxu0 0.0
  %420 = vmatpush2.msra.mxu0 0.0
  %421 = vmatprep.mubr.f32.mxu0 0.0
  %v422 = vand.u32 %v37, 4294901760
  %423 = vmatmul.mubr.f32.gmra.mxu0 %v422
  %v424 = vpop.f32.mrf.mxu0
  %v425 = vadd.f32 %v164, %v424
  %v426 = vpop.f32.mrf.mxu0
  %427 = vmatprep.mubr.f32.mxu0 0.0
  %v428 = vand.u32 %v40, 4294901760
  %429 = vmatmul.mubr.f32.gmra.mxu0 %v428
  %v430 = vpop.f32.mrf.mxu0
  %v431 = vadd.f32 %v174, %v430
  %v432 = vpop.f32.mrf.mxu0
  %433 = vmatprep.mubr.f32.mxu0 0.0
  %v434 = vand.u32 %v43, 4294901760
  %435 = vmatmul.mubr.f32.gmra.mxu0 %v434
  %v436 = vpop.f32.mrf.mxu0
  %v437 = vadd.f32 %v184, %v436
  %v438 = vpop.f32.mrf.mxu0
  %439 = vmatprep.mubr.f32.mxu0 0.0
  %v440 = vand.u32 %v46, 4294901760
  %441 = vmatmul.mubr.f32.gmra.mxu0 %v440
  %v442 = vpop.f32.mrf.mxu0
  %v443 = vadd.f32 %v194, %v442
  %v444 = vpop.f32.mrf.mxu0
  %445 = vmatprep.mubr.f32.mxu0 0.0
  %v446 = vand.u32 %v49, 4294901760
  %447 = vmatmul.mubr.f32.gmra.mxu0 %v446
  %v448 = vpop.f32.mrf.mxu0
  %v449 = vadd.f32 %v204, %v448
  %v450 = vpop.f32.mrf.mxu0
  %451 = vmatprep.mubr.f32.mxu0 0.0
  %v452 = vand.u32 %v52, 4294901760
  %453 = vmatmul.mubr.f32.gmra.mxu0 %v452
  %v454 = vpop.f32.mrf.mxu0
  %v455 = vadd.f32 %v214, %v454
  %v456 = vpop.f32.mrf.mxu0
  %457 = vmatprep.mubr.f32.mxu0 0.0
  %v458 = vand.u32 %v55, 4294901760
  %459 = vmatmul.mubr.f32.gmra.mxu0 %v458
  %v460 = vpop.f32.mrf.mxu0
  %v461 = vadd.f32 %v224, %v460
  %v462 = vpop.f32.mrf.mxu0
  %463 = vmatprep.mubr.f32.mxu0 0.0
  %v464 = vand.u32 %v58, 4294901760
  %465 = vmatmul.mubr.f32.gmra.mxu0 %v464
  %v466 = vpop.f32.mrf.mxu0
  %v467 = vadd.f32 %v234, %v466
  %v468 = vpop.f32.mrf.mxu0
  %469 = vmatprep.mubr.f32.mxu0 0.0
  %v470 = vand.u32 %v61, 4294901760
  %471 = vmatmul.mubr.f32.gmra.mxu0 %v470
  %v472 = vpop.f32.mrf.mxu0
  %v473 = vadd.f32 %v244, %v472
  %v474 = vpop.f32.mrf.mxu0
  %475 = vmatprep.mubr.f32.mxu0 0.0
  %v476 = vand.u32 %v64, 4294901760
  %477 = vmatmul.mubr.f32.gmra.mxu0 %v476
  %v478 = vpop.f32.mrf.mxu0
  %v479 = vadd.f32 %v254, %v478
  %v480 = vpop.f32.mrf.mxu0
  %481 = vmatprep.mubr.f32.mxu0 0.0
  %v482 = vand.u32 %v67, 4294901760
  %483 = vmatmul.mubr.f32.gmra.mxu0 %v482
  %v484 = vpop.f32.mrf.mxu0
  %v485 = vadd.f32 %v264, %v484
  %v486 = vpop.f32.mrf.mxu0
  %487 = vmatprep.mubr.f32.mxu0 0.0
  %v488 = vand.u32 %v70, 4294901760
  %489 = vmatmul.mubr.f32.gmra.mxu0 %v488
  %v490 = vpop.f32.mrf.mxu0
  %v491 = vadd.f32 %v274, %v490
  %v492 = vpop.f32.mrf.mxu0
  %493 = vmatprep.mubr.f32.mxu0 0.0
  %v494 = vand.u32 %v73, 4294901760
  %495 = vmatmul.mubr.f32.gmra.mxu0 %v494
  %v496 = vpop.f32.mrf.mxu0
  %v497 = vadd.f32 %v284, %v496
  %v498 = vpop.f32.mrf.mxu0
  %499 = vmatprep.mubr.f32.mxu0 0.0
  %v500 = vand.u32 %v76, 4294901760
  %501 = vmatmul.mubr.f32.gmra.mxu0 %v500
  %v502 = vpop.f32.mrf.mxu0
  %v503 = vadd.f32 %v294, %v502
  %v504 = vpop.f32.mrf.mxu0
  %505 = vmatprep.mubr.f32.mxu0 0.0
  %v506 = vand.u32 %v79, 4294901760
  %507 = vmatmul.mubr.f32.gmra.mxu0 %v506
  %v508 = vpop.f32.mrf.mxu0
  %v509 = vadd.f32 %v304, %v508
  %v510 = vpop.f32.mrf.mxu0
  %511 = vmatprep.mubr.f32.mxu0 0.0
  %v512 = vand.u32 %v82, 4294901760
  %513 = vmatmul.mubr.f32.gmra.mxu0 %v512
  %v514 = vpop.f32.mrf.mxu0
  %v515 = vadd.f32 %v314, %v514
  %v516 = vpop.f32.mrf.mxu0
  %517 = vdwg.mxu0
  %518 = vmatprep.subr.mxu0 0.0
  %519 = vmatpush1.msra.mxu0 0.0
  %520 = vmatprep.subr.mxu0 0.0
  %521 = vmatpush1.msra.mxu0 0.0
  %522 = vmatprep.subr.mxu0 0.0
  %523 = vmatpush1.msra.mxu0 0.0
  %524 = vmatprep.subr.mxu0 0.0
  %525 = vmatpush1.msra.mxu0 0.0
  %526 = vmatprep.subr.mxu0 0.0
  %527 = vmatpush1.msra.mxu0 0.0
  %528 = vmatprep.subr.mxu0 0.0
  %529 = vmatpush1.msra.mxu0 0.0
  %530 = vmatprep.subr.mxu0 0.0
  %531 = vmatpush1.msra.mxu0 0.0
  %532 = vmatprep.subr.mxu0 0.0
  %533 = vmatpush1.msra.mxu0 0.0
  %534 = vmatprep.subr.mxu0 0.0
  %v535 = vand.u32 %v34, 4294901760
  %v536 = vsub.f32 %v34, %v535
  %537 = vmatpush1.msra.mxu0 %v536
  %538 = vmatprep.subr.mxu0 0.0
  %v539 = vand.u32 %v33, 4294901760
  %v540 = vsub.f32 %v33, %v539
  %541 = vmatpush1.msra.mxu0 %v540
  %542 = vmatprep.subr.mxu0 0.0
  %v543 = vand.u32 %v32, 4294901760
  %v544 = vsub.f32 %v32, %v543
  %545 = vmatpush1.msra.mxu0 %v544
  %546 = vmatprep.subr.mxu0 0.0
  %v547 = vand.u32 %v31, 4294901760
  %v548 = vsub.f32 %v31, %v547
  %549 = vmatpush1.msra.mxu0 %v548
  %550 = vmatprep.subr.mxu0 0.0
  %v551 = vand.u32 %v30, 4294901760
  %v552 = vsub.f32 %v30, %v551
  %553 = vmatpush1.msra.mxu0 %v552
  %554 = vmatprep.subr.mxu0 0.0
  %v555 = vand.u32 %v29, 4294901760
  %v556 = vsub.f32 %v29, %v555
  %557 = vmatpush1.msra.mxu0 %v556
  %558 = vmatprep.subr.mxu0 0.0
  %v559 = vand.u32 %v28, 4294901760
  %v560 = vsub.f32 %v28, %v559
  %561 = vmatpush1.msra.mxu0 %v560
  %562 = vmatprep.subr.mxu0 0.0
  %v563 = vand.u32 %v27, 4294901760
  %v564 = vsub.f32 %v27, %v563
  %565 = vmatpush1.msra.mxu0 %v564
  %566 = vmatprep.subr.mxu0 0.0
  %567 = vmatpush2.msra.mxu0 0.0
  %568 = vmatprep.subr.mxu0 0.0
  %569 = vmatpush2.msra.mxu0 0.0
  %570 = vmatprep.subr.mxu0 0.0
  %571 = vmatpush2.msra.mxu0 0.0
  %572 = vmatprep.subr.mxu0 0.0
  %573 = vmatpush2.msra.mxu0 0.0
  %574 = vmatprep.subr.mxu0 0.0
  %575 = vmatpush2.msra.mxu0 0.0
  %576 = vmatprep.subr.mxu0 0.0
  %577 = vmatpush2.msra.mxu0 0.0
  %578 = vmatprep.subr.mxu0 0.0
  %579 = vmatpush2.msra.mxu0 0.0
  %580 = vmatprep.subr.mxu0 0.0
  %581 = vmatpush2.msra.mxu0 0.0
  %582 = vmatprep.subr.mxu0 0.0
  %583 = vmatpush2.msra.mxu0 0.0
  %584 = vmatprep.subr.mxu0 0.0
  %585 = vmatpush2.msra.mxu0 0.0
  %586 = vmatprep.subr.mxu0 0.0
  %587 = vmatpush2.msra.mxu0 0.0
  %588 = vmatprep.subr.mxu0 0.0
  %589 = vmatpush2.msra.mxu0 0.0
  %590 = vmatprep.subr.mxu0 0.0
  %591 = vmatpush2.msra.mxu0 0.0
  %592 = vmatprep.subr.mxu0 0.0
  %593 = vmatpush2.msra.mxu0 0.0
  %594 = vmatprep.subr.mxu0 0.0
  %595 = vmatpush2.msra.mxu0 0.0
  %596 = vmatprep.subr.mxu0 0.0
  %597 = vmatpush2.msra.mxu0 0.0
  %598 = vmatprep.mubr.f32.mxu0 0.0
  %v599 = vand.u32 %v37, 4294901760
  %v600 = vsub.f32 %v37, %v599
  %601 = vmatmul.mubr.f32.gmra.mxu0 %v600
  %v602 = vpop.f32.mrf.mxu0
  %v603 = vadd.f32 %v425, %v602
  %v604 = vpop.f32.mrf.mxu0
  %605 = vmatprep.mubr.f32.mxu0 0.0
  %v606 = vand.u32 %v40, 4294901760
  %v607 = vsub.f32 %v40, %v606
  %608 = vmatmul.mubr.f32.gmra.mxu0 %v607
  %v609 = vpop.f32.mrf.mxu0
  %v610 = vadd.f32 %v431, %v609
  %v611 = vpop.f32.mrf.mxu0
  %612 = vmatprep.mubr.f32.mxu0 0.0
  %v613 = vand.u32 %v43, 4294901760
  %v614 = vsub.f32 %v43, %v613
  %615 = vmatmul.mubr.f32.gmra.mxu0 %v614
  %v616 = vpop.f32.mrf.mxu0
  %v617 = vadd.f32 %v437, %v616
  %v618 = vpop.f32.mrf.mxu0
  %619 = vmatprep.mubr.f32.mxu0 0.0
  %v620 = vand.u32 %v46, 4294901760
  %v621 = vsub.f32 %v46, %v620
  %622 = vmatmul.mubr.f32.gmra.mxu0 %v621
  %v623 = vpop.f32.mrf.mxu0
  %v624 = vadd.f32 %v443, %v623
  %v625 = vpop.f32.mrf.mxu0
  %626 = vmatprep.mubr.f32.mxu0 0.0
  %v627 = vand.u32 %v49, 4294901760
  %v628 = vsub.f32 %v49, %v627
  %629 = vmatmul.mubr.f32.gmra.mxu0 %v628
  %v630 = vpop.f32.mrf.mxu0
  %v631 = vadd.f32 %v449, %v630
  %v632 = vpop.f32.mrf.mxu0
  %633 = vmatprep.mubr.f32.mxu0 0.0
  %v634 = vand.u32 %v52, 4294901760
  %v635 = vsub.f32 %v52, %v634
  %636 = vmatmul.mubr.f32.gmra.mxu0 %v635
  %v637 = vpop.f32.mrf.mxu0
  %v638 = vadd.f32 %v455, %v637
  %v639 = vpop.f32.mrf.mxu0
  %640 = vmatprep.mubr.f32.mxu0 0.0
  %v641 = vand.u32 %v55, 4294901760
  %v642 = vsub.f32 %v55, %v641
  %643 = vmatmul.mubr.f32.gmra.mxu0 %v642
  %v644 = vpop.f32.mrf.mxu0
  %v645 = vadd.f32 %v461, %v644
  %v646 = vpop.f32.mrf.mxu0
  %647 = vmatprep.mubr.f32.mxu0 0.0
  %v648 = vand.u32 %v58, 4294901760
  %v649 = vsub.f32 %v58, %v648
  %650 = vmatmul.mubr.f32.gmra.mxu0 %v649
  %v651 = vpop.f32.mrf.mxu0
  %v652 = vadd.f32 %v467, %v651
  %v653 = vpop.f32.mrf.mxu0
  %654 = vmatprep.mubr.f32.mxu0 0.0
  %v655 = vand.u32 %v61, 4294901760
  %v656 = vsub.f32 %v61, %v655
  %657 = vmatmul.mubr.f32.gmra.mxu0 %v656
  %v658 = vpop.f32.mrf.mxu0
  %v659 = vadd.f32 %v473, %v658
  %v660 = vpop.f32.mrf.mxu0
  %661 = vmatprep.mubr.f32.mxu0 0.0
  %v662 = vand.u32 %v64, 4294901760
  %v663 = vsub.f32 %v64, %v662
  %664 = vmatmul.mubr.f32.gmra.mxu0 %v663
  %v665 = vpop.f32.mrf.mxu0
  %v666 = vadd.f32 %v479, %v665
  %v667 = vpop.f32.mrf.mxu0
  %668 = vmatprep.mubr.f32.mxu0 0.0
  %v669 = vand.u32 %v67, 4294901760
  %v670 = vsub.f32 %v67, %v669
  %671 = vmatmul.mubr.f32.gmra.mxu0 %v670
  %v672 = vpop.f32.mrf.mxu0
  %v673 = vadd.f32 %v485, %v672
  %v674 = vpop.f32.mrf.mxu0
  %675 = vmatprep.mubr.f32.mxu0 0.0
  %v676 = vand.u32 %v70, 4294901760
  %v677 = vsub.f32 %v70, %v676
  %678 = vmatmul.mubr.f32.gmra.mxu0 %v677
  %v679 = vpop.f32.mrf.mxu0
  %v680 = vadd.f32 %v491, %v679
  %v681 = vpop.f32.mrf.mxu0
  %682 = vmatprep.mubr.f32.mxu0 0.0
  %v683 = vand.u32 %v73, 4294901760
  %v684 = vsub.f32 %v73, %v683
  %685 = vmatmul.mubr.f32.gmra.mxu0 %v684
  %v686 = vpop.f32.mrf.mxu0
  %v687 = vadd.f32 %v497, %v686
  %v688 = vpop.f32.mrf.mxu0
  %689 = vmatprep.mubr.f32.mxu0 0.0
  %v690 = vand.u32 %v76, 4294901760
  %v691 = vsub.f32 %v76, %v690
  %692 = vmatmul.mubr.f32.gmra.mxu0 %v691
  %v693 = vpop.f32.mrf.mxu0
  %v694 = vadd.f32 %v503, %v693
  %v695 = vpop.f32.mrf.mxu0
  %696 = vmatprep.mubr.f32.mxu0 0.0
  %v697 = vand.u32 %v79, 4294901760
  %v698 = vsub.f32 %v79, %v697
  %699 = vmatmul.mubr.f32.gmra.mxu0 %v698
  %v700 = vpop.f32.mrf.mxu0
  %v701 = vadd.f32 %v509, %v700
  %v702 = vpop.f32.mrf.mxu0
  %703 = vmatprep.mubr.f32.mxu0 0.0
  %v704 = vand.u32 %v82, 4294901760
  %v705 = vsub.f32 %v82, %v704
  %706 = vmatmul.mubr.f32.gmra.mxu0 %v705
  %v707 = vpop.f32.mrf.mxu0
  %v708 = vadd.f32 %v515, %v707
  %v709 = vpop.f32.mrf.mxu0
  %710 = vdwg.mxu0
  %711 = vmatprep.subr.mxu0 0.0
  %712 = vmatpush1.msra.mxu0 0.0
  %713 = vmatprep.subr.mxu0 0.0
  %714 = vmatpush1.msra.mxu0 0.0
  %715 = vmatprep.subr.mxu0 0.0
  %716 = vmatpush1.msra.mxu0 0.0
  %717 = vmatprep.subr.mxu0 0.0
  %718 = vmatpush1.msra.mxu0 0.0
  %719 = vmatprep.subr.mxu0 0.0
  %720 = vmatpush1.msra.mxu0 0.0
  %721 = vmatprep.subr.mxu0 0.0
  %722 = vmatpush1.msra.mxu0 0.0
  %723 = vmatprep.subr.mxu0 0.0
  %724 = vmatpush1.msra.mxu0 0.0
  %725 = vmatprep.subr.mxu0 0.0
  %726 = vmatpush1.msra.mxu0 0.0
  %727 = vmatprep.subr.mxu0 0.0
  %v728 = vand.u32 %v34, 4294901760
  %729 = vmatpush1.msra.mxu0 %v728
  %730 = vmatprep.subr.mxu0 0.0
  %v731 = vand.u32 %v33, 4294901760
  %732 = vmatpush1.msra.mxu0 %v731
  %733 = vmatprep.subr.mxu0 0.0
  %v734 = vand.u32 %v32, 4294901760
  %735 = vmatpush1.msra.mxu0 %v734
  %736 = vmatprep.subr.mxu0 0.0
  %v737 = vand.u32 %v31, 4294901760
  %738 = vmatpush1.msra.mxu0 %v737
  %739 = vmatprep.subr.mxu0 0.0
  %v740 = vand.u32 %v30, 4294901760
  %741 = vmatpush1.msra.mxu0 %v740
  %742 = vmatprep.subr.mxu0 0.0
  %v743 = vand.u32 %v29, 4294901760
  %744 = vmatpush1.msra.mxu0 %v743
  %745 = vmatprep.subr.mxu0 0.0
  %v746 = vand.u32 %v28, 4294901760
  %747 = vmatpush1.msra.mxu0 %v746
  %748 = vmatprep.subr.mxu0 0.0
  %v749 = vand.u32 %v27, 4294901760
  %750 = vmatpush1.msra.mxu0 %v749
  %751 = vmatprep.subr.mxu0 0.0
  %752 = vmatpush2.msra.mxu0 0.0
  %753 = vmatprep.subr.mxu0 0.0
  %754 = vmatpush2.msra.mxu0 0.0
  %755 = vmatprep.subr.mxu0 0.0
  %756 = vmatpush2.msra.mxu0 0.0
  %757 = vmatprep.subr.mxu0 0.0
  %758 = vmatpush2.msra.mxu0 0.0
  %759 = vmatprep.subr.mxu0 0.0
  %760 = vmatpush2.msra.mxu0 0.0
  %761 = vmatprep.subr.mxu0 0.0
  %762 = vmatpush2.msra.mxu0 0.0
  %763 = vmatprep.subr.mxu0 0.0
  %764 = vmatpush2.msra.mxu0 0.0
  %765 = vmatprep.subr.mxu0 0.0
  %766 = vmatpush2.msra.mxu0 0.0
  %767 = vmatprep.subr.mxu0 0.0
  %768 = vmatpush2.msra.mxu0 0.0
  %769 = vmatprep.subr.mxu0 0.0
  %770 = vmatpush2.msra.mxu0 0.0
  %771 = vmatprep.subr.mxu0 0.0
  %772 = vmatpush2.msra.mxu0 0.0
  %773 = vmatprep.subr.mxu0 0.0
  %774 = vmatpush2.msra.mxu0 0.0
  %775 = vmatprep.subr.mxu0 0.0
  %776 = vmatpush2.msra.mxu0 0.0
  %777 = vmatprep.subr.mxu0 0.0
  %778 = vmatpush2.msra.mxu0 0.0
  %779 = vmatprep.subr.mxu0 0.0
  %780 = vmatpush2.msra.mxu0 0.0
  %781 = vmatprep.subr.mxu0 0.0
  %782 = vmatpush2.msra.mxu0 0.0
  %783 = vmatprep.mubr.f32.mxu0 0.0
  %v784 = vand.u32 %v37, 4294901760
  %v785 = vsub.f32 %v37, %v784
  %v786 = vand.u32 %v785, 4294901760
  %787 = vmatmul.mubr.f32.gmra.mxu0 %v786
  %v788 = vpop.f32.mrf.mxu0
  %v789 = vadd.f32 %v603, %v788
  %v790 = vpop.f32.mrf.mxu0
  %791 = vmatprep.mubr.f32.mxu0 0.0
  %v792 = vand.u32 %v40, 4294901760
  %v793 = vsub.f32 %v40, %v792
  %v794 = vand.u32 %v793, 4294901760
  %795 = vmatmul.mubr.f32.gmra.mxu0 %v794
  %v796 = vpop.f32.mrf.mxu0
  %v797 = vadd.f32 %v610, %v796
  %v798 = vpop.f32.mrf.mxu0
  %799 = vmatprep.mubr.f32.mxu0 0.0
  %v800 = vand.u32 %v43, 4294901760
  %v801 = vsub.f32 %v43, %v800
  %v802 = vand.u32 %v801, 4294901760
  %803 = vmatmul.mubr.f32.gmra.mxu0 %v802
  %v804 = vpop.f32.mrf.mxu0
  %v805 = vadd.f32 %v617, %v804
  %v806 = vpop.f32.mrf.mxu0
  %807 = vmatprep.mubr.f32.mxu0 0.0
  %v808 = vand.u32 %v46, 4294901760
  %v809 = vsub.f32 %v46, %v808
  %v810 = vand.u32 %v809, 4294901760
  %811 = vmatmul.mubr.f32.gmra.mxu0 %v810
  %v812 = vpop.f32.mrf.mxu0
  %v813 = vadd.f32 %v624, %v812
  %v814 = vpop.f32.mrf.mxu0
  %815 = vmatprep.mubr.f32.mxu0 0.0
  %v816 = vand.u32 %v49, 4294901760
  %v817 = vsub.f32 %v49, %v816
  %v818 = vand.u32 %v817, 4294901760
  %819 = vmatmul.mubr.f32.gmra.mxu0 %v818
  %v820 = vpop.f32.mrf.mxu0
  %v821 = vadd.f32 %v631, %v820
  %v822 = vpop.f32.mrf.mxu0
  %823 = vmatprep.mubr.f32.mxu0 0.0
  %v824 = vand.u32 %v52, 4294901760
  %v825 = vsub.f32 %v52, %v824
  %v826 = vand.u32 %v825, 4294901760
  %827 = vmatmul.mubr.f32.gmra.mxu0 %v826
  %v828 = vpop.f32.mrf.mxu0
  %v829 = vadd.f32 %v638, %v828
  %v830 = vpop.f32.mrf.mxu0
  %831 = vmatprep.mubr.f32.mxu0 0.0
  %v832 = vand.u32 %v55, 4294901760
  %v833 = vsub.f32 %v55, %v832
  %v834 = vand.u32 %v833, 4294901760
  %835 = vmatmul.mubr.f32.gmra.mxu0 %v834
  %v836 = vpop.f32.mrf.mxu0
  %v837 = vadd.f32 %v645, %v836
  %v838 = vpop.f32.mrf.mxu0
  %839 = vmatprep.mubr.f32.mxu0 0.0
  %v840 = vand.u32 %v58, 4294901760
  %v841 = vsub.f32 %v58, %v840
  %v842 = vand.u32 %v841, 4294901760
  %843 = vmatmul.mubr.f32.gmra.mxu0 %v842
  %v844 = vpop.f32.mrf.mxu0
  %v845 = vadd.f32 %v652, %v844
  %v846 = vpop.f32.mrf.mxu0
  %847 = vmatprep.mubr.f32.mxu0 0.0
  %v848 = vand.u32 %v61, 4294901760
  %v849 = vsub.f32 %v61, %v848
  %v850 = vand.u32 %v849, 4294901760
  %851 = vmatmul.mubr.f32.gmra.mxu0 %v850
  %v852 = vpop.f32.mrf.mxu0
  %v853 = vadd.f32 %v659, %v852
  %v854 = vpop.f32.mrf.mxu0
  %855 = vmatprep.mubr.f32.mxu0 0.0
  %v856 = vand.u32 %v64, 4294901760
  %v857 = vsub.f32 %v64, %v856
  %v858 = vand.u32 %v857, 4294901760
  %859 = vmatmul.mubr.f32.gmra.mxu0 %v858
  %v860 = vpop.f32.mrf.mxu0
  %v861 = vadd.f32 %v666, %v860
  %v862 = vpop.f32.mrf.mxu0
  %863 = vmatprep.mubr.f32.mxu0 0.0
  %v864 = vand.u32 %v67, 4294901760
  %v865 = vsub.f32 %v67, %v864
  %v866 = vand.u32 %v865, 4294901760
  %867 = vmatmul.mubr.f32.gmra.mxu0 %v866
  %v868 = vpop.f32.mrf.mxu0
  %v869 = vadd.f32 %v673, %v868
  %v870 = vpop.f32.mrf.mxu0
  %871 = vmatprep.mubr.f32.mxu0 0.0
  %v872 = vand.u32 %v70, 4294901760
  %v873 = vsub.f32 %v70, %v872
  %v874 = vand.u32 %v873, 4294901760
  %875 = vmatmul.mubr.f32.gmra.mxu0 %v874
  %v876 = vpop.f32.mrf.mxu0
  %v877 = vadd.f32 %v680, %v876
  %v878 = vpop.f32.mrf.mxu0
  %879 = vmatprep.mubr.f32.mxu0 0.0
  %v880 = vand.u32 %v73, 4294901760
  %v881 = vsub.f32 %v73, %v880
  %v882 = vand.u32 %v881, 4294901760
  %883 = vmatmul.mubr.f32.gmra.mxu0 %v882
  %v884 = vpop.f32.mrf.mxu0
  %v885 = vadd.f32 %v687, %v884
  %v886 = vpop.f32.mrf.mxu0
  %887 = vmatprep.mubr.f32.mxu0 0.0
  %v888 = vand.u32 %v76, 4294901760
  %v889 = vsub.f32 %v76, %v888
  %v890 = vand.u32 %v889, 4294901760
  %891 = vmatmul.mubr.f32.gmra.mxu0 %v890
  %v892 = vpop.f32.mrf.mxu0
  %v893 = vadd.f32 %v694, %v892
  %v894 = vpop.f32.mrf.mxu0
  %895 = vmatprep.mubr.f32.mxu0 0.0
  %v896 = vand.u32 %v79, 4294901760
  %v897 = vsub.f32 %v79, %v896
  %v898 = vand.u32 %v897, 4294901760
  %899 = vmatmul.mubr.f32.gmra.mxu0 %v898
  %v900 = vpop.f32.mrf.mxu0
  %v901 = vadd.f32 %v701, %v900
  %v902 = vpop.f32.mrf.mxu0
  %903 = vmatprep.mubr.f32.mxu0 0.0
  %v904 = vand.u32 %v82, 4294901760
  %v905 = vsub.f32 %v82, %v904
  %v906 = vand.u32 %v905, 4294901760
  %907 = vmatmul.mubr.f32.gmra.mxu0 %v906
  %v908 = vpop.f32.mrf.mxu0
  %v909 = vadd.f32 %v708, %v908
  %v910 = vpop.f32.mrf.mxu0
  %911 = vdwg.mxu0
  %912 = vmatprep.subr.mxu0 0.0
  %913 = vmatpush1.msra.mxu0 0.0
  %914 = vmatprep.subr.mxu0 0.0
  %915 = vmatpush1.msra.mxu0 0.0
  %916 = vmatprep.subr.mxu0 0.0
  %917 = vmatpush1.msra.mxu0 0.0
  %918 = vmatprep.subr.mxu0 0.0
  %919 = vmatpush1.msra.mxu0 0.0
  %920 = vmatprep.subr.mxu0 0.0
  %921 = vmatpush1.msra.mxu0 0.0
  %922 = vmatprep.subr.mxu0 0.0
  %923 = vmatpush1.msra.mxu0 0.0
  %924 = vmatprep.subr.mxu0 0.0
  %925 = vmatpush1.msra.mxu0 0.0
  %926 = vmatprep.subr.mxu0 0.0
  %927 = vmatpush1.msra.mxu0 0.0
  %928 = vmatprep.subr.mxu0 0.0
  %v929 = vand.u32 %v34, 4294901760
  %v930 = vsub.f32 %v34, %v929
  %v931 = vand.u32 %v930, 4294901760
  %932 = vmatpush1.msra.mxu0 %v931
  %933 = vmatprep.subr.mxu0 0.0
  %v934 = vand.u32 %v33, 4294901760
  %v935 = vsub.f32 %v33, %v934
  %v936 = vand.u32 %v935, 4294901760
  %937 = vmatpush1.msra.mxu0 %v936
  %938 = vmatprep.subr.mxu0 0.0
  %v939 = vand.u32 %v32, 4294901760
  %v940 = vsub.f32 %v32, %v939
  %v941 = vand.u32 %v940, 4294901760
  %942 = vmatpush1.msra.mxu0 %v941
  %943 = vmatprep.subr.mxu0 0.0
  %v944 = vand.u32 %v31, 4294901760
  %v945 = vsub.f32 %v31, %v944
  %v946 = vand.u32 %v945, 4294901760
  %947 = vmatpush1.msra.mxu0 %v946
  %948 = vmatprep.subr.mxu0 0.0
  %v949 = vand.u32 %v30, 4294901760
  %v950 = vsub.f32 %v30, %v949
  %v951 = vand.u32 %v950, 4294901760
  %952 = vmatpush1.msra.mxu0 %v951
  %953 = vmatprep.subr.mxu0 0.0
  %v954 = vand.u32 %v29, 4294901760
  %v955 = vsub.f32 %v29, %v954
  %v956 = vand.u32 %v955, 4294901760
  %957 = vmatpush1.msra.mxu0 %v956
  %958 = vmatprep.subr.mxu0 0.0
  %v959 = vand.u32 %v28, 4294901760
  %v960 = vsub.f32 %v28, %v959
  %v961 = vand.u32 %v960, 4294901760
  %962 = vmatpush1.msra.mxu0 %v961
  %963 = vmatprep.subr.mxu0 0.0
  %v964 = vand.u32 %v27, 4294901760
  %v965 = vsub.f32 %v27, %v964
  %v966 = vand.u32 %v965, 4294901760
  %967 = vmatpush1.msra.mxu0 %v966
  %968 = vmatprep.subr.mxu0 0.0
  %969 = vmatpush2.msra.mxu0 0.0
  %970 = vmatprep.subr.mxu0 0.0
  %971 = vmatpush2.msra.mxu0 0.0
  %972 = vmatprep.subr.mxu0 0.0
  %973 = vmatpush2.msra.mxu0 0.0
  %974 = vmatprep.subr.mxu0 0.0
  %975 = vmatpush2.msra.mxu0 0.0
  %976 = vmatprep.subr.mxu0 0.0
  %977 = vmatpush2.msra.mxu0 0.0
  %978 = vmatprep.subr.mxu0 0.0
  %979 = vmatpush2.msra.mxu0 0.0
  %980 = vmatprep.subr.mxu0 0.0
  %981 = vmatpush2.msra.mxu0 0.0
  %982 = vmatprep.subr.mxu0 0.0
  %983 = vmatpush2.msra.mxu0 0.0
  %984 = vmatprep.subr.mxu0 0.0
  %985 = vmatpush2.msra.mxu0 0.0
  %986 = vmatprep.subr.mxu0 0.0
  %987 = vmatpush2.msra.mxu0 0.0
  %988 = vmatprep.subr.mxu0 0.0
  %989 = vmatpush2.msra.mxu0 0.0
  %990 = vmatprep.subr.mxu0 0.0
  %991 = vmatpush2.msra.mxu0 0.0
  %992 = vmatprep.subr.mxu0 0.0
  %993 = vmatpush2.msra.mxu0 0.0
  %994 = vmatprep.subr.mxu0 0.0
  %995 = vmatpush2.msra.mxu0 0.0
  %996 = vmatprep.subr.mxu0 0.0
  %997 = vmatpush2.msra.mxu0 0.0
  %998 = vmatprep.subr.mxu0 0.0
  %999 = vmatpush2.msra.mxu0 0.0
  %1000 = vmatprep.mubr.f32.mxu0 0.0
  %v1001 = vand.u32 %v37, 4294901760
  %1002 = vmatmul.mubr.f32.gmra.mxu0 %v1001
  %v1003 = vpop.f32.mrf.mxu0
  %v1004 = vadd.f32 %v789, %v1003
  %v1005 = vpop.f32.mrf.mxu0
  %1006 = vmatprep.mubr.f32.mxu0 0.0
  %v1007 = vand.u32 %v40, 4294901760
  %1008 = vmatmul.mubr.f32.gmra.mxu0 %v1007
  %v1009 = vpop.f32.mrf.mxu0
  %v1010 = vadd.f32 %v797, %v1009
  %v1011 = vpop.f32.mrf.mxu0
  %1012 = vmatprep.mubr.f32.mxu0 0.0
  %v1013 = vand.u32 %v43, 4294901760
  %1014 = vmatmul.mubr.f32.gmra.mxu0 %v1013
  %v1015 = vpop.f32.mrf.mxu0
  %v1016 = vadd.f32 %v805, %v1015
  %v1017 = vpop.f32.mrf.mxu0
  %1018 = vmatprep.mubr.f32.mxu0 0.0
  %v1019 = vand.u32 %v46, 4294901760
  %1020 = vmatmul.mubr.f32.gmra.mxu0 %v1019
  %v1021 = vpop.f32.mrf.mxu0
  %v1022 = vadd.f32 %v813, %v1021
  %v1023 = vpop.f32.mrf.mxu0
  %1024 = vmatprep.mubr.f32.mxu0 0.0
  %v1025 = vand.u32 %v49, 4294901760
  %1026 = vmatmul.mubr.f32.gmra.mxu0 %v1025
  %v1027 = vpop.f32.mrf.mxu0
  %v1028 = vadd.f32 %v821, %v1027
  %v1029 = vpop.f32.mrf.mxu0
  %1030 = vmatprep.mubr.f32.mxu0 0.0
  %v1031 = vand.u32 %v52, 4294901760
  %1032 = vmatmul.mubr.f32.gmra.mxu0 %v1031
  %v1033 = vpop.f32.mrf.mxu0
  %v1034 = vadd.f32 %v829, %v1033
  %v1035 = vpop.f32.mrf.mxu0
  %1036 = vmatprep.mubr.f32.mxu0 0.0
  %v1037 = vand.u32 %v55, 4294901760
  %1038 = vmatmul.mubr.f32.gmra.mxu0 %v1037
  %v1039 = vpop.f32.mrf.mxu0
  %v1040 = vadd.f32 %v837, %v1039
  %v1041 = vpop.f32.mrf.mxu0
  %1042 = vmatprep.mubr.f32.mxu0 0.0
  %v1043 = vand.u32 %v58, 4294901760
  %1044 = vmatmul.mubr.f32.gmra.mxu0 %v1043
  %v1045 = vpop.f32.mrf.mxu0
  %v1046 = vadd.f32 %v845, %v1045
  %v1047 = vpop.f32.mrf.mxu0
  %1048 = vmatprep.mubr.f32.mxu0 0.0
  %v1049 = vand.u32 %v61, 4294901760
  %1050 = vmatmul.mubr.f32.gmra.mxu0 %v1049
  %v1051 = vpop.f32.mrf.mxu0
  %v1052 = vadd.f32 %v853, %v1051
  %v1053 = vpop.f32.mrf.mxu0
  %1054 = vmatprep.mubr.f32.mxu0 0.0
  %v1055 = vand.u32 %v64, 4294901760
  %1056 = vmatmul.mubr.f32.gmra.mxu0 %v1055
  %v1057 = vpop.f32.mrf.mxu0
  %v1058 = vadd.f32 %v861, %v1057
  %v1059 = vpop.f32.mrf.mxu0
  %1060 = vmatprep.mubr.f32.mxu0 0.0
  %v1061 = vand.u32 %v67, 4294901760
  %1062 = vmatmul.mubr.f32.gmra.mxu0 %v1061
  %v1063 = vpop.f32.mrf.mxu0
  %v1064 = vadd.f32 %v869, %v1063
  %v1065 = vpop.f32.mrf.mxu0
  %1066 = vmatprep.mubr.f32.mxu0 0.0
  %v1067 = vand.u32 %v70, 4294901760
  %1068 = vmatmul.mubr.f32.gmra.mxu0 %v1067
  %v1069 = vpop.f32.mrf.mxu0
  %v1070 = vadd.f32 %v877, %v1069
  %v1071 = vpop.f32.mrf.mxu0
  %1072 = vmatprep.mubr.f32.mxu0 0.0
  %v1073 = vand.u32 %v73, 4294901760
  %1074 = vmatmul.mubr.f32.gmra.mxu0 %v1073
  %v1075 = vpop.f32.mrf.mxu0
  %v1076 = vadd.f32 %v885, %v1075
  %v1077 = vpop.f32.mrf.mxu0
  %1078 = vmatprep.mubr.f32.mxu0 0.0
  %v1079 = vand.u32 %v76, 4294901760
  %1080 = vmatmul.mubr.f32.gmra.mxu0 %v1079
  %v1081 = vpop.f32.mrf.mxu0
  %v1082 = vadd.f32 %v893, %v1081
  %v1083 = vpop.f32.mrf.mxu0
  %1084 = vmatprep.mubr.f32.mxu0 0.0
  %v1085 = vand.u32 %v79, 4294901760
  %1086 = vmatmul.mubr.f32.gmra.mxu0 %v1085
  %v1087 = vpop.f32.mrf.mxu0
  %v1088 = vadd.f32 %v901, %v1087
  %v1089 = vpop.f32.mrf.mxu0
  %1090 = vmatprep.mubr.f32.mxu0 0.0
  %v1091 = vand.u32 %v82, 4294901760
  %1092 = vmatmul.mubr.f32.gmra.mxu0 %v1091
  %v1093 = vpop.f32.mrf.mxu0
  %v1094 = vadd.f32 %v909, %v1093
  %v1095 = vpop.f32.mrf.mxu0
  %1096 = vdwg.mxu0
  %1097 = vmatprep.subr.mxu0 0.0
  %1098 = vmatpush1.msra.mxu0 0.0
  %1099 = vmatprep.subr.mxu0 0.0
  %1100 = vmatpush1.msra.mxu0 0.0
  %1101 = vmatprep.subr.mxu0 0.0
  %1102 = vmatpush1.msra.mxu0 0.0
  %1103 = vmatprep.subr.mxu0 0.0
  %1104 = vmatpush1.msra.mxu0 0.0
  %1105 = vmatprep.subr.mxu0 0.0
  %1106 = vmatpush1.msra.mxu0 0.0
  %1107 = vmatprep.subr.mxu0 0.0
  %1108 = vmatpush1.msra.mxu0 0.0
  %1109 = vmatprep.subr.mxu0 0.0
  %1110 = vmatpush1.msra.mxu0 0.0
  %1111 = vmatprep.subr.mxu0 0.0
  %1112 = vmatpush1.msra.mxu0 0.0
  %1113 = vmatprep.subr.mxu0 0.0
  %v1114 = vand.u32 %v34, 4294901760
  %1115 = vmatpush1.msra.mxu0 %v1114
  %1116 = vmatprep.subr.mxu0 0.0
  %v1117 = vand.u32 %v33, 4294901760
  %1118 = vmatpush1.msra.mxu0 %v1117
  %1119 = vmatprep.subr.mxu0 0.0
  %v1120 = vand.u32 %v32, 4294901760
  %1121 = vmatpush1.msra.mxu0 %v1120
  %1122 = vmatprep.subr.mxu0 0.0
  %v1123 = vand.u32 %v31, 4294901760
  %1124 = vmatpush1.msra.mxu0 %v1123
  %1125 = vmatprep.subr.mxu0 0.0
  %v1126 = vand.u32 %v30, 4294901760
  %1127 = vmatpush1.msra.mxu0 %v1126
  %1128 = vmatprep.subr.mxu0 0.0
  %v1129 = vand.u32 %v29, 4294901760
  %1130 = vmatpush1.msra.mxu0 %v1129
  %1131 = vmatprep.subr.mxu0 0.0
  %v1132 = vand.u32 %v28, 4294901760
  %1133 = vmatpush1.msra.mxu0 %v1132
  %1134 = vmatprep.subr.mxu0 0.0
  %v1135 = vand.u32 %v27, 4294901760
  %1136 = vmatpush1.msra.mxu0 %v1135
  %1137 = vmatprep.subr.mxu0 0.0
  %1138 = vmatpush2.msra.mxu0 0.0
  %1139 = vmatprep.subr.mxu0 0.0
  %1140 = vmatpush2.msra.mxu0 0.0
  %1141 = vmatprep.subr.mxu0 0.0
  %1142 = vmatpush2.msra.mxu0 0.0
  %1143 = vmatprep.subr.mxu0 0.0
  %1144 = vmatpush2.msra.mxu0 0.0
  %1145 = vmatprep.subr.mxu0 0.0
  %1146 = vmatpush2.msra.mxu0 0.0
  %1147 = vmatprep.subr.mxu0 0.0
  %1148 = vmatpush2.msra.mxu0 0.0
  %1149 = vmatprep.subr.mxu0 0.0
  %1150 = vmatpush2.msra.mxu0 0.0
  %1151 = vmatprep.subr.mxu0 0.0
  %1152 = vmatpush2.msra.mxu0 0.0
  %1153 = vmatprep.subr.mxu0 0.0
  %1154 = vmatpush2.msra.mxu0 0.0
  %1155 = vmatprep.subr.mxu0 0.0
  %1156 = vmatpush2.msra.mxu0 0.0
  %1157 = vmatprep.subr.mxu0 0.0
  %1158 = vmatpush2.msra.mxu0 0.0
  %1159 = vmatprep.subr.mxu0 0.0
  %1160 = vmatpush2.msra.mxu0 0.0
  %1161 = vmatprep.subr.mxu0 0.0
  %1162 = vmatpush2.msra.mxu0 0.0
  %1163 = vmatprep.subr.mxu0 0.0
  %1164 = vmatpush2.msra.mxu0 0.0
  %1165 = vmatprep.subr.mxu0 0.0
  %1166 = vmatpush2.msra.mxu0 0.0
  %1167 = vmatprep.subr.mxu0 0.0
  %1168 = vmatpush2.msra.mxu0 0.0
  %1169 = vmatprep.mubr.f32.mxu0 0.0
  %v1170 = vand.u32 %v37, 4294901760
  %1171 = vmatmul.mubr.f32.gmra.mxu0 %v1170
  %v1172 = vpop.f32.mrf.mxu0
  %v1173 = vadd.f32 %v1004, %v1172
  %v1174 = vpop.f32.mrf.mxu0
  %1175 = vmatprep.mubr.f32.mxu0 0.0
  %v1176 = vand.u32 %v40, 4294901760
  %1177 = vmatmul.mubr.f32.gmra.mxu0 %v1176
  %v1178 = vpop.f32.mrf.mxu0
  %v1179 = vadd.f32 %v1010, %v1178
  %v1180 = vpop.f32.mrf.mxu0
  %1181 = vmatprep.mubr.f32.mxu0 0.0
  %v1182 = vand.u32 %v43, 4294901760
  %1183 = vmatmul.mubr.f32.gmra.mxu0 %v1182
  %v1184 = vpop.f32.mrf.mxu0
  %v1185 = vadd.f32 %v1016, %v1184
  %v1186 = vpop.f32.mrf.mxu0
  %1187 = vmatprep.mubr.f32.mxu0 0.0
  %v1188 = vand.u32 %v46, 4294901760
  %1189 = vmatmul.mubr.f32.gmra.mxu0 %v1188
  %v1190 = vpop.f32.mrf.mxu0
  %v1191 = vadd.f32 %v1022, %v1190
  %v1192 = vpop.f32.mrf.mxu0
  %1193 = vmatprep.mubr.f32.mxu0 0.0
  %v1194 = vand.u32 %v49, 4294901760
  %1195 = vmatmul.mubr.f32.gmra.mxu0 %v1194
  %v1196 = vpop.f32.mrf.mxu0
  %v1197 = vadd.f32 %v1028, %v1196
  %v1198 = vpop.f32.mrf.mxu0
  %1199 = vmatprep.mubr.f32.mxu0 0.0
  %v1200 = vand.u32 %v52, 4294901760
  %1201 = vmatmul.mubr.f32.gmra.mxu0 %v1200
  %v1202 = vpop.f32.mrf.mxu0
  %v1203 = vadd.f32 %v1034, %v1202
  %v1204 = vpop.f32.mrf.mxu0
  %1205 = vmatprep.mubr.f32.mxu0 0.0
  %v1206 = vand.u32 %v55, 4294901760
  %1207 = vmatmul.mubr.f32.gmra.mxu0 %v1206
  %v1208 = vpop.f32.mrf.mxu0
  %v1209 = vadd.f32 %v1040, %v1208
  %v1210 = vpop.f32.mrf.mxu0
  %1211 = vmatprep.mubr.f32.mxu0 0.0
  %v1212 = vand.u32 %v58, 4294901760
  %1213 = vmatmul.mubr.f32.gmra.mxu0 %v1212
  %v1214 = vpop.f32.mrf.mxu0
  %v1215 = vadd.f32 %v1046, %v1214
  %v1216 = vpop.f32.mrf.mxu0
  %1217 = vmatprep.mubr.f32.mxu0 0.0
  %v1218 = vand.u32 %v61, 4294901760
  %1219 = vmatmul.mubr.f32.gmra.mxu0 %v1218
  %v1220 = vpop.f32.mrf.mxu0
  %v1221 = vadd.f32 %v1052, %v1220
  %v1222 = vpop.f32.mrf.mxu0
  %1223 = vmatprep.mubr.f32.mxu0 0.0
  %v1224 = vand.u32 %v64, 4294901760
  %1225 = vmatmul.mubr.f32.gmra.mxu0 %v1224
  %v1226 = vpop.f32.mrf.mxu0
  %v1227 = vadd.f32 %v1058, %v1226
  %v1228 = vpop.f32.mrf.mxu0
  %1229 = vmatprep.mubr.f32.mxu0 0.0
  %v1230 = vand.u32 %v67, 4294901760
  %1231 = vmatmul.mubr.f32.gmra.mxu0 %v1230
  %v1232 = vpop.f32.mrf.mxu0
  %v1233 = vadd.f32 %v1064, %v1232
  %v1234 = vpop.f32.mrf.mxu0
  %1235 = vmatprep.mubr.f32.mxu0 0.0
  %v1236 = vand.u32 %v70, 4294901760
  %1237 = vmatmul.mubr.f32.gmra.mxu0 %v1236
  %v1238 = vpop.f32.mrf.mxu0
  %v1239 = vadd.f32 %v1070, %v1238
  %v1240 = vpop.f32.mrf.mxu0
  %1241 = vmatprep.mubr.f32.mxu0 0.0
  %v1242 = vand.u32 %v73, 4294901760
  %1243 = vmatmul.mubr.f32.gmra.mxu0 %v1242
  %v1244 = vpop.f32.mrf.mxu0
  %v1245 = vadd.f32 %v1076, %v1244
  %v1246 = vpop.f32.mrf.mxu0
  %1247 = vmatprep.mubr.f32.mxu0 0.0
  %v1248 = vand.u32 %v76, 4294901760
  %1249 = vmatmul.mubr.f32.gmra.mxu0 %v1248
  %v1250 = vpop.f32.mrf.mxu0
  %v1251 = vadd.f32 %v1082, %v1250
  %v1252 = vpop.f32.mrf.mxu0
  %1253 = vmatprep.mubr.f32.mxu0 0.0
  %v1254 = vand.u32 %v79, 4294901760
  %1255 = vmatmul.mubr.f32.gmra.mxu0 %v1254
  %v1256 = vpop.f32.mrf.mxu0
  %v1257 = vadd.f32 %v1088, %v1256
  %v1258 = vpop.f32.mrf.mxu0
  %1259 = vmatprep.mubr.f32.mxu0 0.0
  %v1260 = vand.u32 %v82, 4294901760
  %1261 = vmatmul.mubr.f32.gmra.mxu0 %v1260
  %v1262 = vpop.f32.mrf.mxu0
  %v1263 = vadd.f32 %v1094, %v1262
  %v1264 = vpop.f32.mrf.mxu0
  %1265 = vdwg.mxu0
  %vm1266 = vcmask 130048
  %1267 = vst.msk [vmem:[%s2] sm:$0xff] %vm1266, %v1173
  %1268 = vst.msk [vmem:[%s2 + $0x8] sm:$0xff] %vm1266, %v1179
  %1269 = vst.msk [vmem:[%s2 + $0x10] sm:$0xff] %vm1266, %v1185
  %1270 = vst.msk [vmem:[%s2 + $0x18] sm:$0xff] %vm1266, %v1191
  %1271 = vst.msk [vmem:[%s2 + $0x20] sm:$0xff] %vm1266, %v1197
  %1272 = vst.msk [vmem:[%s2 + $0x28] sm:$0xff] %vm1266, %v1203
  %1273 = vst.msk [vmem:[%s2 + $0x30] sm:$0xff] %vm1266, %v1209
  %1274 = vst.msk [vmem:[%s2 + $0x38] sm:$0xff] %vm1266, %v1215
  %1275 = vst.msk [vmem:[%s2 + $0x40] sm:$0xff] %vm1266, %v1221
  %1276 = vst.msk [vmem:[%s2 + $0x48] sm:$0xff] %vm1266, %v1227
  %1277 = vst.msk [vmem:[%s2 + $0x50] sm:$0xff] %vm1266, %v1233
  %1278 = vst.msk [vmem:[%s2 + $0x58] sm:$0xff] %vm1266, %v1239
  %1279 = vst.msk [vmem:[%s2 + $0x60] sm:$0xff] %vm1266, %v1245
  %1280 = vst.msk [vmem:[%s2 + $0x68] sm:$0xff] %vm1266, %v1251
  %1281 = vst.msk [vmem:[%s2 + $0x70] sm:$0xff] %vm1266, %v1257
  %1282 = vst.msk [vmem:[%s2 + $0x78] sm:$0xff] %vm1266, %v1263
  // Predicated region
  $region10: #{gae_forward.7} parent=0 // pred_check
    _
  $region11: #{gae_forward.7} parent=0 // pred_check_branch
    %1284 = sbr.rel (0) target = $region13
  $region12: #{gae_forward.7} parent=0 // pred_region
    _
  $region13: #{gae_forward.7} parent=0 // pred_fallthru
    _
  // Predicated region
  $region14: #{gae_forward.7} parent=0 // pred_check
    _
  $region15: #{gae_forward.7} parent=0 // pred_check_branch
    %1286 = sbr.rel (0) target = $region17
  $region16: #{gae_forward.7} parent=0 // pred_region
    _
  $region17: #{gae_forward.7} parent=0 // pred_fallthru
    _

// kernel: gae_forward.8
$region0: #{gae_forward.8}
  #allocation0 [shape = 'u32[]', space=smem, size = 0x4, offset = 0x4, fixed_abs, tag = 'smem constant byte address 0x4 - core index']
  #allocation1 [shape = 'u32[144,128]{1,0:T(1,128)}', space=vmem, size = 0x12000, scoped, tag = 'internal scratch']
  #allocation2 [shape = 'f32[128,16]{1,0:T(8,128)}', space=vmem, size = 0x10000, scoped, tag = 'scratch operand']
  %s0 = inlined_call_operand.vmem [shape: f32[128,128], index: 0, kind: input, shape index: {}]
  %s1 = inlined_call_operand.vmem [shape: f32[128,16], index: 1, kind: input, shape index: {}]
  %s2 = inlined_call_operand.vmem [shape: f32[1,16], index: 2, kind: input, shape index: {}]
  %s3 = inlined_call_operand.vmem [shape: f32[128,16], index: 3, kind: output, shape index: {}]
  %s4 = sld [smem:[#allocation0]]
  $region30: #{gae_forward.8} parent=0
    _
  %s6 = ssub.s32 1, %s4
  %s7 = scalar_select 0, %s6, %s4
  // Predicated region
  $region2: #{gae_forward.8} parent=0 // pred_check
    _
  $region3: #{gae_forward.8} parent=0 // pred_check_branch
    %9 = sbr.rel (0) target = $region5
  $region4: #{gae_forward.8} parent=0 // pred_region
    _
  $region5: #{gae_forward.8} parent=0 // pred_fallthru
    _
  // Predicated region
  $region6: #{gae_forward.8} parent=0 // pred_check
    _
  $region7: #{gae_forward.8} parent=0 // pred_check_branch
    %11 = sbr.rel (0) target = $region9
  $region8: #{gae_forward.8} parent=0 // pred_region
    _
  $region9: #{gae_forward.8} parent=0 // pred_fallthru
    _
  // Predicated region
  $region10: #{gae_forward.8} parent=0 // pred_check
    _
  $region11: #{gae_forward.8} parent=0 // pred_check_branch
    %13 = sbr.rel (0) target = $region13
  $region12: #{gae_forward.8} parent=0 // pred_region
    _
  $region13: #{gae_forward.8} parent=0 // pred_fallthru
    _
  %p14 = scmp.eq.s32.totalorder 0, 0
  // Predicated region
  $region14: #{gae_forward.8} parent=0 // pred_check
    %p15 = pneg %p14
  $region15: #{gae_forward.8} parent=0 // pred_check_branch
    %17 = sbr.rel (%p15) target = $region17
  $region16: #{gae_forward.8} parent=0 // pred_region
    %vm18 = vcmask 130048
    %19 = vst.msk [vmem:[#allocation2] sm:$0xff] %vm18, 0.0
    %20 = vst.msk [vmem:[#allocation2 + $0x8] sm:$0xff] %vm18, 0.0
    %21 = vst.msk [vmem:[#allocation2 + $0x10] sm:$0xff] %vm18, 0.0
    %22 = vst.msk [vmem:[#allocation2 + $0x18] sm:$0xff] %vm18, 0.0
    %23 = vst.msk [vmem:[#allocation2 + $0x20] sm:$0xff] %vm18, 0.0
    %24 = vst.msk [vmem:[#allocation2 + $0x28] sm:$0xff] %vm18, 0.0
    %25 = vst.msk [vmem:[#allocation2 + $0x30] sm:$0xff] %vm18, 0.0
    %26 = vst.msk [vmem:[#allocation2 + $0x38] sm:$0xff] %vm18, 0.0
    %27 = vst.msk [vmem:[#allocation2 + $0x40] sm:$0xff] %vm18, 0.0
    %28 = vst.msk [vmem:[#allocation2 + $0x48] sm:$0xff] %vm18, 0.0
    %29 = vst.msk [vmem:[#allocation2 + $0x50] sm:$0xff] %vm18, 0.0
    %30 = vst.msk [vmem:[#allocation2 + $0x58] sm:$0xff] %vm18, 0.0
    %31 = vst.msk [vmem:[#allocation2 + $0x60] sm:$0xff] %vm18, 0.0
    %32 = vst.msk [vmem:[#allocation2 + $0x68] sm:$0xff] %vm18, 0.0
    %33 = vst.msk [vmem:[#allocation2 + $0x70] sm:$0xff] %vm18, 0.0
    %34 = vst.msk [vmem:[#allocation2 + $0x78] sm:$0xff] %vm18, 0.0
  $region17: #{gae_forward.8} parent=0 // pred_fallthru
    _
  %v35 = vld [vmem:[#allocation2] sm:$0xff]
  %v36 = vld [vmem:[#allocation2 + $0x8] sm:$0xff]
  %v37 = vld [vmem:[#allocation2 + $0x10] sm:$0xff]
  %v38 = vld [vmem:[#allocation2 + $0x18] sm:$0xff]
  %v39 = vld [vmem:[#allocation2 + $0x20] sm:$0xff]
  %v40 = vld [vmem:[#allocation2 + $0x28] sm:$0xff]
  %v41 = vld [vmem:[#allocation2 + $0x30] sm:$0xff]
  %v42 = vld [vmem:[#allocation2 + $0x38] sm:$0xff]
  %v43 = vld [vmem:[#allocation2 + $0x40] sm:$0xff]
  %v44 = vld [vmem:[#allocation2 + $0x48] sm:$0xff]
  %v45 = vld [vmem:[#allocation2 + $0x50] sm:$0xff]
  %v46 = vld [vmem:[#allocation2 + $0x58] sm:$0xff]
  %v47 = vld [vmem:[#allocation2 + $0x60] sm:$0xff]
  %v48 = vld [vmem:[#allocation2 + $0x68] sm:$0xff]
  %v49 = vld [vmem:[#allocation2 + $0x70] sm:$0xff]
  %v50 = vld [vmem:[#allocation2 + $0x78] sm:$0xff]
  %v51 = vld [vmem:[%s0] sm:$0xff]
  %v52 = vld [vmem:[%s0 + $0x8] sm:$0xff]
  %v53 = vld [vmem:[%s0 + $0x10] sm:$0xff]
  %v54 = vld [vmem:[%s0 + $0x18] sm:$0xff]
  %v55 = vld [vmem:[%s0 + $0x20] sm:$0xff]
  %v56 = vld [vmem:[%s0 + $0x28] sm:$0xff]
  %v57 = vld [vmem:[%s0 + $0x30] sm:$0xff]
  %v58 = vld [vmem:[%s0 + $0x38] sm:$0xff]
  %v59 = vld [vmem:[%s0 + $0x40] sm:$0xff]
  %v60 = vld [vmem:[%s0 + $0x48] sm:$0xff]
  %v61 = vld [vmem:[%s0 + $0x50] sm:$0xff]
  %v62 = vld [vmem:[%s0 + $0x58] sm:$0xff]
  %v63 = vld [vmem:[%s0 + $0x60] sm:$0xff]
  %v64 = vld [vmem:[%s0 + $0x68] sm:$0xff]
  %v65 = vld [vmem:[%s0 + $0x70] sm:$0xff]
  %v66 = vld [vmem:[%s0 + $0x78] sm:$0xff]
  %v67 = vld [vmem:[%s1] sm:$0xff]
  %v68 = vld [vmem:[%s1 + $0x8] sm:$0xff]
  %v69 = vld [vmem:[%s1 + $0x10] sm:$0xff]
  %v70 = vld [vmem:[%s1 + $0x18] sm:$0xff]
  %v71 = vld [vmem:[%s1 + $0x20] sm:$0xff]
  %v72 = vld [vmem:[%s1 + $0x28] sm:$0xff]
  %v73 = vld [vmem:[%s1 + $0x30] sm:$0xff]
  %v74 = vld [vmem:[%s1 + $0x38] sm:$0xff]
  %v75 = vld [vmem:[%s1 + $0x40] sm:$0xff]
  %v76 = vld [vmem:[%s1 + $0x48] sm:$0xff]
  %v77 = vld [vmem:[%s1 + $0x50] sm:$0xff]
  %v78 = vld [vmem:[%s1 + $0x58] sm:$0xff]
  %v79 = vld [vmem:[%s1 + $0x60] sm:$0xff]
  %v80 = vld [vmem:[%s1 + $0x68] sm:$0xff]
  %v81 = vld [vmem:[%s1 + $0x70] sm:$0xff]
  %v82 = vld [vmem:[%s1 + $0x78] sm:$0xff]
  %83 = vmatprep.subr.mxu0 0.0
  %v84 = vand.u32 %v82, 4294901760
  %85 = vmatpush1.msra.mxu0 %v84
  %86 = vmatprep.subr.mxu0 0.0
  %v87 = vand.u32 %v81, 4294901760
  %88 = vmatpush1.msra.mxu0 %v87
  %89 = vmatprep.subr.mxu0 0.0
  %v90 = vand.u32 %v80, 4294901760
  %91 = vmatpush1.msra.mxu0 %v90
  %92 = vmatprep.subr.mxu0 0.0
  %v93 = vand.u32 %v79, 4294901760
  %94 = vmatpush1.msra.mxu0 %v93
  %95 = vmatprep.subr.mxu0 0.0
  %v96 = vand.u32 %v78, 4294901760
  %97 = vmatpush1.msra.mxu0 %v96
  %98 = vmatprep.subr.mxu0 0.0
  %v99 = vand.u32 %v77, 4294901760
  %100 = vmatpush1.msra.mxu0 %v99
  %101 = vmatprep.subr.mxu0 0.0
  %v102 = vand.u32 %v76, 4294901760
  %103 = vmatpush1.msra.mxu0 %v102
  %104 = vmatprep.subr.mxu0 0.0
  %v105 = vand.u32 %v75, 4294901760
  %106 = vmatpush1.msra.mxu0 %v105
  %107 = vmatprep.subr.mxu0 0.0
  %v108 = vand.u32 %v74, 4294901760
  %109 = vmatpush1.msra.mxu0 %v108
  %110 = vmatprep.subr.mxu0 0.0
  %v111 = vand.u32 %v73, 4294901760
  %112 = vmatpush1.msra.mxu0 %v111
  %113 = vmatprep.subr.mxu0 0.0
  %v114 = vand.u32 %v72, 4294901760
  %115 = vmatpush1.msra.mxu0 %v114
  %116 = vmatprep.subr.mxu0 0.0
  %v117 = vand.u32 %v71, 4294901760
  %118 = vmatpush1.msra.mxu0 %v117
  %119 = vmatprep.subr.mxu0 0.0
  %v120 = vand.u32 %v70, 4294901760
  %121 = vmatpush1.msra.mxu0 %v120
  %122 = vmatprep.subr.mxu0 0.0
  %v123 = vand.u32 %v69, 4294901760
  %124 = vmatpush1.msra.mxu0 %v123
  %125 = vmatprep.subr.mxu0 0.0
  %v126 = vand.u32 %v68, 4294901760
  %127 = vmatpush1.msra.mxu0 %v126
  %128 = vmatprep.subr.mxu0 0.0
  %v129 = vand.u32 %v67, 4294901760
  %130 = vmatpush1.msra.mxu0 %v129
  %131 = vmatprep.subr.mxu0 0.0
  %132 = vmatpush2.msra.mxu0 0.0
  %133 = vmatprep.subr.mxu0 0.0
  %134 = vmatpush2.msra.mxu0 0.0
  %135 = vmatprep.subr.mxu0 0.0
  %136 = vmatpush2.msra.mxu0 0.0
  %137 = vmatprep.subr.mxu0 0.0
  %138 = vmatpush2.msra.mxu0 0.0
  %139 = vmatprep.subr.mxu0 0.0
  %140 = vmatpush2.msra.mxu0 0.0
  %141 = vmatprep.subr.mxu0 0.0
  %142 = vmatpush2.msra.mxu0 0.0
  %143 = vmatprep.subr.mxu0 0.0
  %144 = vmatpush2.msra.mxu0 0.0
  %145 = vmatprep.subr.mxu0 0.0
  %146 = vmatpush2.msra.mxu0 0.0
  %147 = vmatprep.subr.mxu0 0.0
  %148 = vmatpush2.msra.mxu0 0.0
  %149 = vmatprep.subr.mxu0 0.0
  %150 = vmatpush2.msra.mxu0 0.0
  %151 = vmatprep.subr.mxu0 0.0
  %152 = vmatpush2.msra.mxu0 0.0
  %153 = vmatprep.subr.mxu0 0.0
  %154 = vmatpush2.msra.mxu0 0.0
  %155 = vmatprep.subr.mxu0 0.0
  %156 = vmatpush2.msra.mxu0 0.0
  %157 = vmatprep.subr.mxu0 0.0
  %158 = vmatpush2.msra.mxu0 0.0
  %159 = vmatprep.subr.mxu0 0.0
  %160 = vmatpush2.msra.mxu0 0.0
  %161 = vmatprep.subr.mxu0 0.0
  %162 = vmatpush2.msra.mxu0 0.0
  %163 = vmatprep.mubr.f32.mxu0 0.0
  %v164 = vand.u32 %v51, 4294901760
  %v165 = vsub.f32 %v51, %v164
  %v166 = vand.u32 %v165, 4294901760
  %v167 = vsub.f32 %v165, %v166
  %v168 = vand.u32 %v167, 4294901760
  %169 = vmatmul.mubr.f32.gmra.mxu0 %v168
  %v170 = vpop.f32.mrf.mxu0
  %v171 = vadd.f32 0.0, %v170
  %v172 = vpop.f32.mrf.mxu0
  %173 = vmatprep.mubr.f32.mxu0 0.0
  %v174 = vand.u32 %v52, 4294901760
  %v175 = vsub.f32 %v52, %v174
  %v176 = vand.u32 %v175, 4294901760
  %v177 = vsub.f32 %v175, %v176
  %v178 = vand.u32 %v177, 4294901760
  %179 = vmatmul.mubr.f32.gmra.mxu0 %v178
  %v180 = vpop.f32.mrf.mxu0
  %v181 = vadd.f32 0.0, %v180
  %v182 = vpop.f32.mrf.mxu0
  %183 = vmatprep.mubr.f32.mxu0 0.0
  %v184 = vand.u32 %v53, 4294901760
  %v185 = vsub.f32 %v53, %v184
  %v186 = vand.u32 %v185, 4294901760
  %v187 = vsub.f32 %v185, %v186
  %v188 = vand.u32 %v187, 4294901760
  %189 = vmatmul.mubr.f32.gmra.mxu0 %v188
  %v190 = vpop.f32.mrf.mxu0
  %v191 = vadd.f32 0.0, %v190
  %v192 = vpop.f32.mrf.mxu0
  %193 = vmatprep.mubr.f32.mxu0 0.0
  %v194 = vand.u32 %v54, 4294901760
  %v195 = vsub.f32 %v54, %v194
  %v196 = vand.u32 %v195, 4294901760
  %v197 = vsub.f32 %v195, %v196
  %v198 = vand.u32 %v197, 4294901760
  %199 = vmatmul.mubr.f32.gmra.mxu0 %v198
  %v200 = vpop.f32.mrf.mxu0
  %v201 = vadd.f32 0.0, %v200
  %v202 = vpop.f32.mrf.mxu0
  %203 = vmatprep.mubr.f32.mxu0 0.0
  %v204 = vand.u32 %v55, 4294901760
  %v205 = vsub.f32 %v55, %v204
  %v206 = vand.u32 %v205, 4294901760
  %v207 = vsub.f32 %v205, %v206
  %v208 = vand.u32 %v207, 4294901760
  %209 = vmatmul.mubr.f32.gmra.mxu0 %v208
  %v210 = vpop.f32.mrf.mxu0
  %v211 = vadd.f32 0.0, %v210
  %v212 = vpop.f32.mrf.mxu0
  %213 = vmatprep.mubr.f32.mxu0 0.0
  %v214 = vand.u32 %v56, 4294901760
  %v215 = vsub.f32 %v56, %v214
  %v216 = vand.u32 %v215, 4294901760
  %v217 = vsub.f32 %v215, %v216
  %v218 = vand.u32 %v217, 4294901760
  %219 = vmatmul.mubr.f32.gmra.mxu0 %v218
  %v220 = vpop.f32.mrf.mxu0
  %v221 = vadd.f32 0.0, %v220
  %v222 = vpop.f32.mrf.mxu0
  %223 = vmatprep.mubr.f32.mxu0 0.0
  %v224 = vand.u32 %v57, 4294901760
  %v225 = vsub.f32 %v57, %v224
  %v226 = vand.u32 %v225, 4294901760
  %v227 = vsub.f32 %v225, %v226
  %v228 = vand.u32 %v227, 4294901760
  %229 = vmatmul.mubr.f32.gmra.mxu0 %v228
  %v230 = vpop.f32.mrf.mxu0
  %v231 = vadd.f32 0.0, %v230
  %v232 = vpop.f32.mrf.mxu0
  %233 = vmatprep.mubr.f32.mxu0 0.0
  %v234 = vand.u32 %v58, 4294901760
  %v235 = vsub.f32 %v58, %v234
  %v236 = vand.u32 %v235, 4294901760
  %v237 = vsub.f32 %v235, %v236
  %v238 = vand.u32 %v237, 4294901760
  %239 = vmatmul.mubr.f32.gmra.mxu0 %v238
  %v240 = vpop.f32.mrf.mxu0
  %v241 = vadd.f32 0.0, %v240
  %v242 = vpop.f32.mrf.mxu0
  %243 = vmatprep.mubr.f32.mxu0 0.0
  %v244 = vand.u32 %v59, 4294901760
  %v245 = vsub.f32 %v59, %v244
  %v246 = vand.u32 %v245, 4294901760
  %v247 = vsub.f32 %v245, %v246
  %v248 = vand.u32 %v247, 4294901760
  %249 = vmatmul.mubr.f32.gmra.mxu0 %v248
  %v250 = vpop.f32.mrf.mxu0
  %v251 = vadd.f32 0.0, %v250
  %v252 = vpop.f32.mrf.mxu0
  %253 = vmatprep.mubr.f32.mxu0 0.0
  %v254 = vand.u32 %v60, 4294901760
  %v255 = vsub.f32 %v60, %v254
  %v256 = vand.u32 %v255, 4294901760
  %v257 = vsub.f32 %v255, %v256
  %v258 = vand.u32 %v257, 4294901760
  %259 = vmatmul.mubr.f32.gmra.mxu0 %v258
  %v260 = vpop.f32.mrf.mxu0
  %v261 = vadd.f32 0.0, %v260
  %v262 = vpop.f32.mrf.mxu0
  %263 = vmatprep.mubr.f32.mxu0 0.0
  %v264 = vand.u32 %v61, 4294901760
  %v265 = vsub.f32 %v61, %v264
  %v266 = vand.u32 %v265, 4294901760
  %v267 = vsub.f32 %v265, %v266
  %v268 = vand.u32 %v267, 4294901760
  %269 = vmatmul.mubr.f32.gmra.mxu0 %v268
  %v270 = vpop.f32.mrf.mxu0
  %v271 = vadd.f32 0.0, %v270
  %v272 = vpop.f32.mrf.mxu0
  %273 = vmatprep.mubr.f32.mxu0 0.0
  %v274 = vand.u32 %v62, 4294901760
  %v275 = vsub.f32 %v62, %v274
  %v276 = vand.u32 %v275, 4294901760
  %v277 = vsub.f32 %v275, %v276
  %v278 = vand.u32 %v277, 4294901760
  %279 = vmatmul.mubr.f32.gmra.mxu0 %v278
  %v280 = vpop.f32.mrf.mxu0
  %v281 = vadd.f32 0.0, %v280
  %v282 = vpop.f32.mrf.mxu0
  %283 = vmatprep.mubr.f32.mxu0 0.0
  %v284 = vand.u32 %v63, 4294901760
  %v285 = vsub.f32 %v63, %v284
  %v286 = vand.u32 %v285, 4294901760
  %v287 = vsub.f32 %v285, %v286
  %v288 = vand.u32 %v287, 4294901760
  %289 = vmatmul.mubr.f32.gmra.mxu0 %v288
  %v290 = vpop.f32.mrf.mxu0
  %v291 = vadd.f32 0.0, %v290
  %v292 = vpop.f32.mrf.mxu0
  %293 = vmatprep.mubr.f32.mxu0 0.0
  %v294 = vand.u32 %v64, 4294901760
  %v295 = vsub.f32 %v64, %v294
  %v296 = vand.u32 %v295, 4294901760
  %v297 = vsub.f32 %v295, %v296
  %v298 = vand.u32 %v297, 4294901760
  %299 = vmatmul.mubr.f32.gmra.mxu0 %v298
  %v300 = vpop.f32.mrf.mxu0
  %v301 = vadd.f32 0.0, %v300
  %v302 = vpop.f32.mrf.mxu0
  %303 = vmatprep.mubr.f32.mxu0 0.0
  %v304 = vand.u32 %v65, 4294901760
  %v305 = vsub.f32 %v65, %v304
  %v306 = vand.u32 %v305, 4294901760
  %v307 = vsub.f32 %v305, %v306
  %v308 = vand.u32 %v307, 4294901760
  %309 = vmatmul.mubr.f32.gmra.mxu0 %v308
  %v310 = vpop.f32.mrf.mxu0
  %v311 = vadd.f32 0.0, %v310
  %v312 = vpop.f32.mrf.mxu0
  %313 = vmatprep.mubr.f32.mxu0 0.0
  %v314 = vand.u32 %v66, 4294901760
  %v315 = vsub.f32 %v66, %v314
  %v316 = vand.u32 %v315, 4294901760
  %v317 = vsub.f32 %v315, %v316
  %v318 = vand.u32 %v317, 4294901760
  %319 = vmatmul.mubr.f32.gmra.mxu0 %v318
  %v320 = vpop.f32.mrf.mxu0
  %v321 = vadd.f32 0.0, %v320
  %v322 = vpop.f32.mrf.mxu0
  %323 = vdwg.mxu0
  %324 = vmatprep.subr.mxu0 0.0
  %v325 = vand.u32 %v82, 4294901760
  %v326 = vsub.f32 %v82, %v325
  %v327 = vand.u32 %v326, 4294901760
  %v328 = vsub.f32 %v326, %v327
  %v329 = vand.u32 %v328, 4294901760
  %330 = vmatpush1.msra.mxu0 %v329
  %331 = vmatprep.subr.mxu0 0.0
  %v332 = vand.u32 %v81, 4294901760
  %v333 = vsub.f32 %v81, %v332
  %v334 = vand.u32 %v333, 4294901760
  %v335 = vsub.f32 %v333, %v334
  %v336 = vand.u32 %v335, 4294901760
  %337 = vmatpush1.msra.mxu0 %v336
  %338 = vmatprep.subr.mxu0 0.0
  %v339 = vand.u32 %v80, 4294901760
  %v340 = vsub.f32 %v80, %v339
  %v341 = vand.u32 %v340, 4294901760
  %v342 = vsub.f32 %v340, %v341
  %v343 = vand.u32 %v342, 4294901760
  %344 = vmatpush1.msra.mxu0 %v343
  %345 = vmatprep.subr.mxu0 0.0
  %v346 = vand.u32 %v79, 4294901760
  %v347 = vsub.f32 %v79, %v346
  %v348 = vand.u32 %v347, 4294901760
  %v349 = vsub.f32 %v347, %v348
  %v350 = vand.u32 %v349, 4294901760
  %351 = vmatpush1.msra.mxu0 %v350
  %352 = vmatprep.subr.mxu0 0.0
  %v353 = vand.u32 %v78, 4294901760
  %v354 = vsub.f32 %v78, %v353
  %v355 = vand.u32 %v354, 4294901760
  %v356 = vsub.f32 %v354, %v355
  %v357 = vand.u32 %v356, 4294901760
  %358 = vmatpush1.msra.mxu0 %v357
  %359 = vmatprep.subr.mxu0 0.0
  %v360 = vand.u32 %v77, 4294901760
  %v361 = vsub.f32 %v77, %v360
  %v362 = vand.u32 %v361, 4294901760
  %v363 = vsub.f32 %v361, %v362
  %v364 = vand.u32 %v363, 4294901760
  %365 = vmatpush1.msra.mxu0 %v364
  %366 = vmatprep.subr.mxu0 0.0
  %v367 = vand.u32 %v76, 4294901760
  %v368 = vsub.f32 %v76, %v367
  %v369 = vand.u32 %v368, 4294901760
  %v370 = vsub.f32 %v368, %v369
  %v371 = vand.u32 %v370, 4294901760
  %372 = vmatpush1.msra.mxu0 %v371
  %373 = vmatprep.subr.mxu0 0.0
  %v374 = vand.u32 %v75, 4294901760
  %v375 = vsub.f32 %v75, %v374
  %v376 = vand.u32 %v375, 4294901760
  %v377 = vsub.f32 %v375, %v376
  %v378 = vand.u32 %v377, 4294901760
  %379 = vmatpush1.msra.mxu0 %v378
  %380 = vmatprep.subr.mxu0 0.0
  %v381 = vand.u32 %v74, 4294901760
  %v382 = vsub.f32 %v74, %v381
  %v383 = vand.u32 %v382, 4294901760
  %v384 = vsub.f32 %v382, %v383
  %v385 = vand.u32 %v384, 4294901760
  %386 = vmatpush1.msra.mxu0 %v385
  %387 = vmatprep.subr.mxu0 0.0
  %v388 = vand.u32 %v73, 4294901760
  %v389 = vsub.f32 %v73, %v388
  %v390 = vand.u32 %v389, 4294901760
  %v391 = vsub.f32 %v389, %v390
  %v392 = vand.u32 %v391, 4294901760
  %393 = vmatpush1.msra.mxu0 %v392
  %394 = vmatprep.subr.mxu0 0.0
  %v395 = vand.u32 %v72, 4294901760
  %v396 = vsub.f32 %v72, %v395
  %v397 = vand.u32 %v396, 4294901760
  %v398 = vsub.f32 %v396, %v397
  %v399 = vand.u32 %v398, 4294901760
  %400 = vmatpush1.msra.mxu0 %v399
  %401 = vmatprep.subr.mxu0 0.0
  %v402 = vand.u32 %v71, 4294901760
  %v403 = vsub.f32 %v71, %v402
  %v404 = vand.u32 %v403, 4294901760
  %v405 = vsub.f32 %v403, %v404
  %v406 = vand.u32 %v405, 4294901760
  %407 = vmatpush1.msra.mxu0 %v406
  %408 = vmatprep.subr.mxu0 0.0
  %v409 = vand.u32 %v70, 4294901760
  %v410 = vsub.f32 %v70, %v409
  %v411 = vand.u32 %v410, 4294901760
  %v412 = vsub.f32 %v410, %v411
  %v413 = vand.u32 %v412, 4294901760
  %414 = vmatpush1.msra.mxu0 %v413
  %415 = vmatprep.subr.mxu0 0.0
  %v416 = vand.u32 %v69, 4294901760
  %v417 = vsub.f32 %v69, %v416
  %v418 = vand.u32 %v417, 4294901760
  %v419 = vsub.f32 %v417, %v418
  %v420 = vand.u32 %v419, 4294901760
  %421 = vmatpush1.msra.mxu0 %v420
  %422 = vmatprep.subr.mxu0 0.0
  %v423 = vand.u32 %v68, 4294901760
  %v424 = vsub.f32 %v68, %v423
  %v425 = vand.u32 %v424, 4294901760
  %v426 = vsub.f32 %v424, %v425
  %v427 = vand.u32 %v426, 4294901760
  %428 = vmatpush1.msra.mxu0 %v427
  %429 = vmatprep.subr.mxu0 0.0
  %v430 = vand.u32 %v67, 4294901760
  %v431 = vsub.f32 %v67, %v430
  %v432 = vand.u32 %v431, 4294901760
  %v433 = vsub.f32 %v431, %v432
  %v434 = vand.u32 %v433, 4294901760
  %435 = vmatpush1.msra.mxu0 %v434
  %436 = vmatprep.subr.mxu0 0.0
  %437 = vmatpush2.msra.mxu0 0.0
  %438 = vmatprep.subr.mxu0 0.0
  %439 = vmatpush2.msra.mxu0 0.0
  %440 = vmatprep.subr.mxu0 0.0
  %441 = vmatpush2.msra.mxu0 0.0
  %442 = vmatprep.subr.mxu0 0.0
  %443 = vmatpush2.msra.mxu0 0.0
  %444 = vmatprep.subr.mxu0 0.0
  %445 = vmatpush2.msra.mxu0 0.0
  %446 = vmatprep.subr.mxu0 0.0
  %447 = vmatpush2.msra.mxu0 0.0
  %448 = vmatprep.subr.mxu0 0.0
  %449 = vmatpush2.msra.mxu0 0.0
  %450 = vmatprep.subr.mxu0 0.0
  %451 = vmatpush2.msra.mxu0 0.0
  %452 = vmatprep.subr.mxu0 0.0
  %453 = vmatpush2.msra.mxu0 0.0
  %454 = vmatprep.subr.mxu0 0.0
  %455 = vmatpush2.msra.mxu0 0.0
  %456 = vmatprep.subr.mxu0 0.0
  %457 = vmatpush2.msra.mxu0 0.0
  %458 = vmatprep.subr.mxu0 0.0
  %459 = vmatpush2.msra.mxu0 0.0
  %460 = vmatprep.subr.mxu0 0.0
  %461 = vmatpush2.msra.mxu0 0.0
  %462 = vmatprep.subr.mxu0 0.0
  %463 = vmatpush2.msra.mxu0 0.0
  %464 = vmatprep.subr.mxu0 0.0
  %465 = vmatpush2.msra.mxu0 0.0
  %466 = vmatprep.subr.mxu0 0.0
  %467 = vmatpush2.msra.mxu0 0.0
  %468 = vmatprep.mubr.f32.mxu0 0.0
  %v469 = vand.u32 %v51, 4294901760
  %470 = vmatmul.mubr.f32.gmra.mxu0 %v469
  %v471 = vpop.f32.mrf.mxu0
  %v472 = vadd.f32 %v171, %v471
  %v473 = vpop.f32.mrf.mxu0
  %474 = vmatprep.mubr.f32.mxu0 0.0
  %v475 = vand.u32 %v52, 4294901760
  %476 = vmatmul.mubr.f32.gmra.mxu0 %v475
  %v477 = vpop.f32.mrf.mxu0
  %v478 = vadd.f32 %v181, %v477
  %v479 = vpop.f32.mrf.mxu0
  %480 = vmatprep.mubr.f32.mxu0 0.0
  %v481 = vand.u32 %v53, 4294901760
  %482 = vmatmul.mubr.f32.gmra.mxu0 %v481
  %v483 = vpop.f32.mrf.mxu0
  %v484 = vadd.f32 %v191, %v483
  %v485 = vpop.f32.mrf.mxu0
  %486 = vmatprep.mubr.f32.mxu0 0.0
  %v487 = vand.u32 %v54, 4294901760
  %488 = vmatmul.mubr.f32.gmra.mxu0 %v487
  %v489 = vpop.f32.mrf.mxu0
  %v490 = vadd.f32 %v201, %v489
  %v491 = vpop.f32.mrf.mxu0
  %492 = vmatprep.mubr.f32.mxu0 0.0
  %v493 = vand.u32 %v55, 4294901760
  %494 = vmatmul.mubr.f32.gmra.mxu0 %v493
  %v495 = vpop.f32.mrf.mxu0
  %v496 = vadd.f32 %v211, %v495
  %v497 = vpop.f32.mrf.mxu0
  %498 = vmatprep.mubr.f32.mxu0 0.0
  %v499 = vand.u32 %v56, 4294901760
  %500 = vmatmul.mubr.f32.gmra.mxu0 %v499
  %v501 = vpop.f32.mrf.mxu0
  %v502 = vadd.f32 %v221, %v501
  %v503 = vpop.f32.mrf.mxu0
  %504 = vmatprep.mubr.f32.mxu0 0.0
  %v505 = vand.u32 %v57, 4294901760
  %506 = vmatmul.mubr.f32.gmra.mxu0 %v505
  %v507 = vpop.f32.mrf.mxu0
  %v508 = vadd.f32 %v231, %v507
  %v509 = vpop.f32.mrf.mxu0
  %510 = vmatprep.mubr.f32.mxu0 0.0
  %v511 = vand.u32 %v58, 4294901760
  %512 = vmatmul.mubr.f32.gmra.mxu0 %v511
  %v513 = vpop.f32.mrf.mxu0
  %v514 = vadd.f32 %v241, %v513
  %v515 = vpop.f32.mrf.mxu0
  %516 = vmatprep.mubr.f32.mxu0 0.0
  %v517 = vand.u32 %v59, 4294901760
  %518 = vmatmul.mubr.f32.gmra.mxu0 %v517
  %v519 = vpop.f32.mrf.mxu0
  %v520 = vadd.f32 %v251, %v519
  %v521 = vpop.f32.mrf.mxu0
  %522 = vmatprep.mubr.f32.mxu0 0.0
  %v523 = vand.u32 %v60, 4294901760
  %524 = vmatmul.mubr.f32.gmra.mxu0 %v523
  %v525 = vpop.f32.mrf.mxu0
  %v526 = vadd.f32 %v261, %v525
  %v527 = vpop.f32.mrf.mxu0
  %528 = vmatprep.mubr.f32.mxu0 0.0
  %v529 = vand.u32 %v61, 4294901760
  %530 = vmatmul.mubr.f32.gmra.mxu0 %v529
  %v531 = vpop.f32.mrf.mxu0
  %v532 = vadd.f32 %v271, %v531
  %v533 = vpop.f32.mrf.mxu0
  %534 = vmatprep.mubr.f32.mxu0 0.0
  %v535 = vand.u32 %v62, 4294901760
  %536 = vmatmul.mubr.f32.gmra.mxu0 %v535
  %v537 = vpop.f32.mrf.mxu0
  %v538 = vadd.f32 %v281, %v537
  %v539 = vpop.f32.mrf.mxu0
  %540 = vmatprep.mubr.f32.mxu0 0.0
  %v541 = vand.u32 %v63, 4294901760
  %542 = vmatmul.mubr.f32.gmra.mxu0 %v541
  %v543 = vpop.f32.mrf.mxu0
  %v544 = vadd.f32 %v291, %v543
  %v545 = vpop.f32.mrf.mxu0
  %546 = vmatprep.mubr.f32.mxu0 0.0
  %v547 = vand.u32 %v64, 4294901760
  %548 = vmatmul.mubr.f32.gmra.mxu0 %v547
  %v549 = vpop.f32.mrf.mxu0
  %v550 = vadd.f32 %v301, %v549
  %v551 = vpop.f32.mrf.mxu0
  %552 = vmatprep.mubr.f32.mxu0 0.0
  %v553 = vand.u32 %v65, 4294901760
  %554 = vmatmul.mubr.f32.gmra.mxu0 %v553
  %v555 = vpop.f32.mrf.mxu0
  %v556 = vadd.f32 %v311, %v555
  %v557 = vpop.f32.mrf.mxu0
  %558 = vmatprep.mubr.f32.mxu0 0.0
  %v559 = vand.u32 %v66, 4294901760
  %560 = vmatmul.mubr.f32.gmra.mxu0 %v559
  %v561 = vpop.f32.mrf.mxu0
  %v562 = vadd.f32 %v321, %v561
  %v563 = vpop.f32.mrf.mxu0
  %564 = vdwg.mxu0
  %565 = vmatprep.subr.mxu0 0.0
  %v566 = vand.u32 %v82, 4294901760
  %v567 = vsub.f32 %v82, %v566
  %568 = vmatpush1.msra.mxu0 %v567
  %569 = vmatprep.subr.mxu0 0.0
  %v570 = vand.u32 %v81, 4294901760
  %v571 = vsub.f32 %v81, %v570
  %572 = vmatpush1.msra.mxu0 %v571
  %573 = vmatprep.subr.mxu0 0.0
  %v574 = vand.u32 %v80, 4294901760
  %v575 = vsub.f32 %v80, %v574
  %576 = vmatpush1.msra.mxu0 %v575
  %577 = vmatprep.subr.mxu0 0.0
  %v578 = vand.u32 %v79, 4294901760
  %v579 = vsub.f32 %v79, %v578
  %580 = vmatpush1.msra.mxu0 %v579
  %581 = vmatprep.subr.mxu0 0.0
  %v582 = vand.u32 %v78, 4294901760
  %v583 = vsub.f32 %v78, %v582
  %584 = vmatpush1.msra.mxu0 %v583
  %585 = vmatprep.subr.mxu0 0.0
  %v586 = vand.u32 %v77, 4294901760
  %v587 = vsub.f32 %v77, %v586
  %588 = vmatpush1.msra.mxu0 %v587
  %589 = vmatprep.subr.mxu0 0.0
  %v590 = vand.u32 %v76, 4294901760
  %v591 = vsub.f32 %v76, %v590
  %592 = vmatpush1.msra.mxu0 %v591
  %593 = vmatprep.subr.mxu0 0.0
  %v594 = vand.u32 %v75, 4294901760
  %v595 = vsub.f32 %v75, %v594
  %596 = vmatpush1.msra.mxu0 %v595
  %597 = vmatprep.subr.mxu0 0.0
  %v598 = vand.u32 %v74, 4294901760
  %v599 = vsub.f32 %v74, %v598
  %600 = vmatpush1.msra.mxu0 %v599
  %601 = vmatprep.subr.mxu0 0.0
  %v602 = vand.u32 %v73, 4294901760
  %v603 = vsub.f32 %v73, %v602
  %604 = vmatpush1.msra.mxu0 %v603
  %605 = vmatprep.subr.mxu0 0.0
  %v606 = vand.u32 %v72, 4294901760
  %v607 = vsub.f32 %v72, %v606
  %608 = vmatpush1.msra.mxu0 %v607
  %609 = vmatprep.subr.mxu0 0.0
  %v610 = vand.u32 %v71, 4294901760
  %v611 = vsub.f32 %v71, %v610
  %612 = vmatpush1.msra.mxu0 %v611
  %613 = vmatprep.subr.mxu0 0.0
  %v614 = vand.u32 %v70, 4294901760
  %v615 = vsub.f32 %v70, %v614
  %616 = vmatpush1.msra.mxu0 %v615
  %617 = vmatprep.subr.mxu0 0.0
  %v618 = vand.u32 %v69, 4294901760
  %v619 = vsub.f32 %v69, %v618
  %620 = vmatpush1.msra.mxu0 %v619
  %621 = vmatprep.subr.mxu0 0.0
  %v622 = vand.u32 %v68, 4294901760
  %v623 = vsub.f32 %v68, %v622
  %624 = vmatpush1.msra.mxu0 %v623
  %625 = vmatprep.subr.mxu0 0.0
  %v626 = vand.u32 %v67, 4294901760
  %v627 = vsub.f32 %v67, %v626
  %628 = vmatpush1.msra.mxu0 %v627
  %629 = vmatprep.subr.mxu0 0.0
  %630 = vmatpush2.msra.mxu0 0.0
  %631 = vmatprep.subr.mxu0 0.0
  %632 = vmatpush2.msra.mxu0 0.0
  %633 = vmatprep.subr.mxu0 0.0
  %634 = vmatpush2.msra.mxu0 0.0
  %635 = vmatprep.subr.mxu0 0.0
  %636 = vmatpush2.msra.mxu0 0.0
  %637 = vmatprep.subr.mxu0 0.0
  %638 = vmatpush2.msra.mxu0 0.0
  %639 = vmatprep.subr.mxu0 0.0
  %640 = vmatpush2.msra.mxu0 0.0
  %641 = vmatprep.subr.mxu0 0.0
  %642 = vmatpush2.msra.mxu0 0.0
  %643 = vmatprep.subr.mxu0 0.0
  %644 = vmatpush2.msra.mxu0 0.0
  %645 = vmatprep.subr.mxu0 0.0
  %646 = vmatpush2.msra.mxu0 0.0
  %647 = vmatprep.subr.mxu0 0.0
  %648 = vmatpush2.msra.mxu0 0.0
  %649 = vmatprep.subr.mxu0 0.0
  %650 = vmatpush2.msra.mxu0 0.0
  %651 = vmatprep.subr.mxu0 0.0
  %652 = vmatpush2.msra.mxu0 0.0
  %653 = vmatprep.subr.mxu0 0.0
  %654 = vmatpush2.msra.mxu0 0.0
  %655 = vmatprep.subr.mxu0 0.0
  %656 = vmatpush2.msra.mxu0 0.0
  %657 = vmatprep.subr.mxu0 0.0
  %658 = vmatpush2.msra.mxu0 0.0
  %659 = vmatprep.subr.mxu0 0.0
  %660 = vmatpush2.msra.mxu0 0.0
  %661 = vmatprep.mubr.f32.mxu0 0.0
  %v662 = vand.u32 %v51, 4294901760
  %v663 = vsub.f32 %v51, %v662
  %664 = vmatmul.mubr.f32.gmra.mxu0 %v663
  %v665 = vpop.f32.mrf.mxu0
  %v666 = vadd.f32 %v472, %v665
  %v667 = vpop.f32.mrf.mxu0
  %668 = vmatprep.mubr.f32.mxu0 0.0
  %v669 = vand.u32 %v52, 4294901760
  %v670 = vsub.f32 %v52, %v669
  %671 = vmatmul.mubr.f32.gmra.mxu0 %v670
  %v672 = vpop.f32.mrf.mxu0
  %v673 = vadd.f32 %v478, %v672
  %v674 = vpop.f32.mrf.mxu0
  %675 = vmatprep.mubr.f32.mxu0 0.0
  %v676 = vand.u32 %v53, 4294901760
  %v677 = vsub.f32 %v53, %v676
  %678 = vmatmul.mubr.f32.gmra.mxu0 %v677
  %v679 = vpop.f32.mrf.mxu0
  %v680 = vadd.f32 %v484, %v679
  %v681 = vpop.f32.mrf.mxu0
  %682 = vmatprep.mubr.f32.mxu0 0.0
  %v683 = vand.u32 %v54, 4294901760
  %v684 = vsub.f32 %v54, %v683
  %685 = vmatmul.mubr.f32.gmra.mxu0 %v684
  %v686 = vpop.f32.mrf.mxu0
  %v687 = vadd.f32 %v490, %v686
  %v688 = vpop.f32.mrf.mxu0
  %689 = vmatprep.mubr.f32.mxu0 0.0
  %v690 = vand.u32 %v55, 4294901760
  %v691 = vsub.f32 %v55, %v690
  %692 = vmatmul.mubr.f32.gmra.mxu0 %v691
  %v693 = vpop.f32.mrf.mxu0
  %v694 = vadd.f32 %v496, %v693
  %v695 = vpop.f32.mrf.mxu0
  %696 = vmatprep.mubr.f32.mxu0 0.0
  %v697 = vand.u32 %v56, 4294901760
  %v698 = vsub.f32 %v56, %v697
  %699 = vmatmul.mubr.f32.gmra.mxu0 %v698
  %v700 = vpop.f32.mrf.mxu0
  %v701 = vadd.f32 %v502, %v700
  %v702 = vpop.f32.mrf.mxu0
  %703 = vmatprep.mubr.f32.mxu0 0.0
  %v704 = vand.u32 %v57, 4294901760
  %v705 = vsub.f32 %v57, %v704
  %706 = vmatmul.mubr.f32.gmra.mxu0 %v705
  %v707 = vpop.f32.mrf.mxu0
  %v708 = vadd.f32 %v508, %v707
  %v709 = vpop.f32.mrf.mxu0
  %710 = vmatprep.mubr.f32.mxu0 0.0
  %v711 = vand.u32 %v58, 4294901760
  %v712 = vsub.f32 %v58, %v711
  %713 = vmatmul.mubr.f32.gmra.mxu0 %v712
  %v714 = vpop.f32.mrf.mxu0
  %v715 = vadd.f32 %v514, %v714
  %v716 = vpop.f32.mrf.mxu0
  %717 = vmatprep.mubr.f32.mxu0 0.0
  %v718 = vand.u32 %v59, 4294901760
  %v719 = vsub.f32 %v59, %v718
  %720 = vmatmul.mubr.f32.gmra.mxu0 %v719
  %v721 = vpop.f32.mrf.mxu0
  %v722 = vadd.f32 %v520, %v721
  %v723 = vpop.f32.mrf.mxu0
  %724 = vmatprep.mubr.f32.mxu0 0.0
  %v725 = vand.u32 %v60, 4294901760
  %v726 = vsub.f32 %v60, %v725
  %727 = vmatmul.mubr.f32.gmra.mxu0 %v726
  %v728 = vpop.f32.mrf.mxu0
  %v729 = vadd.f32 %v526, %v728
  %v730 = vpop.f32.mrf.mxu0
  %731 = vmatprep.mubr.f32.mxu0 0.0
  %v732 = vand.u32 %v61, 4294901760
  %v733 = vsub.f32 %v61, %v732
  %734 = vmatmul.mubr.f32.gmra.mxu0 %v733
  %v735 = vpop.f32.mrf.mxu0
  %v736 = vadd.f32 %v532, %v735
  %v737 = vpop.f32.mrf.mxu0
  %738 = vmatprep.mubr.f32.mxu0 0.0
  %v739 = vand.u32 %v62, 4294901760
  %v740 = vsub.f32 %v62, %v739
  %741 = vmatmul.mubr.f32.gmra.mxu0 %v740
  %v742 = vpop.f32.mrf.mxu0
  %v743 = vadd.f32 %v538, %v742
  %v744 = vpop.f32.mrf.mxu0
  %745 = vmatprep.mubr.f32.mxu0 0.0
  %v746 = vand.u32 %v63, 4294901760
  %v747 = vsub.f32 %v63, %v746
  %748 = vmatmul.mubr.f32.gmra.mxu0 %v747
  %v749 = vpop.f32.mrf.mxu0
  %v750 = vadd.f32 %v544, %v749
  %v751 = vpop.f32.mrf.mxu0
  %752 = vmatprep.mubr.f32.mxu0 0.0
  %v753 = vand.u32 %v64, 4294901760
  %v754 = vsub.f32 %v64, %v753
  %755 = vmatmul.mubr.f32.gmra.mxu0 %v754
  %v756 = vpop.f32.mrf.mxu0
  %v757 = vadd.f32 %v550, %v756
  %v758 = vpop.f32.mrf.mxu0
  %759 = vmatprep.mubr.f32.mxu0 0.0
  %v760 = vand.u32 %v65, 4294901760
  %v761 = vsub.f32 %v65, %v760
  %762 = vmatmul.mubr.f32.gmra.mxu0 %v761
  %v763 = vpop.f32.mrf.mxu0
  %v764 = vadd.f32 %v556, %v763
  %v765 = vpop.f32.mrf.mxu0
  %766 = vmatprep.mubr.f32.mxu0 0.0
  %v767 = vand.u32 %v66, 4294901760
  %v768 = vsub.f32 %v66, %v767
  %769 = vmatmul.mubr.f32.gmra.mxu0 %v768
  %v770 = vpop.f32.mrf.mxu0
  %v771 = vadd.f32 %v562, %v770
  %v772 = vpop.f32.mrf.mxu0
  %773 = vdwg.mxu0
  %774 = vmatprep.subr.mxu0 0.0
  %v775 = vand.u32 %v82, 4294901760
  %776 = vmatpush1.msra.mxu0 %v775
  %777 = vmatprep.subr.mxu0 0.0
  %v778 = vand.u32 %v81, 4294901760
  %779 = vmatpush1.msra.mxu0 %v778
  %780 = vmatprep.subr.mxu0 0.0
  %v781 = vand.u32 %v80, 4294901760
  %782 = vmatpush1.msra.mxu0 %v781
  %783 = vmatprep.subr.mxu0 0.0
  %v784 = vand.u32 %v79, 4294901760
  %785 = vmatpush1.msra.mxu0 %v784
  %786 = vmatprep.subr.mxu0 0.0
  %v787 = vand.u32 %v78, 4294901760
  %788 = vmatpush1.msra.mxu0 %v787
  %789 = vmatprep.subr.mxu0 0.0
  %v790 = vand.u32 %v77, 4294901760
  %791 = vmatpush1.msra.mxu0 %v790
  %792 = vmatprep.subr.mxu0 0.0
  %v793 = vand.u32 %v76, 4294901760
  %794 = vmatpush1.msra.mxu0 %v793
  %795 = vmatprep.subr.mxu0 0.0
  %v796 = vand.u32 %v75, 4294901760
  %797 = vmatpush1.msra.mxu0 %v796
  %798 = vmatprep.subr.mxu0 0.0
  %v799 = vand.u32 %v74, 4294901760
  %800 = vmatpush1.msra.mxu0 %v799
  %801 = vmatprep.subr.mxu0 0.0
  %v802 = vand.u32 %v73, 4294901760
  %803 = vmatpush1.msra.mxu0 %v802
  %804 = vmatprep.subr.mxu0 0.0
  %v805 = vand.u32 %v72, 4294901760
  %806 = vmatpush1.msra.mxu0 %v805
  %807 = vmatprep.subr.mxu0 0.0
  %v808 = vand.u32 %v71, 4294901760
  %809 = vmatpush1.msra.mxu0 %v808
  %810 = vmatprep.subr.mxu0 0.0
  %v811 = vand.u32 %v70, 4294901760
  %812 = vmatpush1.msra.mxu0 %v811
  %813 = vmatprep.subr.mxu0 0.0
  %v814 = vand.u32 %v69, 4294901760
  %815 = vmatpush1.msra.mxu0 %v814
  %816 = vmatprep.subr.mxu0 0.0
  %v817 = vand.u32 %v68, 4294901760
  %818 = vmatpush1.msra.mxu0 %v817
  %819 = vmatprep.subr.mxu0 0.0
  %v820 = vand.u32 %v67, 4294901760
  %821 = vmatpush1.msra.mxu0 %v820
  %822 = vmatprep.subr.mxu0 0.0
  %823 = vmatpush2.msra.mxu0 0.0
  %824 = vmatprep.subr.mxu0 0.0
  %825 = vmatpush2.msra.mxu0 0.0
  %826 = vmatprep.subr.mxu0 0.0
  %827 = vmatpush2.msra.mxu0 0.0
  %828 = vmatprep.subr.mxu0 0.0
  %829 = vmatpush2.msra.mxu0 0.0
  %830 = vmatprep.subr.mxu0 0.0
  %831 = vmatpush2.msra.mxu0 0.0
  %832 = vmatprep.subr.mxu0 0.0
  %833 = vmatpush2.msra.mxu0 0.0
  %834 = vmatprep.subr.mxu0 0.0
  %835 = vmatpush2.msra.mxu0 0.0
  %836 = vmatprep.subr.mxu0 0.0
  %837 = vmatpush2.msra.mxu0 0.0
  %838 = vmatprep.subr.mxu0 0.0
  %839 = vmatpush2.msra.mxu0 0.0
  %840 = vmatprep.subr.mxu0 0.0
  %841 = vmatpush2.msra.mxu0 0.0
  %842 = vmatprep.subr.mxu0 0.0
  %843 = vmatpush2.msra.mxu0 0.0
  %844 = vmatprep.subr.mxu0 0.0
  %845 = vmatpush2.msra.mxu0 0.0
  %846 = vmatprep.subr.mxu0 0.0
  %847 = vmatpush2.msra.mxu0 0.0
  %848 = vmatprep.subr.mxu0 0.0
  %849 = vmatpush2.msra.mxu0 0.0
  %850 = vmatprep.subr.mxu0 0.0
  %851 = vmatpush2.msra.mxu0 0.0
  %852 = vmatprep.subr.mxu0 0.0
  %853 = vmatpush2.msra.mxu0 0.0
  %854 = vmatprep.mubr.f32.mxu0 0.0
  %v855 = vand.u32 %v51, 4294901760
  %v856 = vsub.f32 %v51, %v855
  %v857 = vand.u32 %v856, 4294901760
  %858 = vmatmul.mubr.f32.gmra.mxu0 %v857
  %v859 = vpop.f32.mrf.mxu0
  %v860 = vadd.f32 %v666, %v859
  %v861 = vpop.f32.mrf.mxu0
  %862 = vmatprep.mubr.f32.mxu0 0.0
  %v863 = vand.u32 %v52, 4294901760
  %v864 = vsub.f32 %v52, %v863
  %v865 = vand.u32 %v864, 4294901760
  %866 = vmatmul.mubr.f32.gmra.mxu0 %v865
  %v867 = vpop.f32.mrf.mxu0
  %v868 = vadd.f32 %v673, %v867
  %v869 = vpop.f32.mrf.mxu0
  %870 = vmatprep.mubr.f32.mxu0 0.0
  %v871 = vand.u32 %v53, 4294901760
  %v872 = vsub.f32 %v53, %v871
  %v873 = vand.u32 %v872, 4294901760
  %874 = vmatmul.mubr.f32.gmra.mxu0 %v873
  %v875 = vpop.f32.mrf.mxu0
  %v876 = vadd.f32 %v680, %v875
  %v877 = vpop.f32.mrf.mxu0
  %878 = vmatprep.mubr.f32.mxu0 0.0
  %v879 = vand.u32 %v54, 4294901760
  %v880 = vsub.f32 %v54, %v879
  %v881 = vand.u32 %v880, 4294901760
  %882 = vmatmul.mubr.f32.gmra.mxu0 %v881
  %v883 = vpop.f32.mrf.mxu0
  %v884 = vadd.f32 %v687, %v883
  %v885 = vpop.f32.mrf.mxu0
  %886 = vmatprep.mubr.f32.mxu0 0.0
  %v887 = vand.u32 %v55, 4294901760
  %v888 = vsub.f32 %v55, %v887
  %v889 = vand.u32 %v888, 4294901760
  %890 = vmatmul.mubr.f32.gmra.mxu0 %v889
  %v891 = vpop.f32.mrf.mxu0
  %v892 = vadd.f32 %v694, %v891
  %v893 = vpop.f32.mrf.mxu0
  %894 = vmatprep.mubr.f32.mxu0 0.0
  %v895 = vand.u32 %v56, 4294901760
  %v896 = vsub.f32 %v56, %v895
  %v897 = vand.u32 %v896, 4294901760
  %898 = vmatmul.mubr.f32.gmra.mxu0 %v897
  %v899 = vpop.f32.mrf.mxu0
  %v900 = vadd.f32 %v701, %v899
  %v901 = vpop.f32.mrf.mxu0
  %902 = vmatprep.mubr.f32.mxu0 0.0
  %v903 = vand.u32 %v57, 4294901760
  %v904 = vsub.f32 %v57, %v903
  %v905 = vand.u32 %v904, 4294901760
  %906 = vmatmul.mubr.f32.gmra.mxu0 %v905
  %v907 = vpop.f32.mrf.mxu0
  %v908 = vadd.f32 %v708, %v907
  %v909 = vpop.f32.mrf.mxu0
  %910 = vmatprep.mubr.f32.mxu0 0.0
  %v911 = vand.u32 %v58, 4294901760
  %v912 = vsub.f32 %v58, %v911
  %v913 = vand.u32 %v912, 4294901760
  %914 = vmatmul.mubr.f32.gmra.mxu0 %v913
  %v915 = vpop.f32.mrf.mxu0
  %v916 = vadd.f32 %v715, %v915
  %v917 = vpop.f32.mrf.mxu0
  %918 = vmatprep.mubr.f32.mxu0 0.0
  %v919 = vand.u32 %v59, 4294901760
  %v920 = vsub.f32 %v59, %v919
  %v921 = vand.u32 %v920, 4294901760
  %922 = vmatmul.mubr.f32.gmra.mxu0 %v921
  %v923 = vpop.f32.mrf.mxu0
  %v924 = vadd.f32 %v722, %v923
  %v925 = vpop.f32.mrf.mxu0
  %926 = vmatprep.mubr.f32.mxu0 0.0
  %v927 = vand.u32 %v60, 4294901760
  %v928 = vsub.f32 %v60, %v927
  %v929 = vand.u32 %v928, 4294901760
  %930 = vmatmul.mubr.f32.gmra.mxu0 %v929
  %v931 = vpop.f32.mrf.mxu0
  %v932 = vadd.f32 %v729, %v931
  %v933 = vpop.f32.mrf.mxu0
  %934 = vmatprep.mubr.f32.mxu0 0.0
  %v935 = vand.u32 %v61, 4294901760
  %v936 = vsub.f32 %v61, %v935
  %v937 = vand.u32 %v936, 4294901760
  %938 = vmatmul.mubr.f32.gmra.mxu0 %v937
  %v939 = vpop.f32.mrf.mxu0
  %v940 = vadd.f32 %v736, %v939
  %v941 = vpop.f32.mrf.mxu0
  %942 = vmatprep.mubr.f32.mxu0 0.0
  %v943 = vand.u32 %v62, 4294901760
  %v944 = vsub.f32 %v62, %v943
  %v945 = vand.u32 %v944, 4294901760
  %946 = vmatmul.mubr.f32.gmra.mxu0 %v945
  %v947 = vpop.f32.mrf.mxu0
  %v948 = vadd.f32 %v743, %v947
  %v949 = vpop.f32.mrf.mxu0
  %950 = vmatprep.mubr.f32.mxu0 0.0
  %v951 = vand.u32 %v63, 4294901760
  %v952 = vsub.f32 %v63, %v951
  %v953 = vand.u32 %v952, 4294901760
  %954 = vmatmul.mubr.f32.gmra.mxu0 %v953
  %v955 = vpop.f32.mrf.mxu0
  %v956 = vadd.f32 %v750, %v955
  %v957 = vpop.f32.mrf.mxu0
  %958 = vmatprep.mubr.f32.mxu0 0.0
  %v959 = vand.u32 %v64, 4294901760
  %v960 = vsub.f32 %v64, %v959
  %v961 = vand.u32 %v960, 4294901760
  %962 = vmatmul.mubr.f32.gmra.mxu0 %v961
  %v963 = vpop.f32.mrf.mxu0
  %v964 = vadd.f32 %v757, %v963
  %v965 = vpop.f32.mrf.mxu0
  %966 = vmatprep.mubr.f32.mxu0 0.0
  %v967 = vand.u32 %v65, 4294901760
  %v968 = vsub.f32 %v65, %v967
  %v969 = vand.u32 %v968, 4294901760
  %970 = vmatmul.mubr.f32.gmra.mxu0 %v969
  %v971 = vpop.f32.mrf.mxu0
  %v972 = vadd.f32 %v764, %v971
  %v973 = vpop.f32.mrf.mxu0
  %974 = vmatprep.mubr.f32.mxu0 0.0
  %v975 = vand.u32 %v66, 4294901760
  %v976 = vsub.f32 %v66, %v975
  %v977 = vand.u32 %v976, 4294901760
  %978 = vmatmul.mubr.f32.gmra.mxu0 %v977
  %v979 = vpop.f32.mrf.mxu0
  %v980 = vadd.f32 %v771, %v979
  %v981 = vpop.f32.mrf.mxu0
  %982 = vdwg.mxu0
  %983 = vmatprep.subr.mxu0 0.0
  %v984 = vand.u32 %v82, 4294901760
  %v985 = vsub.f32 %v82, %v984
  %v986 = vand.u32 %v985, 4294901760
  %987 = vmatpush1.msra.mxu0 %v986
  %988 = vmatprep.subr.mxu0 0.0
  %v989 = vand.u32 %v81, 4294901760
  %v990 = vsub.f32 %v81, %v989
  %v991 = vand.u32 %v990, 4294901760
  %992 = vmatpush1.msra.mxu0 %v991
  %993 = vmatprep.subr.mxu0 0.0
  %v994 = vand.u32 %v80, 4294901760
  %v995 = vsub.f32 %v80, %v994
  %v996 = vand.u32 %v995, 4294901760
  %997 = vmatpush1.msra.mxu0 %v996
  %998 = vmatprep.subr.mxu0 0.0
  %v999 = vand.u32 %v79, 4294901760
  %v1000 = vsub.f32 %v79, %v999
  %v1001 = vand.u32 %v1000, 4294901760
  %1002 = vmatpush1.msra.mxu0 %v1001
  %1003 = vmatprep.subr.mxu0 0.0
  %v1004 = vand.u32 %v78, 4294901760
  %v1005 = vsub.f32 %v78, %v1004
  %v1006 = vand.u32 %v1005, 4294901760
  %1007 = vmatpush1.msra.mxu0 %v1006
  %1008 = vmatprep.subr.mxu0 0.0
  %v1009 = vand.u32 %v77, 4294901760
  %v1010 = vsub.f32 %v77, %v1009
  %v1011 = vand.u32 %v1010, 4294901760
  %1012 = vmatpush1.msra.mxu0 %v1011
  %1013 = vmatprep.subr.mxu0 0.0
  %v1014 = vand.u32 %v76, 4294901760
  %v1015 = vsub.f32 %v76, %v1014
  %v1016 = vand.u32 %v1015, 4294901760
  %1017 = vmatpush1.msra.mxu0 %v1016
  %1018 = vmatprep.subr.mxu0 0.0
  %v1019 = vand.u32 %v75, 4294901760
  %v1020 = vsub.f32 %v75, %v1019
  %v1021 = vand.u32 %v1020, 4294901760
  %1022 = vmatpush1.msra.mxu0 %v1021
  %1023 = vmatprep.subr.mxu0 0.0
  %v1024 = vand.u32 %v74, 4294901760
  %v1025 = vsub.f32 %v74, %v1024
  %v1026 = vand.u32 %v1025, 4294901760
  %1027 = vmatpush1.msra.mxu0 %v1026
  %1028 = vmatprep.subr.mxu0 0.0
  %v1029 = vand.u32 %v73, 4294901760
  %v1030 = vsub.f32 %v73, %v1029
  %v1031 = vand.u32 %v1030, 4294901760
  %1032 = vmatpush1.msra.mxu0 %v1031
  %1033 = vmatprep.subr.mxu0 0.0
  %v1034 = vand.u32 %v72, 4294901760
  %v1035 = vsub.f32 %v72, %v1034
  %v1036 = vand.u32 %v1035, 4294901760
  %1037 = vmatpush1.msra.mxu0 %v1036
  %1038 = vmatprep.subr.mxu0 0.0
  %v1039 = vand.u32 %v71, 4294901760
  %v1040 = vsub.f32 %v71, %v1039
  %v1041 = vand.u32 %v1040, 4294901760
  %1042 = vmatpush1.msra.mxu0 %v1041
  %1043 = vmatprep.subr.mxu0 0.0
  %v1044 = vand.u32 %v70, 4294901760
  %v1045 = vsub.f32 %v70, %v1044
  %v1046 = vand.u32 %v1045, 4294901760
  %1047 = vmatpush1.msra.mxu0 %v1046
  %1048 = vmatprep.subr.mxu0 0.0
  %v1049 = vand.u32 %v69, 4294901760
  %v1050 = vsub.f32 %v69, %v1049
  %v1051 = vand.u32 %v1050, 4294901760
  %1052 = vmatpush1.msra.mxu0 %v1051
  %1053 = vmatprep.subr.mxu0 0.0
  %v1054 = vand.u32 %v68, 4294901760
  %v1055 = vsub.f32 %v68, %v1054
  %v1056 = vand.u32 %v1055, 4294901760
  %1057 = vmatpush1.msra.mxu0 %v1056
  %1058 = vmatprep.subr.mxu0 0.0
  %v1059 = vand.u32 %v67, 4294901760
  %v1060 = vsub.f32 %v67, %v1059
  %v1061 = vand.u32 %v1060, 4294901760
  %1062 = vmatpush1.msra.mxu0 %v1061
  %1063 = vmatprep.subr.mxu0 0.0
  %1064 = vmatpush2.msra.mxu0 0.0
  %1065 = vmatprep.subr.mxu0 0.0
  %1066 = vmatpush2.msra.mxu0 0.0
  %1067 = vmatprep.subr.mxu0 0.0
  %1068 = vmatpush2.msra.mxu0 0.0
  %1069 = vmatprep.subr.mxu0 0.0
  %1070 = vmatpush2.msra.mxu0 0.0
  %1071 = vmatprep.subr.mxu0 0.0
  %1072 = vmatpush2.msra.mxu0 0.0
  %1073 = vmatprep.subr.mxu0 0.0
  %1074 = vmatpush2.msra.mxu0 0.0
  %1075 = vmatprep.subr.mxu0 0.0
  %1076 = vmatpush2.msra.mxu0 0.0
  %1077 = vmatprep.subr.mxu0 0.0
  %1078 = vmatpush2.msra.mxu0 0.0
  %1079 = vmatprep.subr.mxu0 0.0
  %1080 = vmatpush2.msra.mxu0 0.0
  %1081 = vmatprep.subr.mxu0 0.0
  %1082 = vmatpush2.msra.mxu0 0.0
  %1083 = vmatprep.subr.mxu0 0.0
  %1084 = vmatpush2.msra.mxu0 0.0
  %1085 = vmatprep.subr.mxu0 0.0
  %1086 = vmatpush2.msra.mxu0 0.0
  %1087 = vmatprep.subr.mxu0 0.0
  %1088 = vmatpush2.msra.mxu0 0.0
  %1089 = vmatprep.subr.mxu0 0.0
  %1090 = vmatpush2.msra.mxu0 0.0
  %1091 = vmatprep.subr.mxu0 0.0
  %1092 = vmatpush2.msra.mxu0 0.0
  %1093 = vmatprep.subr.mxu0 0.0
  %1094 = vmatpush2.msra.mxu0 0.0
  %1095 = vmatprep.mubr.f32.mxu0 0.0
  %v1096 = vand.u32 %v51, 4294901760
  %1097 = vmatmul.mubr.f32.gmra.mxu0 %v1096
  %v1098 = vpop.f32.mrf.mxu0
  %v1099 = vadd.f32 %v860, %v1098
  %v1100 = vpop.f32.mrf.mxu0
  %1101 = vmatprep.mubr.f32.mxu0 0.0
  %v1102 = vand.u32 %v52, 4294901760
  %1103 = vmatmul.mubr.f32.gmra.mxu0 %v1102
  %v1104 = vpop.f32.mrf.mxu0
  %v1105 = vadd.f32 %v868, %v1104
  %v1106 = vpop.f32.mrf.mxu0
  %1107 = vmatprep.mubr.f32.mxu0 0.0
  %v1108 = vand.u32 %v53, 4294901760
  %1109 = vmatmul.mubr.f32.gmra.mxu0 %v1108
  %v1110 = vpop.f32.mrf.mxu0
  %v1111 = vadd.f32 %v876, %v1110
  %v1112 = vpop.f32.mrf.mxu0
  %1113 = vmatprep.mubr.f32.mxu0 0.0
  %v1114 = vand.u32 %v54, 4294901760
  %1115 = vmatmul.mubr.f32.gmra.mxu0 %v1114
  %v1116 = vpop.f32.mrf.mxu0
  %v1117 = vadd.f32 %v884, %v1116
  %v1118 = vpop.f32.mrf.mxu0
  %1119 = vmatprep.mubr.f32.mxu0 0.0
  %v1120 = vand.u32 %v55, 4294901760
  %1121 = vmatmul.mubr.f32.gmra.mxu0 %v1120
  %v1122 = vpop.f32.mrf.mxu0
  %v1123 = vadd.f32 %v892, %v1122
  %v1124 = vpop.f32.mrf.mxu0
  %1125 = vmatprep.mubr.f32.mxu0 0.0
  %v1126 = vand.u32 %v56, 4294901760
  %1127 = vmatmul.mubr.f32.gmra.mxu0 %v1126
  %v1128 = vpop.f32.mrf.mxu0
  %v1129 = vadd.f32 %v900, %v1128
  %v1130 = vpop.f32.mrf.mxu0
  %1131 = vmatprep.mubr.f32.mxu0 0.0
  %v1132 = vand.u32 %v57, 4294901760
  %1133 = vmatmul.mubr.f32.gmra.mxu0 %v1132
  %v1134 = vpop.f32.mrf.mxu0
  %v1135 = vadd.f32 %v908, %v1134
  %v1136 = vpop.f32.mrf.mxu0
  %1137 = vmatprep.mubr.f32.mxu0 0.0
  %v1138 = vand.u32 %v58, 4294901760
  %1139 = vmatmul.mubr.f32.gmra.mxu0 %v1138
  %v1140 = vpop.f32.mrf.mxu0
  %v1141 = vadd.f32 %v916, %v1140
  %v1142 = vpop.f32.mrf.mxu0
  %1143 = vmatprep.mubr.f32.mxu0 0.0
  %v1144 = vand.u32 %v59, 4294901760
  %1145 = vmatmul.mubr.f32.gmra.mxu0 %v1144
  %v1146 = vpop.f32.mrf.mxu0
  %v1147 = vadd.f32 %v924, %v1146
  %v1148 = vpop.f32.mrf.mxu0
  %1149 = vmatprep.mubr.f32.mxu0 0.0
  %v1150 = vand.u32 %v60, 4294901760
  %1151 = vmatmul.mubr.f32.gmra.mxu0 %v1150
  %v1152 = vpop.f32.mrf.mxu0
  %v1153 = vadd.f32 %v932, %v1152
  %v1154 = vpop.f32.mrf.mxu0
  %1155 = vmatprep.mubr.f32.mxu0 0.0
  %v1156 = vand.u32 %v61, 4294901760
  %1157 = vmatmul.mubr.f32.gmra.mxu0 %v1156
  %v1158 = vpop.f32.mrf.mxu0
  %v1159 = vadd.f32 %v940, %v1158
  %v1160 = vpop.f32.mrf.mxu0
  %1161 = vmatprep.mubr.f32.mxu0 0.0
  %v1162 = vand.u32 %v62, 4294901760
  %1163 = vmatmul.mubr.f32.gmra.mxu0 %v1162
  %v1164 = vpop.f32.mrf.mxu0
  %v1165 = vadd.f32 %v948, %v1164
  %v1166 = vpop.f32.mrf.mxu0
  %1167 = vmatprep.mubr.f32.mxu0 0.0
  %v1168 = vand.u32 %v63, 4294901760
  %1169 = vmatmul.mubr.f32.gmra.mxu0 %v1168
  %v1170 = vpop.f32.mrf.mxu0
  %v1171 = vadd.f32 %v956, %v1170
  %v1172 = vpop.f32.mrf.mxu0
  %1173 = vmatprep.mubr.f32.mxu0 0.0
  %v1174 = vand.u32 %v64, 4294901760
  %1175 = vmatmul.mubr.f32.gmra.mxu0 %v1174
  %v1176 = vpop.f32.mrf.mxu0
  %v1177 = vadd.f32 %v964, %v1176
  %v1178 = vpop.f32.mrf.mxu0
  %1179 = vmatprep.mubr.f32.mxu0 0.0
  %v1180 = vand.u32 %v65, 4294901760
  %1181 = vmatmul.mubr.f32.gmra.mxu0 %v1180
  %v1182 = vpop.f32.mrf.mxu0
  %v1183 = vadd.f32 %v972, %v1182
  %v1184 = vpop.f32.mrf.mxu0
  %1185 = vmatprep.mubr.f32.mxu0 0.0
  %v1186 = vand.u32 %v66, 4294901760
  %1187 = vmatmul.mubr.f32.gmra.mxu0 %v1186
  %v1188 = vpop.f32.mrf.mxu0
  %v1189 = vadd.f32 %v980, %v1188
  %v1190 = vpop.f32.mrf.mxu0
  %1191 = vdwg.mxu0
  %1192 = vmatprep.subr.mxu0 0.0
  %v1193 = vand.u32 %v82, 4294901760
  %1194 = vmatpush1.msra.mxu0 %v1193
  %1195 = vmatprep.subr.mxu0 0.0
  %v1196 = vand.u32 %v81, 4294901760
  %1197 = vmatpush1.msra.mxu0 %v1196
  %1198 = vmatprep.subr.mxu0 0.0
  %v1199 = vand.u32 %v80, 4294901760
  %1200 = vmatpush1.msra.mxu0 %v1199
  %1201 = vmatprep.subr.mxu0 0.0
  %v1202 = vand.u32 %v79, 4294901760
  %1203 = vmatpush1.msra.mxu0 %v1202
  %1204 = vmatprep.subr.mxu0 0.0
  %v1205 = vand.u32 %v78, 4294901760
  %1206 = vmatpush1.msra.mxu0 %v1205
  %1207 = vmatprep.subr.mxu0 0.0
  %v1208 = vand.u32 %v77, 4294901760
  %1209 = vmatpush1.msra.mxu0 %v1208
  %1210 = vmatprep.subr.mxu0 0.0
  %v1211 = vand.u32 %v76, 4294901760
  %1212 = vmatpush1.msra.mxu0 %v1211
  %1213 = vmatprep.subr.mxu0 0.0
  %v1214 = vand.u32 %v75, 4294901760
  %1215 = vmatpush1.msra.mxu0 %v1214
  %1216 = vmatprep.subr.mxu0 0.0
  %v1217 = vand.u32 %v74, 4294901760
  %1218 = vmatpush1.msra.mxu0 %v1217
  %1219 = vmatprep.subr.mxu0 0.0
  %v1220 = vand.u32 %v73, 4294901760
  %1221 = vmatpush1.msra.mxu0 %v1220
  %1222 = vmatprep.subr.mxu0 0.0
  %v1223 = vand.u32 %v72, 4294901760
  %1224 = vmatpush1.msra.mxu0 %v1223
  %1225 = vmatprep.subr.mxu0 0.0
  %v1226 = vand.u32 %v71, 4294901760
  %1227 = vmatpush1.msra.mxu0 %v1226
  %1228 = vmatprep.subr.mxu0 0.0
  %v1229 = vand.u32 %v70, 4294901760
  %1230 = vmatpush1.msra.mxu0 %v1229
  %1231 = vmatprep.subr.mxu0 0.0
  %v1232 = vand.u32 %v69, 4294901760
  %1233 = vmatpush1.msra.mxu0 %v1232
  %1234 = vmatprep.subr.mxu0 0.0
  %v1235 = vand.u32 %v68, 4294901760
  %1236 = vmatpush1.msra.mxu0 %v1235
  %1237 = vmatprep.subr.mxu0 0.0
  %v1238 = vand.u32 %v67, 4294901760
  %1239 = vmatpush1.msra.mxu0 %v1238
  %1240 = vmatprep.subr.mxu0 0.0
  %1241 = vmatpush2.msra.mxu0 0.0
  %1242 = vmatprep.subr.mxu0 0.0
  %1243 = vmatpush2.msra.mxu0 0.0
  %1244 = vmatprep.subr.mxu0 0.0
  %1245 = vmatpush2.msra.mxu0 0.0
  %1246 = vmatprep.subr.mxu0 0.0
  %1247 = vmatpush2.msra.mxu0 0.0
  %1248 = vmatprep.subr.mxu0 0.0
  %1249 = vmatpush2.msra.mxu0 0.0
  %1250 = vmatprep.subr.mxu0 0.0
  %1251 = vmatpush2.msra.mxu0 0.0
  %1252 = vmatprep.subr.mxu0 0.0
  %1253 = vmatpush2.msra.mxu0 0.0
  %1254 = vmatprep.subr.mxu0 0.0
  %1255 = vmatpush2.msra.mxu0 0.0
  %1256 = vmatprep.subr.mxu0 0.0
  %1257 = vmatpush2.msra.mxu0 0.0
  %1258 = vmatprep.subr.mxu0 0.0
  %1259 = vmatpush2.msra.mxu0 0.0
  %1260 = vmatprep.subr.mxu0 0.0
  %1261 = vmatpush2.msra.mxu0 0.0
  %1262 = vmatprep.subr.mxu0 0.0
  %1263 = vmatpush2.msra.mxu0 0.0
  %1264 = vmatprep.subr.mxu0 0.0
  %1265 = vmatpush2.msra.mxu0 0.0
  %1266 = vmatprep.subr.mxu0 0.0
  %1267 = vmatpush2.msra.mxu0 0.0
  %1268 = vmatprep.subr.mxu0 0.0
  %1269 = vmatpush2.msra.mxu0 0.0
  %1270 = vmatprep.subr.mxu0 0.0
  %1271 = vmatpush2.msra.mxu0 0.0
  %1272 = vmatprep.mubr.f32.mxu0 0.0
  %v1273 = vand.u32 %v51, 4294901760
  %1274 = vmatmul.mubr.f32.gmra.mxu0 %v1273
  %v1275 = vpop.f32.mrf.mxu0
  %v1276 = vadd.f32 %v1099, %v1275
  %v1277 = vpop.f32.mrf.mxu0
  %1278 = vmatprep.mubr.f32.mxu0 0.0
  %v1279 = vand.u32 %v52, 4294901760
  %1280 = vmatmul.mubr.f32.gmra.mxu0 %v1279
  %v1281 = vpop.f32.mrf.mxu0
  %v1282 = vadd.f32 %v1105, %v1281
  %v1283 = vpop.f32.mrf.mxu0
  %1284 = vmatprep.mubr.f32.mxu0 0.0
  %v1285 = vand.u32 %v53, 4294901760
  %1286 = vmatmul.mubr.f32.gmra.mxu0 %v1285
  %v1287 = vpop.f32.mrf.mxu0
  %v1288 = vadd.f32 %v1111, %v1287
  %v1289 = vpop.f32.mrf.mxu0
  %1290 = vmatprep.mubr.f32.mxu0 0.0
  %v1291 = vand.u32 %v54, 4294901760
  %1292 = vmatmul.mubr.f32.gmra.mxu0 %v1291
  %v1293 = vpop.f32.mrf.mxu0
  %v1294 = vadd.f32 %v1117, %v1293
  %v1295 = vpop.f32.mrf.mxu0
  %1296 = vmatprep.mubr.f32.mxu0 0.0
  %v1297 = vand.u32 %v55, 4294901760
  %1298 = vmatmul.mubr.f32.gmra.mxu0 %v1297
  %v1299 = vpop.f32.mrf.mxu0
  %v1300 = vadd.f32 %v1123, %v1299
  %v1301 = vpop.f32.mrf.mxu0
  %1302 = vmatprep.mubr.f32.mxu0 0.0
  %v1303 = vand.u32 %v56, 4294901760
  %1304 = vmatmul.mubr.f32.gmra.mxu0 %v1303
  %v1305 = vpop.f32.mrf.mxu0
  %v1306 = vadd.f32 %v1129, %v1305
  %v1307 = vpop.f32.mrf.mxu0
  %1308 = vmatprep.mubr.f32.mxu0 0.0
  %v1309 = vand.u32 %v57, 4294901760
  %1310 = vmatmul.mubr.f32.gmra.mxu0 %v1309
  %v1311 = vpop.f32.mrf.mxu0
  %v1312 = vadd.f32 %v1135, %v1311
  %v1313 = vpop.f32.mrf.mxu0
  %1314 = vmatprep.mubr.f32.mxu0 0.0
  %v1315 = vand.u32 %v58, 4294901760
  %1316 = vmatmul.mubr.f32.gmra.mxu0 %v1315
  %v1317 = vpop.f32.mrf.mxu0
  %v1318 = vadd.f32 %v1141, %v1317
  %v1319 = vpop.f32.mrf.mxu0
  %1320 = vmatprep.mubr.f32.mxu0 0.0
  %v1321 = vand.u32 %v59, 4294901760
  %1322 = vmatmul.mubr.f32.gmra.mxu0 %v1321
  %v1323 = vpop.f32.mrf.mxu0
  %v1324 = vadd.f32 %v1147, %v1323
  %v1325 = vpop.f32.mrf.mxu0
  %1326 = vmatprep.mubr.f32.mxu0 0.0
  %v1327 = vand.u32 %v60, 4294901760
  %1328 = vmatmul.mubr.f32.gmra.mxu0 %v1327
  %v1329 = vpop.f32.mrf.mxu0
  %v1330 = vadd.f32 %v1153, %v1329
  %v1331 = vpop.f32.mrf.mxu0
  %1332 = vmatprep.mubr.f32.mxu0 0.0
  %v1333 = vand.u32 %v61, 4294901760
  %1334 = vmatmul.mubr.f32.gmra.mxu0 %v1333
  %v1335 = vpop.f32.mrf.mxu0
  %v1336 = vadd.f32 %v1159, %v1335
  %v1337 = vpop.f32.mrf.mxu0
  %1338 = vmatprep.mubr.f32.mxu0 0.0
  %v1339 = vand.u32 %v62, 4294901760
  %1340 = vmatmul.mubr.f32.gmra.mxu0 %v1339
  %v1341 = vpop.f32.mrf.mxu0
  %v1342 = vadd.f32 %v1165, %v1341
  %v1343 = vpop.f32.mrf.mxu0
  %1344 = vmatprep.mubr.f32.mxu0 0.0
  %v1345 = vand.u32 %v63, 4294901760
  %1346 = vmatmul.mubr.f32.gmra.mxu0 %v1345
  %v1347 = vpop.f32.mrf.mxu0
  %v1348 = vadd.f32 %v1171, %v1347
  %v1349 = vpop.f32.mrf.mxu0
  %1350 = vmatprep.mubr.f32.mxu0 0.0
  %v1351 = vand.u32 %v64, 4294901760
  %1352 = vmatmul.mubr.f32.gmra.mxu0 %v1351
  %v1353 = vpop.f32.mrf.mxu0
  %v1354 = vadd.f32 %v1177, %v1353
  %v1355 = vpop.f32.mrf.mxu0
  %1356 = vmatprep.mubr.f32.mxu0 0.0
  %v1357 = vand.u32 %v65, 4294901760
  %1358 = vmatmul.mubr.f32.gmra.mxu0 %v1357
  %v1359 = vpop.f32.mrf.mxu0
  %v1360 = vadd.f32 %v1183, %v1359
  %v1361 = vpop.f32.mrf.mxu0
  %1362 = vmatprep.mubr.f32.mxu0 0.0
  %v1363 = vand.u32 %v66, 4294901760
  %1364 = vmatmul.mubr.f32.gmra.mxu0 %v1363
  %v1365 = vpop.f32.mrf.mxu0
  %v1366 = vadd.f32 %v1189, %v1365
  %v1367 = vpop.f32.mrf.mxu0
  %1368 = vdwg.mxu0
  %v1369 = vadd.f32 %v35, %v1276
  %v1370 = vadd.f32 %v36, %v1282
  %v1371 = vadd.f32 %v37, %v1288
  %v1372 = vadd.f32 %v38, %v1294
  %v1373 = vadd.f32 %v39, %v1300
  %v1374 = vadd.f32 %v40, %v1306
  %v1375 = vadd.f32 %v41, %v1312
  %v1376 = vadd.f32 %v42, %v1318
  %v1377 = vadd.f32 %v43, %v1324
  %v1378 = vadd.f32 %v44, %v1330
  %v1379 = vadd.f32 %v45, %v1336
  %v1380 = vadd.f32 %v46, %v1342
  %v1381 = vadd.f32 %v47, %v1348
  %v1382 = vadd.f32 %v48, %v1354
  %v1383 = vadd.f32 %v49, %v1360
  %v1384 = vadd.f32 %v50, %v1366
  %vm1385 = vcmask 130048
  %1386 = vst.msk [vmem:[#allocation2] sm:$0xff] %vm1385, %v1369
  %1387 = vst.msk [vmem:[#allocation2 + $0x8] sm:$0xff] %vm1385, %v1370
  %1388 = vst.msk [vmem:[#allocation2 + $0x10] sm:$0xff] %vm1385, %v1371
  %1389 = vst.msk [vmem:[#allocation2 + $0x18] sm:$0xff] %vm1385, %v1372
  %1390 = vst.msk [vmem:[#allocation2 + $0x20] sm:$0xff] %vm1385, %v1373
  %1391 = vst.msk [vmem:[#allocation2 + $0x28] sm:$0xff] %vm1385, %v1374
  %1392 = vst.msk [vmem:[#allocation2 + $0x30] sm:$0xff] %vm1385, %v1375
  %1393 = vst.msk [vmem:[#allocation2 + $0x38] sm:$0xff] %vm1385, %v1376
  %1394 = vst.msk [vmem:[#allocation2 + $0x40] sm:$0xff] %vm1385, %v1377
  %1395 = vst.msk [vmem:[#allocation2 + $0x48] sm:$0xff] %vm1385, %v1378
  %1396 = vst.msk [vmem:[#allocation2 + $0x50] sm:$0xff] %vm1385, %v1379
  %1397 = vst.msk [vmem:[#allocation2 + $0x58] sm:$0xff] %vm1385, %v1380
  %1398 = vst.msk [vmem:[#allocation2 + $0x60] sm:$0xff] %vm1385, %v1381
  %1399 = vst.msk [vmem:[#allocation2 + $0x68] sm:$0xff] %vm1385, %v1382
  %1400 = vst.msk [vmem:[#allocation2 + $0x70] sm:$0xff] %vm1385, %v1383
  %1401 = vst.msk [vmem:[#allocation2 + $0x78] sm:$0xff] %vm1385, %v1384
  // Predicated region
  $region18: #{gae_forward.8} parent=0 // pred_check
    %p1402 = pneg %p14
  $region19: #{gae_forward.8} parent=0 // pred_check_branch
    %1404 = sbr.rel (%p1402) target = $region21
  $region20: #{gae_forward.8} parent=0 // pred_region
    %v1405 = vld [vmem:[#allocation2] sm:$0xff]
    %v1406 = vld [vmem:[#allocation2 + $0x8] sm:$0xff]
    %v1407 = vld [vmem:[#allocation2 + $0x10] sm:$0xff]
    %v1408 = vld [vmem:[#allocation2 + $0x18] sm:$0xff]
    %v1409 = vld [vmem:[#allocation2 + $0x20] sm:$0xff]
    %v1410 = vld [vmem:[#allocation2 + $0x28] sm:$0xff]
    %v1411 = vld [vmem:[#allocation2 + $0x30] sm:$0xff]
    %v1412 = vld [vmem:[#allocation2 + $0x38] sm:$0xff]
    %v1413 = vld [vmem:[#allocation2 + $0x40] sm:$0xff]
    %v1414 = vld [vmem:[#allocation2 + $0x48] sm:$0xff]
    %v1415 = vld [vmem:[#allocation2 + $0x50] sm:$0xff]
    %v1416 = vld [vmem:[#allocation2 + $0x58] sm:$0xff]
    %v1417 = vld [vmem:[#allocation2 + $0x60] sm:$0xff]
    %v1418 = vld [vmem:[#allocation2 + $0x68] sm:$0xff]
    %v1419 = vld [vmem:[#allocation2 + $0x70] sm:$0xff]
    %v1420 = vld [vmem:[#allocation2 + $0x78] sm:$0xff]
    %v1421 = vld [vmem:[%s2] sm:$0x1]
    %v1423 = vlaneseq
    %v1424 = vshrl.u32 %v1423, 7
    %v1425 = vsub.s32 0, %v1424
    %v1426 = vrot.slane %v1421, %v1425
    %v1428 = vadd.f32 %v1405, %v1426
    %v1429 = vadd.f32 %v1406, %v1426
    %v1430 = vadd.f32 %v1407, %v1426
    %v1431 = vadd.f32 %v1408, %v1426
    %v1432 = vadd.f32 %v1409, %v1426
    %v1433 = vadd.f32 %v1410, %v1426
    %v1434 = vadd.f32 %v1411, %v1426
    %v1435 = vadd.f32 %v1412, %v1426
    %v1436 = vadd.f32 %v1413, %v1426
    %v1437 = vadd.f32 %v1414, %v1426
    %v1438 = vadd.f32 %v1415, %v1426
    %v1439 = vadd.f32 %v1416, %v1426
    %v1440 = vadd.f32 %v1417, %v1426
    %v1441 = vadd.f32 %v1418, %v1426
    %v1442 = vadd.f32 %v1419, %v1426
    %v1443 = vadd.f32 %v1420, %v1426
    %1444 = vst.msk [vmem:[%s3] sm:$0xff] %vm1385, %v1428
    %1445 = vst.msk [vmem:[%s3 + $0x8] sm:$0xff] %vm1385, %v1429
    %1446 = vst.msk [vmem:[%s3 + $0x10] sm:$0xff] %vm1385, %v1430
    %1447 = vst.msk [vmem:[%s3 + $0x18] sm:$0xff] %vm1385, %v1431
    %1448 = vst.msk [vmem:[%s3 + $0x20] sm:$0xff] %vm1385, %v1432
    %1449 = vst.msk [vmem:[%s3 + $0x28] sm:$0xff] %vm1385, %v1433
    %1450 = vst.msk [vmem:[%s3 + $0x30] sm:$0xff] %vm1385, %v1434
    %1451 = vst.msk [vmem:[%s3 + $0x38] sm:$0xff] %vm1385, %v1435
    %1452 = vst.msk [vmem:[%s3 + $0x40] sm:$0xff] %vm1385, %v1436
    %1453 = vst.msk [vmem:[%s3 + $0x48] sm:$0xff] %vm1385, %v1437
    %1454 = vst.msk [vmem:[%s3 + $0x50] sm:$0xff] %vm1385, %v1438
    %1455 = vst.msk [vmem:[%s3 + $0x58] sm:$0xff] %vm1385, %v1439
    %1456 = vst.msk [vmem:[%s3 + $0x60] sm:$0xff] %vm1385, %v1440
    %1457 = vst.msk [vmem:[%s3 + $0x68] sm:$0xff] %vm1385, %v1441
    %1458 = vst.msk [vmem:[%s3 + $0x70] sm:$0xff] %vm1385, %v1442
    %1459 = vst.msk [vmem:[%s3 + $0x78] sm:$0xff] %vm1385, %v1443
  $region21: #{gae_forward.8} parent=0 // pred_fallthru
    _
  // Predicated region
  $region22: #{gae_forward.8} parent=0 // pred_check
    _
  $region23: #{gae_forward.8} parent=0 // pred_check_branch
    %1461 = sbr.rel (0) target = $region25
  $region24: #{gae_forward.8} parent=0 // pred_region
    _
  $region25: #{gae_forward.8} parent=0 // pred_fallthru
    _
  // Predicated region
  $region26: #{gae_forward.8} parent=0 // pred_check
    _
  $region27: #{gae_forward.8} parent=0 // pred_check_branch
    %1463 = sbr.rel (0) target = $region29
  $region28: #{gae_forward.8} parent=0 // pred_region
    _
  $region29: #{gae_forward.8} parent=0 // pred_fallthru
    _

// kernel: gae_forward.9
$region0: #{gae_forward.9}
  #allocation0 [shape = 'u32[]', space=smem, size = 0x4, offset = 0x4, fixed_abs, tag = 'smem constant byte address 0x4 - core index']
  #allocation1 [shape = 'u32[144,128]{1,0:T(1,128)}', space=vmem, size = 0x12000, scoped, tag = 'internal scratch']
  %s0 = inlined_call_operand.vmem [shape: f32[128,16], index: 0, kind: input, shape index: {}, may-alias: {0,1}]
  %s1 = inlined_call_operand.vmem [shape: f32[128,16], index: 1, kind: input, shape index: {}, may-alias: {0,1}]
  %s2 = inlined_call_operand.hbm [shape: f32[128,128], index: 2, kind: output, shape index: {}]
  %s3 = sld [smem:[#allocation0]]
  $region18: #{gae_forward.9} parent=0
    _
  %s5 = ssub.s32 1, %s3
  %s6 = scalar_select 0, %s5, %s3
  $region1: #{gae_forward.9} parent=0
    #allocation2 [shape = 'u8[65536]{0}', space=vmem, size = 0x10000, scoped, tag = 'output window, operand 0, single buffered']
    #allocation3 [shape = 's32[1]{0}', space=sflag, size = 0x4, scoped, tag = 'scoped memory for gae_forward.9']
    %7 = vsyncpa [#allocation3], 0
    // Predicated region
    $region2: #{gae_forward.9} parent=1 // pred_check
      _
    $region3: #{gae_forward.9} parent=1 // pred_check_branch
      %9 = sbr.rel (0) target = $region5
    $region4: #{gae_forward.9} parent=1 // pred_region
      _
    $region5: #{gae_forward.9} parent=1 // pred_fallthru
      _
    // Predicated region
    $region6: #{gae_forward.9} parent=1 // pred_check
      _
    $region7: #{gae_forward.9} parent=1 // pred_check_branch
      %11 = sbr.rel (0) target = $region9
    $region8: #{gae_forward.9} parent=1 // pred_region
      _
    $region9: #{gae_forward.9} parent=1 // pred_fallthru
      _
    %v12 = vld [vmem:[%s0] sm:$0xff]
    %v13 = vld [vmem:[%s0 + $0x8] sm:$0xff]
    %v14 = vld [vmem:[%s0 + $0x10] sm:$0xff]
    %v15 = vld [vmem:[%s0 + $0x18] sm:$0xff]
    %v16 = vld [vmem:[%s0 + $0x20] sm:$0xff]
    %v17 = vld [vmem:[%s0 + $0x28] sm:$0xff]
    %v18 = vld [vmem:[%s0 + $0x30] sm:$0xff]
    %v19 = vld [vmem:[%s0 + $0x38] sm:$0xff]
    %v20 = vld [vmem:[%s0 + $0x40] sm:$0xff]
    %v21 = vld [vmem:[%s0 + $0x48] sm:$0xff]
    %v22 = vld [vmem:[%s0 + $0x50] sm:$0xff]
    %v23 = vld [vmem:[%s0 + $0x58] sm:$0xff]
    %v24 = vld [vmem:[%s0 + $0x60] sm:$0xff]
    %v25 = vld [vmem:[%s0 + $0x68] sm:$0xff]
    %v26 = vld [vmem:[%s0 + $0x70] sm:$0xff]
    %v27 = vld [vmem:[%s0 + $0x78] sm:$0xff]
    %v28 = vld [vmem:[%s1] sm:$0xff]
    %v29 = vld [vmem:[%s1 + $0x8] sm:$0xff]
    %v30 = vld [vmem:[%s1 + $0x10] sm:$0xff]
    %v31 = vld [vmem:[%s1 + $0x18] sm:$0xff]
    %v32 = vld [vmem:[%s1 + $0x20] sm:$0xff]
    %v33 = vld [vmem:[%s1 + $0x28] sm:$0xff]
    %v34 = vld [vmem:[%s1 + $0x30] sm:$0xff]
    %v35 = vld [vmem:[%s1 + $0x38] sm:$0xff]
    %v36 = vld [vmem:[%s1 + $0x40] sm:$0xff]
    %v37 = vld [vmem:[%s1 + $0x48] sm:$0xff]
    %v38 = vld [vmem:[%s1 + $0x50] sm:$0xff]
    %v39 = vld [vmem:[%s1 + $0x58] sm:$0xff]
    %v40 = vld [vmem:[%s1 + $0x60] sm:$0xff]
    %v41 = vld [vmem:[%s1 + $0x68] sm:$0xff]
    %v42 = vld [vmem:[%s1 + $0x70] sm:$0xff]
    %v43 = vld [vmem:[%s1 + $0x78] sm:$0xff]
    %vm44 = vcmask 130048
    %v46 = vsel %vm44, %v12, 0
    %v49 = vsel %vm44, %v13, 0
    %v52 = vsel %vm44, %v14, 0
    %v55 = vsel %vm44, %v15, 0
    %v58 = vsel %vm44, %v16, 0
    %v61 = vsel %vm44, %v17, 0
    %v64 = vsel %vm44, %v18, 0
    %v67 = vsel %vm44, %v19, 0
    %v70 = vsel %vm44, %v20, 0
    %v73 = vsel %vm44, %v21, 0
    %v76 = vsel %vm44, %v22, 0
    %v79 = vsel %vm44, %v23, 0
    %v82 = vsel %vm44, %v24, 0
    %v85 = vsel %vm44, %v25, 0
    %v88 = vsel %vm44, %v26, 0
    %v91 = vsel %vm44, %v27, 0
    %v94 = vsel %vm44, %v28, 0
    %v97 = vsel %vm44, %v29, 0
    %v100 = vsel %vm44, %v30, 0
    %v103 = vsel %vm44, %v31, 0
    %v106 = vsel %vm44, %v32, 0
    %v109 = vsel %vm44, %v33, 0
    %v112 = vsel %vm44, %v34, 0
    %v115 = vsel %vm44, %v35, 0
    %v118 = vsel %vm44, %v36, 0
    %v121 = vsel %vm44, %v37, 0
    %v124 = vsel %vm44, %v38, 0
    %v127 = vsel %vm44, %v39, 0
    %v130 = vsel %vm44, %v40, 0
    %v133 = vsel %vm44, %v41, 0
    %v136 = vsel %vm44, %v42, 0
    %v139 = vsel %vm44, %v43, 0
    %141 = vmatprep.subr.mxu0 0.0
    %v142 = vand.u32 %v139, 4294901760
    %143 = vmatpush1.xpose.msra.mxu0 %v142
    %144 = vmatprep.subr.mxu0 0.0
    %v145 = vand.u32 %v136, 4294901760
    %146 = vmatpush1.xpose.msra.mxu0 %v145
    %147 = vmatprep.subr.mxu0 0.0
    %v148 = vand.u32 %v133, 4294901760
    %149 = vmatpush1.xpose.msra.mxu0 %v148
    %150 = vmatprep.subr.mxu0 0.0
    %v151 = vand.u32 %v130, 4294901760
    %152 = vmatpush1.xpose.msra.mxu0 %v151
    %153 = vmatprep.subr.mxu0 0.0
    %v154 = vand.u32 %v127, 4294901760
    %155 = vmatpush1.xpose.msra.mxu0 %v154
    %156 = vmatprep.subr.mxu0 0.0
    %v157 = vand.u32 %v124, 4294901760
    %158 = vmatpush1.xpose.msra.mxu0 %v157
    %159 = vmatprep.subr.mxu0 0.0
    %v160 = vand.u32 %v121, 4294901760
    %161 = vmatpush1.xpose.msra.mxu0 %v160
    %162 = vmatprep.subr.mxu0 0.0
    %v163 = vand.u32 %v118, 4294901760
    %164 = vmatpush1.xpose.msra.mxu0 %v163
    %165 = vmatprep.subr.mxu0 0.0
    %v166 = vand.u32 %v115, 4294901760
    %167 = vmatpush1.xpose.msra.mxu0 %v166
    %168 = vmatprep.subr.mxu0 0.0
    %v169 = vand.u32 %v112, 4294901760
    %170 = vmatpush1.xpose.msra.mxu0 %v169
    %171 = vmatprep.subr.mxu0 0.0
    %v172 = vand.u32 %v109, 4294901760
    %173 = vmatpush1.xpose.msra.mxu0 %v172
    %174 = vmatprep.subr.mxu0 0.0
    %v175 = vand.u32 %v106, 4294901760
    %176 = vmatpush1.xpose.msra.mxu0 %v175
    %177 = vmatprep.subr.mxu0 0.0
    %v178 = vand.u32 %v103, 4294901760
    %179 = vmatpush1.xpose.msra.mxu0 %v178
    %180 = vmatprep.subr.mxu0 0.0
    %v181 = vand.u32 %v100, 4294901760
    %182 = vmatpush1.xpose.msra.mxu0 %v181
    %183 = vmatprep.subr.mxu0 0.0
    %v184 = vand.u32 %v97, 4294901760
    %185 = vmatpush1.xpose.msra.mxu0 %v184
    %186 = vmatprep.subr.mxu0 0.0
    %v187 = vand.u32 %v94, 4294901760
    %188 = vmatpush1.xpose.msra.mxu0 %v187
    %189 = vmatprep.subr.mxu0 0.0
    %190 = vmatpush2.xpose.msra.mxu0 0.0
    %191 = vmatprep.subr.mxu0 0.0
    %192 = vmatpush2.xpose.msra.mxu0 0.0
    %193 = vmatprep.subr.mxu0 0.0
    %194 = vmatpush2.xpose.msra.mxu0 0.0
    %195 = vmatprep.subr.mxu0 0.0
    %196 = vmatpush2.xpose.msra.mxu0 0.0
    %197 = vmatprep.subr.mxu0 0.0
    %198 = vmatpush2.xpose.msra.mxu0 0.0
    %199 = vmatprep.subr.mxu0 0.0
    %200 = vmatpush2.xpose.msra.mxu0 0.0
    %201 = vmatprep.subr.mxu0 0.0
    %202 = vmatpush2.xpose.msra.mxu0 0.0
    %203 = vmatprep.subr.mxu0 0.0
    %204 = vmatpush2.xpose.msra.mxu0 0.0
    %205 = vmatprep.subr.mxu0 0.0
    %206 = vmatpush2.xpose.msra.mxu0 0.0
    %207 = vmatprep.subr.mxu0 0.0
    %208 = vmatpush2.xpose.msra.mxu0 0.0
    %209 = vmatprep.subr.mxu0 0.0
    %210 = vmatpush2.xpose.msra.mxu0 0.0
    %211 = vmatprep.subr.mxu0 0.0
    %212 = vmatpush2.xpose.msra.mxu0 0.0
    %213 = vmatprep.subr.mxu0 0.0
    %214 = vmatpush2.xpose.msra.mxu0 0.0
    %215 = vmatprep.subr.mxu0 0.0
    %216 = vmatpush2.xpose.msra.mxu0 0.0
    %217 = vmatprep.subr.mxu0 0.0
    %218 = vmatpush2.xpose.msra.mxu0 0.0
    %219 = vmatprep.subr.mxu0 0.0
    %220 = vmatpush2.xpose.msra.mxu0 0.0
    %221 = vmatprep.mubr.f32.mxu0 0.0
    %v222 = vand.u32 %v46, 4294901760
    %v223 = vsub.f32 %v46, %v222
    %v224 = vand.u32 %v223, 4294901760
    %v225 = vsub.f32 %v223, %v224
    %v226 = vand.u32 %v225, 4294901760
    %227 = vmatmul.mubr.f32.gmra.mxu0 %v226
    %v228 = vpop.f32.mrf.mxu0
    %v229 = vadd.f32 0.0, %v228
    %v230 = vpop.f32.mrf.mxu0
    %231 = vmatprep.mubr.f32.mxu0 0.0
    %v232 = vand.u32 %v49, 4294901760
    %v233 = vsub.f32 %v49, %v232
    %v234 = vand.u32 %v233, 4294901760
    %v235 = vsub.f32 %v233, %v234
    %v236 = vand.u32 %v235, 4294901760
    %237 = vmatmul.mubr.f32.gmra.mxu0 %v236
    %v238 = vpop.f32.mrf.mxu0
    %v239 = vadd.f32 0.0, %v238
    %v240 = vpop.f32.mrf.mxu0
    %241 = vmatprep.mubr.f32.mxu0 0.0
    %v242 = vand.u32 %v52, 4294901760
    %v243 = vsub.f32 %v52, %v242
    %v244 = vand.u32 %v243, 4294901760
    %v245 = vsub.f32 %v243, %v244
    %v246 = vand.u32 %v245, 4294901760
    %247 = vmatmul.mubr.f32.gmra.mxu0 %v246
    %v248 = vpop.f32.mrf.mxu0
    %v249 = vadd.f32 0.0, %v248
    %v250 = vpop.f32.mrf.mxu0
    %251 = vmatprep.mubr.f32.mxu0 0.0
    %v252 = vand.u32 %v55, 4294901760
    %v253 = vsub.f32 %v55, %v252
    %v254 = vand.u32 %v253, 4294901760
    %v255 = vsub.f32 %v253, %v254
    %v256 = vand.u32 %v255, 4294901760
    %257 = vmatmul.mubr.f32.gmra.mxu0 %v256
    %v258 = vpop.f32.mrf.mxu0
    %v259 = vadd.f32 0.0, %v258
    %v260 = vpop.f32.mrf.mxu0
    %261 = vmatprep.mubr.f32.mxu0 0.0
    %v262 = vand.u32 %v58, 4294901760
    %v263 = vsub.f32 %v58, %v262
    %v264 = vand.u32 %v263, 4294901760
    %v265 = vsub.f32 %v263, %v264
    %v266 = vand.u32 %v265, 4294901760
    %267 = vmatmul.mubr.f32.gmra.mxu0 %v266
    %v268 = vpop.f32.mrf.mxu0
    %v269 = vadd.f32 0.0, %v268
    %v270 = vpop.f32.mrf.mxu0
    %271 = vmatprep.mubr.f32.mxu0 0.0
    %v272 = vand.u32 %v61, 4294901760
    %v273 = vsub.f32 %v61, %v272
    %v274 = vand.u32 %v273, 4294901760
    %v275 = vsub.f32 %v273, %v274
    %v276 = vand.u32 %v275, 4294901760
    %277 = vmatmul.mubr.f32.gmra.mxu0 %v276
    %v278 = vpop.f32.mrf.mxu0
    %v279 = vadd.f32 0.0, %v278
    %v280 = vpop.f32.mrf.mxu0
    %281 = vmatprep.mubr.f32.mxu0 0.0
    %v282 = vand.u32 %v64, 4294901760
    %v283 = vsub.f32 %v64, %v282
    %v284 = vand.u32 %v283, 4294901760
    %v285 = vsub.f32 %v283, %v284
    %v286 = vand.u32 %v285, 4294901760
    %287 = vmatmul.mubr.f32.gmra.mxu0 %v286
    %v288 = vpop.f32.mrf.mxu0
    %v289 = vadd.f32 0.0, %v288
    %v290 = vpop.f32.mrf.mxu0
    %291 = vmatprep.mubr.f32.mxu0 0.0
    %v292 = vand.u32 %v67, 4294901760
    %v293 = vsub.f32 %v67, %v292
    %v294 = vand.u32 %v293, 4294901760
    %v295 = vsub.f32 %v293, %v294
    %v296 = vand.u32 %v295, 4294901760
    %297 = vmatmul.mubr.f32.gmra.mxu0 %v296
    %v298 = vpop.f32.mrf.mxu0
    %v299 = vadd.f32 0.0, %v298
    %v300 = vpop.f32.mrf.mxu0
    %301 = vmatprep.mubr.f32.mxu0 0.0
    %v302 = vand.u32 %v70, 4294901760
    %v303 = vsub.f32 %v70, %v302
    %v304 = vand.u32 %v303, 4294901760
    %v305 = vsub.f32 %v303, %v304
    %v306 = vand.u32 %v305, 4294901760
    %307 = vmatmul.mubr.f32.gmra.mxu0 %v306
    %v308 = vpop.f32.mrf.mxu0
    %v309 = vadd.f32 0.0, %v308
    %v310 = vpop.f32.mrf.mxu0
    %311 = vmatprep.mubr.f32.mxu0 0.0
    %v312 = vand.u32 %v73, 4294901760
    %v313 = vsub.f32 %v73, %v312
    %v314 = vand.u32 %v313, 4294901760
    %v315 = vsub.f32 %v313, %v314
    %v316 = vand.u32 %v315, 4294901760
    %317 = vmatmul.mubr.f32.gmra.mxu0 %v316
    %v318 = vpop.f32.mrf.mxu0
    %v319 = vadd.f32 0.0, %v318
    %v320 = vpop.f32.mrf.mxu0
    %321 = vmatprep.mubr.f32.mxu0 0.0
    %v322 = vand.u32 %v76, 4294901760
    %v323 = vsub.f32 %v76, %v322
    %v324 = vand.u32 %v323, 4294901760
    %v325 = vsub.f32 %v323, %v324
    %v326 = vand.u32 %v325, 4294901760
    %327 = vmatmul.mubr.f32.gmra.mxu0 %v326
    %v328 = vpop.f32.mrf.mxu0
    %v329 = vadd.f32 0.0, %v328
    %v330 = vpop.f32.mrf.mxu0
    %331 = vmatprep.mubr.f32.mxu0 0.0
    %v332 = vand.u32 %v79, 4294901760
    %v333 = vsub.f32 %v79, %v332
    %v334 = vand.u32 %v333, 4294901760
    %v335 = vsub.f32 %v333, %v334
    %v336 = vand.u32 %v335, 4294901760
    %337 = vmatmul.mubr.f32.gmra.mxu0 %v336
    %v338 = vpop.f32.mrf.mxu0
    %v339 = vadd.f32 0.0, %v338
    %v340 = vpop.f32.mrf.mxu0
    %341 = vmatprep.mubr.f32.mxu0 0.0
    %v342 = vand.u32 %v82, 4294901760
    %v343 = vsub.f32 %v82, %v342
    %v344 = vand.u32 %v343, 4294901760
    %v345 = vsub.f32 %v343, %v344
    %v346 = vand.u32 %v345, 4294901760
    %347 = vmatmul.mubr.f32.gmra.mxu0 %v346
    %v348 = vpop.f32.mrf.mxu0
    %v349 = vadd.f32 0.0, %v348
    %v350 = vpop.f32.mrf.mxu0
    %351 = vmatprep.mubr.f32.mxu0 0.0
    %v352 = vand.u32 %v85, 4294901760
    %v353 = vsub.f32 %v85, %v352
    %v354 = vand.u32 %v353, 4294901760
    %v355 = vsub.f32 %v353, %v354
    %v356 = vand.u32 %v355, 4294901760
    %357 = vmatmul.mubr.f32.gmra.mxu0 %v356
    %v358 = vpop.f32.mrf.mxu0
    %v359 = vadd.f32 0.0, %v358
    %v360 = vpop.f32.mrf.mxu0
    %361 = vmatprep.mubr.f32.mxu0 0.0
    %v362 = vand.u32 %v88, 4294901760
    %v363 = vsub.f32 %v88, %v362
    %v364 = vand.u32 %v363, 4294901760
    %v365 = vsub.f32 %v363, %v364
    %v366 = vand.u32 %v365, 4294901760
    %367 = vmatmul.mubr.f32.gmra.mxu0 %v366
    %v368 = vpop.f32.mrf.mxu0
    %v369 = vadd.f32 0.0, %v368
    %v370 = vpop.f32.mrf.mxu0
    %371 = vmatprep.mubr.f32.mxu0 0.0
    %v372 = vand.u32 %v91, 4294901760
    %v373 = vsub.f32 %v91, %v372
    %v374 = vand.u32 %v373, 4294901760
    %v375 = vsub.f32 %v373, %v374
    %v376 = vand.u32 %v375, 4294901760
    %377 = vmatmul.mubr.f32.gmra.mxu0 %v376
    %v378 = vpop.f32.mrf.mxu0
    %v379 = vadd.f32 0.0, %v378
    %v380 = vpop.f32.mrf.mxu0
    %381 = vdwg.mxu0
    %382 = vmatprep.subr.mxu0 0.0
    %v383 = vand.u32 %v139, 4294901760
    %v384 = vsub.f32 %v139, %v383
    %v385 = vand.u32 %v384, 4294901760
    %v386 = vsub.f32 %v384, %v385
    %v387 = vand.u32 %v386, 4294901760
    %388 = vmatpush1.xpose.msra.mxu0 %v387
    %389 = vmatprep.subr.mxu0 0.0
    %v390 = vand.u32 %v136, 4294901760
    %v391 = vsub.f32 %v136, %v390
    %v392 = vand.u32 %v391, 4294901760
    %v393 = vsub.f32 %v391, %v392
    %v394 = vand.u32 %v393, 4294901760
    %395 = vmatpush1.xpose.msra.mxu0 %v394
    %396 = vmatprep.subr.mxu0 0.0
    %v397 = vand.u32 %v133, 4294901760
    %v398 = vsub.f32 %v133, %v397
    %v399 = vand.u32 %v398, 4294901760
    %v400 = vsub.f32 %v398, %v399
    %v401 = vand.u32 %v400, 4294901760
    %402 = vmatpush1.xpose.msra.mxu0 %v401
    %403 = vmatprep.subr.mxu0 0.0
    %v404 = vand.u32 %v130, 4294901760
    %v405 = vsub.f32 %v130, %v404
    %v406 = vand.u32 %v405, 4294901760
    %v407 = vsub.f32 %v405, %v406
    %v408 = vand.u32 %v407, 4294901760
    %409 = vmatpush1.xpose.msra.mxu0 %v408
    %410 = vmatprep.subr.mxu0 0.0
    %v411 = vand.u32 %v127, 4294901760
    %v412 = vsub.f32 %v127, %v411
    %v413 = vand.u32 %v412, 4294901760
    %v414 = vsub.f32 %v412, %v413
    %v415 = vand.u32 %v414, 4294901760
    %416 = vmatpush1.xpose.msra.mxu0 %v415
    %417 = vmatprep.subr.mxu0 0.0
    %v418 = vand.u32 %v124, 4294901760
    %v419 = vsub.f32 %v124, %v418
    %v420 = vand.u32 %v419, 4294901760
    %v421 = vsub.f32 %v419, %v420
    %v422 = vand.u32 %v421, 4294901760
    %423 = vmatpush1.xpose.msra.mxu0 %v422
    %424 = vmatprep.subr.mxu0 0.0
    %v425 = vand.u32 %v121, 4294901760
    %v426 = vsub.f32 %v121, %v425
    %v427 = vand.u32 %v426, 4294901760
    %v428 = vsub.f32 %v426, %v427
    %v429 = vand.u32 %v428, 4294901760
    %430 = vmatpush1.xpose.msra.mxu0 %v429
    %431 = vmatprep.subr.mxu0 0.0
    %v432 = vand.u32 %v118, 4294901760
    %v433 = vsub.f32 %v118, %v432
    %v434 = vand.u32 %v433, 4294901760
    %v435 = vsub.f32 %v433, %v434
    %v436 = vand.u32 %v435, 4294901760
    %437 = vmatpush1.xpose.msra.mxu0 %v436
    %438 = vmatprep.subr.mxu0 0.0
    %v439 = vand.u32 %v115, 4294901760
    %v440 = vsub.f32 %v115, %v439
    %v441 = vand.u32 %v440, 4294901760
    %v442 = vsub.f32 %v440, %v441
    %v443 = vand.u32 %v442, 4294901760
    %444 = vmatpush1.xpose.msra.mxu0 %v443
    %445 = vmatprep.subr.mxu0 0.0
    %v446 = vand.u32 %v112, 4294901760
    %v447 = vsub.f32 %v112, %v446
    %v448 = vand.u32 %v447, 4294901760
    %v449 = vsub.f32 %v447, %v448
    %v450 = vand.u32 %v449, 4294901760
    %451 = vmatpush1.xpose.msra.mxu0 %v450
    %452 = vmatprep.subr.mxu0 0.0
    %v453 = vand.u32 %v109, 4294901760
    %v454 = vsub.f32 %v109, %v453
    %v455 = vand.u32 %v454, 4294901760
    %v456 = vsub.f32 %v454, %v455
    %v457 = vand.u32 %v456, 4294901760
    %458 = vmatpush1.xpose.msra.mxu0 %v457
    %459 = vmatprep.subr.mxu0 0.0
    %v460 = vand.u32 %v106, 4294901760
    %v461 = vsub.f32 %v106, %v460
    %v462 = vand.u32 %v461, 4294901760
    %v463 = vsub.f32 %v461, %v462
    %v464 = vand.u32 %v463, 4294901760
    %465 = vmatpush1.xpose.msra.mxu0 %v464
    %466 = vmatprep.subr.mxu0 0.0
    %v467 = vand.u32 %v103, 4294901760
    %v468 = vsub.f32 %v103, %v467
    %v469 = vand.u32 %v468, 4294901760
    %v470 = vsub.f32 %v468, %v469
    %v471 = vand.u32 %v470, 4294901760
    %472 = vmatpush1.xpose.msra.mxu0 %v471
    %473 = vmatprep.subr.mxu0 0.0
    %v474 = vand.u32 %v100, 4294901760
    %v475 = vsub.f32 %v100, %v474
    %v476 = vand.u32 %v475, 4294901760
    %v477 = vsub.f32 %v475, %v476
    %v478 = vand.u32 %v477, 4294901760
    %479 = vmatpush1.xpose.msra.mxu0 %v478
    %480 = vmatprep.subr.mxu0 0.0
    %v481 = vand.u32 %v97, 4294901760
    %v482 = vsub.f32 %v97, %v481
    %v483 = vand.u32 %v482, 4294901760
    %v484 = vsub.f32 %v482, %v483
    %v485 = vand.u32 %v484, 4294901760
    %486 = vmatpush1.xpose.msra.mxu0 %v485
    %487 = vmatprep.subr.mxu0 0.0
    %v488 = vand.u32 %v94, 4294901760
    %v489 = vsub.f32 %v94, %v488
    %v490 = vand.u32 %v489, 4294901760
    %v491 = vsub.f32 %v489, %v490
    %v492 = vand.u32 %v491, 4294901760
    %493 = vmatpush1.xpose.msra.mxu0 %v492
    %494 = vmatprep.subr.mxu0 0.0
    %495 = vmatpush2.xpose.msra.mxu0 0.0
    %496 = vmatprep.subr.mxu0 0.0
    %497 = vmatpush2.xpose.msra.mxu0 0.0
    %498 = vmatprep.subr.mxu0 0.0
    %499 = vmatpush2.xpose.msra.mxu0 0.0
    %500 = vmatprep.subr.mxu0 0.0
    %501 = vmatpush2.xpose.msra.mxu0 0.0
    %502 = vmatprep.subr.mxu0 0.0
    %503 = vmatpush2.xpose.msra.mxu0 0.0
    %504 = vmatprep.subr.mxu0 0.0
    %505 = vmatpush2.xpose.msra.mxu0 0.0
    %506 = vmatprep.subr.mxu0 0.0
    %507 = vmatpush2.xpose.msra.mxu0 0.0
    %508 = vmatprep.subr.mxu0 0.0
    %509 = vmatpush2.xpose.msra.mxu0 0.0
    %510 = vmatprep.subr.mxu0 0.0
    %511 = vmatpush2.xpose.msra.mxu0 0.0
    %512 = vmatprep.subr.mxu0 0.0
    %513 = vmatpush2.xpose.msra.mxu0 0.0
    %514 = vmatprep.subr.mxu0 0.0
    %515 = vmatpush2.xpose.msra.mxu0 0.0
    %516 = vmatprep.subr.mxu0 0.0
    %517 = vmatpush2.xpose.msra.mxu0 0.0
    %518 = vmatprep.subr.mxu0 0.0
    %519 = vmatpush2.xpose.msra.mxu0 0.0
    %520 = vmatprep.subr.mxu0 0.0
    %521 = vmatpush2.xpose.msra.mxu0 0.0
    %522 = vmatprep.subr.mxu0 0.0
    %523 = vmatpush2.xpose.msra.mxu0 0.0
    %524 = vmatprep.subr.mxu0 0.0
    %525 = vmatpush2.xpose.msra.mxu0 0.0
    %526 = vmatprep.mubr.f32.mxu0 0.0
    %v527 = vand.u32 %v46, 4294901760
    %528 = vmatmul.mubr.f32.gmra.mxu0 %v527
    %v529 = vpop.f32.mrf.mxu0
    %v530 = vadd.f32 %v229, %v529
    %v531 = vpop.f32.mrf.mxu0
    %532 = vmatprep.mubr.f32.mxu0 0.0
    %v533 = vand.u32 %v49, 4294901760
    %534 = vmatmul.mubr.f32.gmra.mxu0 %v533
    %v535 = vpop.f32.mrf.mxu0
    %v536 = vadd.f32 %v239, %v535
    %v537 = vpop.f32.mrf.mxu0
    %538 = vmatprep.mubr.f32.mxu0 0.0
    %v539 = vand.u32 %v52, 4294901760
    %540 = vmatmul.mubr.f32.gmra.mxu0 %v539
    %v541 = vpop.f32.mrf.mxu0
    %v542 = vadd.f32 %v249, %v541
    %v543 = vpop.f32.mrf.mxu0
    %544 = vmatprep.mubr.f32.mxu0 0.0
    %v545 = vand.u32 %v55, 4294901760
    %546 = vmatmul.mubr.f32.gmra.mxu0 %v545
    %v547 = vpop.f32.mrf.mxu0
    %v548 = vadd.f32 %v259, %v547
    %v549 = vpop.f32.mrf.mxu0
    %550 = vmatprep.mubr.f32.mxu0 0.0
    %v551 = vand.u32 %v58, 4294901760
    %552 = vmatmul.mubr.f32.gmra.mxu0 %v551
    %v553 = vpop.f32.mrf.mxu0
    %v554 = vadd.f32 %v269, %v553
    %v555 = vpop.f32.mrf.mxu0
    %556 = vmatprep.mubr.f32.mxu0 0.0
    %v557 = vand.u32 %v61, 4294901760
    %558 = vmatmul.mubr.f32.gmra.mxu0 %v557
    %v559 = vpop.f32.mrf.mxu0
    %v560 = vadd.f32 %v279, %v559
    %v561 = vpop.f32.mrf.mxu0
    %562 = vmatprep.mubr.f32.mxu0 0.0
    %v563 = vand.u32 %v64, 4294901760
    %564 = vmatmul.mubr.f32.gmra.mxu0 %v563
    %v565 = vpop.f32.mrf.mxu0
    %v566 = vadd.f32 %v289, %v565
    %v567 = vpop.f32.mrf.mxu0
    %568 = vmatprep.mubr.f32.mxu0 0.0
    %v569 = vand.u32 %v67, 4294901760
    %570 = vmatmul.mubr.f32.gmra.mxu0 %v569
    %v571 = vpop.f32.mrf.mxu0
    %v572 = vadd.f32 %v299, %v571
    %v573 = vpop.f32.mrf.mxu0
    %574 = vmatprep.mubr.f32.mxu0 0.0
    %v575 = vand.u32 %v70, 4294901760
    %576 = vmatmul.mubr.f32.gmra.mxu0 %v575
    %v577 = vpop.f32.mrf.mxu0
    %v578 = vadd.f32 %v309, %v577
    %v579 = vpop.f32.mrf.mxu0
    %580 = vmatprep.mubr.f32.mxu0 0.0
    %v581 = vand.u32 %v73, 4294901760
    %582 = vmatmul.mubr.f32.gmra.mxu0 %v581
    %v583 = vpop.f32.mrf.mxu0
    %v584 = vadd.f32 %v319, %v583
    %v585 = vpop.f32.mrf.mxu0
    %586 = vmatprep.mubr.f32.mxu0 0.0
    %v587 = vand.u32 %v76, 4294901760
    %588 = vmatmul.mubr.f32.gmra.mxu0 %v587
    %v589 = vpop.f32.mrf.mxu0
    %v590 = vadd.f32 %v329, %v589
    %v591 = vpop.f32.mrf.mxu0
    %592 = vmatprep.mubr.f32.mxu0 0.0
    %v593 = vand.u32 %v79, 4294901760
    %594 = vmatmul.mubr.f32.gmra.mxu0 %v593
    %v595 = vpop.f32.mrf.mxu0
    %v596 = vadd.f32 %v339, %v595
    %v597 = vpop.f32.mrf.mxu0
    %598 = vmatprep.mubr.f32.mxu0 0.0
    %v599 = vand.u32 %v82, 4294901760
    %600 = vmatmul.mubr.f32.gmra.mxu0 %v599
    %v601 = vpop.f32.mrf.mxu0
    %v602 = vadd.f32 %v349, %v601
    %v603 = vpop.f32.mrf.mxu0
    %604 = vmatprep.mubr.f32.mxu0 0.0
    %v605 = vand.u32 %v85, 4294901760
    %606 = vmatmul.mubr.f32.gmra.mxu0 %v605
    %v607 = vpop.f32.mrf.mxu0
    %v608 = vadd.f32 %v359, %v607
    %v609 = vpop.f32.mrf.mxu0
    %610 = vmatprep.mubr.f32.mxu0 0.0
    %v611 = vand.u32 %v88, 4294901760
    %612 = vmatmul.mubr.f32.gmra.mxu0 %v611
    %v613 = vpop.f32.mrf.mxu0
    %v614 = vadd.f32 %v369, %v613
    %v615 = vpop.f32.mrf.mxu0
    %616 = vmatprep.mubr.f32.mxu0 0.0
    %v617 = vand.u32 %v91, 4294901760
    %618 = vmatmul.mubr.f32.gmra.mxu0 %v617
    %v619 = vpop.f32.mrf.mxu0
    %v620 = vadd.f32 %v379, %v619
    %v621 = vpop.f32.mrf.mxu0
    %622 = vdwg.mxu0
    %623 = vmatprep.subr.mxu0 0.0
    %v624 = vand.u32 %v139, 4294901760
    %v625 = vsub.f32 %v139, %v624
    %626 = vmatpush1.xpose.msra.mxu0 %v625
    %627 = vmatprep.subr.mxu0 0.0
    %v628 = vand.u32 %v136, 4294901760
    %v629 = vsub.f32 %v136, %v628
    %630 = vmatpush1.xpose.msra.mxu0 %v629
    %631 = vmatprep.subr.mxu0 0.0
    %v632 = vand.u32 %v133, 4294901760
    %v633 = vsub.f32 %v133, %v632
    %634 = vmatpush1.xpose.msra.mxu0 %v633
    %635 = vmatprep.subr.mxu0 0.0
    %v636 = vand.u32 %v130, 4294901760
    %v637 = vsub.f32 %v130, %v636
    %638 = vmatpush1.xpose.msra.mxu0 %v637
    %639 = vmatprep.subr.mxu0 0.0
    %v640 = vand.u32 %v127, 4294901760
    %v641 = vsub.f32 %v127, %v640
    %642 = vmatpush1.xpose.msra.mxu0 %v641
    %643 = vmatprep.subr.mxu0 0.0
    %v644 = vand.u32 %v124, 4294901760
    %v645 = vsub.f32 %v124, %v644
    %646 = vmatpush1.xpose.msra.mxu0 %v645
    %647 = vmatprep.subr.mxu0 0.0
    %v648 = vand.u32 %v121, 4294901760
    %v649 = vsub.f32 %v121, %v648
    %650 = vmatpush1.xpose.msra.mxu0 %v649
    %651 = vmatprep.subr.mxu0 0.0
    %v652 = vand.u32 %v118, 4294901760
    %v653 = vsub.f32 %v118, %v652
    %654 = vmatpush1.xpose.msra.mxu0 %v653
    %655 = vmatprep.subr.mxu0 0.0
    %v656 = vand.u32 %v115, 4294901760
    %v657 = vsub.f32 %v115, %v656
    %658 = vmatpush1.xpose.msra.mxu0 %v657
    %659 = vmatprep.subr.mxu0 0.0
    %v660 = vand.u32 %v112, 4294901760
    %v661 = vsub.f32 %v112, %v660
    %662 = vmatpush1.xpose.msra.mxu0 %v661
    %663 = vmatprep.subr.mxu0 0.0
    %v664 = vand.u32 %v109, 4294901760
    %v665 = vsub.f32 %v109, %v664
    %666 = vmatpush1.xpose.msra.mxu0 %v665
    %667 = vmatprep.subr.mxu0 0.0
    %v668 = vand.u32 %v106, 4294901760
    %v669 = vsub.f32 %v106, %v668
    %670 = vmatpush1.xpose.msra.mxu0 %v669
    %671 = vmatprep.subr.mxu0 0.0
    %v672 = vand.u32 %v103, 4294901760
    %v673 = vsub.f32 %v103, %v672
    %674 = vmatpush1.xpose.msra.mxu0 %v673
    %675 = vmatprep.subr.mxu0 0.0
    %v676 = vand.u32 %v100, 4294901760
    %v677 = vsub.f32 %v100, %v676
    %678 = vmatpush1.xpose.msra.mxu0 %v677
    %679 = vmatprep.subr.mxu0 0.0
    %v680 = vand.u32 %v97, 4294901760
    %v681 = vsub.f32 %v97, %v680
    %682 = vmatpush1.xpose.msra.mxu0 %v681
    %683 = vmatprep.subr.mxu0 0.0
    %v684 = vand.u32 %v94, 4294901760
    %v685 = vsub.f32 %v94, %v684
    %686 = vmatpush1.xpose.msra.mxu0 %v685
    %687 = vmatprep.subr.mxu0 0.0
    %688 = vmatpush2.xpose.msra.mxu0 0.0
    %689 = vmatprep.subr.mxu0 0.0
    %690 = vmatpush2.xpose.msra.mxu0 0.0
    %691 = vmatprep.subr.mxu0 0.0
    %692 = vmatpush2.xpose.msra.mxu0 0.0
    %693 = vmatprep.subr.mxu0 0.0
    %694 = vmatpush2.xpose.msra.mxu0 0.0
    %695 = vmatprep.subr.mxu0 0.0
    %696 = vmatpush2.xpose.msra.mxu0 0.0
    %697 = vmatprep.subr.mxu0 0.0
    %698 = vmatpush2.xpose.msra.mxu0 0.0
    %699 = vmatprep.subr.mxu0 0.0
    %700 = vmatpush2.xpose.msra.mxu0 0.0
    %701 = vmatprep.subr.mxu0 0.0
    %702 = vmatpush2.xpose.msra.mxu0 0.0
    %703 = vmatprep.subr.mxu0 0.0
    %704 = vmatpush2.xpose.msra.mxu0 0.0
    %705 = vmatprep.subr.mxu0 0.0
    %706 = vmatpush2.xpose.msra.mxu0 0.0
    %707 = vmatprep.subr.mxu0 0.0
    %708 = vmatpush2.xpose.msra.mxu0 0.0
    %709 = vmatprep.subr.mxu0 0.0
    %710 = vmatpush2.xpose.msra.mxu0 0.0
    %711 = vmatprep.subr.mxu0 0.0
    %712 = vmatpush2.xpose.msra.mxu0 0.0
    %713 = vmatprep.subr.mxu0 0.0
    %714 = vmatpush2.xpose.msra.mxu0 0.0
    %715 = vmatprep.subr.mxu0 0.0
    %716 = vmatpush2.xpose.msra.mxu0 0.0
    %717 = vmatprep.subr.mxu0 0.0
    %718 = vmatpush2.xpose.msra.mxu0 0.0
    %719 = vmatprep.mubr.f32.mxu0 0.0
    %v720 = vand.u32 %v46, 4294901760
    %v721 = vsub.f32 %v46, %v720
    %722 = vmatmul.mubr.f32.gmra.mxu0 %v721
    %v723 = vpop.f32.mrf.mxu0
    %v724 = vadd.f32 %v530, %v723
    %v725 = vpop.f32.mrf.mxu0
    %726 = vmatprep.mubr.f32.mxu0 0.0
    %v727 = vand.u32 %v49, 4294901760
    %v728 = vsub.f32 %v49, %v727
    %729 = vmatmul.mubr.f32.gmra.mxu0 %v728
    %v730 = vpop.f32.mrf.mxu0
    %v731 = vadd.f32 %v536, %v730
    %v732 = vpop.f32.mrf.mxu0
    %733 = vmatprep.mubr.f32.mxu0 0.0
    %v734 = vand.u32 %v52, 4294901760
    %v735 = vsub.f32 %v52, %v734
    %736 = vmatmul.mubr.f32.gmra.mxu0 %v735
    %v737 = vpop.f32.mrf.mxu0
    %v738 = vadd.f32 %v542, %v737
    %v739 = vpop.f32.mrf.mxu0
    %740 = vmatprep.mubr.f32.mxu0 0.0
    %v741 = vand.u32 %v55, 4294901760
    %v742 = vsub.f32 %v55, %v741
    %743 = vmatmul.mubr.f32.gmra.mxu0 %v742
    %v744 = vpop.f32.mrf.mxu0
    %v745 = vadd.f32 %v548, %v744
    %v746 = vpop.f32.mrf.mxu0
    %747 = vmatprep.mubr.f32.mxu0 0.0
    %v748 = vand.u32 %v58, 4294901760
    %v749 = vsub.f32 %v58, %v748
    %750 = vmatmul.mubr.f32.gmra.mxu0 %v749
    %v751 = vpop.f32.mrf.mxu0
    %v752 = vadd.f32 %v554, %v751
    %v753 = vpop.f32.mrf.mxu0
    %754 = vmatprep.mubr.f32.mxu0 0.0
    %v755 = vand.u32 %v61, 4294901760
    %v756 = vsub.f32 %v61, %v755
    %757 = vmatmul.mubr.f32.gmra.mxu0 %v756
    %v758 = vpop.f32.mrf.mxu0
    %v759 = vadd.f32 %v560, %v758
    %v760 = vpop.f32.mrf.mxu0
    %761 = vmatprep.mubr.f32.mxu0 0.0
    %v762 = vand.u32 %v64, 4294901760
    %v763 = vsub.f32 %v64, %v762
    %764 = vmatmul.mubr.f32.gmra.mxu0 %v763
    %v765 = vpop.f32.mrf.mxu0
    %v766 = vadd.f32 %v566, %v765
    %v767 = vpop.f32.mrf.mxu0
    %768 = vmatprep.mubr.f32.mxu0 0.0
    %v769 = vand.u32 %v67, 4294901760
    %v770 = vsub.f32 %v67, %v769
    %771 = vmatmul.mubr.f32.gmra.mxu0 %v770
    %v772 = vpop.f32.mrf.mxu0
    %v773 = vadd.f32 %v572, %v772
    %v774 = vpop.f32.mrf.mxu0
    %775 = vmatprep.mubr.f32.mxu0 0.0
    %v776 = vand.u32 %v70, 4294901760
    %v777 = vsub.f32 %v70, %v776
    %778 = vmatmul.mubr.f32.gmra.mxu0 %v777
    %v779 = vpop.f32.mrf.mxu0
    %v780 = vadd.f32 %v578, %v779
    %v781 = vpop.f32.mrf.mxu0
    %782 = vmatprep.mubr.f32.mxu0 0.0
    %v783 = vand.u32 %v73, 4294901760
    %v784 = vsub.f32 %v73, %v783
    %785 = vmatmul.mubr.f32.gmra.mxu0 %v784
    %v786 = vpop.f32.mrf.mxu0
    %v787 = vadd.f32 %v584, %v786
    %v788 = vpop.f32.mrf.mxu0
    %789 = vmatprep.mubr.f32.mxu0 0.0
    %v790 = vand.u32 %v76, 4294901760
    %v791 = vsub.f32 %v76, %v790
    %792 = vmatmul.mubr.f32.gmra.mxu0 %v791
    %v793 = vpop.f32.mrf.mxu0
    %v794 = vadd.f32 %v590, %v793
    %v795 = vpop.f32.mrf.mxu0
    %796 = vmatprep.mubr.f32.mxu0 0.0
    %v797 = vand.u32 %v79, 4294901760
    %v798 = vsub.f32 %v79, %v797
    %799 = vmatmul.mubr.f32.gmra.mxu0 %v798
    %v800 = vpop.f32.mrf.mxu0
    %v801 = vadd.f32 %v596, %v800
    %v802 = vpop.f32.mrf.mxu0
    %803 = vmatprep.mubr.f32.mxu0 0.0
    %v804 = vand.u32 %v82, 4294901760
    %v805 = vsub.f32 %v82, %v804
    %806 = vmatmul.mubr.f32.gmra.mxu0 %v805
    %v807 = vpop.f32.mrf.mxu0
    %v808 = vadd.f32 %v602, %v807
    %v809 = vpop.f32.mrf.mxu0
    %810 = vmatprep.mubr.f32.mxu0 0.0
    %v811 = vand.u32 %v85, 4294901760
    %v812 = vsub.f32 %v85, %v811
    %813 = vmatmul.mubr.f32.gmra.mxu0 %v812
    %v814 = vpop.f32.mrf.mxu0
    %v815 = vadd.f32 %v608, %v814
    %v816 = vpop.f32.mrf.mxu0
    %817 = vmatprep.mubr.f32.mxu0 0.0
    %v818 = vand.u32 %v88, 4294901760
    %v819 = vsub.f32 %v88, %v818
    %820 = vmatmul.mubr.f32.gmra.mxu0 %v819
    %v821 = vpop.f32.mrf.mxu0
    %v822 = vadd.f32 %v614, %v821
    %v823 = vpop.f32.mrf.mxu0
    %824 = vmatprep.mubr.f32.mxu0 0.0
    %v825 = vand.u32 %v91, 4294901760
    %v826 = vsub.f32 %v91, %v825
    %827 = vmatmul.mubr.f32.gmra.mxu0 %v826
    %v828 = vpop.f32.mrf.mxu0
    %v829 = vadd.f32 %v620, %v828
    %v830 = vpop.f32.mrf.mxu0
    %831 = vdwg.mxu0
    %832 = vmatprep.subr.mxu0 0.0
    %v833 = vand.u32 %v139, 4294901760
    %834 = vmatpush1.xpose.msra.mxu0 %v833
    %835 = vmatprep.subr.mxu0 0.0
    %v836 = vand.u32 %v136, 4294901760
    %837 = vmatpush1.xpose.msra.mxu0 %v836
    %838 = vmatprep.subr.mxu0 0.0
    %v839 = vand.u32 %v133, 4294901760
    %840 = vmatpush1.xpose.msra.mxu0 %v839
    %841 = vmatprep.subr.mxu0 0.0
    %v842 = vand.u32 %v130, 4294901760
    %843 = vmatpush1.xpose.msra.mxu0 %v842
    %844 = vmatprep.subr.mxu0 0.0
    %v845 = vand.u32 %v127, 4294901760
    %846 = vmatpush1.xpose.msra.mxu0 %v845
    %847 = vmatprep.subr.mxu0 0.0
    %v848 = vand.u32 %v124, 4294901760
    %849 = vmatpush1.xpose.msra.mxu0 %v848
    %850 = vmatprep.subr.mxu0 0.0
    %v851 = vand.u32 %v121, 4294901760
    %852 = vmatpush1.xpose.msra.mxu0 %v851
    %853 = vmatprep.subr.mxu0 0.0
    %v854 = vand.u32 %v118, 4294901760
    %855 = vmatpush1.xpose.msra.mxu0 %v854
    %856 = vmatprep.subr.mxu0 0.0
    %v857 = vand.u32 %v115, 4294901760
    %858 = vmatpush1.xpose.msra.mxu0 %v857
    %859 = vmatprep.subr.mxu0 0.0
    %v860 = vand.u32 %v112, 4294901760
    %861 = vmatpush1.xpose.msra.mxu0 %v860
    %862 = vmatprep.subr.mxu0 0.0
    %v863 = vand.u32 %v109, 4294901760
    %864 = vmatpush1.xpose.msra.mxu0 %v863
    %865 = vmatprep.subr.mxu0 0.0
    %v866 = vand.u32 %v106, 4294901760
    %867 = vmatpush1.xpose.msra.mxu0 %v866
    %868 = vmatprep.subr.mxu0 0.0
    %v869 = vand.u32 %v103, 4294901760
    %870 = vmatpush1.xpose.msra.mxu0 %v869
    %871 = vmatprep.subr.mxu0 0.0
    %v872 = vand.u32 %v100, 4294901760
    %873 = vmatpush1.xpose.msra.mxu0 %v872
    %874 = vmatprep.subr.mxu0 0.0
    %v875 = vand.u32 %v97, 4294901760
    %876 = vmatpush1.xpose.msra.mxu0 %v875
    %877 = vmatprep.subr.mxu0 0.0
    %v878 = vand.u32 %v94, 4294901760
    %879 = vmatpush1.xpose.msra.mxu0 %v878
    %880 = vmatprep.subr.mxu0 0.0
    %881 = vmatpush2.xpose.msra.mxu0 0.0
    %882 = vmatprep.subr.mxu0 0.0
    %883 = vmatpush2.xpose.msra.mxu0 0.0
    %884 = vmatprep.subr.mxu0 0.0
    %885 = vmatpush2.xpose.msra.mxu0 0.0
    %886 = vmatprep.subr.mxu0 0.0
    %887 = vmatpush2.xpose.msra.mxu0 0.0
    %888 = vmatprep.subr.mxu0 0.0
    %889 = vmatpush2.xpose.msra.mxu0 0.0
    %890 = vmatprep.subr.mxu0 0.0
    %891 = vmatpush2.xpose.msra.mxu0 0.0
    %892 = vmatprep.subr.mxu0 0.0
    %893 = vmatpush2.xpose.msra.mxu0 0.0
    %894 = vmatprep.subr.mxu0 0.0
    %895 = vmatpush2.xpose.msra.mxu0 0.0
    %896 = vmatprep.subr.mxu0 0.0
    %897 = vmatpush2.xpose.msra.mxu0 0.0
    %898 = vmatprep.subr.mxu0 0.0
    %899 = vmatpush2.xpose.msra.mxu0 0.0
    %900 = vmatprep.subr.mxu0 0.0
    %901 = vmatpush2.xpose.msra.mxu0 0.0
    %902 = vmatprep.subr.mxu0 0.0
    %903 = vmatpush2.xpose.msra.mxu0 0.0
    %904 = vmatprep.subr.mxu0 0.0
    %905 = vmatpush2.xpose.msra.mxu0 0.0
    %906 = vmatprep.subr.mxu0 0.0
    %907 = vmatpush2.xpose.msra.mxu0 0.0
    %908 = vmatprep.subr.mxu0 0.0
    %909 = vmatpush2.xpose.msra.mxu0 0.0
    %910 = vmatprep.subr.mxu0 0.0
    %911 = vmatpush2.xpose.msra.mxu0 0.0
    %912 = vmatprep.mubr.f32.mxu0 0.0
    %v913 = vand.u32 %v46, 4294901760
    %v914 = vsub.f32 %v46, %v913
    %v915 = vand.u32 %v914, 4294901760
    %916 = vmatmul.mubr.f32.gmra.mxu0 %v915
    %v917 = vpop.f32.mrf.mxu0
    %v918 = vadd.f32 %v724, %v917
    %v919 = vpop.f32.mrf.mxu0
    %920 = vmatprep.mubr.f32.mxu0 0.0
    %v921 = vand.u32 %v49, 4294901760
    %v922 = vsub.f32 %v49, %v921
    %v923 = vand.u32 %v922, 4294901760
    %924 = vmatmul.mubr.f32.gmra.mxu0 %v923
    %v925 = vpop.f32.mrf.mxu0
    %v926 = vadd.f32 %v731, %v925
    %v927 = vpop.f32.mrf.mxu0
    %928 = vmatprep.mubr.f32.mxu0 0.0
    %v929 = vand.u32 %v52, 4294901760
    %v930 = vsub.f32 %v52, %v929
    %v931 = vand.u32 %v930, 4294901760
    %932 = vmatmul.mubr.f32.gmra.mxu0 %v931
    %v933 = vpop.f32.mrf.mxu0
    %v934 = vadd.f32 %v738, %v933
    %v935 = vpop.f32.mrf.mxu0
    %936 = vmatprep.mubr.f32.mxu0 0.0
    %v937 = vand.u32 %v55, 4294901760
    %v938 = vsub.f32 %v55, %v937
    %v939 = vand.u32 %v938, 4294901760
    %940 = vmatmul.mubr.f32.gmra.mxu0 %v939
    %v941 = vpop.f32.mrf.mxu0
    %v942 = vadd.f32 %v745, %v941
    %v943 = vpop.f32.mrf.mxu0
    %944 = vmatprep.mubr.f32.mxu0 0.0
    %v945 = vand.u32 %v58, 4294901760
    %v946 = vsub.f32 %v58, %v945
    %v947 = vand.u32 %v946, 4294901760
    %948 = vmatmul.mubr.f32.gmra.mxu0 %v947
    %v949 = vpop.f32.mrf.mxu0
    %v950 = vadd.f32 %v752, %v949
    %v951 = vpop.f32.mrf.mxu0
    %952 = vmatprep.mubr.f32.mxu0 0.0
    %v953 = vand.u32 %v61, 4294901760
    %v954 = vsub.f32 %v61, %v953
    %v955 = vand.u32 %v954, 4294901760
    %956 = vmatmul.mubr.f32.gmra.mxu0 %v955
    %v957 = vpop.f32.mrf.mxu0
    %v958 = vadd.f32 %v759, %v957
    %v959 = vpop.f32.mrf.mxu0
    %960 = vmatprep.mubr.f32.mxu0 0.0
    %v961 = vand.u32 %v64, 4294901760
    %v962 = vsub.f32 %v64, %v961
    %v963 = vand.u32 %v962, 4294901760
    %964 = vmatmul.mubr.f32.gmra.mxu0 %v963
    %v965 = vpop.f32.mrf.mxu0
    %v966 = vadd.f32 %v766, %v965
    %v967 = vpop.f32.mrf.mxu0
    %968 = vmatprep.mubr.f32.mxu0 0.0
    %v969 = vand.u32 %v67, 4294901760
    %v970 = vsub.f32 %v67, %v969
    %v971 = vand.u32 %v970, 4294901760
    %972 = vmatmul.mubr.f32.gmra.mxu0 %v971
    %v973 = vpop.f32.mrf.mxu0
    %v974 = vadd.f32 %v773, %v973
    %v975 = vpop.f32.mrf.mxu0
    %976 = vmatprep.mubr.f32.mxu0 0.0
    %v977 = vand.u32 %v70, 4294901760
    %v978 = vsub.f32 %v70, %v977
    %v979 = vand.u32 %v978, 4294901760
    %980 = vmatmul.mubr.f32.gmra.mxu0 %v979
    %v981 = vpop.f32.mrf.mxu0
    %v982 = vadd.f32 %v780, %v981
    %v983 = vpop.f32.mrf.mxu0
    %984 = vmatprep.mubr.f32.mxu0 0.0
    %v985 = vand.u32 %v73, 4294901760
    %v986 = vsub.f32 %v73, %v985
    %v987 = vand.u32 %v986, 4294901760
    %988 = vmatmul.mubr.f32.gmra.mxu0 %v987
    %v989 = vpop.f32.mrf.mxu0
    %v990 = vadd.f32 %v787, %v989
    %v991 = vpop.f32.mrf.mxu0
    %992 = vmatprep.mubr.f32.mxu0 0.0
    %v993 = vand.u32 %v76, 4294901760
    %v994 = vsub.f32 %v76, %v993
    %v995 = vand.u32 %v994, 4294901760
    %996 = vmatmul.mubr.f32.gmra.mxu0 %v995
    %v997 = vpop.f32.mrf.mxu0
    %v998 = vadd.f32 %v794, %v997
    %v999 = vpop.f32.mrf.mxu0
    %1000 = vmatprep.mubr.f32.mxu0 0.0
    %v1001 = vand.u32 %v79, 4294901760
    %v1002 = vsub.f32 %v79, %v1001
    %v1003 = vand.u32 %v1002, 4294901760
    %1004 = vmatmul.mubr.f32.gmra.mxu0 %v1003
    %v1005 = vpop.f32.mrf.mxu0
    %v1006 = vadd.f32 %v801, %v1005
    %v1007 = vpop.f32.mrf.mxu0
    %1008 = vmatprep.mubr.f32.mxu0 0.0
    %v1009 = vand.u32 %v82, 4294901760
    %v1010 = vsub.f32 %v82, %v1009
    %v1011 = vand.u32 %v1010, 4294901760
    %1012 = vmatmul.mubr.f32.gmra.mxu0 %v1011
    %v1013 = vpop.f32.mrf.mxu0
    %v1014 = vadd.f32 %v808, %v1013
    %v1015 = vpop.f32.mrf.mxu0
    %1016 = vmatprep.mubr.f32.mxu0 0.0
    %v1017 = vand.u32 %v85, 4294901760
    %v1018 = vsub.f32 %v85, %v1017
    %v1019 = vand.u32 %v1018, 4294901760
    %1020 = vmatmul.mubr.f32.gmra.mxu0 %v1019
    %v1021 = vpop.f32.mrf.mxu0
    %v1022 = vadd.f32 %v815, %v1021
    %v1023 = vpop.f32.mrf.mxu0
    %1024 = vmatprep.mubr.f32.mxu0 0.0
    %v1025 = vand.u32 %v88, 4294901760
    %v1026 = vsub.f32 %v88, %v1025
    %v1027 = vand.u32 %v1026, 4294901760
    %1028 = vmatmul.mubr.f32.gmra.mxu0 %v1027
    %v1029 = vpop.f32.mrf.mxu0
    %v1030 = vadd.f32 %v822, %v1029
    %v1031 = vpop.f32.mrf.mxu0
    %1032 = vmatprep.mubr.f32.mxu0 0.0
    %v1033 = vand.u32 %v91, 4294901760
    %v1034 = vsub.f32 %v91, %v1033
    %v1035 = vand.u32 %v1034, 4294901760
    %1036 = vmatmul.mubr.f32.gmra.mxu0 %v1035
    %v1037 = vpop.f32.mrf.mxu0
    %v1038 = vadd.f32 %v829, %v1037
    %v1039 = vpop.f32.mrf.mxu0
    %1040 = vdwg.mxu0
    %1041 = vmatprep.subr.mxu0 0.0
    %v1042 = vand.u32 %v139, 4294901760
    %v1043 = vsub.f32 %v139, %v1042
    %v1044 = vand.u32 %v1043, 4294901760
    %1045 = vmatpush1.xpose.msra.mxu0 %v1044
    %1046 = vmatprep.subr.mxu0 0.0
    %v1047 = vand.u32 %v136, 4294901760
    %v1048 = vsub.f32 %v136, %v1047
    %v1049 = vand.u32 %v1048, 4294901760
    %1050 = vmatpush1.xpose.msra.mxu0 %v1049
    %1051 = vmatprep.subr.mxu0 0.0
    %v1052 = vand.u32 %v133, 4294901760
    %v1053 = vsub.f32 %v133, %v1052
    %v1054 = vand.u32 %v1053, 4294901760
    %1055 = vmatpush1.xpose.msra.mxu0 %v1054
    %1056 = vmatprep.subr.mxu0 0.0
    %v1057 = vand.u32 %v130, 4294901760
    %v1058 = vsub.f32 %v130, %v1057
    %v1059 = vand.u32 %v1058, 4294901760
    %1060 = vmatpush1.xpose.msra.mxu0 %v1059
    %1061 = vmatprep.subr.mxu0 0.0
    %v1062 = vand.u32 %v127, 4294901760
    %v1063 = vsub.f32 %v127, %v1062
    %v1064 = vand.u32 %v1063, 4294901760
    %1065 = vmatpush1.xpose.msra.mxu0 %v1064
    %1066 = vmatprep.subr.mxu0 0.0
    %v1067 = vand.u32 %v124, 4294901760
    %v1068 = vsub.f32 %v124, %v1067
    %v1069 = vand.u32 %v1068, 4294901760
    %1070 = vmatpush1.xpose.msra.mxu0 %v1069
    %1071 = vmatprep.subr.mxu0 0.0
    %v1072 = vand.u32 %v121, 4294901760
    %v1073 = vsub.f32 %v121, %v1072
    %v1074 = vand.u32 %v1073, 4294901760
    %1075 = vmatpush1.xpose.msra.mxu0 %v1074
    %1076 = vmatprep.subr.mxu0 0.0
    %v1077 = vand.u32 %v118, 4294901760
    %v1078 = vsub.f32 %v118, %v1077
    %v1079 = vand.u32 %v1078, 4294901760
    %1080 = vmatpush1.xpose.msra.mxu0 %v1079
    %1081 = vmatprep.subr.mxu0 0.0
    %v1082 = vand.u32 %v115, 4294901760
    %v1083 = vsub.f32 %v115, %v1082
    %v1084 = vand.u32 %v1083, 4294901760
    %1085 = vmatpush1.xpose.msra.mxu0 %v1084
    %1086 = vmatprep.subr.mxu0 0.0
    %v1087 = vand.u32 %v112, 4294901760
    %v1088 = vsub.f32 %v112, %v1087
    %v1089 = vand.u32 %v1088, 4294901760
    %1090 = vmatpush1.xpose.msra.mxu0 %v1089
    %1091 = vmatprep.subr.mxu0 0.0
    %v1092 = vand.u32 %v109, 4294901760
    %v1093 = vsub.f32 %v109, %v1092
    %v1094 = vand.u32 %v1093, 4294901760
    %1095 = vmatpush1.xpose.msra.mxu0 %v1094
    %1096 = vmatprep.subr.mxu0 0.0
    %v1097 = vand.u32 %v106, 4294901760
    %v1098 = vsub.f32 %v106, %v1097
    %v1099 = vand.u32 %v1098, 4294901760
    %1100 = vmatpush1.xpose.msra.mxu0 %v1099
    %1101 = vmatprep.subr.mxu0 0.0
    %v1102 = vand.u32 %v103, 4294901760
    %v1103 = vsub.f32 %v103, %v1102
    %v1104 = vand.u32 %v1103, 4294901760
    %1105 = vmatpush1.xpose.msra.mxu0 %v1104
    %1106 = vmatprep.subr.mxu0 0.0
    %v1107 = vand.u32 %v100, 4294901760
    %v1108 = vsub.f32 %v100, %v1107
    %v1109 = vand.u32 %v1108, 4294901760
    %1110 = vmatpush1.xpose.msra.mxu0 %v1109
    %1111 = vmatprep.subr.mxu0 0.0
    %v1112 = vand.u32 %v97, 4294901760
    %v1113 = vsub.f32 %v97, %v1112
    %v1114 = vand.u32 %v1113, 4294901760
    %1115 = vmatpush1.xpose.msra.mxu0 %v1114
    %1116 = vmatprep.subr.mxu0 0.0
    %v1117 = vand.u32 %v94, 4294901760
    %v1118 = vsub.f32 %v94, %v1117
    %v1119 = vand.u32 %v1118, 4294901760
    %1120 = vmatpush1.xpose.msra.mxu0 %v1119
    %1121 = vmatprep.subr.mxu0 0.0
    %1122 = vmatpush2.xpose.msra.mxu0 0.0
    %1123 = vmatprep.subr.mxu0 0.0
    %1124 = vmatpush2.xpose.msra.mxu0 0.0
    %1125 = vmatprep.subr.mxu0 0.0
    %1126 = vmatpush2.xpose.msra.mxu0 0.0
    %1127 = vmatprep.subr.mxu0 0.0
    %1128 = vmatpush2.xpose.msra.mxu0 0.0
    %1129 = vmatprep.subr.mxu0 0.0
    %1130 = vmatpush2.xpose.msra.mxu0 0.0
    %1131 = vmatprep.subr.mxu0 0.0
    %1132 = vmatpush2.xpose.msra.mxu0 0.0
    %1133 = vmatprep.subr.mxu0 0.0
    %1134 = vmatpush2.xpose.msra.mxu0 0.0
    %1135 = vmatprep.subr.mxu0 0.0
    %1136 = vmatpush2.xpose.msra.mxu0 0.0
    %1137 = vmatprep.subr.mxu0 0.0
    %1138 = vmatpush2.xpose.msra.mxu0 0.0
    %1139 = vmatprep.subr.mxu0 0.0
    %1140 = vmatpush2.xpose.msra.mxu0 0.0
    %1141 = vmatprep.subr.mxu0 0.0
    %1142 = vmatpush2.xpose.msra.mxu0 0.0
    %1143 = vmatprep.subr.mxu0 0.0
    %1144 = vmatpush2.xpose.msra.mxu0 0.0
    %1145 = vmatprep.subr.mxu0 0.0
    %1146 = vmatpush2.xpose.msra.mxu0 0.0
    %1147 = vmatprep.subr.mxu0 0.0
    %1148 = vmatpush2.xpose.msra.mxu0 0.0
    %1149 = vmatprep.subr.mxu0 0.0
    %1150 = vmatpush2.xpose.msra.mxu0 0.0
    %1151 = vmatprep.subr.mxu0 0.0
    %1152 = vmatpush2.xpose.msra.mxu0 0.0
    %1153 = vmatprep.mubr.f32.mxu0 0.0
    %v1154 = vand.u32 %v46, 4294901760
    %1155 = vmatmul.mubr.f32.gmra.mxu0 %v1154
    %v1156 = vpop.f32.mrf.mxu0
    %v1157 = vadd.f32 %v918, %v1156
    %v1158 = vpop.f32.mrf.mxu0
    %1159 = vmatprep.mubr.f32.mxu0 0.0
    %v1160 = vand.u32 %v49, 4294901760
    %1161 = vmatmul.mubr.f32.gmra.mxu0 %v1160
    %v1162 = vpop.f32.mrf.mxu0
    %v1163 = vadd.f32 %v926, %v1162
    %v1164 = vpop.f32.mrf.mxu0
    %1165 = vmatprep.mubr.f32.mxu0 0.0
    %v1166 = vand.u32 %v52, 4294901760
    %1167 = vmatmul.mubr.f32.gmra.mxu0 %v1166
    %v1168 = vpop.f32.mrf.mxu0
    %v1169 = vadd.f32 %v934, %v1168
    %v1170 = vpop.f32.mrf.mxu0
    %1171 = vmatprep.mubr.f32.mxu0 0.0
    %v1172 = vand.u32 %v55, 4294901760
    %1173 = vmatmul.mubr.f32.gmra.mxu0 %v1172
    %v1174 = vpop.f32.mrf.mxu0
    %v1175 = vadd.f32 %v942, %v1174
    %v1176 = vpop.f32.mrf.mxu0
    %1177 = vmatprep.mubr.f32.mxu0 0.0
    %v1178 = vand.u32 %v58, 4294901760
    %1179 = vmatmul.mubr.f32.gmra.mxu0 %v1178
    %v1180 = vpop.f32.mrf.mxu0
    %v1181 = vadd.f32 %v950, %v1180
    %v1182 = vpop.f32.mrf.mxu0
    %1183 = vmatprep.mubr.f32.mxu0 0.0
    %v1184 = vand.u32 %v61, 4294901760
    %1185 = vmatmul.mubr.f32.gmra.mxu0 %v1184
    %v1186 = vpop.f32.mrf.mxu0
    %v1187 = vadd.f32 %v958, %v1186
    %v1188 = vpop.f32.mrf.mxu0
    %1189 = vmatprep.mubr.f32.mxu0 0.0
    %v1190 = vand.u32 %v64, 4294901760
    %1191 = vmatmul.mubr.f32.gmra.mxu0 %v1190
    %v1192 = vpop.f32.mrf.mxu0
    %v1193 = vadd.f32 %v966, %v1192
    %v1194 = vpop.f32.mrf.mxu0
    %1195 = vmatprep.mubr.f32.mxu0 0.0
    %v1196 = vand.u32 %v67, 4294901760
    %1197 = vmatmul.mubr.f32.gmra.mxu0 %v1196
    %v1198 = vpop.f32.mrf.mxu0
    %v1199 = vadd.f32 %v974, %v1198
    %v1200 = vpop.f32.mrf.mxu0
    %1201 = vmatprep.mubr.f32.mxu0 0.0
    %v1202 = vand.u32 %v70, 4294901760
    %1203 = vmatmul.mubr.f32.gmra.mxu0 %v1202
    %v1204 = vpop.f32.mrf.mxu0
    %v1205 = vadd.f32 %v982, %v1204
    %v1206 = vpop.f32.mrf.mxu0
    %1207 = vmatprep.mubr.f32.mxu0 0.0
    %v1208 = vand.u32 %v73, 4294901760
    %1209 = vmatmul.mubr.f32.gmra.mxu0 %v1208
    %v1210 = vpop.f32.mrf.mxu0
    %v1211 = vadd.f32 %v990, %v1210
    %v1212 = vpop.f32.mrf.mxu0
    %1213 = vmatprep.mubr.f32.mxu0 0.0
    %v1214 = vand.u32 %v76, 4294901760
    %1215 = vmatmul.mubr.f32.gmra.mxu0 %v1214
    %v1216 = vpop.f32.mrf.mxu0
    %v1217 = vadd.f32 %v998, %v1216
    %v1218 = vpop.f32.mrf.mxu0
    %1219 = vmatprep.mubr.f32.mxu0 0.0
    %v1220 = vand.u32 %v79, 4294901760
    %1221 = vmatmul.mubr.f32.gmra.mxu0 %v1220
    %v1222 = vpop.f32.mrf.mxu0
    %v1223 = vadd.f32 %v1006, %v1222
    %v1224 = vpop.f32.mrf.mxu0
    %1225 = vmatprep.mubr.f32.mxu0 0.0
    %v1226 = vand.u32 %v82, 4294901760
    %1227 = vmatmul.mubr.f32.gmra.mxu0 %v1226
    %v1228 = vpop.f32.mrf.mxu0
    %v1229 = vadd.f32 %v1014, %v1228
    %v1230 = vpop.f32.mrf.mxu0
    %1231 = vmatprep.mubr.f32.mxu0 0.0
    %v1232 = vand.u32 %v85, 4294901760
    %1233 = vmatmul.mubr.f32.gmra.mxu0 %v1232
    %v1234 = vpop.f32.mrf.mxu0
    %v1235 = vadd.f32 %v1022, %v1234
    %v1236 = vpop.f32.mrf.mxu0
    %1237 = vmatprep.mubr.f32.mxu0 0.0
    %v1238 = vand.u32 %v88, 4294901760
    %1239 = vmatmul.mubr.f32.gmra.mxu0 %v1238
    %v1240 = vpop.f32.mrf.mxu0
    %v1241 = vadd.f32 %v1030, %v1240
    %v1242 = vpop.f32.mrf.mxu0
    %1243 = vmatprep.mubr.f32.mxu0 0.0
    %v1244 = vand.u32 %v91, 4294901760
    %1245 = vmatmul.mubr.f32.gmra.mxu0 %v1244
    %v1246 = vpop.f32.mrf.mxu0
    %v1247 = vadd.f32 %v1038, %v1246
    %v1248 = vpop.f32.mrf.mxu0
    %1249 = vdwg.mxu0
    %1250 = vmatprep.subr.mxu0 0.0
    %v1251 = vand.u32 %v139, 4294901760
    %1252 = vmatpush1.xpose.msra.mxu0 %v1251
    %1253 = vmatprep.subr.mxu0 0.0
    %v1254 = vand.u32 %v136, 4294901760
    %1255 = vmatpush1.xpose.msra.mxu0 %v1254
    %1256 = vmatprep.subr.mxu0 0.0
    %v1257 = vand.u32 %v133, 4294901760
    %1258 = vmatpush1.xpose.msra.mxu0 %v1257
    %1259 = vmatprep.subr.mxu0 0.0
    %v1260 = vand.u32 %v130, 4294901760
    %1261 = vmatpush1.xpose.msra.mxu0 %v1260
    %1262 = vmatprep.subr.mxu0 0.0
    %v1263 = vand.u32 %v127, 4294901760
    %1264 = vmatpush1.xpose.msra.mxu0 %v1263
    %1265 = vmatprep.subr.mxu0 0.0
    %v1266 = vand.u32 %v124, 4294901760
    %1267 = vmatpush1.xpose.msra.mxu0 %v1266
    %1268 = vmatprep.subr.mxu0 0.0
    %v1269 = vand.u32 %v121, 4294901760
    %1270 = vmatpush1.xpose.msra.mxu0 %v1269
    %1271 = vmatprep.subr.mxu0 0.0
    %v1272 = vand.u32 %v118, 4294901760
    %1273 = vmatpush1.xpose.msra.mxu0 %v1272
    %1274 = vmatprep.subr.mxu0 0.0
    %v1275 = vand.u32 %v115, 4294901760
    %1276 = vmatpush1.xpose.msra.mxu0 %v1275
    %1277 = vmatprep.subr.mxu0 0.0
    %v1278 = vand.u32 %v112, 4294901760
    %1279 = vmatpush1.xpose.msra.mxu0 %v1278
    %1280 = vmatprep.subr.mxu0 0.0
    %v1281 = vand.u32 %v109, 4294901760
    %1282 = vmatpush1.xpose.msra.mxu0 %v1281
    %1283 = vmatprep.subr.mxu0 0.0
    %v1284 = vand.u32 %v106, 4294901760
    %1285 = vmatpush1.xpose.msra.mxu0 %v1284
    %1286 = vmatprep.subr.mxu0 0.0
    %v1287 = vand.u32 %v103, 4294901760
    %1288 = vmatpush1.xpose.msra.mxu0 %v1287
    %1289 = vmatprep.subr.mxu0 0.0
    %v1290 = vand.u32 %v100, 4294901760
    %1291 = vmatpush1.xpose.msra.mxu0 %v1290
    %1292 = vmatprep.subr.mxu0 0.0
    %v1293 = vand.u32 %v97, 4294901760
    %1294 = vmatpush1.xpose.msra.mxu0 %v1293
    %1295 = vmatprep.subr.mxu0 0.0
    %v1296 = vand.u32 %v94, 4294901760
    %1297 = vmatpush1.xpose.msra.mxu0 %v1296
    %1298 = vmatprep.subr.mxu0 0.0
    %1299 = vmatpush2.xpose.msra.mxu0 0.0
    %1300 = vmatprep.subr.mxu0 0.0
    %1301 = vmatpush2.xpose.msra.mxu0 0.0
    %1302 = vmatprep.subr.mxu0 0.0
    %1303 = vmatpush2.xpose.msra.mxu0 0.0
    %1304 = vmatprep.subr.mxu0 0.0
    %1305 = vmatpush2.xpose.msra.mxu0 0.0
    %1306 = vmatprep.subr.mxu0 0.0
    %1307 = vmatpush2.xpose.msra.mxu0 0.0
    %1308 = vmatprep.subr.mxu0 0.0
    %1309 = vmatpush2.xpose.msra.mxu0 0.0
    %1310 = vmatprep.subr.mxu0 0.0
    %1311 = vmatpush2.xpose.msra.mxu0 0.0
    %1312 = vmatprep.subr.mxu0 0.0
    %1313 = vmatpush2.xpose.msra.mxu0 0.0
    %1314 = vmatprep.subr.mxu0 0.0
    %1315 = vmatpush2.xpose.msra.mxu0 0.0
    %1316 = vmatprep.subr.mxu0 0.0
    %1317 = vmatpush2.xpose.msra.mxu0 0.0
    %1318 = vmatprep.subr.mxu0 0.0
    %1319 = vmatpush2.xpose.msra.mxu0 0.0
    %1320 = vmatprep.subr.mxu0 0.0
    %1321 = vmatpush2.xpose.msra.mxu0 0.0
    %1322 = vmatprep.subr.mxu0 0.0
    %1323 = vmatpush2.xpose.msra.mxu0 0.0
    %1324 = vmatprep.subr.mxu0 0.0
    %1325 = vmatpush2.xpose.msra.mxu0 0.0
    %1326 = vmatprep.subr.mxu0 0.0
    %1327 = vmatpush2.xpose.msra.mxu0 0.0
    %1328 = vmatprep.subr.mxu0 0.0
    %1329 = vmatpush2.xpose.msra.mxu0 0.0
    %1330 = vmatprep.mubr.f32.mxu0 0.0
    %v1331 = vand.u32 %v46, 4294901760
    %1332 = vmatmul.mubr.f32.gmra.mxu0 %v1331
    %v1333 = vpop.f32.mrf.mxu0
    %v1334 = vadd.f32 %v1157, %v1333
    %v1335 = vpop.f32.mrf.mxu0
    %1336 = vmatprep.mubr.f32.mxu0 0.0
    %v1337 = vand.u32 %v49, 4294901760
    %1338 = vmatmul.mubr.f32.gmra.mxu0 %v1337
    %v1339 = vpop.f32.mrf.mxu0
    %v1340 = vadd.f32 %v1163, %v1339
    %v1341 = vpop.f32.mrf.mxu0
    %1342 = vmatprep.mubr.f32.mxu0 0.0
    %v1343 = vand.u32 %v52, 4294901760
    %1344 = vmatmul.mubr.f32.gmra.mxu0 %v1343
    %v1345 = vpop.f32.mrf.mxu0
    %v1346 = vadd.f32 %v1169, %v1345
    %v1347 = vpop.f32.mrf.mxu0
    %1348 = vmatprep.mubr.f32.mxu0 0.0
    %v1349 = vand.u32 %v55, 4294901760
    %1350 = vmatmul.mubr.f32.gmra.mxu0 %v1349
    %v1351 = vpop.f32.mrf.mxu0
    %v1352 = vadd.f32 %v1175, %v1351
    %v1353 = vpop.f32.mrf.mxu0
    %1354 = vmatprep.mubr.f32.mxu0 0.0
    %v1355 = vand.u32 %v58, 4294901760
    %1356 = vmatmul.mubr.f32.gmra.mxu0 %v1355
    %v1357 = vpop.f32.mrf.mxu0
    %v1358 = vadd.f32 %v1181, %v1357
    %v1359 = vpop.f32.mrf.mxu0
    %1360 = vmatprep.mubr.f32.mxu0 0.0
    %v1361 = vand.u32 %v61, 4294901760
    %1362 = vmatmul.mubr.f32.gmra.mxu0 %v1361
    %v1363 = vpop.f32.mrf.mxu0
    %v1364 = vadd.f32 %v1187, %v1363
    %v1365 = vpop.f32.mrf.mxu0
    %1366 = vmatprep.mubr.f32.mxu0 0.0
    %v1367 = vand.u32 %v64, 4294901760
    %1368 = vmatmul.mubr.f32.gmra.mxu0 %v1367
    %v1369 = vpop.f32.mrf.mxu0
    %v1370 = vadd.f32 %v1193, %v1369
    %v1371 = vpop.f32.mrf.mxu0
    %1372 = vmatprep.mubr.f32.mxu0 0.0
    %v1373 = vand.u32 %v67, 4294901760
    %1374 = vmatmul.mubr.f32.gmra.mxu0 %v1373
    %v1375 = vpop.f32.mrf.mxu0
    %v1376 = vadd.f32 %v1199, %v1375
    %v1377 = vpop.f32.mrf.mxu0
    %1378 = vmatprep.mubr.f32.mxu0 0.0
    %v1379 = vand.u32 %v70, 4294901760
    %1380 = vmatmul.mubr.f32.gmra.mxu0 %v1379
    %v1381 = vpop.f32.mrf.mxu0
    %v1382 = vadd.f32 %v1205, %v1381
    %v1383 = vpop.f32.mrf.mxu0
    %1384 = vmatprep.mubr.f32.mxu0 0.0
    %v1385 = vand.u32 %v73, 4294901760
    %1386 = vmatmul.mubr.f32.gmra.mxu0 %v1385
    %v1387 = vpop.f32.mrf.mxu0
    %v1388 = vadd.f32 %v1211, %v1387
    %v1389 = vpop.f32.mrf.mxu0
    %1390 = vmatprep.mubr.f32.mxu0 0.0
    %v1391 = vand.u32 %v76, 4294901760
    %1392 = vmatmul.mubr.f32.gmra.mxu0 %v1391
    %v1393 = vpop.f32.mrf.mxu0
    %v1394 = vadd.f32 %v1217, %v1393
    %v1395 = vpop.f32.mrf.mxu0
    %1396 = vmatprep.mubr.f32.mxu0 0.0
    %v1397 = vand.u32 %v79, 4294901760
    %1398 = vmatmul.mubr.f32.gmra.mxu0 %v1397
    %v1399 = vpop.f32.mrf.mxu0
    %v1400 = vadd.f32 %v1223, %v1399
    %v1401 = vpop.f32.mrf.mxu0
    %1402 = vmatprep.mubr.f32.mxu0 0.0
    %v1403 = vand.u32 %v82, 4294901760
    %1404 = vmatmul.mubr.f32.gmra.mxu0 %v1403
    %v1405 = vpop.f32.mrf.mxu0
    %v1406 = vadd.f32 %v1229, %v1405
    %v1407 = vpop.f32.mrf.mxu0
    %1408 = vmatprep.mubr.f32.mxu0 0.0
    %v1409 = vand.u32 %v85, 4294901760
    %1410 = vmatmul.mubr.f32.gmra.mxu0 %v1409
    %v1411 = vpop.f32.mrf.mxu0
    %v1412 = vadd.f32 %v1235, %v1411
    %v1413 = vpop.f32.mrf.mxu0
    %1414 = vmatprep.mubr.f32.mxu0 0.0
    %v1415 = vand.u32 %v88, 4294901760
    %1416 = vmatmul.mubr.f32.gmra.mxu0 %v1415
    %v1417 = vpop.f32.mrf.mxu0
    %v1418 = vadd.f32 %v1241, %v1417
    %v1419 = vpop.f32.mrf.mxu0
    %1420 = vmatprep.mubr.f32.mxu0 0.0
    %v1421 = vand.u32 %v91, 4294901760
    %1422 = vmatmul.mubr.f32.gmra.mxu0 %v1421
    %v1423 = vpop.f32.mrf.mxu0
    %v1424 = vadd.f32 %v1247, %v1423
    %v1425 = vpop.f32.mrf.mxu0
    %1426 = vdwg.mxu0
    %1427 = vst [vmem:[#allocation2] sm:$0xff] %v1334
    %1428 = vst [vmem:[#allocation2 + $0x8] sm:$0xff] %v1340
    %1429 = vst [vmem:[#allocation2 + $0x10] sm:$0xff] %v1346
    %1430 = vst [vmem:[#allocation2 + $0x18] sm:$0xff] %v1352
    %1431 = vst [vmem:[#allocation2 + $0x20] sm:$0xff] %v1358
    %1432 = vst [vmem:[#allocation2 + $0x28] sm:$0xff] %v1364
    %1433 = vst [vmem:[#allocation2 + $0x30] sm:$0xff] %v1370
    %1434 = vst [vmem:[#allocation2 + $0x38] sm:$0xff] %v1376
    %1435 = vst [vmem:[#allocation2 + $0x40] sm:$0xff] %v1382
    %1436 = vst [vmem:[#allocation2 + $0x48] sm:$0xff] %v1388
    %1437 = vst [vmem:[#allocation2 + $0x50] sm:$0xff] %v1394
    %1438 = vst [vmem:[#allocation2 + $0x58] sm:$0xff] %v1400
    %1439 = vst [vmem:[#allocation2 + $0x60] sm:$0xff] %v1406
    %1440 = vst [vmem:[#allocation2 + $0x68] sm:$0xff] %v1412
    %1441 = vst [vmem:[#allocation2 + $0x70] sm:$0xff] %v1418
    %1442 = vst [vmem:[#allocation2 + $0x78] sm:$0xff] %v1424
    // Predicated region
    $region10: #{gae_forward.9} parent=1 // pred_check
      _
    $region11: #{gae_forward.9} parent=1 // pred_check_branch
      %1444 = sbr.rel (0) target = $region13
    $region12: #{gae_forward.9} parent=1 // pred_region
      %s1446 = ssub.s32 2048, 2048
      %1447 = vsyncadd [#allocation3], %s1446
      %s1448 = sshll.u32 [#allocation2], 4
      %s1449 = int_to_ptr.vmem [resolvable:$true] %s1448
      %1454 = dma.vmem_to_hbm [thread:$0]  %s1449, 2048, %s2, [#allocation3], 128, 128, 8
    $region13: #{gae_forward.9} parent=1 // pred_fallthru
      _
    // Predicated region
    $region14: #{gae_forward.9} parent=1 // pred_check
      _
    $region15: #{gae_forward.9} parent=1 // pred_check_branch
      %1456 = sbr.rel (0) target = $region17
    $region16: #{gae_forward.9} parent=1 // pred_region
      %1457 = dma.done [#allocation3], 2048
    $region17: #{gae_forward.9} parent=1 // pred_fallthru
      _
    %1458 = vsyncpa [#allocation3], 1

</llo_original>
